<compile_context>
chip_gen: v5e
topology: v5e:2x2
jax: 0.10.0
libtpu: 0.0.40
codegen_flags: <defaults>
</compile_context>

<pallas_src>
import functools
import math

import jax
import jax.numpy as jnp
from jax import lax
from jax.experimental import pallas as pl
from jax.experimental.pallas import tpu as pltpu

_LN_EPS = 0.1                                     # Encoder uses nn.LayerNorm(eps=0.1)
_LOG_2PI = math.log(2.0 * math.pi)
_LOG_MIX_W = tuple(math.log(w) for w in (3.0 / 20.0, 3.0 / 4.0, 1.0 / 10.0))
_LOGVAR_UNIFORM = 10.0                            # CompositePrior uniform logvar buffer
_COMPUTE_DTYPE = jnp.bfloat16                     # matmul-weight dtype (f32 accumulate)


# ----------------------------------------------------------------------------
# Shared math (used by the Pallas kernels and by the pure-JAX reference)
# ----------------------------------------------------------------------------
def _swish(v, approx):
    denom = 1.0 + jnp.exp(-v)
    if approx:                                    # EUP approx reciprocal (kernel only)
        return v * pl.reciprocal(denom, approx=True)
    return v / denom


def _layer_norm(h, gamma, beta, eps):
    m = jnp.mean(h, axis=-1, keepdims=True)
    var = jnp.mean(jnp.square(h - m), axis=-1, keepdims=True)
    return (h - m) * lax.rsqrt(var + eps) * gamma + beta


def _dot(h, w):
    # bf16 operands into the MXU, f32 accumulation.
    return jnp.dot(h.astype(w.dtype), w, preferred_element_type=jnp.float32)


def _log_norm_pdf(v, mean, logvar):
    return -0.5 * (logvar + _LOG_2PI + jnp.square(v - mean) * jnp.exp(-logvar))


def _encoder_from_h1pre(h1_pre, w2, w3, w4, w5, w_head, small, head_b, *,
                        latent_dim, approx, eps=_LN_EPS):
    """Encoder body given the bias-free fc1 output.  `small` rows: [b,g,t] x 5 layers.
    The mu/logvar heads are fused into one [H, 2L] matmul (w_head / head_b)."""
    def bgt(i):
        return small[3 * i], small[3 * i + 1], small[3 * i + 2]

    b1, g1, t1 = bgt(0)
    h1 = _layer_norm(_swish(h1_pre + b1, approx), g1, t1, eps)
    res = h1

    def layer(h_prev, res, w, i):
        b, g, t = bgt(i)
        return _layer_norm(_swish(_dot(h_prev, w) + b + res, approx), g, t, eps)

    h2 = layer(h1, res, w2, 1); res = res + h2
    h3 = layer(h2, res, w3, 2); res = res + h3
    h4 = layer(h3, res, w4, 3); res = res + h4
    h5 = layer(h4, res, w5, 4)

    head = _dot(h5, w_head) + head_b              # (M, 2L)
    return head[:, :latent_dim], head[:, latent_dim:]


def _l2_normalize_rows(x_f32):
    # Matches torch: x / sqrt(sum(x^2)) with NO eps (all-zero rows -> NaN, as in torch).
    return x_f32 * lax.rsqrt(jnp.sum(x_f32 * x_f32, axis=-1, keepdims=True))


def _recvae_predict_rows(x_f32, w1, enc_p, dec_w, dec_b, *, latent_dim, approx):
    x_n = _l2_normalize_rows(x_f32)
    h1_pre = _dot(x_n, w1)
    mu, _ = _encoder_from_h1pre(h1_pre, *enc_p, latent_dim=latent_dim, approx=approx)
    return _dot(mu, dec_w) + dec_b


def _recvae_loss_rows(x_f32, w1_cat, enc_p, enc_old_p, dec_w, dec_b, *,
                      hidden_dim, latent_dim, gamma, beta, approx):
    """Per-row mll / weighted-kld.  w1_cat = [W1 || W1_old] along the output axis."""
    # TODO(synk): eval-mode path — training dropout and the reparameterization noise
    # (eps * exp(0.5*logvar)) are omitted; z == mu as in model.eval().
    x_n = _l2_normalize_rows(x_f32)
    h1_cat = _dot(x_n, w1_cat)                          # (M, 2H), one 256-wide MXU dot
    mu, logvar = _encoder_from_h1pre(h1_cat[:, :hidden_dim], *enc_p,
                                     latent_dim=latent_dim, approx=approx)
    post_mu, post_logvar = _encoder_from_h1pre(h1_cat[:, hidden_dim:], *enc_old_p,
                                               latent_dim=latent_dim, approx=approx)
    z = mu
    x_pred = _dot(z, dec_w) + dec_b

    # Multinomial log-likelihood: (log_softmax(x_pred) * x).sum(-1)
    m = jnp.max(x_pred, axis=-1, keepdims=True)
    lse = m + jnp.log(jnp.sum(jnp.exp(x_pred - m), axis=-1, keepdims=True))
    mll_row = jnp.sum((x_pred - lse) * x_f32, axis=-1, keepdims=True)

    # CompositePrior: logsumexp over 3 weighted Gaussians (std / old posterior / unif).
    g0 = _log_norm_pdf(z, 0.0, 0.0) + _LOG_MIX_W[0]
    g1 = _log_norm_pdf(z, post_mu, post_logvar) + _LOG_MIX_W[1]
    g2 = _log_norm_pdf(z, 0.0, _LOGVAR_UNIFORM) + _LOG_MIX_W[2]
    gmax = jnp.maximum(jnp.maximum(g0, g1), g2)
    prior = gmax + jnp.log(jnp.exp(g0 - gmax) + jnp.exp(g1 - gmax) + jnp.exp(g2 - gmax))

    if gamma:                                            # gamma-weighted KL (default)
        kl_weight = gamma * jnp.sum(x_f32, axis=-1, keepdims=True)
    else:                                                # beta-weighted KL branch
        kl_weight = beta
    kld_row = jnp.sum(_log_norm_pdf(z, mu, logvar) - prior, axis=-1, keepdims=True) * kl_weight
    return mll_row, kld_row


# ----------------------------------------------------------------------------
# Pallas kernels
# ----------------------------------------------------------------------------
def _recvae_loss_kernel(*refs, hidden_dim, latent_dim, gamma, beta, valid_batch, tile_m):
    x_ref = refs[0]
    w1_cat = refs[1][...]
    enc = tuple(r[...] for r in refs[2:9])
    enc_old = tuple(r[...] for r in refs[9:16])
    dec_w = refs[16][...]
    dec_b = refs[17][...]
    sums_ref = refs[18]

    x = x_ref[...].astype(jnp.float32)
    mll_row, kld_row = _recvae_loss_rows(
        x, w1_cat, enc, enc_old, dec_w, dec_b,
        hidden_dim=hidden_dim, latent_dim=latent_dim, gamma=gamma, beta=beta, approx=True)

    # Mask padded rows (beyond the true batch) out of the per-tile partial sums.
    row = pl.program_id(0) * tile_m + lax.broadcasted_iota(jnp.int32, (tile_m, 1), 0)
    valid = row < valid_batch
    mll_p = jnp.sum(jnp.where(valid, mll_row, 0.0))
    kld_p = jnp.sum(jnp.where(valid, kld_row, 0.0))

    # One tiny, fully tile-aligned (1, 8, 128) output per grid step:
    # lane 0 = mll partial sum, lane 1 = kld partial sum.
    lane = lax.broadcasted_iota(jnp.int32, (1, 8, 128), 2)
    sums_ref[...] = jnp.where(lane == 0, mll_p, jnp.where(lane == 1, kld_p, 0.0))


def _recvae_predict_kernel(*refs, latent_dim):
    x_ref = refs[0]
    w1 = refs[1][...]
    enc = tuple(r[...] for r in refs[2:9])
    dec_w = refs[9][...]
    dec_b = refs[10][...]
    out_ref = refs[11]

    x = x_ref[...].astype(jnp.float32)
    x_pred = _recvae_predict_rows(x, w1, enc, dec_w, dec_b,
                                  latent_dim=latent_dim, approx=True)
    out_ref[...] = x_pred.astype(out_ref.dtype)          # lane-dense bf16 store


# ----------------------------------------------------------------------------
# Param packing + wrappers
# ----------------------------------------------------------------------------
def _pack_encoder(enc_params):
    """[W,b,g,t]x5 + (Wmu,bmu) + (Wlv,blv)  ->  (w1, (w2..w5, w_head, small, head_b))."""
    (w1, b1, g1, t1, w2, b2, g2, t2, w3, b3, g3, t3,
     w4, b4, g4, t4, w5, b5, g5, t5, wmu, bmu, wlv, blv) = enc_params
    small = jnp.concatenate([b1, g1, t1, b2, g2, t2, b3, g3, t3,
                             b4, g4, t4, b5, g5, t5], axis=0)          # (15, H) f32
    w_head = jnp.concatenate([wmu, wlv], axis=1)                       # (H, 2L) bf16
    head_b = jnp.concatenate([bmu, blv], axis=1)                       # (1, 2L) f32
    return w1, (w2, w3, w4, w5, w_head, small, head_b)


def _pad_batch(x, tile_m):
    batch, n_items = x.shape
    pad = (-batch) % tile_m
    if pad:
        # Safe one-hot pad rows (avoid rsqrt(0) NaNs); they are masked / sliced away.
        safe = jnp.zeros((pad, n_items), x.dtype).at[:, 0].set(1)
        x = jnp.concatenate([x, safe], axis=0)
    return x


_COMPILER_PARAMS = pltpu.CompilerParams(
    dimension_semantics=("parallel",),                  # batch tiles -> 2 TCs on v7x
    vmem_limit_bytes=48 * 1024 * 1024,                  # headroom under v7x's 64 MiB
)


@functools.partial(jax.jit, static_argnames=("gamma", "beta", "tile_m"))
def _recvae_loss_pallas(user_ratings, enc_params, enc_old_params, dec_w, dec_b, *,
                        gamma, beta, tile_m):
    batch, n_items = user_ratings.shape
    hidden_dim = enc_params[1].shape[1]
    latent_dim = enc_params[-1].shape[1]

    # NOTE: packing/concat runs under jit per call; pre-pack once for production.
    w1_e, enc_rest = _pack_encoder(enc_params)
    w1_o, enc_old_rest = _pack_encoder(enc_old_params)
    w1_cat = jnp.concatenate([w1_e, w1_o], axis=1)      # (n_items, 2H) fused fc1

    x = _pad_batch(user_ratings, tile_m)
    num_tiles = x.shape[0] // tile_m
    params = (w1_cat,) + enc_rest + enc_old_rest + (dec_w, dec_b)

    sums = pl.pallas_call(
        functools.partial(_recvae_loss_kernel, hidden_dim=hidden_dim,
                          latent_dim=latent_dim, gamma=gamma, beta=beta,
                          valid_batch=batch, tile_m=tile_m),
        grid=(num_tiles,),
        in_specs=[pl.BlockSpec((tile_m, n_items), lambda i: (i, 0))]
                 + [pl.BlockSpec(p.shape, lambda i: (0, 0)) for p in params],
        out_specs=pl.BlockSpec((1, 8, 128), lambda i: (i, 0, 0)),
        out_shape=jax.ShapeDtypeStruct((num_tiles, 8, 128), jnp.float32),
        compiler_params=_COMPILER_PARAMS,
    )(x, *params)

    mll = jnp.sum(sums[:, 0, 0]) / batch
    kld = jnp.sum(sums[:, 0, 1]) / batch
    return mll, kld


@functools.partial(jax.jit, static_argnames=("tile_m",))
def _recvae_predict_pallas(user_ratings, enc_params, dec_w, dec_b, *, tile_m):
    batch, n_items = user_ratings.shape
    latent_dim = enc_params[-1].shape[1]
    w1, enc_rest = _pack_encoder(enc_params)

    x = _pad_batch(user_ratings, tile_m)
    num_tiles = x.shape[0] // tile_m
    params = (w1,) + enc_rest + (dec_w, dec_b)

    x_pred = pl.pallas_call(
        functools.partial(_recvae_predict_kernel, latent_dim=latent_dim),
        grid=(num_tiles,),
        in_specs=[pl.BlockSpec((tile_m, n_items), lambda i: (i, 0))]
                 + [pl.BlockSpec(p.shape, lambda i: (0, 0)) for p in params],
        out_specs=pl.BlockSpec((tile_m, n_items), lambda i: (i, 0)),
        out_shape=jax.ShapeDtypeStruct((x.shape[0], n_items), jnp.bfloat16),
        compiler_params=_COMPILER_PARAMS,
    )(x, *params)
    return x_pred[:batch]


def recvae_forward(user_ratings, enc_params, enc_old_params, dec_w, dec_b, *,
                   beta=None, gamma=1.0, calculate_loss=True, tile_m=128):
    """Eval-mode RecVAE.forward.  Returns ((mll, kld), negative_elbo) or x_pred."""
    if not calculate_loss:
        return _recvae_predict_pallas(user_ratings, tuple(enc_params), dec_w, dec_b,
                                      tile_m=tile_m)
    if not gamma and not beta:
        raise ValueError("one of gamma / beta must be set (matches the torch module)")
    mll, kld = _recvae_loss_pallas(
        user_ratings, tuple(enc_params), tuple(enc_old_params), dec_w, dec_b,
        gamma=float(gamma) if gamma else 0.0,
        beta=float(beta) if beta else None,
        tile_m=tile_m)
    return (mll, kld), -(mll - kld)


# ----------------------------------------------------------------------------
# Parameter construction (deterministic, mirrors torch Linear / LayerNorm init)
# ----------------------------------------------------------------------------
def _init_linear(key, d_in, d_out, dtype):
    kw, kb = jax.random.split(key)
    bound = 1.0 / math.sqrt(d_in)
    w = jax.random.uniform(kw, (d_in, d_out), jnp.float32, -bound, bound).astype(dtype)
    b = jax.random.uniform(kb, (1, d_out), jnp.float32, -bound, bound)
    return w, b


def init_encoder_params(key, input_dim, hidden_dim, latent_dim, dtype=_COMPUTE_DTYPE):
    """[W, b, ln_gamma, ln_beta] x 5, then fc_mu(W, b), fc_logvar(W, b).
    Weights pre-transposed to [d_in, d_out] (bf16); biases / LN params f32."""
    keys = jax.random.split(key, 7)
    params = []
    for i in range(5):
        d_in = input_dim if i == 0 else hidden_dim
        w, b = _init_linear(keys[i], d_in, hidden_dim, dtype)
        params += [w, b,
                   jnp.ones((1, hidden_dim), jnp.float32),
                   jnp.zeros((1, hidden_dim), jnp.float32)]
    for i in range(2):
        w, b = _init_linear(keys[5 + i], hidden_dim, latent_dim, dtype)
        params += [w, b]
    return params


if __name__ == "__main__":
    key = jax.random.PRNGKey(0)
    # Lane-dense small config: n_items=256, hidden=latent=128; batch=512 -> 4 tiles of
    # 128 rows (>= 2 tiles per TensorCore on v7x).
    batch, n_items, hidden_dim, latent_dim = 512, 256, 128, 128

    k_enc, k_old, k_dec, k_x = jax.random.split(key, 4)
    enc_params = init_encoder_params(k_enc, n_items, hidden_dim, latent_dim)
    enc_old_params = init_encoder_params(k_old, n_items, hidden_dim, latent_dim)
    dec_w, dec_b = _init_linear(k_dec, latent_dim, n_items, _COMPUTE_DTYPE)

    # Implicit-feedback 0/1 ratings supplied in bf16 (exact; halves the input DMA).
    user_ratings = (jax.random.uniform(k_x, (batch, n_items)) < 0.3).astype(jnp.bfloat16)

    # Pallas forward: loss path and the calculate_loss=False (x_pred) path.
    (mll, kld), neg_elbo = recvae_forward(user_ratings, enc_params, enc_old_params,
                                          dec_w, dec_b)
    x_pred = recvae_forward(user_ratings, enc_params, enc_old_params, dec_w, dec_b,
                            calculate_loss=False)
    jax.block_until_ready((mll, kld, neg_elbo, x_pred))

    # Pure-JAX reference (same bf16 weights / packed layout, exact swish reciprocal).
    x_f32 = user_ratings.astype(jnp.float32)
    w1_e, enc_rest = _pack_encoder(tuple(enc_params))
    w1_o, enc_old_rest = _pack_encoder(tuple(enc_old_params))
    w1_cat = jnp.concatenate([w1_e, w1_o], axis=1)
    mll_rows_ref, kld_rows_ref = _recvae_loss_rows(
        x_f32, w1_cat, enc_rest, enc_old_rest, dec_w, dec_b,
        hidden_dim=hidden_dim, latent_dim=latent_dim, gamma=1.0, beta=None, approx=False)
    mll_ref = jnp.mean(mll_rows_ref)
    kld_ref = jnp.mean(kld_rows_ref)
    neg_elbo_ref = -(mll_ref - kld_ref)
    x_pred_ref = _recvae_predict_rows(x_f32, w1_e, enc_rest, dec_w, dec_b,
                                      latent_dim=latent_dim, approx=False)

    # Tolerances cover bf16 weights/output + EUP-approx reciprocal in the kernel path.
    assert x_pred.shape == (batch, n_items) and x_pred.dtype == jnp.bfloat16
    assert jnp.allclose(x_pred.astype(jnp.float32), x_pred_ref,
                        atol=3e-2, rtol=3e-2), "x_pred mismatch"
    assert jnp.allclose(mll, mll_ref, rtol=1e-2, atol=0.5), "mll mismatch"
    assert jnp.allclose(kld, kld_ref, rtol=2e-2, atol=5.0), "kld mismatch"
    assert jnp.allclose(neg_elbo, neg_elbo_ref, rtol=2e-2, atol=5.0), "elbo mismatch"

    print("KERNEL_OK")
</pallas_src>

<mosaic_0001>
module attributes {stable_mosaic.version = 11 : i64} {
  func.func @_recvae_loss_kernel(%arg0: i32, %arg1: memref<128x256xbf16, #tpu.memory_space<vmem>>, %arg2: memref<256x256xbf16, #tpu.memory_space<vmem>>, %arg3: memref<128x128xbf16, #tpu.memory_space<vmem>>, %arg4: memref<128x128xbf16, #tpu.memory_space<vmem>>, %arg5: memref<128x128xbf16, #tpu.memory_space<vmem>>, %arg6: memref<128x128xbf16, #tpu.memory_space<vmem>>, %arg7: memref<128x256xbf16, #tpu.memory_space<vmem>>, %arg8: memref<15x128xf32, #tpu.memory_space<vmem>>, %arg9: memref<1x256xf32, #tpu.memory_space<vmem>>, %arg10: memref<128x128xbf16, #tpu.memory_space<vmem>>, %arg11: memref<128x128xbf16, #tpu.memory_space<vmem>>, %arg12: memref<128x128xbf16, #tpu.memory_space<vmem>>, %arg13: memref<128x128xbf16, #tpu.memory_space<vmem>>, %arg14: memref<128x256xbf16, #tpu.memory_space<vmem>>, %arg15: memref<15x128xf32, #tpu.memory_space<vmem>>, %arg16: memref<1x256xf32, #tpu.memory_space<vmem>>, %arg17: memref<128x256xbf16, #tpu.memory_space<vmem>>, %arg18: memref<1x256xf32, #tpu.memory_space<vmem>>, %arg19: memref<1x8x128xf32, #tpu.memory_space<vmem>>) attributes {dimension_semantics = [#tpu.dimension_semantics<parallel>], iteration_bounds = array<i64: 4>, scalar_prefetch = 0 : i64, scratch_operands = 0 : i64, tpu.core_type = #tpu.core_type<tc>, window_params = [{transform_indices = @transform_0, window_bounds = array<i64: 128, 256>}, {pipeline_mode = #tpu.pipeline_mode<synchronous>, transform_indices = @transform_1, window_bounds = array<i64: 256, 256>}, {pipeline_mode = #tpu.pipeline_mode<synchronous>, transform_indices = @transform_2, window_bounds = array<i64: 128, 128>}, {pipeline_mode = #tpu.pipeline_mode<synchronous>, transform_indices = @transform_3, window_bounds = array<i64: 128, 128>}, {pipeline_mode = #tpu.pipeline_mode<synchronous>, transform_indices = @transform_4, window_bounds = array<i64: 128, 128>}, {pipeline_mode = #tpu.pipeline_mode<synchronous>, transform_indices = @transform_5, window_bounds = array<i64: 128, 128>}, {pipeline_mode = #tpu.pipeline_mode<synchronous>, transform_indices = @transform_6, window_bounds = array<i64: 128, 256>}, {pipeline_mode = #tpu.pipeline_mode<synchronous>, transform_indices = @transform_7, window_bounds = array<i64: 15, 128>}, {pipeline_mode = #tpu.pipeline_mode<synchronous>, transform_indices = @transform_8, window_bounds = array<i64: 1, 256>}, {pipeline_mode = #tpu.pipeline_mode<synchronous>, transform_indices = @transform_9, window_bounds = array<i64: 128, 128>}, {pipeline_mode = #tpu.pipeline_mode<synchronous>, transform_indices = @transform_10, window_bounds = array<i64: 128, 128>}, {pipeline_mode = #tpu.pipeline_mode<synchronous>, transform_indices = @transform_11, window_bounds = array<i64: 128, 128>}, {pipeline_mode = #tpu.pipeline_mode<synchronous>, transform_indices = @transform_12, window_bounds = array<i64: 128, 128>}, {pipeline_mode = #tpu.pipeline_mode<synchronous>, transform_indices = @transform_13, window_bounds = array<i64: 128, 256>}, {pipeline_mode = #tpu.pipeline_mode<synchronous>, transform_indices = @transform_14, window_bounds = array<i64: 15, 128>}, {pipeline_mode = #tpu.pipeline_mode<synchronous>, transform_indices = @transform_15, window_bounds = array<i64: 1, 256>}, {pipeline_mode = #tpu.pipeline_mode<synchronous>, transform_indices = @transform_16, window_bounds = array<i64: 128, 256>}, {pipeline_mode = #tpu.pipeline_mode<synchronous>, transform_indices = @transform_17, window_bounds = array<i64: 1, 256>}, {transform_indices = @transform_18, window_bounds = array<i64: 1, 8, 128>}]} {
    %c0 = arith.constant 0 : index
    %c0_0 = arith.constant 0 : index
    %0 = vector.load %arg2[%c0, %c0_0] : memref<256x256xbf16, #tpu.memory_space<vmem>>, vector<256x256xbf16>
    %c0_1 = arith.constant 0 : index
    %c0_2 = arith.constant 0 : index
    %1 = vector.load %arg3[%c0_1, %c0_2] : memref<128x128xbf16, #tpu.memory_space<vmem>>, vector<128x128xbf16>
    %c0_3 = arith.constant 0 : index
    %c0_4 = arith.constant 0 : index
    %2 = vector.load %arg4[%c0_3, %c0_4] : memref<128x128xbf16, #tpu.memory_space<vmem>>, vector<128x128xbf16>
    %c0_5 = arith.constant 0 : index
    %c0_6 = arith.constant 0 : index
    %3 = vector.load %arg5[%c0_5, %c0_6] : memref<128x128xbf16, #tpu.memory_space<vmem>>, vector<128x128xbf16>
    %c0_7 = arith.constant 0 : index
    %c0_8 = arith.constant 0 : index
    %4 = vector.load %arg6[%c0_7, %c0_8] : memref<128x128xbf16, #tpu.memory_space<vmem>>, vector<128x128xbf16>
    %c0_9 = arith.constant 0 : index
    %c0_10 = arith.constant 0 : index
    %5 = vector.load %arg7[%c0_9, %c0_10] : memref<128x256xbf16, #tpu.memory_space<vmem>>, vector<128x256xbf16>
    %c0_11 = arith.constant 0 : index
    %c0_12 = arith.constant 0 : index
    %6 = vector.load %arg8[%c0_11, %c0_12] : memref<15x128xf32, #tpu.memory_space<vmem>>, vector<15x128xf32>
    %c0_13 = arith.constant 0 : index
    %c0_14 = arith.constant 0 : index
    %7 = vector.load %arg9[%c0_13, %c0_14] : memref<1x256xf32, #tpu.memory_space<vmem>>, vector<1x256xf32>
    %c0_15 = arith.constant 0 : index
    %c0_16 = arith.constant 0 : index
    %8 = vector.load %arg10[%c0_15, %c0_16] : memref<128x128xbf16, #tpu.memory_space<vmem>>, vector<128x128xbf16>
    %c0_17 = arith.constant 0 : index
    %c0_18 = arith.constant 0 : index
    %9 = vector.load %arg11[%c0_17, %c0_18] : memref<128x128xbf16, #tpu.memory_space<vmem>>, vector<128x128xbf16>
    %c0_19 = arith.constant 0 : index
    %c0_20 = arith.constant 0 : index
    %10 = vector.load %arg12[%c0_19, %c0_20] : memref<128x128xbf16, #tpu.memory_space<vmem>>, vector<128x128xbf16>
    %c0_21 = arith.constant 0 : index
    %c0_22 = arith.constant 0 : index
    %11 = vector.load %arg13[%c0_21, %c0_22] : memref<128x128xbf16, #tpu.memory_space<vmem>>, vector<128x128xbf16>
    %c0_23 = arith.constant 0 : index
    %c0_24 = arith.constant 0 : index
    %12 = vector.load %arg14[%c0_23, %c0_24] : memref<128x256xbf16, #tpu.memory_space<vmem>>, vector<128x256xbf16>
    %c0_25 = arith.constant 0 : index
    %c0_26 = arith.constant 0 : index
    %13 = vector.load %arg15[%c0_25, %c0_26] : memref<15x128xf32, #tpu.memory_space<vmem>>, vector<15x128xf32>
    %c0_27 = arith.constant 0 : index
    %c0_28 = arith.constant 0 : index
    %14 = vector.load %arg16[%c0_27, %c0_28] : memref<1x256xf32, #tpu.memory_space<vmem>>, vector<1x256xf32>
    %c0_29 = arith.constant 0 : index
    %c0_30 = arith.constant 0 : index
    %15 = vector.load %arg17[%c0_29, %c0_30] : memref<128x256xbf16, #tpu.memory_space<vmem>>, vector<128x256xbf16>
    %c0_31 = arith.constant 0 : index
    %c0_32 = arith.constant 0 : index
    %16 = vector.load %arg18[%c0_31, %c0_32] : memref<1x256xf32, #tpu.memory_space<vmem>>, vector<1x256xf32>
    %c0_33 = arith.constant 0 : index
    %c0_34 = arith.constant 0 : index
    %17 = vector.load %arg1[%c0_33, %c0_34] : memref<128x256xbf16, #tpu.memory_space<vmem>>, vector<128x256xbf16>
    %18 = arith.extf %17 : vector<128x256xbf16> to vector<128x256xf32>
    %19 = arith.mulf %18, %18 : vector<128x256xf32>
    %cst = arith.constant dense<0.000000e+00> : vector<128xf32>
    %20 = vector.multi_reduction <add>, %19, %cst [1] : vector<128x256xf32> to vector<128xf32>
    %21 = vector.shape_cast %20 : vector<128xf32> to vector<128x1xf32>
    %22 = math.rsqrt %21 : vector<128x1xf32>
    %23 = vector.broadcast %22 : vector<128x1xf32> to vector<128x256xf32>
    %24 = arith.mulf %18, %23 : vector<128x256xf32>
    %25 = arith.truncf %24 : vector<128x256xf32> to vector<128x256xbf16>
    %cst_35 = arith.constant dense<0.000000e+00> : vector<128x256xf32>
    %26 = tpu.matmul %25, %0, %cst_35 {dimension_numbers = #tpu.dot_dimension_numbers<[1], [0], [0], [1], [0, 0, 1, 1], [], []>} : vector<128x256xbf16>, vector<256x256xbf16>, vector<128x256xf32> -> vector<128x256xf32>
    %27 = vector.extract_strided_slice %26 {offsets = [0, 0], sizes = [128, 128], strides = [1, 1]} : vector<128x256xf32> to vector<128x128xf32>
    %28 = vector.extract_strided_slice %6 {offsets = [0, 0], sizes = [1, 128], strides = [1, 1]} : vector<15x128xf32> to vector<1x128xf32>
    %29 = vector.shape_cast %28 : vector<1x128xf32> to vector<128xf32>
    %30 = vector.extract_strided_slice %6 {offsets = [1, 0], sizes = [1, 128], strides = [1, 1]} : vector<15x128xf32> to vector<1x128xf32>
    %31 = vector.shape_cast %30 : vector<1x128xf32> to vector<128xf32>
    %32 = vector.extract_strided_slice %6 {offsets = [2, 0], sizes = [1, 128], strides = [1, 1]} : vector<15x128xf32> to vector<1x128xf32>
    %33 = vector.shape_cast %32 : vector<1x128xf32> to vector<128xf32>
    %34 = vector.shape_cast %29 : vector<128xf32> to vector<1x128xf32>
    %35 = vector.broadcast %34 : vector<1x128xf32> to vector<128x128xf32>
    %36 = arith.addf %27, %35 : vector<128x128xf32>
    %cst_36 = arith.constant 0.000000e+00 : f32
    %37 = vector.broadcast %cst_36 : f32 to vector<128x128xf32>
    %38 = arith.subf %37, %36 : vector<128x128xf32>
    %39 = math.exp %38 : vector<128x128xf32>
    %cst_37 = arith.constant 1.000000e+00 : f32
    %40 = vector.broadcast %cst_37 : f32 to vector<128x128xf32>
    %41 = arith.addf %40, %39 : vector<128x128xf32>
    %42 = tpu.reciprocal %41 {approx = true} : vector<128x128xf32> -> vector<128x128xf32>
    %43 = arith.mulf %36, %42 : vector<128x128xf32>
    %cst_38 = arith.constant dense<0.000000e+00> : vector<128xf32>
    %44 = vector.multi_reduction <add>, %43, %cst_38 [1] : vector<128x128xf32> to vector<128xf32>
    %45 = vector.shape_cast %44 : vector<128xf32> to vector<128x1xf32>
    %cst_39 = arith.constant 1.280000e+02 : f32
    %46 = vector.broadcast %cst_39 : f32 to vector<128x1xf32>
    %47 = arith.divf %45, %46 : vector<128x1xf32>
    %48 = vector.broadcast %47 : vector<128x1xf32> to vector<128x128xf32>
    %49 = arith.subf %43, %48 : vector<128x128xf32>
    %50 = arith.mulf %49, %49 : vector<128x128xf32>
    %cst_40 = arith.constant dense<0.000000e+00> : vector<128xf32>
    %51 = vector.multi_reduction <add>, %50, %cst_40 [1] : vector<128x128xf32> to vector<128xf32>
    %52 = vector.shape_cast %51 : vector<128xf32> to vector<128x1xf32>
    %cst_41 = arith.constant 1.280000e+02 : f32
    %53 = vector.broadcast %cst_41 : f32 to vector<128x1xf32>
    %54 = arith.divf %52, %53 : vector<128x1xf32>
    %55 = vector.broadcast %47 : vector<128x1xf32> to vector<128x128xf32>
    %56 = arith.subf %43, %55 : vector<128x128xf32>
    %cst_42 = arith.constant 1.000000e-01 : f32
    %57 = vector.broadcast %cst_42 : f32 to vector<128x1xf32>
    %58 = arith.addf %54, %57 : vector<128x1xf32>
    %59 = math.rsqrt %58 : vector<128x1xf32>
    %60 = vector.broadcast %59 : vector<128x1xf32> to vector<128x128xf32>
    %61 = arith.mulf %56, %60 : vector<128x128xf32>
    %62 = vector.shape_cast %31 : vector<128xf32> to vector<1x128xf32>
    %63 = vector.broadcast %62 : vector<1x128xf32> to vector<128x128xf32>
    %64 = arith.mulf %61, %63 : vector<128x128xf32>
    %65 = vector.shape_cast %33 : vector<128xf32> to vector<1x128xf32>
    %66 = vector.broadcast %65 : vector<1x128xf32> to vector<128x128xf32>
    %67 = arith.addf %64, %66 : vector<128x128xf32>
    %68 = vector.extract_strided_slice %6 {offsets = [3, 0], sizes = [1, 128], strides = [1, 1]} : vector<15x128xf32> to vector<1x128xf32>
    %69 = vector.shape_cast %68 : vector<1x128xf32> to vector<128xf32>
    %70 = vector.extract_strided_slice %6 {offsets = [4, 0], sizes = [1, 128], strides = [1, 1]} : vector<15x128xf32> to vector<1x128xf32>
    %71 = vector.shape_cast %70 : vector<1x128xf32> to vector<128xf32>
    %72 = vector.extract_strided_slice %6 {offsets = [5, 0], sizes = [1, 128], strides = [1, 1]} : vector<15x128xf32> to vector<1x128xf32>
    %73 = vector.shape_cast %72 : vector<1x128xf32> to vector<128xf32>
    %74 = arith.truncf %67 : vector<128x128xf32> to vector<128x128xbf16>
    %cst_43 = arith.constant dense<0.000000e+00> : vector<128x128xf32>
    %75 = tpu.matmul %74, %1, %cst_43 {dimension_numbers = #tpu.dot_dimension_numbers<[1], [0], [0], [1], [0, 0, 1, 1], [], []>} : vector<128x128xbf16>, vector<128x128xbf16>, vector<128x128xf32> -> vector<128x128xf32>
    %76 = vector.shape_cast %69 : vector<128xf32> to vector<1x128xf32>
    %77 = vector.broadcast %76 : vector<1x128xf32> to vector<128x128xf32>
    %78 = arith.addf %75, %77 : vector<128x128xf32>
    %79 = arith.addf %78, %67 : vector<128x128xf32>
    %cst_44 = arith.constant 0.000000e+00 : f32
    %80 = vector.broadcast %cst_44 : f32 to vector<128x128xf32>
    %81 = arith.subf %80, %79 : vector<128x128xf32>
    %82 = math.exp %81 : vector<128x128xf32>
    %cst_45 = arith.constant 1.000000e+00 : f32
    %83 = vector.broadcast %cst_45 : f32 to vector<128x128xf32>
    %84 = arith.addf %83, %82 : vector<128x128xf32>
    %85 = tpu.reciprocal %84 {approx = true} : vector<128x128xf32> -> vector<128x128xf32>
    %86 = arith.mulf %79, %85 : vector<128x128xf32>
    %cst_46 = arith.constant dense<0.000000e+00> : vector<128xf32>
    %87 = vector.multi_reduction <add>, %86, %cst_46 [1] : vector<128x128xf32> to vector<128xf32>
    %88 = vector.shape_cast %87 : vector<128xf32> to vector<128x1xf32>
    %cst_47 = arith.constant 1.280000e+02 : f32
    %89 = vector.broadcast %cst_47 : f32 to vector<128x1xf32>
    %90 = arith.divf %88, %89 : vector<128x1xf32>
    %91 = vector.broadcast %90 : vector<128x1xf32> to vector<128x128xf32>
    %92 = arith.subf %86, %91 : vector<128x128xf32>
    %93 = arith.mulf %92, %92 : vector<128x128xf32>
    %cst_48 = arith.constant dense<0.000000e+00> : vector<128xf32>
    %94 = vector.multi_reduction <add>, %93, %cst_48 [1] : vector<128x128xf32> to vector<128xf32>
    %95 = vector.shape_cast %94 : vector<128xf32> to vector<128x1xf32>
    %cst_49 = arith.constant 1.280000e+02 : f32
    %96 = vector.broadcast %cst_49 : f32 to vector<128x1xf32>
    %97 = arith.divf %95, %96 : vector<128x1xf32>
    %98 = vector.broadcast %90 : vector<128x1xf32> to vector<128x128xf32>
    %99 = arith.subf %86, %98 : vector<128x128xf32>
    %cst_50 = arith.constant 1.000000e-01 : f32
    %100 = vector.broadcast %cst_50 : f32 to vector<128x1xf32>
    %101 = arith.addf %97, %100 : vector<128x1xf32>
    %102 = math.rsqrt %101 : vector<128x1xf32>
    %103 = vector.broadcast %102 : vector<128x1xf32> to vector<128x128xf32>
    %104 = arith.mulf %99, %103 : vector<128x128xf32>
    %105 = vector.shape_cast %71 : vector<128xf32> to vector<1x128xf32>
    %106 = vector.broadcast %105 : vector<1x128xf32> to vector<128x128xf32>
    %107 = arith.mulf %104, %106 : vector<128x128xf32>
    %108 = vector.shape_cast %73 : vector<128xf32> to vector<1x128xf32>
    %109 = vector.broadcast %108 : vector<1x128xf32> to vector<128x128xf32>
    %110 = arith.addf %107, %109 : vector<128x128xf32>
    %111 = arith.addf %67, %110 : vector<128x128xf32>
    %112 = vector.extract_strided_slice %6 {offsets = [6, 0], sizes = [1, 128], strides = [1, 1]} : vector<15x128xf32> to vector<1x128xf32>
    %113 = vector.shape_cast %112 : vector<1x128xf32> to vector<128xf32>
    %114 = vector.extract_strided_slice %6 {offsets = [7, 0], sizes = [1, 128], strides = [1, 1]} : vector<15x128xf32> to vector<1x128xf32>
    %115 = vector.shape_cast %114 : vector<1x128xf32> to vector<128xf32>
    %116 = vector.extract_strided_slice %6 {offsets = [8, 0], sizes = [1, 128], strides = [1, 1]} : vector<15x128xf32> to vector<1x128xf32>
    %117 = vector.shape_cast %116 : vector<1x128xf32> to vector<128xf32>
    %118 = arith.truncf %110 : vector<128x128xf32> to vector<128x128xbf16>
    %cst_51 = arith.constant dense<0.000000e+00> : vector<128x128xf32>
    %119 = tpu.matmul %118, %2, %cst_51 {dimension_numbers = #tpu.dot_dimension_numbers<[1], [0], [0], [1], [0, 0, 1, 1], [], []>} : vector<128x128xbf16>, vector<128x128xbf16>, vector<128x128xf32> -> vector<128x128xf32>
    %120 = vector.shape_cast %113 : vector<128xf32> to vector<1x128xf32>
    %121 = vector.broadcast %120 : vector<1x128xf32> to vector<128x128xf32>
    %122 = arith.addf %119, %121 : vector<128x128xf32>
    %123 = arith.addf %122, %111 : vector<128x128xf32>
    %cst_52 = arith.constant 0.000000e+00 : f32
    %124 = vector.broadcast %cst_52 : f32 to vector<128x128xf32>
    %125 = arith.subf %124, %123 : vector<128x128xf32>
    %126 = math.exp %125 : vector<128x128xf32>
    %cst_53 = arith.constant 1.000000e+00 : f32
    %127 = vector.broadcast %cst_53 : f32 to vector<128x128xf32>
    %128 = arith.addf %127, %126 : vector<128x128xf32>
    %129 = tpu.reciprocal %128 {approx = true} : vector<128x128xf32> -> vector<128x128xf32>
    %130 = arith.mulf %123, %129 : vector<128x128xf32>
    %cst_54 = arith.constant dense<0.000000e+00> : vector<128xf32>
    %131 = vector.multi_reduction <add>, %130, %cst_54 [1] : vector<128x128xf32> to vector<128xf32>
    %132 = vector.shape_cast %131 : vector<128xf32> to vector<128x1xf32>
    %cst_55 = arith.constant 1.280000e+02 : f32
    %133 = vector.broadcast %cst_55 : f32 to vector<128x1xf32>
    %134 = arith.divf %132, %133 : vector<128x1xf32>
    %135 = vector.broadcast %134 : vector<128x1xf32> to vector<128x128xf32>
    %136 = arith.subf %130, %135 : vector<128x128xf32>
    %137 = arith.mulf %136, %136 : vector<128x128xf32>
    %cst_56 = arith.constant dense<0.000000e+00> : vector<128xf32>
    %138 = vector.multi_reduction <add>, %137, %cst_56 [1] : vector<128x128xf32> to vector<128xf32>
    %139 = vector.shape_cast %138 : vector<128xf32> to vector<128x1xf32>
    %cst_57 = arith.constant 1.280000e+02 : f32
    %140 = vector.broadcast %cst_57 : f32 to vector<128x1xf32>
    %141 = arith.divf %139, %140 : vector<128x1xf32>
    %142 = vector.broadcast %134 : vector<128x1xf32> to vector<128x128xf32>
    %143 = arith.subf %130, %142 : vector<128x128xf32>
    %cst_58 = arith.constant 1.000000e-01 : f32
    %144 = vector.broadcast %cst_58 : f32 to vector<128x1xf32>
    %145 = arith.addf %141, %144 : vector<128x1xf32>
    %146 = math.rsqrt %145 : vector<128x1xf32>
    %147 = vector.broadcast %146 : vector<128x1xf32> to vector<128x128xf32>
    %148 = arith.mulf %143, %147 : vector<128x128xf32>
    %149 = vector.shape_cast %115 : vector<128xf32> to vector<1x128xf32>
    %150 = vector.broadcast %149 : vector<1x128xf32> to vector<128x128xf32>
    %151 = arith.mulf %148, %150 : vector<128x128xf32>
    %152 = vector.shape_cast %117 : vector<128xf32> to vector<1x128xf32>
    %153 = vector.broadcast %152 : vector<1x128xf32> to vector<128x128xf32>
    %154 = arith.addf %151, %153 : vector<128x128xf32>
    %155 = arith.addf %111, %154 : vector<128x128xf32>
    %156 = vector.extract_strided_slice %6 {offsets = [9, 0], sizes = [1, 128], strides = [1, 1]} : vector<15x128xf32> to vector<1x128xf32>
    %157 = vector.shape_cast %156 : vector<1x128xf32> to vector<128xf32>
    %158 = vector.extract_strided_slice %6 {offsets = [10, 0], sizes = [1, 128], strides = [1, 1]} : vector<15x128xf32> to vector<1x128xf32>
    %159 = vector.shape_cast %158 : vector<1x128xf32> to vector<128xf32>
    %160 = vector.extract_strided_slice %6 {offsets = [11, 0], sizes = [1, 128], strides = [1, 1]} : vector<15x128xf32> to vector<1x128xf32>
    %161 = vector.shape_cast %160 : vector<1x128xf32> to vector<128xf32>
    %162 = arith.truncf %154 : vector<128x128xf32> to vector<128x128xbf16>
    %cst_59 = arith.constant dense<0.000000e+00> : vector<128x128xf32>
    %163 = tpu.matmul %162, %3, %cst_59 {dimension_numbers = #tpu.dot_dimension_numbers<[1], [0], [0], [1], [0, 0, 1, 1], [], []>} : vector<128x128xbf16>, vector<128x128xbf16>, vector<128x128xf32> -> vector<128x128xf32>
    %164 = vector.shape_cast %157 : vector<128xf32> to vector<1x128xf32>
    %165 = vector.broadcast %164 : vector<1x128xf32> to vector<128x128xf32>
    %166 = arith.addf %163, %165 : vector<128x128xf32>
    %167 = arith.addf %166, %155 : vector<128x128xf32>
    %cst_60 = arith.constant 0.000000e+00 : f32
    %168 = vector.broadcast %cst_60 : f32 to vector<128x128xf32>
    %169 = arith.subf %168, %167 : vector<128x128xf32>
    %170 = math.exp %169 : vector<128x128xf32>
    %cst_61 = arith.constant 1.000000e+00 : f32
    %171 = vector.broadcast %cst_61 : f32 to vector<128x128xf32>
    %172 = arith.addf %171, %170 : vector<128x128xf32>
    %173 = tpu.reciprocal %172 {approx = true} : vector<128x128xf32> -> vector<128x128xf32>
    %174 = arith.mulf %167, %173 : vector<128x128xf32>
    %cst_62 = arith.constant dense<0.000000e+00> : vector<128xf32>
    %175 = vector.multi_reduction <add>, %174, %cst_62 [1] : vector<128x128xf32> to vector<128xf32>
    %176 = vector.shape_cast %175 : vector<128xf32> to vector<128x1xf32>
    %cst_63 = arith.constant 1.280000e+02 : f32
    %177 = vector.broadcast %cst_63 : f32 to vector<128x1xf32>
    %178 = arith.divf %176, %177 : vector<128x1xf32>
    %179 = vector.broadcast %178 : vector<128x1xf32> to vector<128x128xf32>
    %180 = arith.subf %174, %179 : vector<128x128xf32>
    %181 = arith.mulf %180, %180 : vector<128x128xf32>
    %cst_64 = arith.constant dense<0.000000e+00> : vector<128xf32>
    %182 = vector.multi_reduction <add>, %181, %cst_64 [1] : vector<128x128xf32> to vector<128xf32>
    %183 = vector.shape_cast %182 : vector<128xf32> to vector<128x1xf32>
    %cst_65 = arith.constant 1.280000e+02 : f32
    %184 = vector.broadcast %cst_65 : f32 to vector<128x1xf32>
    %185 = arith.divf %183, %184 : vector<128x1xf32>
    %186 = vector.broadcast %178 : vector<128x1xf32> to vector<128x128xf32>
    %187 = arith.subf %174, %186 : vector<128x128xf32>
    %cst_66 = arith.constant 1.000000e-01 : f32
    %188 = vector.broadcast %cst_66 : f32 to vector<128x1xf32>
    %189 = arith.addf %185, %188 : vector<128x1xf32>
    %190 = math.rsqrt %189 : vector<128x1xf32>
    %191 = vector.broadcast %190 : vector<128x1xf32> to vector<128x128xf32>
    %192 = arith.mulf %187, %191 : vector<128x128xf32>
    %193 = vector.shape_cast %159 : vector<128xf32> to vector<1x128xf32>
    %194 = vector.broadcast %193 : vector<1x128xf32> to vector<128x128xf32>
    %195 = arith.mulf %192, %194 : vector<128x128xf32>
    %196 = vector.shape_cast %161 : vector<128xf32> to vector<1x128xf32>
    %197 = vector.broadcast %196 : vector<1x128xf32> to vector<128x128xf32>
    %198 = arith.addf %195, %197 : vector<128x128xf32>
    %199 = arith.addf %155, %198 : vector<128x128xf32>
    %200 = vector.extract_strided_slice %6 {offsets = [12, 0], sizes = [1, 128], strides = [1, 1]} : vector<15x128xf32> to vector<1x128xf32>
    %201 = vector.shape_cast %200 : vector<1x128xf32> to vector<128xf32>
    %202 = vector.extract_strided_slice %6 {offsets = [13, 0], sizes = [1, 128], strides = [1, 1]} : vector<15x128xf32> to vector<1x128xf32>
    %203 = vector.shape_cast %202 : vector<1x128xf32> to vector<128xf32>
    %204 = vector.extract_strided_slice %6 {offsets = [14, 0], sizes = [1, 128], strides = [1, 1]} : vector<15x128xf32> to vector<1x128xf32>
    %205 = vector.shape_cast %204 : vector<1x128xf32> to vector<128xf32>
    %206 = arith.truncf %198 : vector<128x128xf32> to vector<128x128xbf16>
    %cst_67 = arith.constant dense<0.000000e+00> : vector<128x128xf32>
    %207 = tpu.matmul %206, %4, %cst_67 {dimension_numbers = #tpu.dot_dimension_numbers<[1], [0], [0], [1], [0, 0, 1, 1], [], []>} : vector<128x128xbf16>, vector<128x128xbf16>, vector<128x128xf32> -> vector<128x128xf32>
    %208 = vector.shape_cast %201 : vector<128xf32> to vector<1x128xf32>
    %209 = vector.broadcast %208 : vector<1x128xf32> to vector<128x128xf32>
    %210 = arith.addf %207, %209 : vector<128x128xf32>
    %211 = arith.addf %210, %199 : vector<128x128xf32>
    %cst_68 = arith.constant 0.000000e+00 : f32
    %212 = vector.broadcast %cst_68 : f32 to vector<128x128xf32>
    %213 = arith.subf %212, %211 : vector<128x128xf32>
    %214 = math.exp %213 : vector<128x128xf32>
    %cst_69 = arith.constant 1.000000e+00 : f32
    %215 = vector.broadcast %cst_69 : f32 to vector<128x128xf32>
    %216 = arith.addf %215, %214 : vector<128x128xf32>
    %217 = tpu.reciprocal %216 {approx = true} : vector<128x128xf32> -> vector<128x128xf32>
    %218 = arith.mulf %211, %217 : vector<128x128xf32>
    %cst_70 = arith.constant dense<0.000000e+00> : vector<128xf32>
    %219 = vector.multi_reduction <add>, %218, %cst_70 [1] : vector<128x128xf32> to vector<128xf32>
    %220 = vector.shape_cast %219 : vector<128xf32> to vector<128x1xf32>
    %cst_71 = arith.constant 1.280000e+02 : f32
    %221 = vector.broadcast %cst_71 : f32 to vector<128x1xf32>
    %222 = arith.divf %220, %221 : vector<128x1xf32>
    %223 = vector.broadcast %222 : vector<128x1xf32> to vector<128x128xf32>
    %224 = arith.subf %218, %223 : vector<128x128xf32>
    %225 = arith.mulf %224, %224 : vector<128x128xf32>
    %cst_72 = arith.constant dense<0.000000e+00> : vector<128xf32>
    %226 = vector.multi_reduction <add>, %225, %cst_72 [1] : vector<128x128xf32> to vector<128xf32>
    %227 = vector.shape_cast %226 : vector<128xf32> to vector<128x1xf32>
    %cst_73 = arith.constant 1.280000e+02 : f32
    %228 = vector.broadcast %cst_73 : f32 to vector<128x1xf32>
    %229 = arith.divf %227, %228 : vector<128x1xf32>
    %230 = vector.broadcast %222 : vector<128x1xf32> to vector<128x128xf32>
    %231 = arith.subf %218, %230 : vector<128x128xf32>
    %cst_74 = arith.constant 1.000000e-01 : f32
    %232 = vector.broadcast %cst_74 : f32 to vector<128x1xf32>
    %233 = arith.addf %229, %232 : vector<128x1xf32>
    %234 = math.rsqrt %233 : vector<128x1xf32>
    %235 = vector.broadcast %234 : vector<128x1xf32> to vector<128x128xf32>
    %236 = arith.mulf %231, %235 : vector<128x128xf32>
    %237 = vector.shape_cast %203 : vector<128xf32> to vector<1x128xf32>
    %238 = vector.broadcast %237 : vector<1x128xf32> to vector<128x128xf32>
    %239 = arith.mulf %236, %238 : vector<128x128xf32>
    %240 = vector.shape_cast %205 : vector<128xf32> to vector<1x128xf32>
    %241 = vector.broadcast %240 : vector<1x128xf32> to vector<128x128xf32>
    %242 = arith.addf %239, %241 : vector<128x128xf32>
    %243 = arith.truncf %242 : vector<128x128xf32> to vector<128x128xbf16>
    %cst_75 = arith.constant dense<0.000000e+00> : vector<128x256xf32>
    %244 = tpu.matmul %243, %5, %cst_75 {dimension_numbers = #tpu.dot_dimension_numbers<[1], [0], [0], [1], [0, 0, 1, 1], [], []>} : vector<128x128xbf16>, vector<128x256xbf16>, vector<128x256xf32> -> vector<128x256xf32>
    %245 = vector.broadcast %7 : vector<1x256xf32> to vector<128x256xf32>
    %246 = arith.addf %244, %245 : vector<128x256xf32>
    %247 = vector.extract_strided_slice %246 {offsets = [0, 0], sizes = [128, 128], strides = [1, 1]} : vector<128x256xf32> to vector<128x128xf32>
    %248 = vector.extract_strided_slice %246 {offsets = [0, 128], sizes = [128, 128], strides = [1, 1]} : vector<128x256xf32> to vector<128x128xf32>
    %249 = vector.extract_strided_slice %26 {offsets = [0, 128], sizes = [128, 128], strides = [1, 1]} : vector<128x256xf32> to vector<128x128xf32>
    %250 = vector.extract_strided_slice %13 {offsets = [0, 0], sizes = [1, 128], strides = [1, 1]} : vector<15x128xf32> to vector<1x128xf32>
    %251 = vector.shape_cast %250 : vector<1x128xf32> to vector<128xf32>
    %252 = vector.extract_strided_slice %13 {offsets = [1, 0], sizes = [1, 128], strides = [1, 1]} : vector<15x128xf32> to vector<1x128xf32>
    %253 = vector.shape_cast %252 : vector<1x128xf32> to vector<128xf32>
    %254 = vector.extract_strided_slice %13 {offsets = [2, 0], sizes = [1, 128], strides = [1, 1]} : vector<15x128xf32> to vector<1x128xf32>
    %255 = vector.shape_cast %254 : vector<1x128xf32> to vector<128xf32>
    %256 = vector.shape_cast %251 : vector<128xf32> to vector<1x128xf32>
    %257 = vector.broadcast %256 : vector<1x128xf32> to vector<128x128xf32>
    %258 = arith.addf %249, %257 : vector<128x128xf32>
    %cst_76 = arith.constant 0.000000e+00 : f32
    %259 = vector.broadcast %cst_76 : f32 to vector<128x128xf32>
    %260 = arith.subf %259, %258 : vector<128x128xf32>
    %261 = math.exp %260 : vector<128x128xf32>
    %cst_77 = arith.constant 1.000000e+00 : f32
    %262 = vector.broadcast %cst_77 : f32 to vector<128x128xf32>
    %263 = arith.addf %262, %261 : vector<128x128xf32>
    %264 = tpu.reciprocal %263 {approx = true} : vector<128x128xf32> -> vector<128x128xf32>
    %265 = arith.mulf %258, %264 : vector<128x128xf32>
    %cst_78 = arith.constant dense<0.000000e+00> : vector<128xf32>
    %266 = vector.multi_reduction <add>, %265, %cst_78 [1] : vector<128x128xf32> to vector<128xf32>
    %267 = vector.shape_cast %266 : vector<128xf32> to vector<128x1xf32>
    %cst_79 = arith.constant 1.280000e+02 : f32
    %268 = vector.broadcast %cst_79 : f32 to vector<128x1xf32>
    %269 = arith.divf %267, %268 : vector<128x1xf32>
    %270 = vector.broadcast %269 : vector<128x1xf32> to vector<128x128xf32>
    %271 = arith.subf %265, %270 : vector<128x128xf32>
    %272 = arith.mulf %271, %271 : vector<128x128xf32>
    %cst_80 = arith.constant dense<0.000000e+00> : vector<128xf32>
    %273 = vector.multi_reduction <add>, %272, %cst_80 [1] : vector<128x128xf32> to vector<128xf32>
    %274 = vector.shape_cast %273 : vector<128xf32> to vector<128x1xf32>
    %cst_81 = arith.constant 1.280000e+02 : f32
    %275 = vector.broadcast %cst_81 : f32 to vector<128x1xf32>
    %276 = arith.divf %274, %275 : vector<128x1xf32>
    %277 = vector.broadcast %269 : vector<128x1xf32> to vector<128x128xf32>
    %278 = arith.subf %265, %277 : vector<128x128xf32>
    %cst_82 = arith.constant 1.000000e-01 : f32
    %279 = vector.broadcast %cst_82 : f32 to vector<128x1xf32>
    %280 = arith.addf %276, %279 : vector<128x1xf32>
    %281 = math.rsqrt %280 : vector<128x1xf32>
    %282 = vector.broadcast %281 : vector<128x1xf32> to vector<128x128xf32>
    %283 = arith.mulf %278, %282 : vector<128x128xf32>
    %284 = vector.shape_cast %253 : vector<128xf32> to vector<1x128xf32>
    %285 = vector.broadcast %284 : vector<1x128xf32> to vector<128x128xf32>
    %286 = arith.mulf %283, %285 : vector<128x128xf32>
    %287 = vector.shape_cast %255 : vector<128xf32> to vector<1x128xf32>
    %288 = vector.broadcast %287 : vector<1x128xf32> to vector<128x128xf32>
    %289 = arith.addf %286, %288 : vector<128x128xf32>
    %290 = vector.extract_strided_slice %13 {offsets = [3, 0], sizes = [1, 128], strides = [1, 1]} : vector<15x128xf32> to vector<1x128xf32>
    %291 = vector.shape_cast %290 : vector<1x128xf32> to vector<128xf32>
    %292 = vector.extract_strided_slice %13 {offsets = [4, 0], sizes = [1, 128], strides = [1, 1]} : vector<15x128xf32> to vector<1x128xf32>
    %293 = vector.shape_cast %292 : vector<1x128xf32> to vector<128xf32>
    %294 = vector.extract_strided_slice %13 {offsets = [5, 0], sizes = [1, 128], strides = [1, 1]} : vector<15x128xf32> to vector<1x128xf32>
    %295 = vector.shape_cast %294 : vector<1x128xf32> to vector<128xf32>
    %296 = arith.truncf %289 : vector<128x128xf32> to vector<128x128xbf16>
    %cst_83 = arith.constant dense<0.000000e+00> : vector<128x128xf32>
    %297 = tpu.matmul %296, %8, %cst_83 {dimension_numbers = #tpu.dot_dimension_numbers<[1], [0], [0], [1], [0, 0, 1, 1], [], []>} : vector<128x128xbf16>, vector<128x128xbf16>, vector<128x128xf32> -> vector<128x128xf32>
    %298 = vector.shape_cast %291 : vector<128xf32> to vector<1x128xf32>
    %299 = vector.broadcast %298 : vector<1x128xf32> to vector<128x128xf32>
    %300 = arith.addf %297, %299 : vector<128x128xf32>
    %301 = arith.addf %300, %289 : vector<128x128xf32>
    %cst_84 = arith.constant 0.000000e+00 : f32
    %302 = vector.broadcast %cst_84 : f32 to vector<128x128xf32>
    %303 = arith.subf %302, %301 : vector<128x128xf32>
    %304 = math.exp %303 : vector<128x128xf32>
    %cst_85 = arith.constant 1.000000e+00 : f32
    %305 = vector.broadcast %cst_85 : f32 to vector<128x128xf32>
    %306 = arith.addf %305, %304 : vector<128x128xf32>
    %307 = tpu.reciprocal %306 {approx = true} : vector<128x128xf32> -> vector<128x128xf32>
    %308 = arith.mulf %301, %307 : vector<128x128xf32>
    %cst_86 = arith.constant dense<0.000000e+00> : vector<128xf32>
    %309 = vector.multi_reduction <add>, %308, %cst_86 [1] : vector<128x128xf32> to vector<128xf32>
    %310 = vector.shape_cast %309 : vector<128xf32> to vector<128x1xf32>
    %cst_87 = arith.constant 1.280000e+02 : f32
    %311 = vector.broadcast %cst_87 : f32 to vector<128x1xf32>
    %312 = arith.divf %310, %311 : vector<128x1xf32>
    %313 = vector.broadcast %312 : vector<128x1xf32> to vector<128x128xf32>
    %314 = arith.subf %308, %313 : vector<128x128xf32>
    %315 = arith.mulf %314, %314 : vector<128x128xf32>
    %cst_88 = arith.constant dense<0.000000e+00> : vector<128xf32>
    %316 = vector.multi_reduction <add>, %315, %cst_88 [1] : vector<128x128xf32> to vector<128xf32>
    %317 = vector.shape_cast %316 : vector<128xf32> to vector<128x1xf32>
    %cst_89 = arith.constant 1.280000e+02 : f32
    %318 = vector.broadcast %cst_89 : f32 to vector<128x1xf32>
    %319 = arith.divf %317, %318 : vector<128x1xf32>
    %320 = vector.broadcast %312 : vector<128x1xf32> to vector<128x128xf32>
    %321 = arith.subf %308, %320 : vector<128x128xf32>
    %cst_90 = arith.constant 1.000000e-01 : f32
    %322 = vector.broadcast %cst_90 : f32 to vector<128x1xf32>
    %323 = arith.addf %319, %322 : vector<128x1xf32>
    %324 = math.rsqrt %323 : vector<128x1xf32>
    %325 = vector.broadcast %324 : vector<128x1xf32> to vector<128x128xf32>
    %326 = arith.mulf %321, %325 : vector<128x128xf32>
    %327 = vector.shape_cast %293 : vector<128xf32> to vector<1x128xf32>
    %328 = vector.broadcast %327 : vector<1x128xf32> to vector<128x128xf32>
    %329 = arith.mulf %326, %328 : vector<128x128xf32>
    %330 = vector.shape_cast %295 : vector<128xf32> to vector<1x128xf32>
    %331 = vector.broadcast %330 : vector<1x128xf32> to vector<128x128xf32>
    %332 = arith.addf %329, %331 : vector<128x128xf32>
    %333 = arith.addf %289, %332 : vector<128x128xf32>
    %334 = vector.extract_strided_slice %13 {offsets = [6, 0], sizes = [1, 128], strides = [1, 1]} : vector<15x128xf32> to vector<1x128xf32>
    %335 = vector.shape_cast %334 : vector<1x128xf32> to vector<128xf32>
    %336 = vector.extract_strided_slice %13 {offsets = [7, 0], sizes = [1, 128], strides = [1, 1]} : vector<15x128xf32> to vector<1x128xf32>
    %337 = vector.shape_cast %336 : vector<1x128xf32> to vector<128xf32>
    %338 = vector.extract_strided_slice %13 {offsets = [8, 0], sizes = [1, 128], strides = [1, 1]} : vector<15x128xf32> to vector<1x128xf32>
    %339 = vector.shape_cast %338 : vector<1x128xf32> to vector<128xf32>
    %340 = arith.truncf %332 : vector<128x128xf32> to vector<128x128xbf16>
    %cst_91 = arith.constant dense<0.000000e+00> : vector<128x128xf32>
    %341 = tpu.matmul %340, %9, %cst_91 {dimension_numbers = #tpu.dot_dimension_numbers<[1], [0], [0], [1], [0, 0, 1, 1], [], []>} : vector<128x128xbf16>, vector<128x128xbf16>, vector<128x128xf32> -> vector<128x128xf32>
    %342 = vector.shape_cast %335 : vector<128xf32> to vector<1x128xf32>
    %343 = vector.broadcast %342 : vector<1x128xf32> to vector<128x128xf32>
    %344 = arith.addf %341, %343 : vector<128x128xf32>
    %345 = arith.addf %344, %333 : vector<128x128xf32>
    %cst_92 = arith.constant 0.000000e+00 : f32
    %346 = vector.broadcast %cst_92 : f32 to vector<128x128xf32>
    %347 = arith.subf %346, %345 : vector<128x128xf32>
    %348 = math.exp %347 : vector<128x128xf32>
    %cst_93 = arith.constant 1.000000e+00 : f32
    %349 = vector.broadcast %cst_93 : f32 to vector<128x128xf32>
    %350 = arith.addf %349, %348 : vector<128x128xf32>
    %351 = tpu.reciprocal %350 {approx = true} : vector<128x128xf32> -> vector<128x128xf32>
    %352 = arith.mulf %345, %351 : vector<128x128xf32>
    %cst_94 = arith.constant dense<0.000000e+00> : vector<128xf32>
    %353 = vector.multi_reduction <add>, %352, %cst_94 [1] : vector<128x128xf32> to vector<128xf32>
    %354 = vector.shape_cast %353 : vector<128xf32> to vector<128x1xf32>
    %cst_95 = arith.constant 1.280000e+02 : f32
    %355 = vector.broadcast %cst_95 : f32 to vector<128x1xf32>
    %356 = arith.divf %354, %355 : vector<128x1xf32>
    %357 = vector.broadcast %356 : vector<128x1xf32> to vector<128x128xf32>
    %358 = arith.subf %352, %357 : vector<128x128xf32>
    %359 = arith.mulf %358, %358 : vector<128x128xf32>
    %cst_96 = arith.constant dense<0.000000e+00> : vector<128xf32>
    %360 = vector.multi_reduction <add>, %359, %cst_96 [1] : vector<128x128xf32> to vector<128xf32>
    %361 = vector.shape_cast %360 : vector<128xf32> to vector<128x1xf32>
    %cst_97 = arith.constant 1.280000e+02 : f32
    %362 = vector.broadcast %cst_97 : f32 to vector<128x1xf32>
    %363 = arith.divf %361, %362 : vector<128x1xf32>
    %364 = vector.broadcast %356 : vector<128x1xf32> to vector<128x128xf32>
    %365 = arith.subf %352, %364 : vector<128x128xf32>
    %cst_98 = arith.constant 1.000000e-01 : f32
    %366 = vector.broadcast %cst_98 : f32 to vector<128x1xf32>
    %367 = arith.addf %363, %366 : vector<128x1xf32>
    %368 = math.rsqrt %367 : vector<128x1xf32>
    %369 = vector.broadcast %368 : vector<128x1xf32> to vector<128x128xf32>
    %370 = arith.mulf %365, %369 : vector<128x128xf32>
    %371 = vector.shape_cast %337 : vector<128xf32> to vector<1x128xf32>
    %372 = vector.broadcast %371 : vector<1x128xf32> to vector<128x128xf32>
    %373 = arith.mulf %370, %372 : vector<128x128xf32>
    %374 = vector.shape_cast %339 : vector<128xf32> to vector<1x128xf32>
    %375 = vector.broadcast %374 : vector<1x128xf32> to vector<128x128xf32>
    %376 = arith.addf %373, %375 : vector<128x128xf32>
    %377 = arith.addf %333, %376 : vector<128x128xf32>
    %378 = vector.extract_strided_slice %13 {offsets = [9, 0], sizes = [1, 128], strides = [1, 1]} : vector<15x128xf32> to vector<1x128xf32>
    %379 = vector.shape_cast %378 : vector<1x128xf32> to vector<128xf32>
    %380 = vector.extract_strided_slice %13 {offsets = [10, 0], sizes = [1, 128], strides = [1, 1]} : vector<15x128xf32> to vector<1x128xf32>
    %381 = vector.shape_cast %380 : vector<1x128xf32> to vector<128xf32>
    %382 = vector.extract_strided_slice %13 {offsets = [11, 0], sizes = [1, 128], strides = [1, 1]} : vector<15x128xf32> to vector<1x128xf32>
    %383 = vector.shape_cast %382 : vector<1x128xf32> to vector<128xf32>
    %384 = arith.truncf %376 : vector<128x128xf32> to vector<128x128xbf16>
    %cst_99 = arith.constant dense<0.000000e+00> : vector<128x128xf32>
    %385 = tpu.matmul %384, %10, %cst_99 {dimension_numbers = #tpu.dot_dimension_numbers<[1], [0], [0], [1], [0, 0, 1, 1], [], []>} : vector<128x128xbf16>, vector<128x128xbf16>, vector<128x128xf32> -> vector<128x128xf32>
    %386 = vector.shape_cast %379 : vector<128xf32> to vector<1x128xf32>
    %387 = vector.broadcast %386 : vector<1x128xf32> to vector<128x128xf32>
    %388 = arith.addf %385, %387 : vector<128x128xf32>
    %389 = arith.addf %388, %377 : vector<128x128xf32>
    %cst_100 = arith.constant 0.000000e+00 : f32
    %390 = vector.broadcast %cst_100 : f32 to vector<128x128xf32>
    %391 = arith.subf %390, %389 : vector<128x128xf32>
    %392 = math.exp %391 : vector<128x128xf32>
    %cst_101 = arith.constant 1.000000e+00 : f32
    %393 = vector.broadcast %cst_101 : f32 to vector<128x128xf32>
    %394 = arith.addf %393, %392 : vector<128x128xf32>
    %395 = tpu.reciprocal %394 {approx = true} : vector<128x128xf32> -> vector<128x128xf32>
    %396 = arith.mulf %389, %395 : vector<128x128xf32>
    %cst_102 = arith.constant dense<0.000000e+00> : vector<128xf32>
    %397 = vector.multi_reduction <add>, %396, %cst_102 [1] : vector<128x128xf32> to vector<128xf32>
    %398 = vector.shape_cast %397 : vector<128xf32> to vector<128x1xf32>
    %cst_103 = arith.constant 1.280000e+02 : f32
    %399 = vector.broadcast %cst_103 : f32 to vector<128x1xf32>
    %400 = arith.divf %398, %399 : vector<128x1xf32>
    %401 = vector.broadcast %400 : vector<128x1xf32> to vector<128x128xf32>
    %402 = arith.subf %396, %401 : vector<128x128xf32>
    %403 = arith.mulf %402, %402 : vector<128x128xf32>
    %cst_104 = arith.constant dense<0.000000e+00> : vector<128xf32>
    %404 = vector.multi_reduction <add>, %403, %cst_104 [1] : vector<128x128xf32> to vector<128xf32>
    %405 = vector.shape_cast %404 : vector<128xf32> to vector<128x1xf32>
    %cst_105 = arith.constant 1.280000e+02 : f32
    %406 = vector.broadcast %cst_105 : f32 to vector<128x1xf32>
    %407 = arith.divf %405, %406 : vector<128x1xf32>
    %408 = vector.broadcast %400 : vector<128x1xf32> to vector<128x128xf32>
    %409 = arith.subf %396, %408 : vector<128x128xf32>
    %cst_106 = arith.constant 1.000000e-01 : f32
    %410 = vector.broadcast %cst_106 : f32 to vector<128x1xf32>
    %411 = arith.addf %407, %410 : vector<128x1xf32>
    %412 = math.rsqrt %411 : vector<128x1xf32>
    %413 = vector.broadcast %412 : vector<128x1xf32> to vector<128x128xf32>
    %414 = arith.mulf %409, %413 : vector<128x128xf32>
    %415 = vector.shape_cast %381 : vector<128xf32> to vector<1x128xf32>
    %416 = vector.broadcast %415 : vector<1x128xf32> to vector<128x128xf32>
    %417 = arith.mulf %414, %416 : vector<128x128xf32>
    %418 = vector.shape_cast %383 : vector<128xf32> to vector<1x128xf32>
    %419 = vector.broadcast %418 : vector<1x128xf32> to vector<128x128xf32>
    %420 = arith.addf %417, %419 : vector<128x128xf32>
    %421 = arith.addf %377, %420 : vector<128x128xf32>
    %422 = vector.extract_strided_slice %13 {offsets = [12, 0], sizes = [1, 128], strides = [1, 1]} : vector<15x128xf32> to vector<1x128xf32>
    %423 = vector.shape_cast %422 : vector<1x128xf32> to vector<128xf32>
    %424 = vector.extract_strided_slice %13 {offsets = [13, 0], sizes = [1, 128], strides = [1, 1]} : vector<15x128xf32> to vector<1x128xf32>
    %425 = vector.shape_cast %424 : vector<1x128xf32> to vector<128xf32>
    %426 = vector.extract_strided_slice %13 {offsets = [14, 0], sizes = [1, 128], strides = [1, 1]} : vector<15x128xf32> to vector<1x128xf32>
    %427 = vector.shape_cast %426 : vector<1x128xf32> to vector<128xf32>
    %428 = arith.truncf %420 : vector<128x128xf32> to vector<128x128xbf16>
    %cst_107 = arith.constant dense<0.000000e+00> : vector<128x128xf32>
    %429 = tpu.matmul %428, %11, %cst_107 {dimension_numbers = #tpu.dot_dimension_numbers<[1], [0], [0], [1], [0, 0, 1, 1], [], []>} : vector<128x128xbf16>, vector<128x128xbf16>, vector<128x128xf32> -> vector<128x128xf32>
    %430 = vector.shape_cast %423 : vector<128xf32> to vector<1x128xf32>
    %431 = vector.broadcast %430 : vector<1x128xf32> to vector<128x128xf32>
    %432 = arith.addf %429, %431 : vector<128x128xf32>
    %433 = arith.addf %432, %421 : vector<128x128xf32>
    %cst_108 = arith.constant 0.000000e+00 : f32
    %434 = vector.broadcast %cst_108 : f32 to vector<128x128xf32>
    %435 = arith.subf %434, %433 : vector<128x128xf32>
    %436 = math.exp %435 : vector<128x128xf32>
    %cst_109 = arith.constant 1.000000e+00 : f32
    %437 = vector.broadcast %cst_109 : f32 to vector<128x128xf32>
    %438 = arith.addf %437, %436 : vector<128x128xf32>
    %439 = tpu.reciprocal %438 {approx = true} : vector<128x128xf32> -> vector<128x128xf32>
    %440 = arith.mulf %433, %439 : vector<128x128xf32>
    %cst_110 = arith.constant dense<0.000000e+00> : vector<128xf32>
    %441 = vector.multi_reduction <add>, %440, %cst_110 [1] : vector<128x128xf32> to vector<128xf32>
    %442 = vector.shape_cast %441 : vector<128xf32> to vector<128x1xf32>
    %cst_111 = arith.constant 1.280000e+02 : f32
    %443 = vector.broadcast %cst_111 : f32 to vector<128x1xf32>
    %444 = arith.divf %442, %443 : vector<128x1xf32>
    %445 = vector.broadcast %444 : vector<128x1xf32> to vector<128x128xf32>
    %446 = arith.subf %440, %445 : vector<128x128xf32>
    %447 = arith.mulf %446, %446 : vector<128x128xf32>
    %cst_112 = arith.constant dense<0.000000e+00> : vector<128xf32>
    %448 = vector.multi_reduction <add>, %447, %cst_112 [1] : vector<128x128xf32> to vector<128xf32>
    %449 = vector.shape_cast %448 : vector<128xf32> to vector<128x1xf32>
    %cst_113 = arith.constant 1.280000e+02 : f32
    %450 = vector.broadcast %cst_113 : f32 to vector<128x1xf32>
    %451 = arith.divf %449, %450 : vector<128x1xf32>
    %452 = vector.broadcast %444 : vector<128x1xf32> to vector<128x128xf32>
    %453 = arith.subf %440, %452 : vector<128x128xf32>
    %cst_114 = arith.constant 1.000000e-01 : f32
    %454 = vector.broadcast %cst_114 : f32 to vector<128x1xf32>
    %455 = arith.addf %451, %454 : vector<128x1xf32>
    %456 = math.rsqrt %455 : vector<128x1xf32>
    %457 = vector.broadcast %456 : vector<128x1xf32> to vector<128x128xf32>
    %458 = arith.mulf %453, %457 : vector<128x128xf32>
    %459 = vector.shape_cast %425 : vector<128xf32> to vector<1x128xf32>
    %460 = vector.broadcast %459 : vector<1x128xf32> to vector<128x128xf32>
    %461 = arith.mulf %458, %460 : vector<128x128xf32>
    %462 = vector.shape_cast %427 : vector<128xf32> to vector<1x128xf32>
    %463 = vector.broadcast %462 : vector<1x128xf32> to vector<128x128xf32>
    %464 = arith.addf %461, %463 : vector<128x128xf32>
    %465 = arith.truncf %464 : vector<128x128xf32> to vector<128x128xbf16>
    %cst_115 = arith.constant dense<0.000000e+00> : vector<128x256xf32>
    %466 = tpu.matmul %465, %12, %cst_115 {dimension_numbers = #tpu.dot_dimension_numbers<[1], [0], [0], [1], [0, 0, 1, 1], [], []>} : vector<128x128xbf16>, vector<128x256xbf16>, vector<128x256xf32> -> vector<128x256xf32>
    %467 = vector.broadcast %14 : vector<1x256xf32> to vector<128x256xf32>
    %468 = arith.addf %466, %467 : vector<128x256xf32>
    %469 = vector.extract_strided_slice %468 {offsets = [0, 0], sizes = [128, 128], strides = [1, 1]} : vector<128x256xf32> to vector<128x128xf32>
    %470 = vector.extract_strided_slice %468 {offsets = [0, 128], sizes = [128, 128], strides = [1, 1]} : vector<128x256xf32> to vector<128x128xf32>
    %471 = arith.truncf %247 : vector<128x128xf32> to vector<128x128xbf16>
    %cst_116 = arith.constant dense<0.000000e+00> : vector<128x256xf32>
    %472 = tpu.matmul %471, %15, %cst_116 {dimension_numbers = #tpu.dot_dimension_numbers<[1], [0], [0], [1], [0, 0, 1, 1], [], []>} : vector<128x128xbf16>, vector<128x256xbf16>, vector<128x256xf32> -> vector<128x256xf32>
    %473 = vector.broadcast %16 : vector<1x256xf32> to vector<128x256xf32>
    %474 = arith.addf %472, %473 : vector<128x256xf32>
    %cst_117 = arith.constant dense<0xFF800000> : vector<128xf32>
    %475 = vector.multi_reduction <maximumf>, %474, %cst_117 [1] : vector<128x256xf32> to vector<128xf32>
    %476 = vector.shape_cast %475 : vector<128xf32> to vector<128x1xf32>
    %477 = vector.broadcast %476 : vector<128x1xf32> to vector<128x256xf32>
    %478 = arith.subf %474, %477 : vector<128x256xf32>
    %479 = math.exp %478 : vector<128x256xf32>
    %cst_118 = arith.constant dense<0.000000e+00> : vector<128xf32>
    %480 = vector.multi_reduction <add>, %479, %cst_118 [1] : vector<128x256xf32> to vector<128xf32>
    %481 = vector.shape_cast %480 : vector<128xf32> to vector<128x1xf32>
    %482 = math.log %481 : vector<128x1xf32>
    %483 = arith.addf %476, %482 : vector<128x1xf32>
    %484 = vector.broadcast %483 : vector<128x1xf32> to vector<128x256xf32>
    %485 = arith.subf %474, %484 : vector<128x256xf32>
    %486 = arith.mulf %485, %18 : vector<128x256xf32>
    %cst_119 = arith.constant dense<0.000000e+00> : vector<128xf32>
    %487 = vector.multi_reduction <add>, %486, %cst_119 [1] : vector<128x256xf32> to vector<128xf32>
    %488 = vector.shape_cast %487 : vector<128xf32> to vector<128x1xf32>
    %cst_120 = arith.constant 0.000000e+00 : f32
    %489 = vector.broadcast %cst_120 : f32 to vector<128x128xf32>
    %490 = arith.subf %247, %489 : vector<128x128xf32>
    %491 = arith.mulf %490, %490 : vector<128x128xf32>
    %cst_121 = arith.constant -0.000000e+00 : f32
    %492 = math.exp %cst_121 : f32
    %493 = vector.broadcast %492 : f32 to vector<128x128xf32>
    %494 = arith.mulf %491, %493 : vector<128x128xf32>
    %cst_122 = arith.constant 1.83787704 : f32
    %495 = vector.broadcast %cst_122 : f32 to vector<128x128xf32>
    %496 = arith.addf %495, %494 : vector<128x128xf32>
    %cst_123 = arith.constant -5.000000e-01 : f32
    %497 = vector.broadcast %cst_123 : f32 to vector<128x128xf32>
    %498 = arith.mulf %497, %496 : vector<128x128xf32>
    %cst_124 = arith.constant -1.897120e+00 : f32
    %499 = vector.broadcast %cst_124 : f32 to vector<128x128xf32>
    %500 = arith.addf %498, %499 : vector<128x128xf32>
    %cst_125 = arith.constant 1.83787704 : f32
    %501 = vector.broadcast %cst_125 : f32 to vector<128x128xf32>
    %502 = arith.addf %470, %501 : vector<128x128xf32>
    %503 = arith.subf %247, %469 : vector<128x128xf32>
    %504 = arith.mulf %503, %503 : vector<128x128xf32>
    %cst_126 = arith.constant 0.000000e+00 : f32
    %505 = vector.broadcast %cst_126 : f32 to vector<128x128xf32>
    %506 = arith.subf %505, %470 : vector<128x128xf32>
    %507 = math.exp %506 : vector<128x128xf32>
    %508 = arith.mulf %504, %507 : vector<128x128xf32>
    %509 = arith.addf %502, %508 : vector<128x128xf32>
    %cst_127 = arith.constant -5.000000e-01 : f32
    %510 = vector.broadcast %cst_127 : f32 to vector<128x128xf32>
    %511 = arith.mulf %510, %509 : vector<128x128xf32>
    %cst_128 = arith.constant -0.287682086 : f32
    %512 = vector.broadcast %cst_128 : f32 to vector<128x128xf32>
    %513 = arith.addf %511, %512 : vector<128x128xf32>
    %cst_129 = arith.constant 0.000000e+00 : f32
    %514 = vector.broadcast %cst_129 : f32 to vector<128x128xf32>
    %515 = arith.subf %247, %514 : vector<128x128xf32>
    %516 = arith.mulf %515, %515 : vector<128x128xf32>
    %cst_130 = arith.constant -1.000000e+01 : f32
    %517 = math.exp %cst_130 : f32
    %518 = vector.broadcast %517 : f32 to vector<128x128xf32>
    %519 = arith.mulf %516, %518 : vector<128x128xf32>
    %cst_131 = arith.constant 11.8378773 : f32
    %520 = vector.broadcast %cst_131 : f32 to vector<128x128xf32>
    %521 = arith.addf %520, %519 : vector<128x128xf32>
    %cst_132 = arith.constant -5.000000e-01 : f32
    %522 = vector.broadcast %cst_132 : f32 to vector<128x128xf32>
    %523 = arith.mulf %522, %521 : vector<128x128xf32>
    %cst_133 = arith.constant -2.30258512 : f32
    %524 = vector.broadcast %cst_133 : f32 to vector<128x128xf32>
    %525 = arith.addf %523, %524 : vector<128x128xf32>
    %526 = arith.maximumf %500, %513 : vector<128x128xf32>
    %527 = arith.maximumf %526, %525 : vector<128x128xf32>
    %528 = arith.subf %500, %527 : vector<128x128xf32>
    %529 = math.exp %528 : vector<128x128xf32>
    %530 = arith.subf %513, %527 : vector<128x128xf32>
    %531 = math.exp %530 : vector<128x128xf32>
    %532 = arith.addf %529, %531 : vector<128x128xf32>
    %533 = arith.subf %525, %527 : vector<128x128xf32>
    %534 = math.exp %533 : vector<128x128xf32>
    %535 = arith.addf %532, %534 : vector<128x128xf32>
    %536 = math.log %535 : vector<128x128xf32>
    %537 = arith.addf %527, %536 : vector<128x128xf32>
    %cst_134 = arith.constant dense<0.000000e+00> : vector<128xf32>
    %538 = vector.multi_reduction <add>, %18, %cst_134 [1] : vector<128x256xf32> to vector<128xf32>
    %539 = vector.shape_cast %538 : vector<128xf32> to vector<128x1xf32>
    %cst_135 = arith.constant 1.000000e+00 : f32
    %540 = vector.broadcast %cst_135 : f32 to vector<128x1xf32>
    %541 = arith.mulf %540, %539 : vector<128x1xf32>
    %cst_136 = arith.constant 1.83787704 : f32
    %542 = vector.broadcast %cst_136 : f32 to vector<128x128xf32>
    %543 = arith.addf %248, %542 : vector<128x128xf32>
    %544 = arith.subf %247, %247 : vector<128x128xf32>
    %545 = arith.mulf %544, %544 : vector<128x128xf32>
    %cst_137 = arith.constant 0.000000e+00 : f32
    %546 = vector.broadcast %cst_137 : f32 to vector<128x128xf32>
    %547 = arith.subf %546, %248 : vector<128x128xf32>
    %548 = math.exp %547 : vector<128x128xf32>
    %549 = arith.mulf %545, %548 : vector<128x128xf32>
    %550 = arith.addf %543, %549 : vector<128x128xf32>
    %cst_138 = arith.constant -5.000000e-01 : f32
    %551 = vector.broadcast %cst_138 : f32 to vector<128x128xf32>
    %552 = arith.mulf %551, %550 : vector<128x128xf32>
    %553 = arith.subf %552, %537 : vector<128x128xf32>
    %cst_139 = arith.constant dense<0.000000e+00> : vector<128xf32>
    %554 = vector.multi_reduction <add>, %553, %cst_139 [1] : vector<128x128xf32> to vector<128xf32>
    %555 = vector.shape_cast %554 : vector<128xf32> to vector<128x1xf32>
    %556 = arith.mulf %555, %541 : vector<128x1xf32>
    %c128_i32 = arith.constant 128 : i32
    %557 = arith.muli %arg0, %c128_i32 : i32
    %558 = tpu.iota {dimensions = array<i32: 0>} : vector<128x1xi32>
    %559 = vector.broadcast %557 : i32 to vector<128x1xi32>
    %560 = arith.addi %559, %558 : vector<128x1xi32>
    %c512_i32 = arith.constant 512 : i32
    %561 = vector.broadcast %c512_i32 : i32 to vector<128x1xi32>
    %562 = arith.cmpi slt, %560, %561 : vector<128x1xi32>
    %cst_140 = arith.constant 0.000000e+00 : f32
    %563 = vector.broadcast %cst_140 : f32 to vector<128x1xf32>
    %564 = arith.select %562, %488, %563 : vector<128x1xi1>, vector<128x1xf32>
    %565 = vector.shape_cast %564 : vector<128x1xf32> to vector<1x128x1xf32>
    %cst_141 = arith.constant dense<0.000000e+00> : vector<1xf32>
    %566 = vector.multi_reduction <add>, %565, %cst_141 [1, 2] : vector<1x128x1xf32> to vector<1xf32>
    %567 = vector.shape_cast %566 : vector<1xf32> to vector<1x1x1xf32>
    %568 = vector.extract %567[0, 0, 0] : f32 from vector<1x1x1xf32>
    %cst_142 = arith.constant 0.000000e+00 : f32
    %569 = vector.broadcast %cst_142 : f32 to vector<128x1xf32>
    %570 = arith.select %562, %556, %569 : vector<128x1xi1>, vector<128x1xf32>
    %571 = vector.shape_cast %570 : vector<128x1xf32> to vector<1x128x1xf32>
    %cst_143 = arith.constant dense<0.000000e+00> : vector<1xf32>
    %572 = vector.multi_reduction <add>, %571, %cst_143 [1, 2] : vector<1x128x1xf32> to vector<1xf32>
    %573 = vector.shape_cast %572 : vector<1xf32> to vector<1x1x1xf32>
    %574 = vector.extract %573[0, 0, 0] : f32 from vector<1x1x1xf32>
    %575 = tpu.iota {dimensions = array<i32: 2>} : vector<1x8x128xi32>
    %c0_i32 = arith.constant 0 : i32
    %576 = vector.broadcast %c0_i32 : i32 to vector<1x8x128xi32>
    %577 = arith.cmpi eq, %575, %576 : vector<1x8x128xi32>
    %c1_i32 = arith.constant 1 : i32
    %578 = vector.broadcast %c1_i32 : i32 to vector<1x8x128xi32>
    %579 = arith.cmpi eq, %575, %578 : vector<1x8x128xi32>
    %cst_144 = arith.constant 0.000000e+00 : f32
    %580 = vector.broadcast %574 : f32 to vector<1x8x128xf32>
    %581 = vector.broadcast %cst_144 : f32 to vector<1x8x128xf32>
    %582 = arith.select %579, %580, %581 : vector<1x8x128xi1>, vector<1x8x128xf32>
    %583 = vector.broadcast %568 : f32 to vector<1x8x128xf32>
    %584 = arith.select %577, %583, %582 : vector<1x8x128xi1>, vector<1x8x128xf32>
    %c0_145 = arith.constant 0 : index
    %c0_146 = arith.constant 0 : index
    %c0_147 = arith.constant 0 : index
    %585 = vector.load %arg19[%c0_145, %c0_146, %c0_147] : memref<1x8x128xf32, #tpu.memory_space<vmem>>, vector<1x8x128xf32>
    tpu.vector_store %arg19[%c0_145, %c0_146, %c0_147], %584 {strides = array<i32>} : memref<1x8x128xf32, #tpu.memory_space<vmem>>, vector<1x8x128xf32>,
    return
  }
  func.func @transform_0(%arg0: i32) -> (i32, i32) {
    %c0_i32 = arith.constant 0 : i32
    %c0_i32_0 = arith.constant 0 : i32
    return %arg0, %c0_i32 : i32, i32
  }
  func.func @transform_1(%arg0: i32) -> (i32, i32) {
    %c0_i32 = arith.constant 0 : i32
    %c0_i32_0 = arith.constant 0 : i32
    %c0_i32_1 = arith.constant 0 : i32
    return %c0_i32, %c0_i32_0 : i32, i32
  }
  func.func @transform_2(%arg0: i32) -> (i32, i32) {
    %c0_i32 = arith.constant 0 : i32
    %c0_i32_0 = arith.constant 0 : i32
    %c0_i32_1 = arith.constant 0 : i32
    return %c0_i32, %c0_i32_0 : i32, i32
  }
  func.func @transform_3(%arg0: i32) -> (i32, i32) {
    %c0_i32 = arith.constant 0 : i32
    %c0_i32_0 = arith.constant 0 : i32
    %c0_i32_1 = arith.constant 0 : i32
    return %c0_i32, %c0_i32_0 : i32, i32
  }
  func.func @transform_4(%arg0: i32) -> (i32, i32) {
    %c0_i32 = arith.constant 0 : i32
    %c0_i32_0 = arith.constant 0 : i32
    %c0_i32_1 = arith.constant 0 : i32
    return %c0_i32, %c0_i32_0 : i32, i32
  }
  func.func @transform_5(%arg0: i32) -> (i32, i32) {
    %c0_i32 = arith.constant 0 : i32
    %c0_i32_0 = arith.constant 0 : i32
    %c0_i32_1 = arith.constant 0 : i32
    return %c0_i32, %c0_i32_0 : i32, i32
  }
  func.func @transform_6(%arg0: i32) -> (i32, i32) {
    %c0_i32 = arith.constant 0 : i32
    %c0_i32_0 = arith.constant 0 : i32
    %c0_i32_1 = arith.constant 0 : i32
    return %c0_i32, %c0_i32_0 : i32, i32
  }
  func.func @transform_7(%arg0: i32) -> (i32, i32) {
    %c0_i32 = arith.constant 0 : i32
    %c0_i32_0 = arith.constant 0 : i32
    %c0_i32_1 = arith.constant 0 : i32
    return %c0_i32, %c0_i32_0 : i32, i32
  }
  func.func @transform_8(%arg0: i32) -> (i32, i32) {
    %c0_i32 = arith.constant 0 : i32
    %c0_i32_0 = arith.constant 0 : i32
    %c0_i32_1 = arith.constant 0 : i32
    return %c0_i32, %c0_i32_0 : i32, i32
  }
  func.func @transform_9(%arg0: i32) -> (i32, i32) {
    %c0_i32 = arith.constant 0 : i32
    %c0_i32_0 = arith.constant 0 : i32
    %c0_i32_1 = arith.constant 0 : i32
    return %c0_i32, %c0_i32_0 : i32, i32
  }
  func.func @transform_10(%arg0: i32) -> (i32, i32) {
    %c0_i32 = arith.constant 0 : i32
    %c0_i32_0 = arith.constant 0 : i32
    %c0_i32_1 = arith.constant 0 : i32
    return %c0_i32, %c0_i32_0 : i32, i32
  }
  func.func @transform_11(%arg0: i32) -> (i32, i32) {
    %c0_i32 = arith.constant 0 : i32
    %c0_i32_0 = arith.constant 0 : i32
    %c0_i32_1 = arith.constant 0 : i32
    return %c0_i32, %c0_i32_0 : i32, i32
  }
  func.func @transform_12(%arg0: i32) -> (i32, i32) {
    %c0_i32 = arith.constant 0 : i32
    %c0_i32_0 = arith.constant 0 : i32
    %c0_i32_1 = arith.constant 0 : i32
    return %c0_i32, %c0_i32_0 : i32, i32
  }
  func.func @transform_13(%arg0: i32) -> (i32, i32) {
    %c0_i32 = arith.constant 0 : i32
    %c0_i32_0 = arith.constant 0 : i32
    %c0_i32_1 = arith.constant 0 : i32
    return %c0_i32, %c0_i32_0 : i32, i32
  }
  func.func @transform_14(%arg0: i32) -> (i32, i32) {
    %c0_i32 = arith.constant 0 : i32
    %c0_i32_0 = arith.constant 0 : i32
    %c0_i32_1 = arith.constant 0 : i32
    return %c0_i32, %c0_i32_0 : i32, i32
  }
  func.func @transform_15(%arg0: i32) -> (i32, i32) {
    %c0_i32 = arith.constant 0 : i32
    %c0_i32_0 = arith.constant 0 : i32
    %c0_i32_1 = arith.constant 0 : i32
    return %c0_i32, %c0_i32_0 : i32, i32
  }
  func.func @transform_16(%arg0: i32) -> (i32, i32) {
    %c0_i32 = arith.constant 0 : i32
    %c0_i32_0 = arith.constant 0 : i32
    %c0_i32_1 = arith.constant 0 : i32
    return %c0_i32, %c0_i32_0 : i32, i32
  }
  func.func @transform_17(%arg0: i32) -> (i32, i32) {
    %c0_i32 = arith.constant 0 : i32
    %c0_i32_0 = arith.constant 0 : i32
    %c0_i32_1 = arith.constant 0 : i32
    return %c0_i32, %c0_i32_0 : i32, i32
  }
  func.func @transform_18(%arg0: i32) -> (i32, i32, i32) {
    %c0_i32 = arith.constant 0 : i32
    %c0_i32_0 = arith.constant 0 : i32
    %c0_i32_1 = arith.constant 0 : i32
    return %arg0, %c0_i32, %c0_i32_0 : i32, i32, i32
  }
}

</mosaic_0001>

<llo_original>
// kernel: _recvae_loss_pallas.1
$region0: #{_recvae_loss_pallas.1}
  #allocation0 [shape = 'u32[]', space=smem, size = 0x4, offset = 0x4, fixed_abs, tag = 'smem constant byte address 0x4 - core index']
  #allocation1 [shape = 'u32[72,128]{1,0:T(1,128)}', space=vmem, size = 0x9000, scoped, tag = 'internal scratch']
  %s0 = inlined_call_operand.vmem [shape: bf16[512,256], index: 0, kind: input, shape index: {}]
  %s1 = inlined_call_operand.vmem [shape: bf16[256,256], index: 1, kind: input, shape index: {}]
  %s2 = inlined_call_operand.hbm [shape: bf16[128,128], index: 2, kind: input, shape index: {}]
  %s3 = inlined_call_operand.hbm [shape: bf16[128,128], index: 3, kind: input, shape index: {}]
  %s4 = inlined_call_operand.hbm [shape: bf16[128,128], index: 4, kind: input, shape index: {}]
  %s5 = inlined_call_operand.hbm [shape: bf16[128,128], index: 5, kind: input, shape index: {}]
  %s6 = inlined_call_operand.vmem [shape: bf16[128,256], index: 6, kind: input, shape index: {}]
  %s7 = inlined_call_operand.vmem [shape: f32[15,128], index: 7, kind: input, shape index: {}]
  %s8 = inlined_call_operand.vmem [shape: f32[1,256], index: 8, kind: input, shape index: {}]
  %s9 = inlined_call_operand.hbm [shape: bf16[128,128], index: 9, kind: input, shape index: {}]
  %s10 = inlined_call_operand.hbm [shape: bf16[128,128], index: 10, kind: input, shape index: {}]
  %s11 = inlined_call_operand.hbm [shape: bf16[128,128], index: 11, kind: input, shape index: {}]
  %s12 = inlined_call_operand.hbm [shape: bf16[128,128], index: 12, kind: input, shape index: {}]
  %s13 = inlined_call_operand.vmem [shape: bf16[128,256], index: 13, kind: input, shape index: {}]
  %s14 = inlined_call_operand.vmem [shape: f32[15,128], index: 14, kind: input, shape index: {}]
  %s15 = inlined_call_operand.vmem [shape: f32[1,256], index: 15, kind: input, shape index: {}]
  %s16 = inlined_call_operand.vmem [shape: bf16[128,256], index: 16, kind: input, shape index: {}]
  %s17 = inlined_call_operand.vmem [shape: f32[1,256], index: 17, kind: input, shape index: {}]
  %s18 = inlined_call_operand.vmem [shape: f32[4,8,128], index: 18, kind: output, shape index: {}]
  %s19 = sld [smem:[#allocation0]]
  $region137: #{_recvae_loss_pallas.1} parent=0
    _
  %s21 = ssub.s32 1, %s19
  %s22 = scalar_select 0, %s21, %s19
  $region1: #{_recvae_loss_pallas.1} parent=0
    #allocation2 [shape = 'u8[32768]{0}', space=vmem, size = 0x8000, scoped, tag = 'input window, operand 2, single buffered']
    #allocation3 [shape = 's32[2]{0}', space=sflag, size = 0x8, scoped, tag = 'scoped memory for _recvae_loss_pallas.1']
    #allocation4 [shape = 'u8[32768]{0}', space=vmem, size = 0x8000, scoped, tag = 'input window, operand 3, single buffered']
    #allocation5 [shape = 's32[1]{0}', space=sflag, size = 0x4, scoped, tag = 'scoped memory for _recvae_loss_pallas.1']
    #allocation6 [shape = 'u8[32768]{0}', space=vmem, size = 0x8000, scoped, tag = 'input window, operand 4, single buffered']
    #allocation7 [shape = 'u8[32768]{0}', space=vmem, size = 0x8000, scoped, tag = 'input window, operand 5, single buffered']
    #allocation8 [shape = 's32[1]{0}', space=sflag, size = 0x4, scoped, tag = 'scoped memory for _recvae_loss_pallas.1']
    #allocation9 [shape = 'u8[32768]{0}', space=vmem, size = 0x8000, scoped, tag = 'input window, operand 9, single buffered']
    #allocation10 [shape = 'u8[32768]{0}', space=vmem, size = 0x8000, scoped, tag = 'input window, operand 10, single buffered']
    #allocation11 [shape = 's32[1]{0}', space=sflag, size = 0x4, scoped, tag = 'scoped memory for _recvae_loss_pallas.1']
    #allocation12 [shape = 'u8[32768]{0}', space=vmem, size = 0x8000, scoped, tag = 'input window, operand 11, single buffered']
    #allocation13 [shape = 'u8[32768]{0}', space=vmem, size = 0x8000, scoped, tag = 'input window, operand 12, single buffered']
    #allocation14 [shape = 's32[1]{0}', space=sflag, size = 0x4, scoped, tag = 'scoped memory for _recvae_loss_pallas.1']
    %23 = vsyncpa [#allocation3], 0
    %24 = vsyncpa [#allocation5], 0
    %25 = vsyncpa [#allocation8], 0
    %26 = vsyncpa [#allocation11], 0
    %27 = vsyncpa [#allocation14], 0
    loop: start=0, step=1, limit=6
    $region2: #{_recvae_loss_pallas.1} parent=1 // loop_pre_header
      _
    $region3: #{_recvae_loss_pallas.1} parent=1 // loop_header
      %s29 = sphi 0, %s33
      %p30 = scmp.ge.s32.totalorder %s29, 6
      %s39 = sphi 0, %s41
      %s42 = sphi 0, %s39
      %s43 = sphi 0, %s42
      %s59 = sphi 0, %s43
      %s63 = sphi 0, %s63
      %s65 = sphi 0, %s63
      %s66 = sphi 0, %s65
      %s80 = sphi 0, %s66
      %s84 = sphi 0, %s84
      %s86 = sphi 0, %s84
      %s87 = sphi 0, %s86
      %s101 = sphi 0, %s87
      %s105 = sphi 0, %s105
      %s107 = sphi 0, %s105
      %s108 = sphi 0, %s107
      %s122 = sphi 0, %s108
      %s126 = sphi 0, %s126
      %s128 = sphi 0, %s126
      %s129 = sphi 0, %s128
      %s143 = sphi 0, %s129
      %s147 = sphi 0, %s147
      %s149 = sphi 0, %s147
      %s150 = sphi 0, %s149
      %s164 = sphi 0, %s150
      %s168 = sphi 0, %s168
      %s170 = sphi 0, %s168
      %s171 = sphi 0, %s170
      %s185 = sphi 0, %s171
      %s189 = sphi 0, %s189
      %s191 = sphi 0, %s189
      %s192 = sphi 0, %s191
      %s206 = sphi 0, %s192
      %s210 = sphi 0, %s210
      %s212 = sphi 0, %s210
      %s213 = sphi 0, %s212
      %s227 = sphi 0, %s213
      %s231 = sphi 0, %s231
      %s233 = sphi 0, %s231
      %s234 = sphi 0, %s233
      %s248 = sphi 0, %s234
      %s252 = sphi 0, %s252
      %s254 = sphi 0, %s252
      %s255 = sphi 0, %s254
      %s269 = sphi 0, %s255
      %s273 = sphi 0, %s273
      %s275 = sphi 0, %s273
      %s276 = sphi 0, %s275
      %s290 = sphi 0, %s276
      %s294 = sphi 0, %s294
      %s296 = sphi 0, %s294
      %s297 = sphi 0, %s296
      %s311 = sphi 0, %s297
      %s315 = sphi 0, %s315
      %s317 = sphi 0, %s315
      %s318 = sphi 0, %s317
      %s332 = sphi 0, %s318
      %s336 = sphi 0, %s336
      %s338 = sphi 0, %s336
      %s339 = sphi 0, %s338
      %s353 = sphi 0, %s339
      %s357 = sphi 0, %s357
      %s359 = sphi 0, %s357
      %s360 = sphi 0, %s359
      %s374 = sphi 0, %s360
      %s378 = sphi 0, %s378
      %s380 = sphi 0, %s378
      %s381 = sphi 0, %s380
      %s395 = sphi 0, %s381
      %s399 = sphi 0, %s399
      %s401 = sphi 0, %s399
      %s402 = sphi 0, %s401
      %s416 = sphi 0, %s402
      %s422 = sphi 0, %s424
      %s425 = sphi 0, %s422
      %s426 = sphi 0, %s425
      %s442 = sphi 0, %s426
    $region4: #{_recvae_loss_pallas.1} parent=1 // loop_header_branch
      %32 = sbr.rel (%p30) target = $region8
    $region5: #{_recvae_loss_pallas.1} parent=1 // loop_body
      %s34 = ssub.s32 %s29, 1
      %s35 = ssub.s32 %s29, 2
      %s36 = sadd.s32 %s29, 1
      %s37 = ssub.s32 %s29, %s36
      %p38 = scmp.eq.s32.totalorder %s37, 0
      %s40 = sadd.s32 %s39, 1
      %s41 = scalar_select %p38, %s39, %s40
      %p44 = pneg %p38
      %p45 = scmp.eq.s32.totalorder %s29, 3
      %p46 = por %p44, %p45
      %p47 = scmp.ne.s32.totalorder %s39, %s42
      %p48 = scmp.eq.s32.totalorder %s29, 0
      %p49 = por %p47, %p48
      %p50 = scmp.ne.s32.totalorder %s39, %s42
      %p51 = scmp.eq.s32.totalorder %s34, 3
      %p52 = por %p50, %p51
      %p53 = scmp.ne.s32.totalorder %s42, %s43
      %p54 = scmp.eq.s32.totalorder %s34, 0
      %p55 = por %p53, %p54
      %p56 = scmp.ne.s32.totalorder %s42, %s43
      %p57 = scmp.eq.s32.totalorder %s35, 3
      %p58 = por %p56, %p57
      %p60 = scmp.ne.s32.totalorder %s43, %s59
      %p61 = scmp.eq.s32.totalorder %s35, 0
      %p62 = por %p60, %p61
      %s64 = sadd.s32 %s63, 1
      %p67 = scmp.eq.s32.totalorder %s29, 3
      %p68 = scmp.ne.s32.totalorder %s63, %s65
      %p69 = scmp.eq.s32.totalorder %s29, 0
      %p70 = por %p68, %p69
      %p71 = scmp.ne.s32.totalorder %s63, %s65
      %p72 = scmp.eq.s32.totalorder %s34, 3
      %p73 = por %p71, %p72
      %p74 = scmp.ne.s32.totalorder %s65, %s66
      %p75 = scmp.eq.s32.totalorder %s34, 0
      %p76 = por %p74, %p75
      %p77 = scmp.ne.s32.totalorder %s65, %s66
      %p78 = scmp.eq.s32.totalorder %s35, 3
      %p79 = por %p77, %p78
      %p81 = scmp.ne.s32.totalorder %s66, %s80
      %p82 = scmp.eq.s32.totalorder %s35, 0
      %p83 = por %p81, %p82
      %s85 = sadd.s32 %s84, 1
      %p88 = scmp.eq.s32.totalorder %s29, 3
      %p89 = scmp.ne.s32.totalorder %s84, %s86
      %p90 = scmp.eq.s32.totalorder %s29, 0
      %p91 = por %p89, %p90
      %p92 = scmp.ne.s32.totalorder %s84, %s86
      %p93 = scmp.eq.s32.totalorder %s34, 3
      %p94 = por %p92, %p93
      %p95 = scmp.ne.s32.totalorder %s86, %s87
      %p96 = scmp.eq.s32.totalorder %s34, 0
      %p97 = por %p95, %p96
      %p98 = scmp.ne.s32.totalorder %s86, %s87
      %p99 = scmp.eq.s32.totalorder %s35, 3
      %p100 = por %p98, %p99
      %p102 = scmp.ne.s32.totalorder %s87, %s101
      %p103 = scmp.eq.s32.totalorder %s35, 0
      %p104 = por %p102, %p103
      %s106 = sadd.s32 %s105, 1
      %p109 = scmp.eq.s32.totalorder %s29, 3
      %p110 = scmp.ne.s32.totalorder %s105, %s107
      %p111 = scmp.eq.s32.totalorder %s29, 0
      %p112 = por %p110, %p111
      %p113 = scmp.ne.s32.totalorder %s105, %s107
      %p114 = scmp.eq.s32.totalorder %s34, 3
      %p115 = por %p113, %p114
      %p116 = scmp.ne.s32.totalorder %s107, %s108
      %p117 = scmp.eq.s32.totalorder %s34, 0
      %p118 = por %p116, %p117
      %p119 = scmp.ne.s32.totalorder %s107, %s108
      %p120 = scmp.eq.s32.totalorder %s35, 3
      %p121 = por %p119, %p120
      %p123 = scmp.ne.s32.totalorder %s108, %s122
      %p124 = scmp.eq.s32.totalorder %s35, 0
      %p125 = por %p123, %p124
      %s127 = sadd.s32 %s126, 1
      %p130 = scmp.eq.s32.totalorder %s29, 3
      %p131 = scmp.ne.s32.totalorder %s126, %s128
      %p132 = scmp.eq.s32.totalorder %s29, 0
      %p133 = por %p131, %p132
      %p134 = scmp.ne.s32.totalorder %s126, %s128
      %p135 = scmp.eq.s32.totalorder %s34, 3
      %p136 = por %p134, %p135
      %p137 = scmp.ne.s32.totalorder %s128, %s129
      %p138 = scmp.eq.s32.totalorder %s34, 0
      %p139 = por %p137, %p138
      %p140 = scmp.ne.s32.totalorder %s128, %s129
      %p141 = scmp.eq.s32.totalorder %s35, 3
      %p142 = por %p140, %p141
      %p144 = scmp.ne.s32.totalorder %s129, %s143
      %p145 = scmp.eq.s32.totalorder %s35, 0
      %p146 = por %p144, %p145
      %s148 = sadd.s32 %s147, 1
      %p151 = scmp.eq.s32.totalorder %s29, 3
      %p152 = scmp.ne.s32.totalorder %s147, %s149
      %p153 = scmp.eq.s32.totalorder %s29, 0
      %p154 = por %p152, %p153
      %p155 = scmp.ne.s32.totalorder %s147, %s149
      %p156 = scmp.eq.s32.totalorder %s34, 3
      %p157 = por %p155, %p156
      %p158 = scmp.ne.s32.totalorder %s149, %s150
      %p159 = scmp.eq.s32.totalorder %s34, 0
      %p160 = por %p158, %p159
      %p161 = scmp.ne.s32.totalorder %s149, %s150
      %p162 = scmp.eq.s32.totalorder %s35, 3
      %p163 = por %p161, %p162
      %p165 = scmp.ne.s32.totalorder %s150, %s164
      %p166 = scmp.eq.s32.totalorder %s35, 0
      %p167 = por %p165, %p166
      %s169 = sadd.s32 %s168, 1
      %p172 = scmp.eq.s32.totalorder %s29, 3
      %p173 = scmp.ne.s32.totalorder %s168, %s170
      %p174 = scmp.eq.s32.totalorder %s29, 0
      %p175 = por %p173, %p174
      %p176 = scmp.ne.s32.totalorder %s168, %s170
      %p177 = scmp.eq.s32.totalorder %s34, 3
      %p178 = por %p176, %p177
      %p179 = scmp.ne.s32.totalorder %s170, %s171
      %p180 = scmp.eq.s32.totalorder %s34, 0
      %p181 = por %p179, %p180
      %p182 = scmp.ne.s32.totalorder %s170, %s171
      %p183 = scmp.eq.s32.totalorder %s35, 3
      %p184 = por %p182, %p183
      %p186 = scmp.ne.s32.totalorder %s171, %s185
      %p187 = scmp.eq.s32.totalorder %s35, 0
      %p188 = por %p186, %p187
      %s190 = sadd.s32 %s189, 1
      %p193 = scmp.eq.s32.totalorder %s29, 3
      %p194 = scmp.ne.s32.totalorder %s189, %s191
      %p195 = scmp.eq.s32.totalorder %s29, 0
      %p196 = por %p194, %p195
      %p197 = scmp.ne.s32.totalorder %s189, %s191
      %p198 = scmp.eq.s32.totalorder %s34, 3
      %p199 = por %p197, %p198
      %p200 = scmp.ne.s32.totalorder %s191, %s192
      %p201 = scmp.eq.s32.totalorder %s34, 0
      %p202 = por %p200, %p201
      %p203 = scmp.ne.s32.totalorder %s191, %s192
      %p204 = scmp.eq.s32.totalorder %s35, 3
      %p205 = por %p203, %p204
      %p207 = scmp.ne.s32.totalorder %s192, %s206
      %p208 = scmp.eq.s32.totalorder %s35, 0
      %p209 = por %p207, %p208
      %s211 = sadd.s32 %s210, 1
      %p214 = scmp.eq.s32.totalorder %s29, 3
      %p215 = scmp.ne.s32.totalorder %s210, %s212
      %p216 = scmp.eq.s32.totalorder %s29, 0
      %p217 = por %p215, %p216
      %p218 = scmp.ne.s32.totalorder %s210, %s212
      %p219 = scmp.eq.s32.totalorder %s34, 3
      %p220 = por %p218, %p219
      %p221 = scmp.ne.s32.totalorder %s212, %s213
      %p222 = scmp.eq.s32.totalorder %s34, 0
      %p223 = por %p221, %p222
      %p224 = scmp.ne.s32.totalorder %s212, %s213
      %p225 = scmp.eq.s32.totalorder %s35, 3
      %p226 = por %p224, %p225
      %p228 = scmp.ne.s32.totalorder %s213, %s227
      %p229 = scmp.eq.s32.totalorder %s35, 0
      %p230 = por %p228, %p229
      %s232 = sadd.s32 %s231, 1
      %p235 = scmp.eq.s32.totalorder %s29, 3
      %p236 = scmp.ne.s32.totalorder %s231, %s233
      %p237 = scmp.eq.s32.totalorder %s29, 0
      %p238 = por %p236, %p237
      %p239 = scmp.ne.s32.totalorder %s231, %s233
      %p240 = scmp.eq.s32.totalorder %s34, 3
      %p241 = por %p239, %p240
      %p242 = scmp.ne.s32.totalorder %s233, %s234
      %p243 = scmp.eq.s32.totalorder %s34, 0
      %p244 = por %p242, %p243
      %p245 = scmp.ne.s32.totalorder %s233, %s234
      %p246 = scmp.eq.s32.totalorder %s35, 3
      %p247 = por %p245, %p246
      %p249 = scmp.ne.s32.totalorder %s234, %s248
      %p250 = scmp.eq.s32.totalorder %s35, 0
      %p251 = por %p249, %p250
      %s253 = sadd.s32 %s252, 1
      %p256 = scmp.eq.s32.totalorder %s29, 3
      %p257 = scmp.ne.s32.totalorder %s252, %s254
      %p258 = scmp.eq.s32.totalorder %s29, 0
      %p259 = por %p257, %p258
      %p260 = scmp.ne.s32.totalorder %s252, %s254
      %p261 = scmp.eq.s32.totalorder %s34, 3
      %p262 = por %p260, %p261
      %p263 = scmp.ne.s32.totalorder %s254, %s255
      %p264 = scmp.eq.s32.totalorder %s34, 0
      %p265 = por %p263, %p264
      %p266 = scmp.ne.s32.totalorder %s254, %s255
      %p267 = scmp.eq.s32.totalorder %s35, 3
      %p268 = por %p266, %p267
      %p270 = scmp.ne.s32.totalorder %s255, %s269
      %p271 = scmp.eq.s32.totalorder %s35, 0
      %p272 = por %p270, %p271
      %s274 = sadd.s32 %s273, 1
      %p277 = scmp.eq.s32.totalorder %s29, 3
      %p278 = scmp.ne.s32.totalorder %s273, %s275
      %p279 = scmp.eq.s32.totalorder %s29, 0
      %p280 = por %p278, %p279
      %p281 = scmp.ne.s32.totalorder %s273, %s275
      %p282 = scmp.eq.s32.totalorder %s34, 3
      %p283 = por %p281, %p282
      %p284 = scmp.ne.s32.totalorder %s275, %s276
      %p285 = scmp.eq.s32.totalorder %s34, 0
      %p286 = por %p284, %p285
      %p287 = scmp.ne.s32.totalorder %s275, %s276
      %p288 = scmp.eq.s32.totalorder %s35, 3
      %p289 = por %p287, %p288
      %p291 = scmp.ne.s32.totalorder %s276, %s290
      %p292 = scmp.eq.s32.totalorder %s35, 0
      %p293 = por %p291, %p292
      %s295 = sadd.s32 %s294, 1
      %p298 = scmp.eq.s32.totalorder %s29, 3
      %p299 = scmp.ne.s32.totalorder %s294, %s296
      %p300 = scmp.eq.s32.totalorder %s29, 0
      %p301 = por %p299, %p300
      %p302 = scmp.ne.s32.totalorder %s294, %s296
      %p303 = scmp.eq.s32.totalorder %s34, 3
      %p304 = por %p302, %p303
      %p305 = scmp.ne.s32.totalorder %s296, %s297
      %p306 = scmp.eq.s32.totalorder %s34, 0
      %p307 = por %p305, %p306
      %p308 = scmp.ne.s32.totalorder %s296, %s297
      %p309 = scmp.eq.s32.totalorder %s35, 3
      %p310 = por %p308, %p309
      %p312 = scmp.ne.s32.totalorder %s297, %s311
      %p313 = scmp.eq.s32.totalorder %s35, 0
      %p314 = por %p312, %p313
      %s316 = sadd.s32 %s315, 1
      %p319 = scmp.eq.s32.totalorder %s29, 3
      %p320 = scmp.ne.s32.totalorder %s315, %s317
      %p321 = scmp.eq.s32.totalorder %s29, 0
      %p322 = por %p320, %p321
      %p323 = scmp.ne.s32.totalorder %s315, %s317
      %p324 = scmp.eq.s32.totalorder %s34, 3
      %p325 = por %p323, %p324
      %p326 = scmp.ne.s32.totalorder %s317, %s318
      %p327 = scmp.eq.s32.totalorder %s34, 0
      %p328 = por %p326, %p327
      %p329 = scmp.ne.s32.totalorder %s317, %s318
      %p330 = scmp.eq.s32.totalorder %s35, 3
      %p331 = por %p329, %p330
      %p333 = scmp.ne.s32.totalorder %s318, %s332
      %p334 = scmp.eq.s32.totalorder %s35, 0
      %p335 = por %p333, %p334
      %s337 = sadd.s32 %s336, 1
      %p340 = scmp.eq.s32.totalorder %s29, 3
      %p341 = scmp.ne.s32.totalorder %s336, %s338
      %p342 = scmp.eq.s32.totalorder %s29, 0
      %p343 = por %p341, %p342
      %p344 = scmp.ne.s32.totalorder %s336, %s338
      %p345 = scmp.eq.s32.totalorder %s34, 3
      %p346 = por %p344, %p345
      %p347 = scmp.ne.s32.totalorder %s338, %s339
      %p348 = scmp.eq.s32.totalorder %s34, 0
      %p349 = por %p347, %p348
      %p350 = scmp.ne.s32.totalorder %s338, %s339
      %p351 = scmp.eq.s32.totalorder %s35, 3
      %p352 = por %p350, %p351
      %p354 = scmp.ne.s32.totalorder %s339, %s353
      %p355 = scmp.eq.s32.totalorder %s35, 0
      %p356 = por %p354, %p355
      %s358 = sadd.s32 %s357, 1
      %p361 = scmp.eq.s32.totalorder %s29, 3
      %p362 = scmp.ne.s32.totalorder %s357, %s359
      %p363 = scmp.eq.s32.totalorder %s29, 0
      %p364 = por %p362, %p363
      %p365 = scmp.ne.s32.totalorder %s357, %s359
      %p366 = scmp.eq.s32.totalorder %s34, 3
      %p367 = por %p365, %p366
      %p368 = scmp.ne.s32.totalorder %s359, %s360
      %p369 = scmp.eq.s32.totalorder %s34, 0
      %p370 = por %p368, %p369
      %p371 = scmp.ne.s32.totalorder %s359, %s360
      %p372 = scmp.eq.s32.totalorder %s35, 3
      %p373 = por %p371, %p372
      %p375 = scmp.ne.s32.totalorder %s360, %s374
      %p376 = scmp.eq.s32.totalorder %s35, 0
      %p377 = por %p375, %p376
      %s379 = sadd.s32 %s378, 1
      %p382 = scmp.eq.s32.totalorder %s29, 3
      %p383 = scmp.ne.s32.totalorder %s378, %s380
      %p384 = scmp.eq.s32.totalorder %s29, 0
      %p385 = por %p383, %p384
      %p386 = scmp.ne.s32.totalorder %s378, %s380
      %p387 = scmp.eq.s32.totalorder %s34, 3
      %p388 = por %p386, %p387
      %p389 = scmp.ne.s32.totalorder %s380, %s381
      %p390 = scmp.eq.s32.totalorder %s34, 0
      %p391 = por %p389, %p390
      %p392 = scmp.ne.s32.totalorder %s380, %s381
      %p393 = scmp.eq.s32.totalorder %s35, 3
      %p394 = por %p392, %p393
      %p396 = scmp.ne.s32.totalorder %s381, %s395
      %p397 = scmp.eq.s32.totalorder %s35, 0
      %p398 = por %p396, %p397
      %s400 = sadd.s32 %s399, 1
      %p403 = scmp.eq.s32.totalorder %s29, 3
      %p404 = scmp.ne.s32.totalorder %s399, %s401
      %p405 = scmp.eq.s32.totalorder %s29, 0
      %p406 = por %p404, %p405
      %p407 = scmp.ne.s32.totalorder %s399, %s401
      %p408 = scmp.eq.s32.totalorder %s34, 3
      %p409 = por %p407, %p408
      %p410 = scmp.ne.s32.totalorder %s401, %s402
      %p411 = scmp.eq.s32.totalorder %s34, 0
      %p412 = por %p410, %p411
      %p413 = scmp.ne.s32.totalorder %s401, %s402
      %p414 = scmp.eq.s32.totalorder %s35, 3
      %p415 = por %p413, %p414
      %p417 = scmp.ne.s32.totalorder %s402, %s416
      %p418 = scmp.eq.s32.totalorder %s35, 0
      %p419 = por %p417, %p418
      %s420 = ssub.s32 %s29, %s36
      %p421 = scmp.eq.s32.totalorder %s420, 0
      %s423 = sadd.s32 %s422, 1
      %s424 = scalar_select %p421, %s422, %s423
      %p427 = pneg %p421
      %p428 = scmp.eq.s32.totalorder %s29, 3
      %p429 = por %p427, %p428
      %p430 = scmp.ne.s32.totalorder %s422, %s425
      %p431 = scmp.eq.s32.totalorder %s29, 0
      %p432 = por %p430, %p431
      %p433 = scmp.ne.s32.totalorder %s422, %s425
      %p434 = scmp.eq.s32.totalorder %s34, 3
      %p435 = por %p433, %p434
      %p436 = scmp.ne.s32.totalorder %s425, %s426
      %p437 = scmp.eq.s32.totalorder %s34, 0
      %p438 = por %p436, %p437
      %p439 = scmp.ne.s32.totalorder %s425, %s426
      %p440 = scmp.eq.s32.totalorder %s35, 3
      %p441 = por %p439, %p440
      %p443 = scmp.ne.s32.totalorder %s426, %s442
      %p444 = scmp.eq.s32.totalorder %s35, 0
      %p445 = por %p443, %p444
      %p446 = scmp.le.s32.totalorder 1, %s29
      %p447 = scmp.lt.s32.totalorder %s29, 5
      %p448 = pnand %p446, %p447
      %p449 = pneg %p448
      // Predicated region
      $region9: #{_recvae_loss_pallas.1} parent=5 // pred_check
        _
      $region10: #{_recvae_loss_pallas.1} parent=5 // pred_check_branch
        %451 = sbr.rel (%p448) target = $region12
      $region11: #{_recvae_loss_pallas.1} parent=5 // pred_region
        %s452 = ssub.s32 %s29, 1
        // Predicated region
        $region13: #{_recvae_loss_pallas.1} parent=11 // pred_check
          %p453 = pneg %p76
        $region14: #{_recvae_loss_pallas.1} parent=11 // pred_check_branch
          %455 = sbr.rel (%p453) target = $region16
        $region15: #{_recvae_loss_pallas.1} parent=11 // pred_region
          _
        $region16: #{_recvae_loss_pallas.1} parent=11 // pred_fallthru
          _
        // Predicated region
        $region17: #{_recvae_loss_pallas.1} parent=11 // pred_check
          %p456 = pneg %p97
        $region18: #{_recvae_loss_pallas.1} parent=11 // pred_check_branch
          %458 = sbr.rel (%p456) target = $region20
        $region19: #{_recvae_loss_pallas.1} parent=11 // pred_region
          %460 = vsyncadd [#allocation3], 0
          %s461 = sshll.u32 %s2, 4
          %s462 = int_to_ptr.hbm [resolvable:$true] %s461
          %s463 = sshll.u32 [#allocation2], 4
          %s464 = int_to_ptr.vmem [resolvable:$true] %s463
          %469 = dma.hbm_to_vmem [thread:$0]  %s462, 1024, %s464, [#allocation3], 64, 64, 4
        $region20: #{_recvae_loss_pallas.1} parent=11 // pred_fallthru
          _
        // Predicated region
        $region21: #{_recvae_loss_pallas.1} parent=11 // pred_check
          %p470 = pneg %p118
        $region22: #{_recvae_loss_pallas.1} parent=11 // pred_check_branch
          %472 = sbr.rel (%p470) target = $region24
        $region23: #{_recvae_loss_pallas.1} parent=11 // pred_region
          %474 = vsyncadd [#allocation5], 0
          %s475 = sshll.u32 %s3, 4
          %s476 = int_to_ptr.hbm [resolvable:$true] %s475
          %s477 = sshll.u32 [#allocation4], 4
          %s478 = int_to_ptr.vmem [resolvable:$true] %s477
          %483 = dma.hbm_to_vmem [thread:$0]  %s476, 1024, %s478, [#allocation5], 64, 64, 4
        $region24: #{_recvae_loss_pallas.1} parent=11 // pred_fallthru
          _
        // Predicated region
        $region25: #{_recvae_loss_pallas.1} parent=11 // pred_check
          %p484 = pneg %p139
        $region26: #{_recvae_loss_pallas.1} parent=11 // pred_check_branch
          %486 = sbr.rel (%p484) target = $region28
        $region27: #{_recvae_loss_pallas.1} parent=11 // pred_region
          %488 = vsyncadd [#allocation5], 0
          %s489 = sshll.u32 %s4, 4
          %s490 = int_to_ptr.hbm [resolvable:$true] %s489
          %s491 = sshll.u32 [#allocation6], 4
          %s492 = int_to_ptr.vmem [resolvable:$true] %s491
          %497 = dma.hbm_to_vmem [thread:$0]  %s490, 1024, %s492, [#allocation5], 64, 64, 4
        $region28: #{_recvae_loss_pallas.1} parent=11 // pred_fallthru
          _
        // Predicated region
        $region29: #{_recvae_loss_pallas.1} parent=11 // pred_check
          %p498 = pneg %p160
        $region30: #{_recvae_loss_pallas.1} parent=11 // pred_check_branch
          %500 = sbr.rel (%p498) target = $region32
        $region31: #{_recvae_loss_pallas.1} parent=11 // pred_region
          %502 = vsyncadd [#allocation8], 0
          %s503 = sshll.u32 %s5, 4
          %s504 = int_to_ptr.hbm [resolvable:$true] %s503
          %s505 = sshll.u32 [#allocation7], 4
          %s506 = int_to_ptr.vmem [resolvable:$true] %s505
          %511 = dma.hbm_to_vmem [thread:$0]  %s504, 1024, %s506, [#allocation8], 64, 64, 4
        $region32: #{_recvae_loss_pallas.1} parent=11 // pred_fallthru
          _
        // Predicated region
        $region33: #{_recvae_loss_pallas.1} parent=11 // pred_check
          %p512 = pneg %p181
        $region34: #{_recvae_loss_pallas.1} parent=11 // pred_check_branch
          %514 = sbr.rel (%p512) target = $region36
        $region35: #{_recvae_loss_pallas.1} parent=11 // pred_region
          _
        $region36: #{_recvae_loss_pallas.1} parent=11 // pred_fallthru
          _
        // Predicated region
        $region37: #{_recvae_loss_pallas.1} parent=11 // pred_check
          %p515 = pneg %p202
        $region38: #{_recvae_loss_pallas.1} parent=11 // pred_check_branch
          %517 = sbr.rel (%p515) target = $region40
        $region39: #{_recvae_loss_pallas.1} parent=11 // pred_region
          _
        $region40: #{_recvae_loss_pallas.1} parent=11 // pred_fallthru
          _
        // Predicated region
        $region41: #{_recvae_loss_pallas.1} parent=11 // pred_check
          %p518 = pneg %p223
        $region42: #{_recvae_loss_pallas.1} parent=11 // pred_check_branch
          %520 = sbr.rel (%p518) target = $region44
        $region43: #{_recvae_loss_pallas.1} parent=11 // pred_region
          _
        $region44: #{_recvae_loss_pallas.1} parent=11 // pred_fallthru
          _
        // Predicated region
        $region45: #{_recvae_loss_pallas.1} parent=11 // pred_check
          %p521 = pneg %p244
        $region46: #{_recvae_loss_pallas.1} parent=11 // pred_check_branch
          %523 = sbr.rel (%p521) target = $region48
        $region47: #{_recvae_loss_pallas.1} parent=11 // pred_region
          %525 = vsyncadd [#allocation8], 0
          %s526 = sshll.u32 %s9, 4
          %s527 = int_to_ptr.hbm [resolvable:$true] %s526
          %s528 = sshll.u32 [#allocation9], 4
          %s529 = int_to_ptr.vmem [resolvable:$true] %s528
          %534 = dma.hbm_to_vmem [thread:$0]  %s527, 1024, %s529, [#allocation8], 64, 64, 4
        $region48: #{_recvae_loss_pallas.1} parent=11 // pred_fallthru
          _
        // Predicated region
        $region49: #{_recvae_loss_pallas.1} parent=11 // pred_check
          %p535 = pneg %p265
        $region50: #{_recvae_loss_pallas.1} parent=11 // pred_check_branch
          %537 = sbr.rel (%p535) target = $region52
        $region51: #{_recvae_loss_pallas.1} parent=11 // pred_region
          %539 = vsyncadd [#allocation11], 0
          %s540 = sshll.u32 %s10, 4
          %s541 = int_to_ptr.hbm [resolvable:$true] %s540
          %s542 = sshll.u32 [#allocation10], 4
          %s543 = int_to_ptr.vmem [resolvable:$true] %s542
          %548 = dma.hbm_to_vmem [thread:$0]  %s541, 1024, %s543, [#allocation11], 64, 64, 4
        $region52: #{_recvae_loss_pallas.1} parent=11 // pred_fallthru
          _
        // Predicated region
        $region53: #{_recvae_loss_pallas.1} parent=11 // pred_check
          %p549 = pneg %p286
        $region54: #{_recvae_loss_pallas.1} parent=11 // pred_check_branch
          %551 = sbr.rel (%p549) target = $region56
        $region55: #{_recvae_loss_pallas.1} parent=11 // pred_region
          %553 = vsyncadd [#allocation11], 0
          %s554 = sshll.u32 %s11, 4
          %s555 = int_to_ptr.hbm [resolvable:$true] %s554
          %s556 = sshll.u32 [#allocation12], 4
          %s557 = int_to_ptr.vmem [resolvable:$true] %s556
          %562 = dma.hbm_to_vmem [thread:$0]  %s555, 1024, %s557, [#allocation11], 64, 64, 4
        $region56: #{_recvae_loss_pallas.1} parent=11 // pred_fallthru
          _
        // Predicated region
        $region57: #{_recvae_loss_pallas.1} parent=11 // pred_check
          %p563 = pneg %p307
        $region58: #{_recvae_loss_pallas.1} parent=11 // pred_check_branch
          %565 = sbr.rel (%p563) target = $region60
        $region59: #{_recvae_loss_pallas.1} parent=11 // pred_region
          %567 = vsyncadd [#allocation14], 0
          %s568 = sshll.u32 %s12, 4
          %s569 = int_to_ptr.hbm [resolvable:$true] %s568
          %s570 = sshll.u32 [#allocation13], 4
          %s571 = int_to_ptr.vmem [resolvable:$true] %s570
          %576 = dma.hbm_to_vmem [thread:$0]  %s569, 1024, %s571, [#allocation14], 64, 64, 4
        $region60: #{_recvae_loss_pallas.1} parent=11 // pred_fallthru
          _
        // Predicated region
        $region61: #{_recvae_loss_pallas.1} parent=11 // pred_check
          %p577 = pneg %p328
        $region62: #{_recvae_loss_pallas.1} parent=11 // pred_check_branch
          %579 = sbr.rel (%p577) target = $region64
        $region63: #{_recvae_loss_pallas.1} parent=11 // pred_region
          _
        $region64: #{_recvae_loss_pallas.1} parent=11 // pred_fallthru
          _
        // Predicated region
        $region65: #{_recvae_loss_pallas.1} parent=11 // pred_check
          %p580 = pneg %p349
        $region66: #{_recvae_loss_pallas.1} parent=11 // pred_check_branch
          %582 = sbr.rel (%p580) target = $region68
        $region67: #{_recvae_loss_pallas.1} parent=11 // pred_region
          _
        $region68: #{_recvae_loss_pallas.1} parent=11 // pred_fallthru
          _
        // Predicated region
        $region69: #{_recvae_loss_pallas.1} parent=11 // pred_check
          %p583 = pneg %p370
        $region70: #{_recvae_loss_pallas.1} parent=11 // pred_check_branch
          %585 = sbr.rel (%p583) target = $region72
        $region71: #{_recvae_loss_pallas.1} parent=11 // pred_region
          _
        $region72: #{_recvae_loss_pallas.1} parent=11 // pred_fallthru
          _
        // Predicated region
        $region73: #{_recvae_loss_pallas.1} parent=11 // pred_check
          %p586 = pneg %p391
        $region74: #{_recvae_loss_pallas.1} parent=11 // pred_check_branch
          %588 = sbr.rel (%p586) target = $region76
        $region75: #{_recvae_loss_pallas.1} parent=11 // pred_region
          _
        $region76: #{_recvae_loss_pallas.1} parent=11 // pred_fallthru
          _
        // Predicated region
        $region77: #{_recvae_loss_pallas.1} parent=11 // pred_check
          %p589 = pneg %p412
        $region78: #{_recvae_loss_pallas.1} parent=11 // pred_check_branch
          %591 = sbr.rel (%p589) target = $region80
        $region79: #{_recvae_loss_pallas.1} parent=11 // pred_region
          _
        $region80: #{_recvae_loss_pallas.1} parent=11 // pred_fallthru
          _
      $region12: #{_recvae_loss_pallas.1} parent=5 // pred_fallthru
        _
      %p592 = scmp.lt.s32.totalorder %s29, 4
      // Predicated region
      $region81: #{_recvae_loss_pallas.1} parent=5 // pred_check
        %p593 = pneg %p592
      $region82: #{_recvae_loss_pallas.1} parent=5 // pred_check_branch
        %595 = sbr.rel (%p593) target = $region84
      $region83: #{_recvae_loss_pallas.1} parent=5 // pred_region
        // Predicated region
        $region85: #{_recvae_loss_pallas.1} parent=83 // pred_check
          %p596 = pneg %p49
        $region86: #{_recvae_loss_pallas.1} parent=83 // pred_check_branch
          %598 = sbr.rel (%p596) target = $region88
        $region87: #{_recvae_loss_pallas.1} parent=83 // pred_region
          %s599 = smul.u32 16, %s29
          %p600 = scmp.lt.s32.totalorder %s599, 63
          %s601 = scalar_select %p600, %s599, 63
          %s602 = smul.addr %s601, 2
          %s603 = smul.addr %s602, 4
          %s604 = scalar_lea.vmem %s0, %s603
          %s605 = smul.u32 16, %s29
        $region88: #{_recvae_loss_pallas.1} parent=83 // pred_fallthru
          _
      $region84: #{_recvae_loss_pallas.1} parent=5 // pred_fallthru
        _
      %p606 = scmp.le.s32.totalorder 1, %s29
      %p607 = scmp.lt.s32.totalorder %s29, 5
      %p608 = pnand %p606, %p607
      %p609 = pneg %p608
      // Predicated region
      $region89: #{_recvae_loss_pallas.1} parent=5 // pred_check
        _
      $region90: #{_recvae_loss_pallas.1} parent=5 // pred_check_branch
        %611 = sbr.rel (%p608) target = $region92
      $region91: #{_recvae_loss_pallas.1} parent=5 // pred_region
        %s612 = ssub.s32 %s29, 1
        // Predicated region
        $region93: #{_recvae_loss_pallas.1} parent=91 // pred_check
          %p613 = pneg %p97
        $region94: #{_recvae_loss_pallas.1} parent=91 // pred_check_branch
          %615 = sbr.rel (%p613) target = $region96
        $region95: #{_recvae_loss_pallas.1} parent=91 // pred_region
          %617 = dma.done [#allocation3], 1024
        $region96: #{_recvae_loss_pallas.1} parent=91 // pred_fallthru
          _
        // Predicated region
        $region97: #{_recvae_loss_pallas.1} parent=91 // pred_check
          %p618 = pneg %p118
        $region98: #{_recvae_loss_pallas.1} parent=91 // pred_check_branch
          %620 = sbr.rel (%p618) target = $region100
        $region99: #{_recvae_loss_pallas.1} parent=91 // pred_region
          %622 = dma.done [#allocation5], 1024
        $region100: #{_recvae_loss_pallas.1} parent=91 // pred_fallthru
          _
        // Predicated region
        $region101: #{_recvae_loss_pallas.1} parent=91 // pred_check
          %p623 = pneg %p139
        $region102: #{_recvae_loss_pallas.1} parent=91 // pred_check_branch
          %625 = sbr.rel (%p623) target = $region104
        $region103: #{_recvae_loss_pallas.1} parent=91 // pred_region
          %627 = dma.done [#allocation5], 1024
        $region104: #{_recvae_loss_pallas.1} parent=91 // pred_fallthru
          _
        // Predicated region
        $region105: #{_recvae_loss_pallas.1} parent=91 // pred_check
          %p628 = pneg %p160
        $region106: #{_recvae_loss_pallas.1} parent=91 // pred_check_branch
          %630 = sbr.rel (%p628) target = $region108
        $region107: #{_recvae_loss_pallas.1} parent=91 // pred_region
          %632 = dma.done [#allocation8], 1024
        $region108: #{_recvae_loss_pallas.1} parent=91 // pred_fallthru
          _
        // Predicated region
        $region109: #{_recvae_loss_pallas.1} parent=91 // pred_check
          %p633 = pneg %p244
        $region110: #{_recvae_loss_pallas.1} parent=91 // pred_check_branch
          %635 = sbr.rel (%p633) target = $region112
        $region111: #{_recvae_loss_pallas.1} parent=91 // pred_region
          %637 = dma.done [#allocation8], 1024
        $region112: #{_recvae_loss_pallas.1} parent=91 // pred_fallthru
          _
        // Predicated region
        $region113: #{_recvae_loss_pallas.1} parent=91 // pred_check
          %p638 = pneg %p265
        $region114: #{_recvae_loss_pallas.1} parent=91 // pred_check_branch
          %640 = sbr.rel (%p638) target = $region116
        $region115: #{_recvae_loss_pallas.1} parent=91 // pred_region
          %642 = dma.done [#allocation11], 1024
        $region116: #{_recvae_loss_pallas.1} parent=91 // pred_fallthru
          _
        // Predicated region
        $region117: #{_recvae_loss_pallas.1} parent=91 // pred_check
          %p643 = pneg %p286
        $region118: #{_recvae_loss_pallas.1} parent=91 // pred_check_branch
          %645 = sbr.rel (%p643) target = $region120
        $region119: #{_recvae_loss_pallas.1} parent=91 // pred_region
          %647 = dma.done [#allocation11], 1024
        $region120: #{_recvae_loss_pallas.1} parent=91 // pred_fallthru
          _
        // Predicated region
        $region121: #{_recvae_loss_pallas.1} parent=91 // pred_check
          %p648 = pneg %p307
        $region122: #{_recvae_loss_pallas.1} parent=91 // pred_check_branch
          %650 = sbr.rel (%p648) target = $region124
        $region123: #{_recvae_loss_pallas.1} parent=91 // pred_region
          %652 = dma.done [#allocation14], 1024
        $region124: #{_recvae_loss_pallas.1} parent=91 // pred_fallthru
          _
        %s653 = smul.u32 16, %s34
        %p654 = scmp.lt.s32.totalorder %s653, 63
        %s655 = scalar_select %p654, %s653, 63
        %s656 = smul.addr %s655, 2
        %s657 = smul.addr %s656, 4
        %s658 = scalar_lea.vmem %s0, %s657
        %p659 = pneg %p55
        %p660 = pneg %p52
        %p661 = pneg %p76
        %p662 = pneg %p73
        %p663 = pneg %p97
        %p664 = pneg %p94
        %p665 = pneg %p118
        %p666 = pneg %p115
        %p667 = pneg %p139
        %p668 = pneg %p136
        %p669 = pneg %p160
        %p670 = pneg %p157
        %p671 = pneg %p181
        %p672 = pneg %p178
        %p673 = pneg %p202
        %p674 = pneg %p199
        %p675 = pneg %p223
        %p676 = pneg %p220
        %p677 = pneg %p244
        %p678 = pneg %p241
        %p679 = pneg %p265
        %p680 = pneg %p262
        %p681 = pneg %p286
        %p682 = pneg %p283
        %p683 = pneg %p307
        %p684 = pneg %p304
        %p685 = pneg %p328
        %p686 = pneg %p325
        %p687 = pneg %p349
        %p688 = pneg %p346
        %p689 = pneg %p370
        %p690 = pneg %p367
        %p691 = pneg %p391
        %p692 = pneg %p388
        %p693 = pneg %p412
        %p694 = pneg %p409
        %p695 = pneg %p438
        %p696 = pneg %p435
        %p697 = scmp.lt.s32.totalorder %s34, 3
        %s698 = scalar_select %p697, %s34, 3
        %s699 = smul.addr %s698, 8
        %s700 = scalar_lea.vmem %s18, %s699
        %s701 = smul.u32 16, %s34
        %p702 = scmp.lt.s32.totalorder %s701, 63
        %s703 = scalar_select %p702, %s701, 63
        %s704 = smul.addr %s703, 2
        %s705 = smul.addr %s704, 4
        %s706 = scalar_lea.vmem %s0, %s705
        %s707 = smul.u32 16, %s34
        %p708 = scmp.lt.s32.totalorder %s34, 3
        %s709 = scalar_select %p708, %s34, 3
        %s710 = smul.addr %s709, 8
        %s711 = scalar_lea.vmem %s18, %s710
        %v712 = vld [vmem:[%s1] sm:$0xff]
        %v713 = vld [vmem:[%s1 + $0x8] sm:$0xff]
        %v714 = vld [vmem:[%s1 + $0x10] sm:$0xff]
        %v715 = vld [vmem:[%s1 + $0x18] sm:$0xff]
        %v716 = vld [vmem:[%s1 + $0x20] sm:$0xff]
        %v717 = vld [vmem:[%s1 + $0x28] sm:$0xff]
        %v718 = vld [vmem:[%s1 + $0x30] sm:$0xff]
        %v719 = vld [vmem:[%s1 + $0x38] sm:$0xff]
        %v720 = vld [vmem:[%s1 + $0x40] sm:$0xff]
        %v721 = vld [vmem:[%s1 + $0x48] sm:$0xff]
        %v722 = vld [vmem:[%s1 + $0x50] sm:$0xff]
        %v723 = vld [vmem:[%s1 + $0x58] sm:$0xff]
        %v724 = vld [vmem:[%s1 + $0x60] sm:$0xff]
        %v725 = vld [vmem:[%s1 + $0x68] sm:$0xff]
        %v726 = vld [vmem:[%s1 + $0x70] sm:$0xff]
        %v727 = vld [vmem:[%s1 + $0x78] sm:$0xff]
        %v728 = vld [vmem:[%s1 + $0x80] sm:$0xff]
        %v729 = vld [vmem:[%s1 + $0x88] sm:$0xff]
        %v730 = vld [vmem:[%s1 + $0x90] sm:$0xff]
        %v731 = vld [vmem:[%s1 + $0x98] sm:$0xff]
        %v732 = vld [vmem:[%s1 + $0xa0] sm:$0xff]
        %v733 = vld [vmem:[%s1 + $0xa8] sm:$0xff]
        %v734 = vld [vmem:[%s1 + $0xb0] sm:$0xff]
        %v735 = vld [vmem:[%s1 + $0xb8] sm:$0xff]
        %v736 = vld [vmem:[%s1 + $0xc0] sm:$0xff]
        %v737 = vld [vmem:[%s1 + $0xc8] sm:$0xff]
        %v738 = vld [vmem:[%s1 + $0xd0] sm:$0xff]
        %v739 = vld [vmem:[%s1 + $0xd8] sm:$0xff]
        %v740 = vld [vmem:[%s1 + $0xe0] sm:$0xff]
        %v741 = vld [vmem:[%s1 + $0xe8] sm:$0xff]
        %v742 = vld [vmem:[%s1 + $0xf0] sm:$0xff]
        %v743 = vld [vmem:[%s1 + $0xf8] sm:$0xff]
        %v744 = vld [vmem:[#allocation2] sm:$0xf]
        %v745 = vld [vmem:[#allocation2 + $0x4] sm:$0xf]
        %v746 = vld [vmem:[#allocation2 + $0x8] sm:$0xf]
        %v747 = vld [vmem:[#allocation2 + $0xc] sm:$0xf]
        %v748 = vld [vmem:[#allocation2 + $0x10] sm:$0xf]
        %v749 = vld [vmem:[#allocation2 + $0x14] sm:$0xf]
        %v750 = vld [vmem:[#allocation2 + $0x18] sm:$0xf]
        %v751 = vld [vmem:[#allocation2 + $0x1c] sm:$0xf]
        %v752 = vld [vmem:[#allocation2 + $0x20] sm:$0xf]
        %v753 = vld [vmem:[#allocation2 + $0x24] sm:$0xf]
        %v754 = vld [vmem:[#allocation2 + $0x28] sm:$0xf]
        %v755 = vld [vmem:[#allocation2 + $0x2c] sm:$0xf]
        %v756 = vld [vmem:[#allocation2 + $0x30] sm:$0xf]
        %v757 = vld [vmem:[#allocation2 + $0x34] sm:$0xf]
        %v758 = vld [vmem:[#allocation2 + $0x38] sm:$0xf]
        %v759 = vld [vmem:[#allocation2 + $0x3c] sm:$0xf]
        %v760 = vld [vmem:[#allocation4] sm:$0xf]
        %v761 = vld [vmem:[#allocation4 + $0x4] sm:$0xf]
        %v762 = vld [vmem:[#allocation4 + $0x8] sm:$0xf]
        %v763 = vld [vmem:[#allocation4 + $0xc] sm:$0xf]
        %v764 = vld [vmem:[#allocation4 + $0x10] sm:$0xf]
        %v765 = vld [vmem:[#allocation4 + $0x14] sm:$0xf]
        %v766 = vld [vmem:[#allocation4 + $0x18] sm:$0xf]
        %v767 = vld [vmem:[#allocation4 + $0x1c] sm:$0xf]
        %v768 = vld [vmem:[#allocation4 + $0x20] sm:$0xf]
        %v769 = vld [vmem:[#allocation4 + $0x24] sm:$0xf]
        %v770 = vld [vmem:[#allocation4 + $0x28] sm:$0xf]
        %v771 = vld [vmem:[#allocation4 + $0x2c] sm:$0xf]
        %v772 = vld [vmem:[#allocation4 + $0x30] sm:$0xf]
        %v773 = vld [vmem:[#allocation4 + $0x34] sm:$0xf]
        %v774 = vld [vmem:[#allocation4 + $0x38] sm:$0xf]
        %v775 = vld [vmem:[#allocation4 + $0x3c] sm:$0xf]
        %v776 = vld [vmem:[#allocation6] sm:$0xf]
        %v777 = vld [vmem:[#allocation6 + $0x4] sm:$0xf]
        %v778 = vld [vmem:[#allocation6 + $0x8] sm:$0xf]
        %v779 = vld [vmem:[#allocation6 + $0xc] sm:$0xf]
        %v780 = vld [vmem:[#allocation6 + $0x10] sm:$0xf]
        %v781 = vld [vmem:[#allocation6 + $0x14] sm:$0xf]
        %v782 = vld [vmem:[#allocation6 + $0x18] sm:$0xf]
        %v783 = vld [vmem:[#allocation6 + $0x1c] sm:$0xf]
        %v784 = vld [vmem:[#allocation6 + $0x20] sm:$0xf]
        %v785 = vld [vmem:[#allocation6 + $0x24] sm:$0xf]
        %v786 = vld [vmem:[#allocation6 + $0x28] sm:$0xf]
        %v787 = vld [vmem:[#allocation6 + $0x2c] sm:$0xf]
        %v788 = vld [vmem:[#allocation6 + $0x30] sm:$0xf]
        %v789 = vld [vmem:[#allocation6 + $0x34] sm:$0xf]
        %v790 = vld [vmem:[#allocation6 + $0x38] sm:$0xf]
        %v791 = vld [vmem:[#allocation6 + $0x3c] sm:$0xf]
        %v792 = vld [vmem:[#allocation7] sm:$0xf]
        %v793 = vld [vmem:[#allocation7 + $0x4] sm:$0xf]
        %v794 = vld [vmem:[#allocation7 + $0x8] sm:$0xf]
        %v795 = vld [vmem:[#allocation7 + $0xc] sm:$0xf]
        %v796 = vld [vmem:[#allocation7 + $0x10] sm:$0xf]
        %v797 = vld [vmem:[#allocation7 + $0x14] sm:$0xf]
        %v798 = vld [vmem:[#allocation7 + $0x18] sm:$0xf]
        %v799 = vld [vmem:[#allocation7 + $0x1c] sm:$0xf]
        %v800 = vld [vmem:[#allocation7 + $0x20] sm:$0xf]
        %v801 = vld [vmem:[#allocation7 + $0x24] sm:$0xf]
        %v802 = vld [vmem:[#allocation7 + $0x28] sm:$0xf]
        %v803 = vld [vmem:[#allocation7 + $0x2c] sm:$0xf]
        %v804 = vld [vmem:[#allocation7 + $0x30] sm:$0xf]
        %v805 = vld [vmem:[#allocation7 + $0x34] sm:$0xf]
        %v806 = vld [vmem:[#allocation7 + $0x38] sm:$0xf]
        %v807 = vld [vmem:[#allocation7 + $0x3c] sm:$0xf]
        %v808 = vld [vmem:[%s6] sm:$0xff]
        %v809 = vld [vmem:[%s6 + $0x8] sm:$0xff]
        %v810 = vld [vmem:[%s6 + $0x10] sm:$0xff]
        %v811 = vld [vmem:[%s6 + $0x18] sm:$0xff]
        %v812 = vld [vmem:[%s6 + $0x20] sm:$0xff]
        %v813 = vld [vmem:[%s6 + $0x28] sm:$0xff]
        %v814 = vld [vmem:[%s6 + $0x30] sm:$0xff]
        %v815 = vld [vmem:[%s6 + $0x38] sm:$0xff]
        %v816 = vld [vmem:[%s6 + $0x40] sm:$0xff]
        %v817 = vld [vmem:[%s6 + $0x48] sm:$0xff]
        %v818 = vld [vmem:[%s6 + $0x50] sm:$0xff]
        %v819 = vld [vmem:[%s6 + $0x58] sm:$0xff]
        %v820 = vld [vmem:[%s6 + $0x60] sm:$0xff]
        %v821 = vld [vmem:[%s6 + $0x68] sm:$0xff]
        %v822 = vld [vmem:[%s6 + $0x70] sm:$0xff]
        %v823 = vld [vmem:[%s6 + $0x78] sm:$0xff]
        %v824 = vld [vmem:[%s7] sm:$0xff]
        %v825 = vld [vmem:[%s7 + $0x8] sm:$0x7f]
        %v826 = vld [vmem:[%s8] sm:$0x3]
        %v827 = vld [vmem:[#allocation9] sm:$0xf]
        %v828 = vld [vmem:[#allocation9 + $0x4] sm:$0xf]
        %v829 = vld [vmem:[#allocation9 + $0x8] sm:$0xf]
        %v830 = vld [vmem:[#allocation9 + $0xc] sm:$0xf]
        %v831 = vld [vmem:[#allocation9 + $0x10] sm:$0xf]
        %v832 = vld [vmem:[#allocation9 + $0x14] sm:$0xf]
        %v833 = vld [vmem:[#allocation9 + $0x18] sm:$0xf]
        %v834 = vld [vmem:[#allocation9 + $0x1c] sm:$0xf]
        %v835 = vld [vmem:[#allocation9 + $0x20] sm:$0xf]
        %v836 = vld [vmem:[#allocation9 + $0x24] sm:$0xf]
        %v837 = vld [vmem:[#allocation9 + $0x28] sm:$0xf]
        %v838 = vld [vmem:[#allocation9 + $0x2c] sm:$0xf]
        %v839 = vld [vmem:[#allocation9 + $0x30] sm:$0xf]
        %v840 = vld [vmem:[#allocation9 + $0x34] sm:$0xf]
        %v841 = vld [vmem:[#allocation9 + $0x38] sm:$0xf]
        %v842 = vld [vmem:[#allocation9 + $0x3c] sm:$0xf]
        %v843 = vld [vmem:[#allocation10] sm:$0xf]
        %v844 = vld [vmem:[#allocation10 + $0x4] sm:$0xf]
        %v845 = vld [vmem:[#allocation10 + $0x8] sm:$0xf]
        %v846 = vld [vmem:[#allocation10 + $0xc] sm:$0xf]
        %v847 = vld [vmem:[#allocation10 + $0x10] sm:$0xf]
        %v848 = vld [vmem:[#allocation10 + $0x14] sm:$0xf]
        %v849 = vld [vmem:[#allocation10 + $0x18] sm:$0xf]
        %v850 = vld [vmem:[#allocation10 + $0x1c] sm:$0xf]
        %v851 = vld [vmem:[#allocation10 + $0x20] sm:$0xf]
        %v852 = vld [vmem:[#allocation10 + $0x24] sm:$0xf]
        %v853 = vld [vmem:[#allocation10 + $0x28] sm:$0xf]
        %v854 = vld [vmem:[#allocation10 + $0x2c] sm:$0xf]
        %v855 = vld [vmem:[#allocation10 + $0x30] sm:$0xf]
        %v856 = vld [vmem:[#allocation10 + $0x34] sm:$0xf]
        %v857 = vld [vmem:[#allocation10 + $0x38] sm:$0xf]
        %v858 = vld [vmem:[#allocation10 + $0x3c] sm:$0xf]
        %v859 = vld [vmem:[#allocation12] sm:$0xf]
        %v860 = vld [vmem:[#allocation12 + $0x4] sm:$0xf]
        %v861 = vld [vmem:[#allocation12 + $0x8] sm:$0xf]
        %v862 = vld [vmem:[#allocation12 + $0xc] sm:$0xf]
        %v863 = vld [vmem:[#allocation12 + $0x10] sm:$0xf]
        %v864 = vld [vmem:[#allocation12 + $0x14] sm:$0xf]
        %v865 = vld [vmem:[#allocation12 + $0x18] sm:$0xf]
        %v866 = vld [vmem:[#allocation12 + $0x1c] sm:$0xf]
        %v867 = vld [vmem:[#allocation12 + $0x20] sm:$0xf]
        %v868 = vld [vmem:[#allocation12 + $0x24] sm:$0xf]
        %v869 = vld [vmem:[#allocation12 + $0x28] sm:$0xf]
        %v870 = vld [vmem:[#allocation12 + $0x2c] sm:$0xf]
        %v871 = vld [vmem:[#allocation12 + $0x30] sm:$0xf]
        %v872 = vld [vmem:[#allocation12 + $0x34] sm:$0xf]
        %v873 = vld [vmem:[#allocation12 + $0x38] sm:$0xf]
        %v874 = vld [vmem:[#allocation12 + $0x3c] sm:$0xf]
        %v875 = vld [vmem:[#allocation13] sm:$0xf]
        %v876 = vld [vmem:[#allocation13 + $0x4] sm:$0xf]
        %v877 = vld [vmem:[#allocation13 + $0x8] sm:$0xf]
        %v878 = vld [vmem:[#allocation13 + $0xc] sm:$0xf]
        %v879 = vld [vmem:[#allocation13 + $0x10] sm:$0xf]
        %v880 = vld [vmem:[#allocation13 + $0x14] sm:$0xf]
        %v881 = vld [vmem:[#allocation13 + $0x18] sm:$0xf]
        %v882 = vld [vmem:[#allocation13 + $0x1c] sm:$0xf]
        %v883 = vld [vmem:[#allocation13 + $0x20] sm:$0xf]
        %v884 = vld [vmem:[#allocation13 + $0x24] sm:$0xf]
        %v885 = vld [vmem:[#allocation13 + $0x28] sm:$0xf]
        %v886 = vld [vmem:[#allocation13 + $0x2c] sm:$0xf]
        %v887 = vld [vmem:[#allocation13 + $0x30] sm:$0xf]
        %v888 = vld [vmem:[#allocation13 + $0x34] sm:$0xf]
        %v889 = vld [vmem:[#allocation13 + $0x38] sm:$0xf]
        %v890 = vld [vmem:[#allocation13 + $0x3c] sm:$0xf]
        %v891 = vld [vmem:[%s13] sm:$0xff]
        %v892 = vld [vmem:[%s13 + $0x8] sm:$0xff]
        %v893 = vld [vmem:[%s13 + $0x10] sm:$0xff]
        %v894 = vld [vmem:[%s13 + $0x18] sm:$0xff]
        %v895 = vld [vmem:[%s13 + $0x20] sm:$0xff]
        %v896 = vld [vmem:[%s13 + $0x28] sm:$0xff]
        %v897 = vld [vmem:[%s13 + $0x30] sm:$0xff]
        %v898 = vld [vmem:[%s13 + $0x38] sm:$0xff]
        %v899 = vld [vmem:[%s13 + $0x40] sm:$0xff]
        %v900 = vld [vmem:[%s13 + $0x48] sm:$0xff]
        %v901 = vld [vmem:[%s13 + $0x50] sm:$0xff]
        %v902 = vld [vmem:[%s13 + $0x58] sm:$0xff]
        %v903 = vld [vmem:[%s13 + $0x60] sm:$0xff]
        %v904 = vld [vmem:[%s13 + $0x68] sm:$0xff]
        %v905 = vld [vmem:[%s13 + $0x70] sm:$0xff]
        %v906 = vld [vmem:[%s13 + $0x78] sm:$0xff]
        %v907 = vld [vmem:[%s14] sm:$0xff]
        %v908 = vld [vmem:[%s14 + $0x8] sm:$0x7f]
        %v909 = vld [vmem:[%s15] sm:$0x3]
        %v910 = vld [vmem:[%s16] sm:$0xff]
        %v911 = vld [vmem:[%s16 + $0x8] sm:$0xff]
        %v912 = vld [vmem:[%s16 + $0x10] sm:$0xff]
        %v913 = vld [vmem:[%s16 + $0x18] sm:$0xff]
        %v914 = vld [vmem:[%s16 + $0x20] sm:$0xff]
        %v915 = vld [vmem:[%s16 + $0x28] sm:$0xff]
        %v916 = vld [vmem:[%s16 + $0x30] sm:$0xff]
        %v917 = vld [vmem:[%s16 + $0x38] sm:$0xff]
        %v918 = vld [vmem:[%s16 + $0x40] sm:$0xff]
        %v919 = vld [vmem:[%s16 + $0x48] sm:$0xff]
        %v920 = vld [vmem:[%s16 + $0x50] sm:$0xff]
        %v921 = vld [vmem:[%s16 + $0x58] sm:$0xff]
        %v922 = vld [vmem:[%s16 + $0x60] sm:$0xff]
        %v923 = vld [vmem:[%s16 + $0x68] sm:$0xff]
        %v924 = vld [vmem:[%s16 + $0x70] sm:$0xff]
        %v925 = vld [vmem:[%s16 + $0x78] sm:$0xff]
        %v926 = vld [vmem:[%s17] sm:$0x3]
        %v927 = vld [vmem:[%s706] sm:$0xff]
        %v928 = vld [vmem:[%s706 + $0x8] sm:$0xff]
        %v929 = vld [vmem:[%s706 + $0x10] sm:$0xff]
        %v930 = vld [vmem:[%s706 + $0x18] sm:$0xff]
        %v931 = vld [vmem:[%s706 + $0x20] sm:$0xff]
        %v932 = vld [vmem:[%s706 + $0x28] sm:$0xff]
        %v933 = vld [vmem:[%s706 + $0x30] sm:$0xff]
        %v934 = vld [vmem:[%s706 + $0x38] sm:$0xff]
        %v935 = vld [vmem:[%s706 + $0x40] sm:$0xff]
        %v936 = vld [vmem:[%s706 + $0x48] sm:$0xff]
        %v937 = vld [vmem:[%s706 + $0x50] sm:$0xff]
        %v938 = vld [vmem:[%s706 + $0x58] sm:$0xff]
        %v939 = vld [vmem:[%s706 + $0x60] sm:$0xff]
        %v940 = vld [vmem:[%s706 + $0x68] sm:$0xff]
        %v941 = vld [vmem:[%s706 + $0x70] sm:$0xff]
        %v942 = vld [vmem:[%s706 + $0x78] sm:$0xff]
        %v943 = vunpack.c.l.bf16 %v927
        %v944 = vunpack.c.h.bf16 %v927
        %v945 = vunpack.c.l.bf16 %v928
        %v946 = vunpack.c.h.bf16 %v928
        %v947 = vunpack.c.l.bf16 %v929
        %v948 = vunpack.c.h.bf16 %v929
        %v949 = vunpack.c.l.bf16 %v930
        %v950 = vunpack.c.h.bf16 %v930
        %v951 = vunpack.c.l.bf16 %v931
        %v952 = vunpack.c.h.bf16 %v931
        %v953 = vunpack.c.l.bf16 %v932
        %v954 = vunpack.c.h.bf16 %v932
        %v955 = vunpack.c.l.bf16 %v933
        %v956 = vunpack.c.h.bf16 %v933
        %v957 = vunpack.c.l.bf16 %v934
        %v958 = vunpack.c.h.bf16 %v934
        %v959 = vunpack.c.l.bf16 %v935
        %v960 = vunpack.c.h.bf16 %v935
        %v961 = vunpack.c.l.bf16 %v936
        %v962 = vunpack.c.h.bf16 %v936
        %v963 = vunpack.c.l.bf16 %v937
        %v964 = vunpack.c.h.bf16 %v937
        %v965 = vunpack.c.l.bf16 %v938
        %v966 = vunpack.c.h.bf16 %v938
        %v967 = vunpack.c.l.bf16 %v939
        %v968 = vunpack.c.h.bf16 %v939
        %v969 = vunpack.c.l.bf16 %v940
        %v970 = vunpack.c.h.bf16 %v940
        %v971 = vunpack.c.l.bf16 %v941
        %v972 = vunpack.c.h.bf16 %v941
        %v973 = vunpack.c.l.bf16 %v942
        %v974 = vunpack.c.h.bf16 %v942
        %v975 = vmul.f32 %v943, %v943
        %v976 = vmul.f32 %v944, %v944
        %v977 = vmul.f32 %v945, %v945
        %v978 = vmul.f32 %v946, %v946
        %v979 = vmul.f32 %v947, %v947
        %v980 = vmul.f32 %v948, %v948
        %v981 = vmul.f32 %v949, %v949
        %v982 = vmul.f32 %v950, %v950
        %v983 = vmul.f32 %v951, %v951
        %v984 = vmul.f32 %v952, %v952
        %v985 = vmul.f32 %v953, %v953
        %v986 = vmul.f32 %v954, %v954
        %v987 = vmul.f32 %v955, %v955
        %v988 = vmul.f32 %v956, %v956
        %v989 = vmul.f32 %v957, %v957
        %v990 = vmul.f32 %v958, %v958
        %v991 = vmul.f32 %v959, %v959
        %v992 = vmul.f32 %v960, %v960
        %v993 = vmul.f32 %v961, %v961
        %v994 = vmul.f32 %v962, %v962
        %v995 = vmul.f32 %v963, %v963
        %v996 = vmul.f32 %v964, %v964
        %v997 = vmul.f32 %v965, %v965
        %v998 = vmul.f32 %v966, %v966
        %v999 = vmul.f32 %v967, %v967
        %v1000 = vmul.f32 %v968, %v968
        %v1001 = vmul.f32 %v969, %v969
        %v1002 = vmul.f32 %v970, %v970
        %v1003 = vmul.f32 %v971, %v971
        %v1004 = vmul.f32 %v972, %v972
        %v1005 = vmul.f32 %v973, %v973
        %v1006 = vmul.f32 %v974, %v974
        %v1007 = vadd.f32 %v975, %v976
        %1008 = vadd.xlane.f32.xlu0 %v1007
        %v1009 = vpop.xlane.xlu0 %1008
        %v1010 = vadd.f32 %v977, %v978
        %1011 = vadd.xlane.f32.xlu0 %v1010
        %v1012 = vpop.xlane.xlu0 %1011
        %v1013 = vadd.f32 %v979, %v980
        %1014 = vadd.xlane.f32.xlu0 %v1013
        %v1015 = vpop.xlane.xlu0 %1014
        %v1016 = vadd.f32 %v981, %v982
        %1017 = vadd.xlane.f32.xlu0 %v1016
        %v1018 = vpop.xlane.xlu0 %1017
        %v1019 = vadd.f32 %v983, %v984
        %1020 = vadd.xlane.f32.xlu0 %v1019
        %v1021 = vpop.xlane.xlu0 %1020
        %v1022 = vadd.f32 %v985, %v986
        %1023 = vadd.xlane.f32.xlu0 %v1022
        %v1024 = vpop.xlane.xlu0 %1023
        %v1025 = vadd.f32 %v987, %v988
        %1026 = vadd.xlane.f32.xlu0 %v1025
        %v1027 = vpop.xlane.xlu0 %1026
        %v1028 = vadd.f32 %v989, %v990
        %1029 = vadd.xlane.f32.xlu0 %v1028
        %v1030 = vpop.xlane.xlu0 %1029
        %v1031 = vadd.f32 %v991, %v992
        %1032 = vadd.xlane.f32.xlu0 %v1031
        %v1033 = vpop.xlane.xlu0 %1032
        %v1034 = vadd.f32 %v993, %v994
        %1035 = vadd.xlane.f32.xlu0 %v1034
        %v1036 = vpop.xlane.xlu0 %1035
        %v1037 = vadd.f32 %v995, %v996
        %1038 = vadd.xlane.f32.xlu0 %v1037
        %v1039 = vpop.xlane.xlu0 %1038
        %v1040 = vadd.f32 %v997, %v998
        %1041 = vadd.xlane.f32.xlu0 %v1040
        %v1042 = vpop.xlane.xlu0 %1041
        %v1043 = vadd.f32 %v999, %v1000
        %1044 = vadd.xlane.f32.xlu0 %v1043
        %v1045 = vpop.xlane.xlu0 %1044
        %v1046 = vadd.f32 %v1001, %v1002
        %1047 = vadd.xlane.f32.xlu0 %v1046
        %v1048 = vpop.xlane.xlu0 %1047
        %v1049 = vadd.f32 %v1003, %v1004
        %1050 = vadd.xlane.f32.xlu0 %v1049
        %v1051 = vpop.xlane.xlu0 %1050
        %v1052 = vadd.f32 %v1005, %v1006
        %1053 = vadd.xlane.f32.xlu0 %v1052
        %v1054 = vpop.xlane.xlu0 %1053
        %v1055 = vrsqrt.pop %v1009
        %v1056 = vmul.f32 %v1055, %v1009
        %v1057 = vmul.f32 %v1056, %v1055
        %v1058 = vmul.f32 0.5, %v1057
        %v1059 = vsub.f32 1.5, %v1058
        %v1060 = vmul.f32 %v1055, %v1059
        %vm1061 = vweird.f32 %v1009
        %vm1062 = vweird.f32 %v1055
        %vm1063 = vmor %vm1061, %vm1062
        %v1064 = vsel %vm1063, %v1055, %v1060
        %v1065 = vrsqrt.pop %v1012
        %v1066 = vmul.f32 %v1065, %v1012
        %v1067 = vmul.f32 %v1066, %v1065
        %v1068 = vmul.f32 0.5, %v1067
        %v1069 = vsub.f32 1.5, %v1068
        %v1070 = vmul.f32 %v1065, %v1069
        %vm1071 = vweird.f32 %v1012
        %vm1072 = vweird.f32 %v1065
        %vm1073 = vmor %vm1071, %vm1072
        %v1074 = vsel %vm1073, %v1065, %v1070
        %v1075 = vrsqrt.pop %v1015
        %v1076 = vmul.f32 %v1075, %v1015
        %v1077 = vmul.f32 %v1076, %v1075
        %v1078 = vmul.f32 0.5, %v1077
        %v1079 = vsub.f32 1.5, %v1078
        %v1080 = vmul.f32 %v1075, %v1079
        %vm1081 = vweird.f32 %v1015
        %vm1082 = vweird.f32 %v1075
        %vm1083 = vmor %vm1081, %vm1082
        %v1084 = vsel %vm1083, %v1075, %v1080
        %v1085 = vrsqrt.pop %v1018
        %v1086 = vmul.f32 %v1085, %v1018
        %v1087 = vmul.f32 %v1086, %v1085
        %v1088 = vmul.f32 0.5, %v1087
        %v1089 = vsub.f32 1.5, %v1088
        %v1090 = vmul.f32 %v1085, %v1089
        %vm1091 = vweird.f32 %v1018
        %vm1092 = vweird.f32 %v1085
        %vm1093 = vmor %vm1091, %vm1092
        %v1094 = vsel %vm1093, %v1085, %v1090
        %v1095 = vrsqrt.pop %v1021
        %v1096 = vmul.f32 %v1095, %v1021
        %v1097 = vmul.f32 %v1096, %v1095
        %v1098 = vmul.f32 0.5, %v1097
        %v1099 = vsub.f32 1.5, %v1098
        %v1100 = vmul.f32 %v1095, %v1099
        %vm1101 = vweird.f32 %v1021
        %vm1102 = vweird.f32 %v1095
        %vm1103 = vmor %vm1101, %vm1102
        %v1104 = vsel %vm1103, %v1095, %v1100
        %v1105 = vrsqrt.pop %v1024
        %v1106 = vmul.f32 %v1105, %v1024
        %v1107 = vmul.f32 %v1106, %v1105
        %v1108 = vmul.f32 0.5, %v1107
        %v1109 = vsub.f32 1.5, %v1108
        %v1110 = vmul.f32 %v1105, %v1109
        %vm1111 = vweird.f32 %v1024
        %vm1112 = vweird.f32 %v1105
        %vm1113 = vmor %vm1111, %vm1112
        %v1114 = vsel %vm1113, %v1105, %v1110
        %v1115 = vrsqrt.pop %v1027
        %v1116 = vmul.f32 %v1115, %v1027
        %v1117 = vmul.f32 %v1116, %v1115
        %v1118 = vmul.f32 0.5, %v1117
        %v1119 = vsub.f32 1.5, %v1118
        %v1120 = vmul.f32 %v1115, %v1119
        %vm1121 = vweird.f32 %v1027
        %vm1122 = vweird.f32 %v1115
        %vm1123 = vmor %vm1121, %vm1122
        %v1124 = vsel %vm1123, %v1115, %v1120
        %v1125 = vrsqrt.pop %v1030
        %v1126 = vmul.f32 %v1125, %v1030
        %v1127 = vmul.f32 %v1126, %v1125
        %v1128 = vmul.f32 0.5, %v1127
        %v1129 = vsub.f32 1.5, %v1128
        %v1130 = vmul.f32 %v1125, %v1129
        %vm1131 = vweird.f32 %v1030
        %vm1132 = vweird.f32 %v1125
        %vm1133 = vmor %vm1131, %vm1132
        %v1134 = vsel %vm1133, %v1125, %v1130
        %v1135 = vrsqrt.pop %v1033
        %v1136 = vmul.f32 %v1135, %v1033
        %v1137 = vmul.f32 %v1136, %v1135
        %v1138 = vmul.f32 0.5, %v1137
        %v1139 = vsub.f32 1.5, %v1138
        %v1140 = vmul.f32 %v1135, %v1139
        %vm1141 = vweird.f32 %v1033
        %vm1142 = vweird.f32 %v1135
        %vm1143 = vmor %vm1141, %vm1142
        %v1144 = vsel %vm1143, %v1135, %v1140
        %v1145 = vrsqrt.pop %v1036
        %v1146 = vmul.f32 %v1145, %v1036
        %v1147 = vmul.f32 %v1146, %v1145
        %v1148 = vmul.f32 0.5, %v1147
        %v1149 = vsub.f32 1.5, %v1148
        %v1150 = vmul.f32 %v1145, %v1149
        %vm1151 = vweird.f32 %v1036
        %vm1152 = vweird.f32 %v1145
        %vm1153 = vmor %vm1151, %vm1152
        %v1154 = vsel %vm1153, %v1145, %v1150
        %v1155 = vrsqrt.pop %v1039
        %v1156 = vmul.f32 %v1155, %v1039
        %v1157 = vmul.f32 %v1156, %v1155
        %v1158 = vmul.f32 0.5, %v1157
        %v1159 = vsub.f32 1.5, %v1158
        %v1160 = vmul.f32 %v1155, %v1159
        %vm1161 = vweird.f32 %v1039
        %vm1162 = vweird.f32 %v1155
        %vm1163 = vmor %vm1161, %vm1162
        %v1164 = vsel %vm1163, %v1155, %v1160
        %v1165 = vrsqrt.pop %v1042
        %v1166 = vmul.f32 %v1165, %v1042
        %v1167 = vmul.f32 %v1166, %v1165
        %v1168 = vmul.f32 0.5, %v1167
        %v1169 = vsub.f32 1.5, %v1168
        %v1170 = vmul.f32 %v1165, %v1169
        %vm1171 = vweird.f32 %v1042
        %vm1172 = vweird.f32 %v1165
        %vm1173 = vmor %vm1171, %vm1172
        %v1174 = vsel %vm1173, %v1165, %v1170
        %v1175 = vrsqrt.pop %v1045
        %v1176 = vmul.f32 %v1175, %v1045
        %v1177 = vmul.f32 %v1176, %v1175
        %v1178 = vmul.f32 0.5, %v1177
        %v1179 = vsub.f32 1.5, %v1178
        %v1180 = vmul.f32 %v1175, %v1179
        %vm1181 = vweird.f32 %v1045
        %vm1182 = vweird.f32 %v1175
        %vm1183 = vmor %vm1181, %vm1182
        %v1184 = vsel %vm1183, %v1175, %v1180
        %v1185 = vrsqrt.pop %v1048
        %v1186 = vmul.f32 %v1185, %v1048
        %v1187 = vmul.f32 %v1186, %v1185
        %v1188 = vmul.f32 0.5, %v1187
        %v1189 = vsub.f32 1.5, %v1188
        %v1190 = vmul.f32 %v1185, %v1189
        %vm1191 = vweird.f32 %v1048
        %vm1192 = vweird.f32 %v1185
        %vm1193 = vmor %vm1191, %vm1192
        %v1194 = vsel %vm1193, %v1185, %v1190
        %v1195 = vrsqrt.pop %v1051
        %v1196 = vmul.f32 %v1195, %v1051
        %v1197 = vmul.f32 %v1196, %v1195
        %v1198 = vmul.f32 0.5, %v1197
        %v1199 = vsub.f32 1.5, %v1198
        %v1200 = vmul.f32 %v1195, %v1199
        %vm1201 = vweird.f32 %v1051
        %vm1202 = vweird.f32 %v1195
        %vm1203 = vmor %vm1201, %vm1202
        %v1204 = vsel %vm1203, %v1195, %v1200
        %v1205 = vrsqrt.pop %v1054
        %v1206 = vmul.f32 %v1205, %v1054
        %v1207 = vmul.f32 %v1206, %v1205
        %v1208 = vmul.f32 0.5, %v1207
        %v1209 = vsub.f32 1.5, %v1208
        %v1210 = vmul.f32 %v1205, %v1209
        %vm1211 = vweird.f32 %v1054
        %vm1212 = vweird.f32 %v1205
        %vm1213 = vmor %vm1211, %vm1212
        %v1214 = vsel %vm1213, %v1205, %v1210
        %v1215 = vmul.f32 %v943, %v1064
        %v1216 = vmul.f32 %v944, %v1064
        %v1217 = vmul.f32 %v945, %v1074
        %v1218 = vmul.f32 %v946, %v1074
        %v1219 = vmul.f32 %v947, %v1084
        %v1220 = vmul.f32 %v948, %v1084
        %v1221 = vmul.f32 %v949, %v1094
        %v1222 = vmul.f32 %v950, %v1094
        %v1223 = vmul.f32 %v951, %v1104
        %v1224 = vmul.f32 %v952, %v1104
        %v1225 = vmul.f32 %v953, %v1114
        %v1226 = vmul.f32 %v954, %v1114
        %v1227 = vmul.f32 %v955, %v1124
        %v1228 = vmul.f32 %v956, %v1124
        %v1229 = vmul.f32 %v957, %v1134
        %v1230 = vmul.f32 %v958, %v1134
        %v1231 = vmul.f32 %v959, %v1144
        %v1232 = vmul.f32 %v960, %v1144
        %v1233 = vmul.f32 %v961, %v1154
        %v1234 = vmul.f32 %v962, %v1154
        %v1235 = vmul.f32 %v963, %v1164
        %v1236 = vmul.f32 %v964, %v1164
        %v1237 = vmul.f32 %v965, %v1174
        %v1238 = vmul.f32 %v966, %v1174
        %v1239 = vmul.f32 %v967, %v1184
        %v1240 = vmul.f32 %v968, %v1184
        %v1241 = vmul.f32 %v969, %v1194
        %v1242 = vmul.f32 %v970, %v1194
        %v1243 = vmul.f32 %v971, %v1204
        %v1244 = vmul.f32 %v972, %v1204
        %v1245 = vmul.f32 %v973, %v1214
        %v1246 = vmul.f32 %v974, %v1214
        %v1247 = vpack.c.bf16 %v1217, %v1215
        %v1248 = vpack.c.bf16 %v1218, %v1216
        %v1249 = vpack.c.bf16 %v1221, %v1219
        %v1250 = vpack.c.bf16 %v1222, %v1220
        %v1251 = vpack.c.bf16 %v1225, %v1223
        %v1252 = vpack.c.bf16 %v1226, %v1224
        %v1253 = vpack.c.bf16 %v1229, %v1227
        %v1254 = vpack.c.bf16 %v1230, %v1228
        %v1255 = vpack.c.bf16 %v1233, %v1231
        %v1256 = vpack.c.bf16 %v1234, %v1232
        %v1257 = vpack.c.bf16 %v1237, %v1235
        %v1258 = vpack.c.bf16 %v1238, %v1236
        %v1259 = vpack.c.bf16 %v1241, %v1239
        %v1260 = vpack.c.bf16 %v1242, %v1240
        %v1261 = vpack.c.bf16 %v1245, %v1243
        %v1262 = vpack.c.bf16 %v1246, %v1244
        %v1295 = vunpack.c.l.b16 %v712
        %v1296 = vunpack.c.h.b16 %v712
        %v1297 = vunpack.c.l.b16 %v713
        %v1298 = vunpack.c.h.b16 %v713
        %v1299 = vunpack.c.l.b16 %v714
        %v1300 = vunpack.c.h.b16 %v714
        %v1301 = vunpack.c.l.b16 %v715
        %v1302 = vunpack.c.h.b16 %v715
        %v1303 = vunpack.c.l.b16 %v716
        %v1304 = vunpack.c.h.b16 %v716
        %v1305 = vunpack.c.l.b16 %v717
        %v1306 = vunpack.c.h.b16 %v717
        %v1307 = vunpack.c.l.b16 %v718
        %v1308 = vunpack.c.h.b16 %v718
        %v1309 = vunpack.c.l.b16 %v719
        %v1310 = vunpack.c.h.b16 %v719
        %v1311 = vunpack.c.l.b16 %v720
        %v1312 = vunpack.c.h.b16 %v720
        %v1313 = vunpack.c.l.b16 %v721
        %v1314 = vunpack.c.h.b16 %v721
        %v1315 = vunpack.c.l.b16 %v722
        %v1316 = vunpack.c.h.b16 %v722
        %v1317 = vunpack.c.l.b16 %v723
        %v1318 = vunpack.c.h.b16 %v723
        %v1319 = vunpack.c.l.b16 %v724
        %v1320 = vunpack.c.h.b16 %v724
        %v1321 = vunpack.c.l.b16 %v725
        %v1322 = vunpack.c.h.b16 %v725
        %v1323 = vunpack.c.l.b16 %v726
        %v1324 = vunpack.c.h.b16 %v726
        %v1325 = vunpack.c.l.b16 %v727
        %v1326 = vunpack.c.h.b16 %v727
        %v1327 = vunpack.c.l.b16 %v728
        %v1328 = vunpack.c.h.b16 %v728
        %v1329 = vunpack.c.l.b16 %v729
        %v1330 = vunpack.c.h.b16 %v729
        %v1331 = vunpack.c.l.b16 %v730
        %v1332 = vunpack.c.h.b16 %v730
        %v1333 = vunpack.c.l.b16 %v731
        %v1334 = vunpack.c.h.b16 %v731
        %v1335 = vunpack.c.l.b16 %v732
        %v1336 = vunpack.c.h.b16 %v732
        %v1337 = vunpack.c.l.b16 %v733
        %v1338 = vunpack.c.h.b16 %v733
        %v1339 = vunpack.c.l.b16 %v734
        %v1340 = vunpack.c.h.b16 %v734
        %v1341 = vunpack.c.l.b16 %v735
        %v1342 = vunpack.c.h.b16 %v735
        %v1343 = vunpack.c.l.b16 %v736
        %v1344 = vunpack.c.h.b16 %v736
        %v1345 = vunpack.c.l.b16 %v737
        %v1346 = vunpack.c.h.b16 %v737
        %v1347 = vunpack.c.l.b16 %v738
        %v1348 = vunpack.c.h.b16 %v738
        %v1349 = vunpack.c.l.b16 %v739
        %v1350 = vunpack.c.h.b16 %v739
        %v1351 = vunpack.c.l.b16 %v740
        %v1352 = vunpack.c.h.b16 %v740
        %v1353 = vunpack.c.l.b16 %v741
        %v1354 = vunpack.c.h.b16 %v741
        %v1355 = vunpack.c.l.b16 %v742
        %v1356 = vunpack.c.h.b16 %v742
        %v1357 = vunpack.c.l.b16 %v743
        %v1358 = vunpack.c.h.b16 %v743
        %v1359 = vpack.c.b16 %v1297, %v1295
        %v1360 = vpack.c.b16 %v1298, %v1296
        %v1361 = vpack.c.b16 %v1301, %v1299
        %v1362 = vpack.c.b16 %v1302, %v1300
        %v1363 = vpack.c.b16 %v1305, %v1303
        %v1364 = vpack.c.b16 %v1306, %v1304
        %v1365 = vpack.c.b16 %v1309, %v1307
        %v1366 = vpack.c.b16 %v1310, %v1308
        %v1367 = vpack.c.b16 %v1313, %v1311
        %v1368 = vpack.c.b16 %v1314, %v1312
        %v1369 = vpack.c.b16 %v1317, %v1315
        %v1370 = vpack.c.b16 %v1318, %v1316
        %v1371 = vpack.c.b16 %v1321, %v1319
        %v1372 = vpack.c.b16 %v1322, %v1320
        %v1373 = vpack.c.b16 %v1325, %v1323
        %v1374 = vpack.c.b16 %v1326, %v1324
        %v1375 = vpack.c.b16 %v1329, %v1327
        %v1376 = vpack.c.b16 %v1330, %v1328
        %v1377 = vpack.c.b16 %v1333, %v1331
        %v1378 = vpack.c.b16 %v1334, %v1332
        %v1379 = vpack.c.b16 %v1337, %v1335
        %v1380 = vpack.c.b16 %v1338, %v1336
        %v1381 = vpack.c.b16 %v1341, %v1339
        %v1382 = vpack.c.b16 %v1342, %v1340
        %v1383 = vpack.c.b16 %v1345, %v1343
        %v1384 = vpack.c.b16 %v1346, %v1344
        %v1385 = vpack.c.b16 %v1349, %v1347
        %v1386 = vpack.c.b16 %v1350, %v1348
        %v1387 = vpack.c.b16 %v1353, %v1351
        %v1388 = vpack.c.b16 %v1354, %v1352
        %v1389 = vpack.c.b16 %v1357, %v1355
        %v1390 = vpack.c.b16 %v1358, %v1356
        %1423 = vmatpush.bf16.msra.mxu0 %v1373
        %1424 = vmatpush.bf16.msra.mxu0 %v1371
        %1425 = vmatpush.bf16.msra.mxu0 %v1369
        %1426 = vmatpush.bf16.msra.mxu0 %v1367
        %1427 = vmatpush.bf16.msra.mxu0 %v1365
        %1428 = vmatpush.bf16.msra.mxu0 %v1363
        %1429 = vmatpush.bf16.msra.mxu0 %v1361
        %1430 = vmatpush.bf16.msra.mxu0 %v1359
        %1431 = vmatmul.bf16.gmra.mxu0 %v1247
        %v1432 = vpop.f32.mrf.mxu0
        %v1433 = vadd.f32 0.0, %v1432
        %v1434 = vpop.f32.mrf.mxu0
        %v1435 = vadd.f32 0.0, %v1434
        %1436 = vmatmul.bf16.gmra.mxu0 %v1249
        %v1437 = vpop.f32.mrf.mxu0
        %v1438 = vadd.f32 0.0, %v1437
        %v1439 = vpop.f32.mrf.mxu0
        %v1440 = vadd.f32 0.0, %v1439
        %1441 = vmatmul.bf16.gmra.mxu0 %v1251
        %v1442 = vpop.f32.mrf.mxu0
        %v1443 = vadd.f32 0.0, %v1442
        %v1444 = vpop.f32.mrf.mxu0
        %v1445 = vadd.f32 0.0, %v1444
        %1446 = vmatmul.bf16.gmra.mxu0 %v1253
        %v1447 = vpop.f32.mrf.mxu0
        %v1448 = vadd.f32 0.0, %v1447
        %v1449 = vpop.f32.mrf.mxu0
        %v1450 = vadd.f32 0.0, %v1449
        %1451 = vmatmul.bf16.gmra.mxu0 %v1255
        %v1452 = vpop.f32.mrf.mxu0
        %v1453 = vadd.f32 0.0, %v1452
        %v1454 = vpop.f32.mrf.mxu0
        %v1455 = vadd.f32 0.0, %v1454
        %1456 = vmatmul.bf16.gmra.mxu0 %v1257
        %v1457 = vpop.f32.mrf.mxu0
        %v1458 = vadd.f32 0.0, %v1457
        %v1459 = vpop.f32.mrf.mxu0
        %v1460 = vadd.f32 0.0, %v1459
        %1461 = vmatmul.bf16.gmra.mxu0 %v1259
        %v1462 = vpop.f32.mrf.mxu0
        %v1463 = vadd.f32 0.0, %v1462
        %v1464 = vpop.f32.mrf.mxu0
        %v1465 = vadd.f32 0.0, %v1464
        %1466 = vmatmul.bf16.gmra.mxu0 %v1261
        %v1467 = vpop.f32.mrf.mxu0
        %v1468 = vadd.f32 0.0, %v1467
        %v1469 = vpop.f32.mrf.mxu0
        %v1470 = vadd.f32 0.0, %v1469
        %1471 = vdwg.mxu0
        %1472 = vmatpush.bf16.msra.mxu0 %v1389
        %1473 = vmatpush.bf16.msra.mxu0 %v1387
        %1474 = vmatpush.bf16.msra.mxu0 %v1385
        %1475 = vmatpush.bf16.msra.mxu0 %v1383
        %1476 = vmatpush.bf16.msra.mxu0 %v1381
        %1477 = vmatpush.bf16.msra.mxu0 %v1379
        %1478 = vmatpush.bf16.msra.mxu0 %v1377
        %1479 = vmatpush.bf16.msra.mxu0 %v1375
        %1480 = vmatmul.bf16.gmra.mxu0 %v1248
        %v1481 = vpop.f32.mrf.mxu0
        %v1482 = vadd.f32 %v1433, %v1481
        %v1483 = vpop.f32.mrf.mxu0
        %v1484 = vadd.f32 %v1435, %v1483
        %1485 = vmatmul.bf16.gmra.mxu0 %v1250
        %v1486 = vpop.f32.mrf.mxu0
        %v1487 = vadd.f32 %v1438, %v1486
        %v1488 = vpop.f32.mrf.mxu0
        %v1489 = vadd.f32 %v1440, %v1488
        %1490 = vmatmul.bf16.gmra.mxu0 %v1252
        %v1491 = vpop.f32.mrf.mxu0
        %v1492 = vadd.f32 %v1443, %v1491
        %v1493 = vpop.f32.mrf.mxu0
        %v1494 = vadd.f32 %v1445, %v1493
        %1495 = vmatmul.bf16.gmra.mxu0 %v1254
        %v1496 = vpop.f32.mrf.mxu0
        %v1497 = vadd.f32 %v1448, %v1496
        %v1498 = vpop.f32.mrf.mxu0
        %v1499 = vadd.f32 %v1450, %v1498
        %1500 = vmatmul.bf16.gmra.mxu0 %v1256
        %v1501 = vpop.f32.mrf.mxu0
        %v1502 = vadd.f32 %v1453, %v1501
        %v1503 = vpop.f32.mrf.mxu0
        %v1504 = vadd.f32 %v1455, %v1503
        %1505 = vmatmul.bf16.gmra.mxu0 %v1258
        %v1506 = vpop.f32.mrf.mxu0
        %v1507 = vadd.f32 %v1458, %v1506
        %v1508 = vpop.f32.mrf.mxu0
        %v1509 = vadd.f32 %v1460, %v1508
        %1510 = vmatmul.bf16.gmra.mxu0 %v1260
        %v1511 = vpop.f32.mrf.mxu0
        %v1512 = vadd.f32 %v1463, %v1511
        %v1513 = vpop.f32.mrf.mxu0
        %v1514 = vadd.f32 %v1465, %v1513
        %1515 = vmatmul.bf16.gmra.mxu0 %v1262
        %v1516 = vpop.f32.mrf.mxu0
        %v1517 = vadd.f32 %v1468, %v1516
        %v1518 = vpop.f32.mrf.mxu0
        %v1519 = vadd.f32 %v1470, %v1518
        %1520 = vdwg.mxu0
        %1521 = vmatpush.bf16.msra.mxu0 %v1374
        %1522 = vmatpush.bf16.msra.mxu0 %v1372
        %1523 = vmatpush.bf16.msra.mxu0 %v1370
        %1524 = vmatpush.bf16.msra.mxu0 %v1368
        %1525 = vmatpush.bf16.msra.mxu0 %v1366
        %1526 = vmatpush.bf16.msra.mxu0 %v1364
        %1527 = vmatpush.bf16.msra.mxu0 %v1362
        %1528 = vmatpush.bf16.msra.mxu0 %v1360
        %1529 = vmatmul.bf16.gmra.mxu0 %v1247
        %v1530 = vpop.f32.mrf.mxu0
        %v1531 = vadd.f32 0.0, %v1530
        %v1532 = vpop.f32.mrf.mxu0
        %v1533 = vadd.f32 0.0, %v1532
        %1534 = vmatmul.bf16.gmra.mxu0 %v1249
        %v1535 = vpop.f32.mrf.mxu0
        %v1536 = vadd.f32 0.0, %v1535
        %v1537 = vpop.f32.mrf.mxu0
        %v1538 = vadd.f32 0.0, %v1537
        %1539 = vmatmul.bf16.gmra.mxu0 %v1251
        %v1540 = vpop.f32.mrf.mxu0
        %v1541 = vadd.f32 0.0, %v1540
        %v1542 = vpop.f32.mrf.mxu0
        %v1543 = vadd.f32 0.0, %v1542
        %1544 = vmatmul.bf16.gmra.mxu0 %v1253
        %v1545 = vpop.f32.mrf.mxu0
        %v1546 = vadd.f32 0.0, %v1545
        %v1547 = vpop.f32.mrf.mxu0
        %v1548 = vadd.f32 0.0, %v1547
        %1549 = vmatmul.bf16.gmra.mxu0 %v1255
        %v1550 = vpop.f32.mrf.mxu0
        %v1551 = vadd.f32 0.0, %v1550
        %v1552 = vpop.f32.mrf.mxu0
        %v1553 = vadd.f32 0.0, %v1552
        %1554 = vmatmul.bf16.gmra.mxu0 %v1257
        %v1555 = vpop.f32.mrf.mxu0
        %v1556 = vadd.f32 0.0, %v1555
        %v1557 = vpop.f32.mrf.mxu0
        %v1558 = vadd.f32 0.0, %v1557
        %1559 = vmatmul.bf16.gmra.mxu0 %v1259
        %v1560 = vpop.f32.mrf.mxu0
        %v1561 = vadd.f32 0.0, %v1560
        %v1562 = vpop.f32.mrf.mxu0
        %v1563 = vadd.f32 0.0, %v1562
        %1564 = vmatmul.bf16.gmra.mxu0 %v1261
        %v1565 = vpop.f32.mrf.mxu0
        %v1566 = vadd.f32 0.0, %v1565
        %v1567 = vpop.f32.mrf.mxu0
        %v1568 = vadd.f32 0.0, %v1567
        %1569 = vdwg.mxu0
        %1570 = vmatpush.bf16.msra.mxu0 %v1390
        %1571 = vmatpush.bf16.msra.mxu0 %v1388
        %1572 = vmatpush.bf16.msra.mxu0 %v1386
        %1573 = vmatpush.bf16.msra.mxu0 %v1384
        %1574 = vmatpush.bf16.msra.mxu0 %v1382
        %1575 = vmatpush.bf16.msra.mxu0 %v1380
        %1576 = vmatpush.bf16.msra.mxu0 %v1378
        %1577 = vmatpush.bf16.msra.mxu0 %v1376
        %1578 = vmatmul.bf16.gmra.mxu0 %v1248
        %v1579 = vpop.f32.mrf.mxu0
        %v1580 = vadd.f32 %v1531, %v1579
        %v1581 = vpop.f32.mrf.mxu0
        %v1582 = vadd.f32 %v1533, %v1581
        %1583 = vmatmul.bf16.gmra.mxu0 %v1250
        %v1584 = vpop.f32.mrf.mxu0
        %v1585 = vadd.f32 %v1536, %v1584
        %v1586 = vpop.f32.mrf.mxu0
        %v1587 = vadd.f32 %v1538, %v1586
        %1588 = vmatmul.bf16.gmra.mxu0 %v1252
        %v1589 = vpop.f32.mrf.mxu0
        %v1590 = vadd.f32 %v1541, %v1589
        %v1591 = vpop.f32.mrf.mxu0
        %v1592 = vadd.f32 %v1543, %v1591
        %1593 = vmatmul.bf16.gmra.mxu0 %v1254
        %v1594 = vpop.f32.mrf.mxu0
        %v1595 = vadd.f32 %v1546, %v1594
        %v1596 = vpop.f32.mrf.mxu0
        %v1597 = vadd.f32 %v1548, %v1596
        %1598 = vmatmul.bf16.gmra.mxu0 %v1256
        %v1599 = vpop.f32.mrf.mxu0
        %v1600 = vadd.f32 %v1551, %v1599
        %v1601 = vpop.f32.mrf.mxu0
        %v1602 = vadd.f32 %v1553, %v1601
        %1603 = vmatmul.bf16.gmra.mxu0 %v1258
        %v1604 = vpop.f32.mrf.mxu0
        %v1605 = vadd.f32 %v1556, %v1604
        %v1606 = vpop.f32.mrf.mxu0
        %v1607 = vadd.f32 %v1558, %v1606
        %1608 = vmatmul.bf16.gmra.mxu0 %v1260
        %v1609 = vpop.f32.mrf.mxu0
        %v1610 = vadd.f32 %v1561, %v1609
        %v1611 = vpop.f32.mrf.mxu0
        %v1612 = vadd.f32 %v1563, %v1611
        %1613 = vmatmul.bf16.gmra.mxu0 %v1262
        %v1614 = vpop.f32.mrf.mxu0
        %v1615 = vadd.f32 %v1566, %v1614
        %v1616 = vpop.f32.mrf.mxu0
        %v1617 = vadd.f32 %v1568, %v1616
        %1618 = vdwg.mxu0
        %v1619 = vperm.slane %v824, 0
        %v1620 = vadd.f32 %v1482, %v1619
        %v1621 = vadd.f32 %v1484, %v1619
        %v1622 = vadd.f32 %v1487, %v1619
        %v1623 = vadd.f32 %v1489, %v1619
        %v1624 = vadd.f32 %v1492, %v1619
        %v1625 = vadd.f32 %v1494, %v1619
        %v1626 = vadd.f32 %v1497, %v1619
        %v1627 = vadd.f32 %v1499, %v1619
        %v1628 = vadd.f32 %v1502, %v1619
        %v1629 = vadd.f32 %v1504, %v1619
        %v1630 = vadd.f32 %v1507, %v1619
        %v1631 = vadd.f32 %v1509, %v1619
        %v1632 = vadd.f32 %v1512, %v1619
        %v1633 = vadd.f32 %v1514, %v1619
        %v1634 = vadd.f32 %v1517, %v1619
        %v1635 = vadd.f32 %v1519, %v1619
        %v1636 = vsub.f32 0.0, %v1620
        %v1637 = vsub.f32 0.0, %v1621
        %v1638 = vsub.f32 0.0, %v1622
        %v1639 = vsub.f32 0.0, %v1623
        %v1640 = vsub.f32 0.0, %v1624
        %v1641 = vsub.f32 0.0, %v1625
        %v1642 = vsub.f32 0.0, %v1626
        %v1643 = vsub.f32 0.0, %v1627
        %v1644 = vsub.f32 0.0, %v1628
        %v1645 = vsub.f32 0.0, %v1629
        %v1646 = vsub.f32 0.0, %v1630
        %v1647 = vsub.f32 0.0, %v1631
        %v1648 = vsub.f32 0.0, %v1632
        %v1649 = vsub.f32 0.0, %v1633
        %v1650 = vsub.f32 0.0, %v1634
        %v1651 = vsub.f32 0.0, %v1635
        %v1652 = vmul.f32 %v1636, 1.442695
        %v1653 = vpow.pop %v1652
        %v1654 = vmul.f32 %v1637, 1.442695
        %v1655 = vpow.pop %v1654
        %v1656 = vmul.f32 %v1638, 1.442695
        %v1657 = vpow.pop %v1656
        %v1658 = vmul.f32 %v1639, 1.442695
        %v1659 = vpow.pop %v1658
        %v1660 = vmul.f32 %v1640, 1.442695
        %v1661 = vpow.pop %v1660
        %v1662 = vmul.f32 %v1641, 1.442695
        %v1663 = vpow.pop %v1662
        %v1664 = vmul.f32 %v1642, 1.442695
        %v1665 = vpow.pop %v1664
        %v1666 = vmul.f32 %v1643, 1.442695
        %v1667 = vpow.pop %v1666
        %v1668 = vmul.f32 %v1644, 1.442695
        %v1669 = vpow.pop %v1668
        %v1670 = vmul.f32 %v1645, 1.442695
        %v1671 = vpow.pop %v1670
        %v1672 = vmul.f32 %v1646, 1.442695
        %v1673 = vpow.pop %v1672
        %v1674 = vmul.f32 %v1647, 1.442695
        %v1675 = vpow.pop %v1674
        %v1676 = vmul.f32 %v1648, 1.442695
        %v1677 = vpow.pop %v1676
        %v1678 = vmul.f32 %v1649, 1.442695
        %v1679 = vpow.pop %v1678
        %v1680 = vmul.f32 %v1650, 1.442695
        %v1681 = vpow.pop %v1680
        %v1682 = vmul.f32 %v1651, 1.442695
        %v1683 = vpow.pop %v1682
        %v1684 = vadd.f32 %v1653, 1.0
        %v1685 = vadd.f32 %v1655, 1.0
        %v1686 = vadd.f32 %v1657, 1.0
        %v1687 = vadd.f32 %v1659, 1.0
        %v1688 = vadd.f32 %v1661, 1.0
        %v1689 = vadd.f32 %v1663, 1.0
        %v1690 = vadd.f32 %v1665, 1.0
        %v1691 = vadd.f32 %v1667, 1.0
        %v1692 = vadd.f32 %v1669, 1.0
        %v1693 = vadd.f32 %v1671, 1.0
        %v1694 = vadd.f32 %v1673, 1.0
        %v1695 = vadd.f32 %v1675, 1.0
        %v1696 = vadd.f32 %v1677, 1.0
        %v1697 = vadd.f32 %v1679, 1.0
        %v1698 = vadd.f32 %v1681, 1.0
        %v1699 = vadd.f32 %v1683, 1.0
        %v1700 = vrcp.pop %v1684
        %v1701 = vrcp.pop %v1685
        %v1702 = vrcp.pop %v1686
        %v1703 = vrcp.pop %v1687
        %v1704 = vrcp.pop %v1688
        %v1705 = vrcp.pop %v1689
        %v1706 = vrcp.pop %v1690
        %v1707 = vrcp.pop %v1691
        %v1708 = vrcp.pop %v1692
        %v1709 = vrcp.pop %v1693
        %v1710 = vrcp.pop %v1694
        %v1711 = vrcp.pop %v1695
        %v1712 = vrcp.pop %v1696
        %v1713 = vrcp.pop %v1697
        %v1714 = vrcp.pop %v1698
        %v1715 = vrcp.pop %v1699
        %v1716 = vmul.f32 %v1620, %v1700
        %v1717 = vmul.f32 %v1621, %v1701
        %v1718 = vmul.f32 %v1622, %v1702
        %v1719 = vmul.f32 %v1623, %v1703
        %v1720 = vmul.f32 %v1624, %v1704
        %v1721 = vmul.f32 %v1625, %v1705
        %v1722 = vmul.f32 %v1626, %v1706
        %v1723 = vmul.f32 %v1627, %v1707
        %v1724 = vmul.f32 %v1628, %v1708
        %v1725 = vmul.f32 %v1629, %v1709
        %v1726 = vmul.f32 %v1630, %v1710
        %v1727 = vmul.f32 %v1631, %v1711
        %v1728 = vmul.f32 %v1632, %v1712
        %v1729 = vmul.f32 %v1633, %v1713
        %v1730 = vmul.f32 %v1634, %v1714
        %v1731 = vmul.f32 %v1635, %v1715
        %1732 = vadd.xlane.f32.xlu0 %v1716
        %v1733 = vpop.xlane.xlu0 %1732
        %1734 = vadd.xlane.f32.xlu0 %v1717
        %v1735 = vpop.xlane.xlu0 %1734
        %1736 = vadd.xlane.f32.xlu0 %v1718
        %v1737 = vpop.xlane.xlu0 %1736
        %1738 = vadd.xlane.f32.xlu0 %v1719
        %v1739 = vpop.xlane.xlu0 %1738
        %1740 = vadd.xlane.f32.xlu0 %v1720
        %v1741 = vpop.xlane.xlu0 %1740
        %1742 = vadd.xlane.f32.xlu0 %v1721
        %v1743 = vpop.xlane.xlu0 %1742
        %1744 = vadd.xlane.f32.xlu0 %v1722
        %v1745 = vpop.xlane.xlu0 %1744
        %1746 = vadd.xlane.f32.xlu0 %v1723
        %v1747 = vpop.xlane.xlu0 %1746
        %1748 = vadd.xlane.f32.xlu0 %v1724
        %v1749 = vpop.xlane.xlu0 %1748
        %1750 = vadd.xlane.f32.xlu0 %v1725
        %v1751 = vpop.xlane.xlu0 %1750
        %1752 = vadd.xlane.f32.xlu0 %v1726
        %v1753 = vpop.xlane.xlu0 %1752
        %1754 = vadd.xlane.f32.xlu0 %v1727
        %v1755 = vpop.xlane.xlu0 %1754
        %1756 = vadd.xlane.f32.xlu0 %v1728
        %v1757 = vpop.xlane.xlu0 %1756
        %1758 = vadd.xlane.f32.xlu0 %v1729
        %v1759 = vpop.xlane.xlu0 %1758
        %1760 = vadd.xlane.f32.xlu0 %v1730
        %v1761 = vpop.xlane.xlu0 %1760
        %1762 = vadd.xlane.f32.xlu0 %v1731
        %v1763 = vpop.xlane.xlu0 %1762
        %v1764 = vrcp.pop 128.0
        %v1765 = vmul.f32 128.0, %v1764
        %v1766 = vsub.f32 1.0, %v1765
        %v1767 = vmul.f32 %v1764, %v1766
        %v1768 = vadd.f32 %v1764, %v1767
        %vm1769 = vweird.f32 %v1764
        %v1770 = vsel %vm1769, %v1764, %v1768
        %v1771 = vmul.f32 %v1733, %v1770
        %v1772 = vmul.f32 %v1735, %v1770
        %v1773 = vmul.f32 %v1737, %v1770
        %v1774 = vmul.f32 %v1739, %v1770
        %v1775 = vmul.f32 %v1741, %v1770
        %v1776 = vmul.f32 %v1743, %v1770
        %v1777 = vmul.f32 %v1745, %v1770
        %v1778 = vmul.f32 %v1747, %v1770
        %v1779 = vmul.f32 %v1749, %v1770
        %v1780 = vmul.f32 %v1751, %v1770
        %v1781 = vmul.f32 %v1753, %v1770
        %v1782 = vmul.f32 %v1755, %v1770
        %v1783 = vmul.f32 %v1757, %v1770
        %v1784 = vmul.f32 %v1759, %v1770
        %v1785 = vmul.f32 %v1761, %v1770
        %v1786 = vmul.f32 %v1763, %v1770
        %v1787 = vsub.f32 %v1716, %v1771
        %v1788 = vsub.f32 %v1717, %v1772
        %v1789 = vsub.f32 %v1718, %v1773
        %v1790 = vsub.f32 %v1719, %v1774
        %v1791 = vsub.f32 %v1720, %v1775
        %v1792 = vsub.f32 %v1721, %v1776
        %v1793 = vsub.f32 %v1722, %v1777
        %v1794 = vsub.f32 %v1723, %v1778
        %v1795 = vsub.f32 %v1724, %v1779
        %v1796 = vsub.f32 %v1725, %v1780
        %v1797 = vsub.f32 %v1726, %v1781
        %v1798 = vsub.f32 %v1727, %v1782
        %v1799 = vsub.f32 %v1728, %v1783
        %v1800 = vsub.f32 %v1729, %v1784
        %v1801 = vsub.f32 %v1730, %v1785
        %v1802 = vsub.f32 %v1731, %v1786
        %v1803 = vmul.f32 %v1787, %v1787
        %v1804 = vmul.f32 %v1788, %v1788
        %v1805 = vmul.f32 %v1789, %v1789
        %v1806 = vmul.f32 %v1790, %v1790
        %v1807 = vmul.f32 %v1791, %v1791
        %v1808 = vmul.f32 %v1792, %v1792
        %v1809 = vmul.f32 %v1793, %v1793
        %v1810 = vmul.f32 %v1794, %v1794
        %v1811 = vmul.f32 %v1795, %v1795
        %v1812 = vmul.f32 %v1796, %v1796
        %v1813 = vmul.f32 %v1797, %v1797
        %v1814 = vmul.f32 %v1798, %v1798
        %v1815 = vmul.f32 %v1799, %v1799
        %v1816 = vmul.f32 %v1800, %v1800
        %v1817 = vmul.f32 %v1801, %v1801
        %v1818 = vmul.f32 %v1802, %v1802
        %1819 = vadd.xlane.f32.xlu0 %v1803
        %v1820 = vpop.xlane.xlu0 %1819
        %1821 = vadd.xlane.f32.xlu0 %v1804
        %v1822 = vpop.xlane.xlu0 %1821
        %1823 = vadd.xlane.f32.xlu0 %v1805
        %v1824 = vpop.xlane.xlu0 %1823
        %1825 = vadd.xlane.f32.xlu0 %v1806
        %v1826 = vpop.xlane.xlu0 %1825
        %1827 = vadd.xlane.f32.xlu0 %v1807
        %v1828 = vpop.xlane.xlu0 %1827
        %1829 = vadd.xlane.f32.xlu0 %v1808
        %v1830 = vpop.xlane.xlu0 %1829
        %1831 = vadd.xlane.f32.xlu0 %v1809
        %v1832 = vpop.xlane.xlu0 %1831
        %1833 = vadd.xlane.f32.xlu0 %v1810
        %v1834 = vpop.xlane.xlu0 %1833
        %1835 = vadd.xlane.f32.xlu0 %v1811
        %v1836 = vpop.xlane.xlu0 %1835
        %1837 = vadd.xlane.f32.xlu0 %v1812
        %v1838 = vpop.xlane.xlu0 %1837
        %1839 = vadd.xlane.f32.xlu0 %v1813
        %v1840 = vpop.xlane.xlu0 %1839
        %1841 = vadd.xlane.f32.xlu0 %v1814
        %v1842 = vpop.xlane.xlu0 %1841
        %1843 = vadd.xlane.f32.xlu0 %v1815
        %v1844 = vpop.xlane.xlu0 %1843
        %1845 = vadd.xlane.f32.xlu0 %v1816
        %v1846 = vpop.xlane.xlu0 %1845
        %1847 = vadd.xlane.f32.xlu0 %v1817
        %v1848 = vpop.xlane.xlu0 %1847
        %1849 = vadd.xlane.f32.xlu0 %v1818
        %v1850 = vpop.xlane.xlu0 %1849
        %v1851 = vmul.f32 %v1820, %v1770
        %v1852 = vmul.f32 %v1822, %v1770
        %v1853 = vmul.f32 %v1824, %v1770
        %v1854 = vmul.f32 %v1826, %v1770
        %v1855 = vmul.f32 %v1828, %v1770
        %v1856 = vmul.f32 %v1830, %v1770
        %v1857 = vmul.f32 %v1832, %v1770
        %v1858 = vmul.f32 %v1834, %v1770
        %v1859 = vmul.f32 %v1836, %v1770
        %v1860 = vmul.f32 %v1838, %v1770
        %v1861 = vmul.f32 %v1840, %v1770
        %v1862 = vmul.f32 %v1842, %v1770
        %v1863 = vmul.f32 %v1844, %v1770
        %v1864 = vmul.f32 %v1846, %v1770
        %v1865 = vmul.f32 %v1848, %v1770
        %v1866 = vmul.f32 %v1850, %v1770
        %v1867 = vadd.f32 %v1851, 0.1
        %v1868 = vadd.f32 %v1852, 0.1
        %v1869 = vadd.f32 %v1853, 0.1
        %v1870 = vadd.f32 %v1854, 0.1
        %v1871 = vadd.f32 %v1855, 0.1
        %v1872 = vadd.f32 %v1856, 0.1
        %v1873 = vadd.f32 %v1857, 0.1
        %v1874 = vadd.f32 %v1858, 0.1
        %v1875 = vadd.f32 %v1859, 0.1
        %v1876 = vadd.f32 %v1860, 0.1
        %v1877 = vadd.f32 %v1861, 0.1
        %v1878 = vadd.f32 %v1862, 0.1
        %v1879 = vadd.f32 %v1863, 0.1
        %v1880 = vadd.f32 %v1864, 0.1
        %v1881 = vadd.f32 %v1865, 0.1
        %v1882 = vadd.f32 %v1866, 0.1
        %v1883 = vrsqrt.pop %v1867
        %v1884 = vmul.f32 %v1883, %v1867
        %v1885 = vmul.f32 %v1884, %v1883
        %v1886 = vmul.f32 0.5, %v1885
        %v1887 = vsub.f32 1.5, %v1886
        %v1888 = vmul.f32 %v1883, %v1887
        %vm1889 = vweird.f32 %v1867
        %vm1890 = vweird.f32 %v1883
        %vm1891 = vmor %vm1889, %vm1890
        %v1892 = vsel %vm1891, %v1883, %v1888
        %v1893 = vrsqrt.pop %v1868
        %v1894 = vmul.f32 %v1893, %v1868
        %v1895 = vmul.f32 %v1894, %v1893
        %v1896 = vmul.f32 0.5, %v1895
        %v1897 = vsub.f32 1.5, %v1896
        %v1898 = vmul.f32 %v1893, %v1897
        %vm1899 = vweird.f32 %v1868
        %vm1900 = vweird.f32 %v1893
        %vm1901 = vmor %vm1899, %vm1900
        %v1902 = vsel %vm1901, %v1893, %v1898
        %v1903 = vrsqrt.pop %v1869
        %v1904 = vmul.f32 %v1903, %v1869
        %v1905 = vmul.f32 %v1904, %v1903
        %v1906 = vmul.f32 0.5, %v1905
        %v1907 = vsub.f32 1.5, %v1906
        %v1908 = vmul.f32 %v1903, %v1907
        %vm1909 = vweird.f32 %v1869
        %vm1910 = vweird.f32 %v1903
        %vm1911 = vmor %vm1909, %vm1910
        %v1912 = vsel %vm1911, %v1903, %v1908
        %v1913 = vrsqrt.pop %v1870
        %v1914 = vmul.f32 %v1913, %v1870
        %v1915 = vmul.f32 %v1914, %v1913
        %v1916 = vmul.f32 0.5, %v1915
        %v1917 = vsub.f32 1.5, %v1916
        %v1918 = vmul.f32 %v1913, %v1917
        %vm1919 = vweird.f32 %v1870
        %vm1920 = vweird.f32 %v1913
        %vm1921 = vmor %vm1919, %vm1920
        %v1922 = vsel %vm1921, %v1913, %v1918
        %v1923 = vrsqrt.pop %v1871
        %v1924 = vmul.f32 %v1923, %v1871
        %v1925 = vmul.f32 %v1924, %v1923
        %v1926 = vmul.f32 0.5, %v1925
        %v1927 = vsub.f32 1.5, %v1926
        %v1928 = vmul.f32 %v1923, %v1927
        %vm1929 = vweird.f32 %v1871
        %vm1930 = vweird.f32 %v1923
        %vm1931 = vmor %vm1929, %vm1930
        %v1932 = vsel %vm1931, %v1923, %v1928
        %v1933 = vrsqrt.pop %v1872
        %v1934 = vmul.f32 %v1933, %v1872
        %v1935 = vmul.f32 %v1934, %v1933
        %v1936 = vmul.f32 0.5, %v1935
        %v1937 = vsub.f32 1.5, %v1936
        %v1938 = vmul.f32 %v1933, %v1937
        %vm1939 = vweird.f32 %v1872
        %vm1940 = vweird.f32 %v1933
        %vm1941 = vmor %vm1939, %vm1940
        %v1942 = vsel %vm1941, %v1933, %v1938
        %v1943 = vrsqrt.pop %v1873
        %v1944 = vmul.f32 %v1943, %v1873
        %v1945 = vmul.f32 %v1944, %v1943
        %v1946 = vmul.f32 0.5, %v1945
        %v1947 = vsub.f32 1.5, %v1946
        %v1948 = vmul.f32 %v1943, %v1947
        %vm1949 = vweird.f32 %v1873
        %vm1950 = vweird.f32 %v1943
        %vm1951 = vmor %vm1949, %vm1950
        %v1952 = vsel %vm1951, %v1943, %v1948
        %v1953 = vrsqrt.pop %v1874
        %v1954 = vmul.f32 %v1953, %v1874
        %v1955 = vmul.f32 %v1954, %v1953
        %v1956 = vmul.f32 0.5, %v1955
        %v1957 = vsub.f32 1.5, %v1956
        %v1958 = vmul.f32 %v1953, %v1957
        %vm1959 = vweird.f32 %v1874
        %vm1960 = vweird.f32 %v1953
        %vm1961 = vmor %vm1959, %vm1960
        %v1962 = vsel %vm1961, %v1953, %v1958
        %v1963 = vrsqrt.pop %v1875
        %v1964 = vmul.f32 %v1963, %v1875
        %v1965 = vmul.f32 %v1964, %v1963
        %v1966 = vmul.f32 0.5, %v1965
        %v1967 = vsub.f32 1.5, %v1966
        %v1968 = vmul.f32 %v1963, %v1967
        %vm1969 = vweird.f32 %v1875
        %vm1970 = vweird.f32 %v1963
        %vm1971 = vmor %vm1969, %vm1970
        %v1972 = vsel %vm1971, %v1963, %v1968
        %v1973 = vrsqrt.pop %v1876
        %v1974 = vmul.f32 %v1973, %v1876
        %v1975 = vmul.f32 %v1974, %v1973
        %v1976 = vmul.f32 0.5, %v1975
        %v1977 = vsub.f32 1.5, %v1976
        %v1978 = vmul.f32 %v1973, %v1977
        %vm1979 = vweird.f32 %v1876
        %vm1980 = vweird.f32 %v1973
        %vm1981 = vmor %vm1979, %vm1980
        %v1982 = vsel %vm1981, %v1973, %v1978
        %v1983 = vrsqrt.pop %v1877
        %v1984 = vmul.f32 %v1983, %v1877
        %v1985 = vmul.f32 %v1984, %v1983
        %v1986 = vmul.f32 0.5, %v1985
        %v1987 = vsub.f32 1.5, %v1986
        %v1988 = vmul.f32 %v1983, %v1987
        %vm1989 = vweird.f32 %v1877
        %vm1990 = vweird.f32 %v1983
        %vm1991 = vmor %vm1989, %vm1990
        %v1992 = vsel %vm1991, %v1983, %v1988
        %v1993 = vrsqrt.pop %v1878
        %v1994 = vmul.f32 %v1993, %v1878
        %v1995 = vmul.f32 %v1994, %v1993
        %v1996 = vmul.f32 0.5, %v1995
        %v1997 = vsub.f32 1.5, %v1996
        %v1998 = vmul.f32 %v1993, %v1997
        %vm1999 = vweird.f32 %v1878
        %vm2000 = vweird.f32 %v1993
        %vm2001 = vmor %vm1999, %vm2000
        %v2002 = vsel %vm2001, %v1993, %v1998
        %v2003 = vrsqrt.pop %v1879
        %v2004 = vmul.f32 %v2003, %v1879
        %v2005 = vmul.f32 %v2004, %v2003
        %v2006 = vmul.f32 0.5, %v2005
        %v2007 = vsub.f32 1.5, %v2006
        %v2008 = vmul.f32 %v2003, %v2007
        %vm2009 = vweird.f32 %v1879
        %vm2010 = vweird.f32 %v2003
        %vm2011 = vmor %vm2009, %vm2010
        %v2012 = vsel %vm2011, %v2003, %v2008
        %v2013 = vrsqrt.pop %v1880
        %v2014 = vmul.f32 %v2013, %v1880
        %v2015 = vmul.f32 %v2014, %v2013
        %v2016 = vmul.f32 0.5, %v2015
        %v2017 = vsub.f32 1.5, %v2016
        %v2018 = vmul.f32 %v2013, %v2017
        %vm2019 = vweird.f32 %v1880
        %vm2020 = vweird.f32 %v2013
        %vm2021 = vmor %vm2019, %vm2020
        %v2022 = vsel %vm2021, %v2013, %v2018
        %v2023 = vrsqrt.pop %v1881
        %v2024 = vmul.f32 %v2023, %v1881
        %v2025 = vmul.f32 %v2024, %v2023
        %v2026 = vmul.f32 0.5, %v2025
        %v2027 = vsub.f32 1.5, %v2026
        %v2028 = vmul.f32 %v2023, %v2027
        %vm2029 = vweird.f32 %v1881
        %vm2030 = vweird.f32 %v2023
        %vm2031 = vmor %vm2029, %vm2030
        %v2032 = vsel %vm2031, %v2023, %v2028
        %v2033 = vrsqrt.pop %v1882
        %v2034 = vmul.f32 %v2033, %v1882
        %v2035 = vmul.f32 %v2034, %v2033
        %v2036 = vmul.f32 0.5, %v2035
        %v2037 = vsub.f32 1.5, %v2036
        %v2038 = vmul.f32 %v2033, %v2037
        %vm2039 = vweird.f32 %v1882
        %vm2040 = vweird.f32 %v2033
        %vm2041 = vmor %vm2039, %vm2040
        %v2042 = vsel %vm2041, %v2033, %v2038
        %v2043 = vmul.f32 %v1787, %v1892
        %v2044 = vmul.f32 %v1788, %v1902
        %v2045 = vmul.f32 %v1789, %v1912
        %v2046 = vmul.f32 %v1790, %v1922
        %v2047 = vmul.f32 %v1791, %v1932
        %v2048 = vmul.f32 %v1792, %v1942
        %v2049 = vmul.f32 %v1793, %v1952
        %v2050 = vmul.f32 %v1794, %v1962
        %v2051 = vmul.f32 %v1795, %v1972
        %v2052 = vmul.f32 %v1796, %v1982
        %v2053 = vmul.f32 %v1797, %v1992
        %v2054 = vmul.f32 %v1798, %v2002
        %v2055 = vmul.f32 %v1799, %v2012
        %v2056 = vmul.f32 %v1800, %v2022
        %v2057 = vmul.f32 %v1801, %v2032
        %v2058 = vmul.f32 %v1802, %v2042
        %v2059 = vperm.slane %v824, 1
        %v2060 = vmul.f32 %v2043, %v2059
        %v2061 = vmul.f32 %v2044, %v2059
        %v2062 = vmul.f32 %v2045, %v2059
        %v2063 = vmul.f32 %v2046, %v2059
        %v2064 = vmul.f32 %v2047, %v2059
        %v2065 = vmul.f32 %v2048, %v2059
        %v2066 = vmul.f32 %v2049, %v2059
        %v2067 = vmul.f32 %v2050, %v2059
        %v2068 = vmul.f32 %v2051, %v2059
        %v2069 = vmul.f32 %v2052, %v2059
        %v2070 = vmul.f32 %v2053, %v2059
        %v2071 = vmul.f32 %v2054, %v2059
        %v2072 = vmul.f32 %v2055, %v2059
        %v2073 = vmul.f32 %v2056, %v2059
        %v2074 = vmul.f32 %v2057, %v2059
        %v2075 = vmul.f32 %v2058, %v2059
        %v2076 = vperm.slane %v824, 2
        %v2077 = vadd.f32 %v2060, %v2076
        %v2078 = vadd.f32 %v2061, %v2076
        %v2079 = vadd.f32 %v2062, %v2076
        %v2080 = vadd.f32 %v2063, %v2076
        %v2081 = vadd.f32 %v2064, %v2076
        %v2082 = vadd.f32 %v2065, %v2076
        %v2083 = vadd.f32 %v2066, %v2076
        %v2084 = vadd.f32 %v2067, %v2076
        %v2085 = vadd.f32 %v2068, %v2076
        %v2086 = vadd.f32 %v2069, %v2076
        %v2087 = vadd.f32 %v2070, %v2076
        %v2088 = vadd.f32 %v2071, %v2076
        %v2089 = vadd.f32 %v2072, %v2076
        %v2090 = vadd.f32 %v2073, %v2076
        %v2091 = vadd.f32 %v2074, %v2076
        %v2092 = vadd.f32 %v2075, %v2076
        %v2093 = vpack.c.bf16 %v2078, %v2077
        %v2094 = vpack.c.bf16 %v2080, %v2079
        %v2095 = vpack.c.bf16 %v2082, %v2081
        %v2096 = vpack.c.bf16 %v2084, %v2083
        %v2097 = vpack.c.bf16 %v2086, %v2085
        %v2098 = vpack.c.bf16 %v2088, %v2087
        %v2099 = vpack.c.bf16 %v2090, %v2089
        %v2100 = vpack.c.bf16 %v2092, %v2091
        %v2101 = vperm.slane %v824, 3
        %v2118 = vunpack.c.l.b16 %v744
        %v2119 = vunpack.c.l.b16 %v745
        %v2120 = vunpack.c.l.b16 %v746
        %v2121 = vunpack.c.l.b16 %v747
        %v2122 = vunpack.c.l.b16 %v748
        %v2123 = vunpack.c.l.b16 %v749
        %v2124 = vunpack.c.l.b16 %v750
        %v2125 = vunpack.c.l.b16 %v751
        %v2126 = vunpack.c.l.b16 %v752
        %v2127 = vunpack.c.l.b16 %v753
        %v2128 = vunpack.c.l.b16 %v754
        %v2129 = vunpack.c.l.b16 %v755
        %v2130 = vunpack.c.l.b16 %v756
        %v2131 = vunpack.c.l.b16 %v757
        %v2132 = vunpack.c.l.b16 %v758
        %v2133 = vunpack.c.l.b16 %v759
        %v2134 = vpack.c.b16 %v2119, %v2118
        %v2135 = vpack.c.b16 %v2121, %v2120
        %v2136 = vpack.c.b16 %v2123, %v2122
        %v2137 = vpack.c.b16 %v2125, %v2124
        %v2138 = vpack.c.b16 %v2127, %v2126
        %v2139 = vpack.c.b16 %v2129, %v2128
        %v2140 = vpack.c.b16 %v2131, %v2130
        %v2141 = vpack.c.b16 %v2133, %v2132
        %2150 = vmatpush.bf16.msra.mxu0 %v2141
        %2151 = vmatpush.bf16.msra.mxu0 %v2140
        %2152 = vmatpush.bf16.msra.mxu0 %v2139
        %2153 = vmatpush.bf16.msra.mxu0 %v2138
        %2154 = vmatpush.bf16.msra.mxu0 %v2137
        %2155 = vmatpush.bf16.msra.mxu0 %v2136
        %2156 = vmatpush.bf16.msra.mxu0 %v2135
        %2157 = vmatpush.bf16.msra.mxu0 %v2134
        %2158 = vmatmul.bf16.gmra.mxu0 %v2093
        %v2159 = vpop.f32.mrf.mxu0
        %v2160 = vadd.f32 %v2101, %v2159
        %v2161 = vpop.f32.mrf.mxu0
        %v2162 = vadd.f32 %v2101, %v2161
        %2163 = vmatmul.bf16.gmra.mxu0 %v2094
        %v2164 = vpop.f32.mrf.mxu0
        %v2165 = vadd.f32 %v2101, %v2164
        %v2166 = vpop.f32.mrf.mxu0
        %v2167 = vadd.f32 %v2101, %v2166
        %2168 = vmatmul.bf16.gmra.mxu0 %v2095
        %v2169 = vpop.f32.mrf.mxu0
        %v2170 = vadd.f32 %v2101, %v2169
        %v2171 = vpop.f32.mrf.mxu0
        %v2172 = vadd.f32 %v2101, %v2171
        %2173 = vmatmul.bf16.gmra.mxu0 %v2096
        %v2174 = vpop.f32.mrf.mxu0
        %v2175 = vadd.f32 %v2101, %v2174
        %v2176 = vpop.f32.mrf.mxu0
        %v2177 = vadd.f32 %v2101, %v2176
        %2178 = vmatmul.bf16.gmra.mxu0 %v2097
        %v2179 = vpop.f32.mrf.mxu0
        %v2180 = vadd.f32 %v2101, %v2179
        %v2181 = vpop.f32.mrf.mxu0
        %v2182 = vadd.f32 %v2101, %v2181
        %2183 = vmatmul.bf16.gmra.mxu0 %v2098
        %v2184 = vpop.f32.mrf.mxu0
        %v2185 = vadd.f32 %v2101, %v2184
        %v2186 = vpop.f32.mrf.mxu0
        %v2187 = vadd.f32 %v2101, %v2186
        %2188 = vmatmul.bf16.gmra.mxu0 %v2099
        %v2189 = vpop.f32.mrf.mxu0
        %v2190 = vadd.f32 %v2101, %v2189
        %v2191 = vpop.f32.mrf.mxu0
        %v2192 = vadd.f32 %v2101, %v2191
        %2193 = vmatmul.bf16.gmra.mxu0 %v2100
        %v2194 = vpop.f32.mrf.mxu0
        %v2195 = vadd.f32 %v2101, %v2194
        %v2196 = vpop.f32.mrf.mxu0
        %v2197 = vadd.f32 %v2101, %v2196
        %2198 = vdwg.mxu0
        %v2199 = vadd.f32 %v2160, %v2077
        %v2200 = vadd.f32 %v2162, %v2078
        %v2201 = vadd.f32 %v2165, %v2079
        %v2202 = vadd.f32 %v2167, %v2080
        %v2203 = vadd.f32 %v2170, %v2081
        %v2204 = vadd.f32 %v2172, %v2082
        %v2205 = vadd.f32 %v2175, %v2083
        %v2206 = vadd.f32 %v2177, %v2084
        %v2207 = vadd.f32 %v2180, %v2085
        %v2208 = vadd.f32 %v2182, %v2086
        %v2209 = vadd.f32 %v2185, %v2087
        %v2210 = vadd.f32 %v2187, %v2088
        %v2211 = vadd.f32 %v2190, %v2089
        %v2212 = vadd.f32 %v2192, %v2090
        %v2213 = vadd.f32 %v2195, %v2091
        %v2214 = vadd.f32 %v2197, %v2092
        %v2215 = vsub.f32 0.0, %v2199
        %v2216 = vsub.f32 0.0, %v2200
        %v2217 = vsub.f32 0.0, %v2201
        %v2218 = vsub.f32 0.0, %v2202
        %v2219 = vsub.f32 0.0, %v2203
        %v2220 = vsub.f32 0.0, %v2204
        %v2221 = vsub.f32 0.0, %v2205
        %v2222 = vsub.f32 0.0, %v2206
        %v2223 = vsub.f32 0.0, %v2207
        %v2224 = vsub.f32 0.0, %v2208
        %v2225 = vsub.f32 0.0, %v2209
        %v2226 = vsub.f32 0.0, %v2210
        %v2227 = vsub.f32 0.0, %v2211
        %v2228 = vsub.f32 0.0, %v2212
        %v2229 = vsub.f32 0.0, %v2213
        %v2230 = vsub.f32 0.0, %v2214
        %v2231 = vmul.f32 %v2215, 1.442695
        %v2232 = vpow.pop %v2231
        %v2233 = vmul.f32 %v2216, 1.442695
        %v2234 = vpow.pop %v2233
        %v2235 = vmul.f32 %v2217, 1.442695
        %v2236 = vpow.pop %v2235
        %v2237 = vmul.f32 %v2218, 1.442695
        %v2238 = vpow.pop %v2237
        %v2239 = vmul.f32 %v2219, 1.442695
        %v2240 = vpow.pop %v2239
        %v2241 = vmul.f32 %v2220, 1.442695
        %v2242 = vpow.pop %v2241
        %v2243 = vmul.f32 %v2221, 1.442695
        %v2244 = vpow.pop %v2243
        %v2245 = vmul.f32 %v2222, 1.442695
        %v2246 = vpow.pop %v2245
        %v2247 = vmul.f32 %v2223, 1.442695
        %v2248 = vpow.pop %v2247
        %v2249 = vmul.f32 %v2224, 1.442695
        %v2250 = vpow.pop %v2249
        %v2251 = vmul.f32 %v2225, 1.442695
        %v2252 = vpow.pop %v2251
        %v2253 = vmul.f32 %v2226, 1.442695
        %v2254 = vpow.pop %v2253
        %v2255 = vmul.f32 %v2227, 1.442695
        %v2256 = vpow.pop %v2255
        %v2257 = vmul.f32 %v2228, 1.442695
        %v2258 = vpow.pop %v2257
        %v2259 = vmul.f32 %v2229, 1.442695
        %v2260 = vpow.pop %v2259
        %v2261 = vmul.f32 %v2230, 1.442695
        %v2262 = vpow.pop %v2261
        %v2263 = vadd.f32 %v2232, 1.0
        %v2264 = vadd.f32 %v2234, 1.0
        %v2265 = vadd.f32 %v2236, 1.0
        %v2266 = vadd.f32 %v2238, 1.0
        %v2267 = vadd.f32 %v2240, 1.0
        %v2268 = vadd.f32 %v2242, 1.0
        %v2269 = vadd.f32 %v2244, 1.0
        %v2270 = vadd.f32 %v2246, 1.0
        %v2271 = vadd.f32 %v2248, 1.0
        %v2272 = vadd.f32 %v2250, 1.0
        %v2273 = vadd.f32 %v2252, 1.0
        %v2274 = vadd.f32 %v2254, 1.0
        %v2275 = vadd.f32 %v2256, 1.0
        %v2276 = vadd.f32 %v2258, 1.0
        %v2277 = vadd.f32 %v2260, 1.0
        %v2278 = vadd.f32 %v2262, 1.0
        %v2279 = vrcp.pop %v2263
        %v2280 = vrcp.pop %v2264
        %v2281 = vrcp.pop %v2265
        %v2282 = vrcp.pop %v2266
        %v2283 = vrcp.pop %v2267
        %v2284 = vrcp.pop %v2268
        %v2285 = vrcp.pop %v2269
        %v2286 = vrcp.pop %v2270
        %v2287 = vrcp.pop %v2271
        %v2288 = vrcp.pop %v2272
        %v2289 = vrcp.pop %v2273
        %v2290 = vrcp.pop %v2274
        %v2291 = vrcp.pop %v2275
        %v2292 = vrcp.pop %v2276
        %v2293 = vrcp.pop %v2277
        %v2294 = vrcp.pop %v2278
        %v2295 = vmul.f32 %v2199, %v2279
        %v2296 = vmul.f32 %v2200, %v2280
        %v2297 = vmul.f32 %v2201, %v2281
        %v2298 = vmul.f32 %v2202, %v2282
        %v2299 = vmul.f32 %v2203, %v2283
        %v2300 = vmul.f32 %v2204, %v2284
        %v2301 = vmul.f32 %v2205, %v2285
        %v2302 = vmul.f32 %v2206, %v2286
        %v2303 = vmul.f32 %v2207, %v2287
        %v2304 = vmul.f32 %v2208, %v2288
        %v2305 = vmul.f32 %v2209, %v2289
        %v2306 = vmul.f32 %v2210, %v2290
        %v2307 = vmul.f32 %v2211, %v2291
        %v2308 = vmul.f32 %v2212, %v2292
        %v2309 = vmul.f32 %v2213, %v2293
        %v2310 = vmul.f32 %v2214, %v2294
        %2311 = vadd.xlane.f32.xlu0 %v2295
        %v2312 = vpop.xlane.xlu0 %2311
        %2313 = vadd.xlane.f32.xlu0 %v2296
        %v2314 = vpop.xlane.xlu0 %2313
        %2315 = vadd.xlane.f32.xlu0 %v2297
        %v2316 = vpop.xlane.xlu0 %2315
        %2317 = vadd.xlane.f32.xlu0 %v2298
        %v2318 = vpop.xlane.xlu0 %2317
        %2319 = vadd.xlane.f32.xlu0 %v2299
        %v2320 = vpop.xlane.xlu0 %2319
        %2321 = vadd.xlane.f32.xlu0 %v2300
        %v2322 = vpop.xlane.xlu0 %2321
        %2323 = vadd.xlane.f32.xlu0 %v2301
        %v2324 = vpop.xlane.xlu0 %2323
        %2325 = vadd.xlane.f32.xlu0 %v2302
        %v2326 = vpop.xlane.xlu0 %2325
        %2327 = vadd.xlane.f32.xlu0 %v2303
        %v2328 = vpop.xlane.xlu0 %2327
        %2329 = vadd.xlane.f32.xlu0 %v2304
        %v2330 = vpop.xlane.xlu0 %2329
        %2331 = vadd.xlane.f32.xlu0 %v2305
        %v2332 = vpop.xlane.xlu0 %2331
        %2333 = vadd.xlane.f32.xlu0 %v2306
        %v2334 = vpop.xlane.xlu0 %2333
        %2335 = vadd.xlane.f32.xlu0 %v2307
        %v2336 = vpop.xlane.xlu0 %2335
        %2337 = vadd.xlane.f32.xlu0 %v2308
        %v2338 = vpop.xlane.xlu0 %2337
        %2339 = vadd.xlane.f32.xlu0 %v2309
        %v2340 = vpop.xlane.xlu0 %2339
        %2341 = vadd.xlane.f32.xlu0 %v2310
        %v2342 = vpop.xlane.xlu0 %2341
        %v2343 = vmul.f32 %v2312, %v1770
        %v2344 = vmul.f32 %v2314, %v1770
        %v2345 = vmul.f32 %v2316, %v1770
        %v2346 = vmul.f32 %v2318, %v1770
        %v2347 = vmul.f32 %v2320, %v1770
        %v2348 = vmul.f32 %v2322, %v1770
        %v2349 = vmul.f32 %v2324, %v1770
        %v2350 = vmul.f32 %v2326, %v1770
        %v2351 = vmul.f32 %v2328, %v1770
        %v2352 = vmul.f32 %v2330, %v1770
        %v2353 = vmul.f32 %v2332, %v1770
        %v2354 = vmul.f32 %v2334, %v1770
        %v2355 = vmul.f32 %v2336, %v1770
        %v2356 = vmul.f32 %v2338, %v1770
        %v2357 = vmul.f32 %v2340, %v1770
        %v2358 = vmul.f32 %v2342, %v1770
        %v2359 = vsub.f32 %v2295, %v2343
        %v2360 = vsub.f32 %v2296, %v2344
        %v2361 = vsub.f32 %v2297, %v2345
        %v2362 = vsub.f32 %v2298, %v2346
        %v2363 = vsub.f32 %v2299, %v2347
        %v2364 = vsub.f32 %v2300, %v2348
        %v2365 = vsub.f32 %v2301, %v2349
        %v2366 = vsub.f32 %v2302, %v2350
        %v2367 = vsub.f32 %v2303, %v2351
        %v2368 = vsub.f32 %v2304, %v2352
        %v2369 = vsub.f32 %v2305, %v2353
        %v2370 = vsub.f32 %v2306, %v2354
        %v2371 = vsub.f32 %v2307, %v2355
        %v2372 = vsub.f32 %v2308, %v2356
        %v2373 = vsub.f32 %v2309, %v2357
        %v2374 = vsub.f32 %v2310, %v2358
        %v2375 = vmul.f32 %v2359, %v2359
        %v2376 = vmul.f32 %v2360, %v2360
        %v2377 = vmul.f32 %v2361, %v2361
        %v2378 = vmul.f32 %v2362, %v2362
        %v2379 = vmul.f32 %v2363, %v2363
        %v2380 = vmul.f32 %v2364, %v2364
        %v2381 = vmul.f32 %v2365, %v2365
        %v2382 = vmul.f32 %v2366, %v2366
        %v2383 = vmul.f32 %v2367, %v2367
        %v2384 = vmul.f32 %v2368, %v2368
        %v2385 = vmul.f32 %v2369, %v2369
        %v2386 = vmul.f32 %v2370, %v2370
        %v2387 = vmul.f32 %v2371, %v2371
        %v2388 = vmul.f32 %v2372, %v2372
        %v2389 = vmul.f32 %v2373, %v2373
        %v2390 = vmul.f32 %v2374, %v2374
        %2391 = vadd.xlane.f32.xlu0 %v2375
        %v2392 = vpop.xlane.xlu0 %2391
        %2393 = vadd.xlane.f32.xlu0 %v2376
        %v2394 = vpop.xlane.xlu0 %2393
        %2395 = vadd.xlane.f32.xlu0 %v2377
        %v2396 = vpop.xlane.xlu0 %2395
        %2397 = vadd.xlane.f32.xlu0 %v2378
        %v2398 = vpop.xlane.xlu0 %2397
        %2399 = vadd.xlane.f32.xlu0 %v2379
        %v2400 = vpop.xlane.xlu0 %2399
        %2401 = vadd.xlane.f32.xlu0 %v2380
        %v2402 = vpop.xlane.xlu0 %2401
        %2403 = vadd.xlane.f32.xlu0 %v2381
        %v2404 = vpop.xlane.xlu0 %2403
        %2405 = vadd.xlane.f32.xlu0 %v2382
        %v2406 = vpop.xlane.xlu0 %2405
        %2407 = vadd.xlane.f32.xlu0 %v2383
        %v2408 = vpop.xlane.xlu0 %2407
        %2409 = vadd.xlane.f32.xlu0 %v2384
        %v2410 = vpop.xlane.xlu0 %2409
        %2411 = vadd.xlane.f32.xlu0 %v2385
        %v2412 = vpop.xlane.xlu0 %2411
        %2413 = vadd.xlane.f32.xlu0 %v2386
        %v2414 = vpop.xlane.xlu0 %2413
        %2415 = vadd.xlane.f32.xlu0 %v2387
        %v2416 = vpop.xlane.xlu0 %2415
        %2417 = vadd.xlane.f32.xlu0 %v2388
        %v2418 = vpop.xlane.xlu0 %2417
        %2419 = vadd.xlane.f32.xlu0 %v2389
        %v2420 = vpop.xlane.xlu0 %2419
        %2421 = vadd.xlane.f32.xlu0 %v2390
        %v2422 = vpop.xlane.xlu0 %2421
        %v2423 = vmul.f32 %v2392, %v1770
        %v2424 = vmul.f32 %v2394, %v1770
        %v2425 = vmul.f32 %v2396, %v1770
        %v2426 = vmul.f32 %v2398, %v1770
        %v2427 = vmul.f32 %v2400, %v1770
        %v2428 = vmul.f32 %v2402, %v1770
        %v2429 = vmul.f32 %v2404, %v1770
        %v2430 = vmul.f32 %v2406, %v1770
        %v2431 = vmul.f32 %v2408, %v1770
        %v2432 = vmul.f32 %v2410, %v1770
        %v2433 = vmul.f32 %v2412, %v1770
        %v2434 = vmul.f32 %v2414, %v1770
        %v2435 = vmul.f32 %v2416, %v1770
        %v2436 = vmul.f32 %v2418, %v1770
        %v2437 = vmul.f32 %v2420, %v1770
        %v2438 = vmul.f32 %v2422, %v1770
        %v2439 = vadd.f32 %v2423, 0.1
        %v2440 = vadd.f32 %v2424, 0.1
        %v2441 = vadd.f32 %v2425, 0.1
        %v2442 = vadd.f32 %v2426, 0.1
        %v2443 = vadd.f32 %v2427, 0.1
        %v2444 = vadd.f32 %v2428, 0.1
        %v2445 = vadd.f32 %v2429, 0.1
        %v2446 = vadd.f32 %v2430, 0.1
        %v2447 = vadd.f32 %v2431, 0.1
        %v2448 = vadd.f32 %v2432, 0.1
        %v2449 = vadd.f32 %v2433, 0.1
        %v2450 = vadd.f32 %v2434, 0.1
        %v2451 = vadd.f32 %v2435, 0.1
        %v2452 = vadd.f32 %v2436, 0.1
        %v2453 = vadd.f32 %v2437, 0.1
        %v2454 = vadd.f32 %v2438, 0.1
        %v2455 = vrsqrt.pop %v2439
        %v2456 = vmul.f32 %v2455, %v2439
        %v2457 = vmul.f32 %v2456, %v2455
        %v2458 = vmul.f32 0.5, %v2457
        %v2459 = vsub.f32 1.5, %v2458
        %v2460 = vmul.f32 %v2455, %v2459
        %vm2461 = vweird.f32 %v2439
        %vm2462 = vweird.f32 %v2455
        %vm2463 = vmor %vm2461, %vm2462
        %v2464 = vsel %vm2463, %v2455, %v2460
        %v2465 = vrsqrt.pop %v2440
        %v2466 = vmul.f32 %v2465, %v2440
        %v2467 = vmul.f32 %v2466, %v2465
        %v2468 = vmul.f32 0.5, %v2467
        %v2469 = vsub.f32 1.5, %v2468
        %v2470 = vmul.f32 %v2465, %v2469
        %vm2471 = vweird.f32 %v2440
        %vm2472 = vweird.f32 %v2465
        %vm2473 = vmor %vm2471, %vm2472
        %v2474 = vsel %vm2473, %v2465, %v2470
        %v2475 = vrsqrt.pop %v2441
        %v2476 = vmul.f32 %v2475, %v2441
        %v2477 = vmul.f32 %v2476, %v2475
        %v2478 = vmul.f32 0.5, %v2477
        %v2479 = vsub.f32 1.5, %v2478
        %v2480 = vmul.f32 %v2475, %v2479
        %vm2481 = vweird.f32 %v2441
        %vm2482 = vweird.f32 %v2475
        %vm2483 = vmor %vm2481, %vm2482
        %v2484 = vsel %vm2483, %v2475, %v2480
        %v2485 = vrsqrt.pop %v2442
        %v2486 = vmul.f32 %v2485, %v2442
        %v2487 = vmul.f32 %v2486, %v2485
        %v2488 = vmul.f32 0.5, %v2487
        %v2489 = vsub.f32 1.5, %v2488
        %v2490 = vmul.f32 %v2485, %v2489
        %vm2491 = vweird.f32 %v2442
        %vm2492 = vweird.f32 %v2485
        %vm2493 = vmor %vm2491, %vm2492
        %v2494 = vsel %vm2493, %v2485, %v2490
        %v2495 = vrsqrt.pop %v2443
        %v2496 = vmul.f32 %v2495, %v2443
        %v2497 = vmul.f32 %v2496, %v2495
        %v2498 = vmul.f32 0.5, %v2497
        %v2499 = vsub.f32 1.5, %v2498
        %v2500 = vmul.f32 %v2495, %v2499
        %vm2501 = vweird.f32 %v2443
        %vm2502 = vweird.f32 %v2495
        %vm2503 = vmor %vm2501, %vm2502
        %v2504 = vsel %vm2503, %v2495, %v2500
        %v2505 = vrsqrt.pop %v2444
        %v2506 = vmul.f32 %v2505, %v2444
        %v2507 = vmul.f32 %v2506, %v2505
        %v2508 = vmul.f32 0.5, %v2507
        %v2509 = vsub.f32 1.5, %v2508
        %v2510 = vmul.f32 %v2505, %v2509
        %vm2511 = vweird.f32 %v2444
        %vm2512 = vweird.f32 %v2505
        %vm2513 = vmor %vm2511, %vm2512
        %v2514 = vsel %vm2513, %v2505, %v2510
        %v2515 = vrsqrt.pop %v2445
        %v2516 = vmul.f32 %v2515, %v2445
        %v2517 = vmul.f32 %v2516, %v2515
        %v2518 = vmul.f32 0.5, %v2517
        %v2519 = vsub.f32 1.5, %v2518
        %v2520 = vmul.f32 %v2515, %v2519
        %vm2521 = vweird.f32 %v2445
        %vm2522 = vweird.f32 %v2515
        %vm2523 = vmor %vm2521, %vm2522
        %v2524 = vsel %vm2523, %v2515, %v2520
        %v2525 = vrsqrt.pop %v2446
        %v2526 = vmul.f32 %v2525, %v2446
        %v2527 = vmul.f32 %v2526, %v2525
        %v2528 = vmul.f32 0.5, %v2527
        %v2529 = vsub.f32 1.5, %v2528
        %v2530 = vmul.f32 %v2525, %v2529
        %vm2531 = vweird.f32 %v2446
        %vm2532 = vweird.f32 %v2525
        %vm2533 = vmor %vm2531, %vm2532
        %v2534 = vsel %vm2533, %v2525, %v2530
        %v2535 = vrsqrt.pop %v2447
        %v2536 = vmul.f32 %v2535, %v2447
        %v2537 = vmul.f32 %v2536, %v2535
        %v2538 = vmul.f32 0.5, %v2537
        %v2539 = vsub.f32 1.5, %v2538
        %v2540 = vmul.f32 %v2535, %v2539
        %vm2541 = vweird.f32 %v2447
        %vm2542 = vweird.f32 %v2535
        %vm2543 = vmor %vm2541, %vm2542
        %v2544 = vsel %vm2543, %v2535, %v2540
        %v2545 = vrsqrt.pop %v2448
        %v2546 = vmul.f32 %v2545, %v2448
        %v2547 = vmul.f32 %v2546, %v2545
        %v2548 = vmul.f32 0.5, %v2547
        %v2549 = vsub.f32 1.5, %v2548
        %v2550 = vmul.f32 %v2545, %v2549
        %vm2551 = vweird.f32 %v2448
        %vm2552 = vweird.f32 %v2545
        %vm2553 = vmor %vm2551, %vm2552
        %v2554 = vsel %vm2553, %v2545, %v2550
        %v2555 = vrsqrt.pop %v2449
        %v2556 = vmul.f32 %v2555, %v2449
        %v2557 = vmul.f32 %v2556, %v2555
        %v2558 = vmul.f32 0.5, %v2557
        %v2559 = vsub.f32 1.5, %v2558
        %v2560 = vmul.f32 %v2555, %v2559
        %vm2561 = vweird.f32 %v2449
        %vm2562 = vweird.f32 %v2555
        %vm2563 = vmor %vm2561, %vm2562
        %v2564 = vsel %vm2563, %v2555, %v2560
        %v2565 = vrsqrt.pop %v2450
        %v2566 = vmul.f32 %v2565, %v2450
        %v2567 = vmul.f32 %v2566, %v2565
        %v2568 = vmul.f32 0.5, %v2567
        %v2569 = vsub.f32 1.5, %v2568
        %v2570 = vmul.f32 %v2565, %v2569
        %vm2571 = vweird.f32 %v2450
        %vm2572 = vweird.f32 %v2565
        %vm2573 = vmor %vm2571, %vm2572
        %v2574 = vsel %vm2573, %v2565, %v2570
        %v2575 = vrsqrt.pop %v2451
        %v2576 = vmul.f32 %v2575, %v2451
        %v2577 = vmul.f32 %v2576, %v2575
        %v2578 = vmul.f32 0.5, %v2577
        %v2579 = vsub.f32 1.5, %v2578
        %v2580 = vmul.f32 %v2575, %v2579
        %vm2581 = vweird.f32 %v2451
        %vm2582 = vweird.f32 %v2575
        %vm2583 = vmor %vm2581, %vm2582
        %v2584 = vsel %vm2583, %v2575, %v2580
        %v2585 = vrsqrt.pop %v2452
        %v2586 = vmul.f32 %v2585, %v2452
        %v2587 = vmul.f32 %v2586, %v2585
        %v2588 = vmul.f32 0.5, %v2587
        %v2589 = vsub.f32 1.5, %v2588
        %v2590 = vmul.f32 %v2585, %v2589
        %vm2591 = vweird.f32 %v2452
        %vm2592 = vweird.f32 %v2585
        %vm2593 = vmor %vm2591, %vm2592
        %v2594 = vsel %vm2593, %v2585, %v2590
        %v2595 = vrsqrt.pop %v2453
        %v2596 = vmul.f32 %v2595, %v2453
        %v2597 = vmul.f32 %v2596, %v2595
        %v2598 = vmul.f32 0.5, %v2597
        %v2599 = vsub.f32 1.5, %v2598
        %v2600 = vmul.f32 %v2595, %v2599
        %vm2601 = vweird.f32 %v2453
        %vm2602 = vweird.f32 %v2595
        %vm2603 = vmor %vm2601, %vm2602
        %v2604 = vsel %vm2603, %v2595, %v2600
        %v2605 = vrsqrt.pop %v2454
        %v2606 = vmul.f32 %v2605, %v2454
        %v2607 = vmul.f32 %v2606, %v2605
        %v2608 = vmul.f32 0.5, %v2607
        %v2609 = vsub.f32 1.5, %v2608
        %v2610 = vmul.f32 %v2605, %v2609
        %vm2611 = vweird.f32 %v2454
        %vm2612 = vweird.f32 %v2605
        %vm2613 = vmor %vm2611, %vm2612
        %v2614 = vsel %vm2613, %v2605, %v2610
        %v2615 = vmul.f32 %v2359, %v2464
        %v2616 = vmul.f32 %v2360, %v2474
        %v2617 = vmul.f32 %v2361, %v2484
        %v2618 = vmul.f32 %v2362, %v2494
        %v2619 = vmul.f32 %v2363, %v2504
        %v2620 = vmul.f32 %v2364, %v2514
        %v2621 = vmul.f32 %v2365, %v2524
        %v2622 = vmul.f32 %v2366, %v2534
        %v2623 = vmul.f32 %v2367, %v2544
        %v2624 = vmul.f32 %v2368, %v2554
        %v2625 = vmul.f32 %v2369, %v2564
        %v2626 = vmul.f32 %v2370, %v2574
        %v2627 = vmul.f32 %v2371, %v2584
        %v2628 = vmul.f32 %v2372, %v2594
        %v2629 = vmul.f32 %v2373, %v2604
        %v2630 = vmul.f32 %v2374, %v2614
        %v2631 = vperm.slane %v824, 4
        %v2632 = vmul.f32 %v2615, %v2631
        %v2633 = vmul.f32 %v2616, %v2631
        %v2634 = vmul.f32 %v2617, %v2631
        %v2635 = vmul.f32 %v2618, %v2631
        %v2636 = vmul.f32 %v2619, %v2631
        %v2637 = vmul.f32 %v2620, %v2631
        %v2638 = vmul.f32 %v2621, %v2631
        %v2639 = vmul.f32 %v2622, %v2631
        %v2640 = vmul.f32 %v2623, %v2631
        %v2641 = vmul.f32 %v2624, %v2631
        %v2642 = vmul.f32 %v2625, %v2631
        %v2643 = vmul.f32 %v2626, %v2631
        %v2644 = vmul.f32 %v2627, %v2631
        %v2645 = vmul.f32 %v2628, %v2631
        %v2646 = vmul.f32 %v2629, %v2631
        %v2647 = vmul.f32 %v2630, %v2631
        %v2648 = vperm.slane %v824, 5
        %v2649 = vadd.f32 %v2632, %v2648
        %v2650 = vadd.f32 %v2633, %v2648
        %v2651 = vadd.f32 %v2634, %v2648
        %v2652 = vadd.f32 %v2635, %v2648
        %v2653 = vadd.f32 %v2636, %v2648
        %v2654 = vadd.f32 %v2637, %v2648
        %v2655 = vadd.f32 %v2638, %v2648
        %v2656 = vadd.f32 %v2639, %v2648
        %v2657 = vadd.f32 %v2640, %v2648
        %v2658 = vadd.f32 %v2641, %v2648
        %v2659 = vadd.f32 %v2642, %v2648
        %v2660 = vadd.f32 %v2643, %v2648
        %v2661 = vadd.f32 %v2644, %v2648
        %v2662 = vadd.f32 %v2645, %v2648
        %v2663 = vadd.f32 %v2646, %v2648
        %v2664 = vadd.f32 %v2647, %v2648
        %v2665 = vadd.f32 %v2077, %v2649
        %v2666 = vadd.f32 %v2078, %v2650
        %v2667 = vadd.f32 %v2079, %v2651
        %v2668 = vadd.f32 %v2080, %v2652
        %v2669 = vadd.f32 %v2081, %v2653
        %v2670 = vadd.f32 %v2082, %v2654
        %v2671 = vadd.f32 %v2083, %v2655
        %v2672 = vadd.f32 %v2084, %v2656
        %v2673 = vadd.f32 %v2085, %v2657
        %v2674 = vadd.f32 %v2086, %v2658
        %v2675 = vadd.f32 %v2087, %v2659
        %v2676 = vadd.f32 %v2088, %v2660
        %v2677 = vadd.f32 %v2089, %v2661
        %v2678 = vadd.f32 %v2090, %v2662
        %v2679 = vadd.f32 %v2091, %v2663
        %v2680 = vadd.f32 %v2092, %v2664
        %v2681 = vpack.c.bf16 %v2650, %v2649
        %v2682 = vpack.c.bf16 %v2652, %v2651
        %v2683 = vpack.c.bf16 %v2654, %v2653
        %v2684 = vpack.c.bf16 %v2656, %v2655
        %v2685 = vpack.c.bf16 %v2658, %v2657
        %v2686 = vpack.c.bf16 %v2660, %v2659
        %v2687 = vpack.c.bf16 %v2662, %v2661
        %v2688 = vpack.c.bf16 %v2664, %v2663
        %v2689 = vperm.slane %v824, 6
        %v2706 = vunpack.c.l.b16 %v760
        %v2707 = vunpack.c.l.b16 %v761
        %v2708 = vunpack.c.l.b16 %v762
        %v2709 = vunpack.c.l.b16 %v763
        %v2710 = vunpack.c.l.b16 %v764
        %v2711 = vunpack.c.l.b16 %v765
        %v2712 = vunpack.c.l.b16 %v766
        %v2713 = vunpack.c.l.b16 %v767
        %v2714 = vunpack.c.l.b16 %v768
        %v2715 = vunpack.c.l.b16 %v769
        %v2716 = vunpack.c.l.b16 %v770
        %v2717 = vunpack.c.l.b16 %v771
        %v2718 = vunpack.c.l.b16 %v772
        %v2719 = vunpack.c.l.b16 %v773
        %v2720 = vunpack.c.l.b16 %v774
        %v2721 = vunpack.c.l.b16 %v775
        %v2722 = vpack.c.b16 %v2707, %v2706
        %v2723 = vpack.c.b16 %v2709, %v2708
        %v2724 = vpack.c.b16 %v2711, %v2710
        %v2725 = vpack.c.b16 %v2713, %v2712
        %v2726 = vpack.c.b16 %v2715, %v2714
        %v2727 = vpack.c.b16 %v2717, %v2716
        %v2728 = vpack.c.b16 %v2719, %v2718
        %v2729 = vpack.c.b16 %v2721, %v2720
        %2738 = vmatpush.bf16.msra.mxu0 %v2729
        %2739 = vmatpush.bf16.msra.mxu0 %v2728
        %2740 = vmatpush.bf16.msra.mxu0 %v2727
        %2741 = vmatpush.bf16.msra.mxu0 %v2726
        %2742 = vmatpush.bf16.msra.mxu0 %v2725
        %2743 = vmatpush.bf16.msra.mxu0 %v2724
        %2744 = vmatpush.bf16.msra.mxu0 %v2723
        %2745 = vmatpush.bf16.msra.mxu0 %v2722
        %2746 = vmatmul.bf16.gmra.mxu0 %v2681
        %v2747 = vpop.f32.mrf.mxu0
        %v2748 = vadd.f32 %v2689, %v2747
        %v2749 = vpop.f32.mrf.mxu0
        %v2750 = vadd.f32 %v2689, %v2749
        %2751 = vmatmul.bf16.gmra.mxu0 %v2682
        %v2752 = vpop.f32.mrf.mxu0
        %v2753 = vadd.f32 %v2689, %v2752
        %v2754 = vpop.f32.mrf.mxu0
        %v2755 = vadd.f32 %v2689, %v2754
        %2756 = vmatmul.bf16.gmra.mxu0 %v2683
        %v2757 = vpop.f32.mrf.mxu0
        %v2758 = vadd.f32 %v2689, %v2757
        %v2759 = vpop.f32.mrf.mxu0
        %v2760 = vadd.f32 %v2689, %v2759
        %2761 = vmatmul.bf16.gmra.mxu0 %v2684
        %v2762 = vpop.f32.mrf.mxu0
        %v2763 = vadd.f32 %v2689, %v2762
        %v2764 = vpop.f32.mrf.mxu0
        %v2765 = vadd.f32 %v2689, %v2764
        %2766 = vmatmul.bf16.gmra.mxu0 %v2685
        %v2767 = vpop.f32.mrf.mxu0
        %v2768 = vadd.f32 %v2689, %v2767
        %v2769 = vpop.f32.mrf.mxu0
        %v2770 = vadd.f32 %v2689, %v2769
        %2771 = vmatmul.bf16.gmra.mxu0 %v2686
        %v2772 = vpop.f32.mrf.mxu0
        %v2773 = vadd.f32 %v2689, %v2772
        %v2774 = vpop.f32.mrf.mxu0
        %v2775 = vadd.f32 %v2689, %v2774
        %2776 = vmatmul.bf16.gmra.mxu0 %v2687
        %v2777 = vpop.f32.mrf.mxu0
        %v2778 = vadd.f32 %v2689, %v2777
        %v2779 = vpop.f32.mrf.mxu0
        %v2780 = vadd.f32 %v2689, %v2779
        %2781 = vmatmul.bf16.gmra.mxu0 %v2688
        %v2782 = vpop.f32.mrf.mxu0
        %v2783 = vadd.f32 %v2689, %v2782
        %v2784 = vpop.f32.mrf.mxu0
        %v2785 = vadd.f32 %v2689, %v2784
        %2786 = vdwg.mxu0
        %v2787 = vadd.f32 %v2748, %v2665
        %v2788 = vadd.f32 %v2750, %v2666
        %v2789 = vadd.f32 %v2753, %v2667
        %v2790 = vadd.f32 %v2755, %v2668
        %v2791 = vadd.f32 %v2758, %v2669
        %v2792 = vadd.f32 %v2760, %v2670
        %v2793 = vadd.f32 %v2763, %v2671
        %v2794 = vadd.f32 %v2765, %v2672
        %v2795 = vadd.f32 %v2768, %v2673
        %v2796 = vadd.f32 %v2770, %v2674
        %v2797 = vadd.f32 %v2773, %v2675
        %v2798 = vadd.f32 %v2775, %v2676
        %v2799 = vadd.f32 %v2778, %v2677
        %v2800 = vadd.f32 %v2780, %v2678
        %v2801 = vadd.f32 %v2783, %v2679
        %v2802 = vadd.f32 %v2785, %v2680
        %v2803 = vsub.f32 0.0, %v2787
        %v2804 = vsub.f32 0.0, %v2788
        %v2805 = vsub.f32 0.0, %v2789
        %v2806 = vsub.f32 0.0, %v2790
        %v2807 = vsub.f32 0.0, %v2791
        %v2808 = vsub.f32 0.0, %v2792
        %v2809 = vsub.f32 0.0, %v2793
        %v2810 = vsub.f32 0.0, %v2794
        %v2811 = vsub.f32 0.0, %v2795
        %v2812 = vsub.f32 0.0, %v2796
        %v2813 = vsub.f32 0.0, %v2797
        %v2814 = vsub.f32 0.0, %v2798
        %v2815 = vsub.f32 0.0, %v2799
        %v2816 = vsub.f32 0.0, %v2800
        %v2817 = vsub.f32 0.0, %v2801
        %v2818 = vsub.f32 0.0, %v2802
        %v2819 = vmul.f32 %v2803, 1.442695
        %v2820 = vpow.pop %v2819
        %v2821 = vmul.f32 %v2804, 1.442695
        %v2822 = vpow.pop %v2821
        %v2823 = vmul.f32 %v2805, 1.442695
        %v2824 = vpow.pop %v2823
        %v2825 = vmul.f32 %v2806, 1.442695
        %v2826 = vpow.pop %v2825
        %v2827 = vmul.f32 %v2807, 1.442695
        %v2828 = vpow.pop %v2827
        %v2829 = vmul.f32 %v2808, 1.442695
        %v2830 = vpow.pop %v2829
        %v2831 = vmul.f32 %v2809, 1.442695
        %v2832 = vpow.pop %v2831
        %v2833 = vmul.f32 %v2810, 1.442695
        %v2834 = vpow.pop %v2833
        %v2835 = vmul.f32 %v2811, 1.442695
        %v2836 = vpow.pop %v2835
        %v2837 = vmul.f32 %v2812, 1.442695
        %v2838 = vpow.pop %v2837
        %v2839 = vmul.f32 %v2813, 1.442695
        %v2840 = vpow.pop %v2839
        %v2841 = vmul.f32 %v2814, 1.442695
        %v2842 = vpow.pop %v2841
        %v2843 = vmul.f32 %v2815, 1.442695
        %v2844 = vpow.pop %v2843
        %v2845 = vmul.f32 %v2816, 1.442695
        %v2846 = vpow.pop %v2845
        %v2847 = vmul.f32 %v2817, 1.442695
        %v2848 = vpow.pop %v2847
        %v2849 = vmul.f32 %v2818, 1.442695
        %v2850 = vpow.pop %v2849
        %v2851 = vadd.f32 %v2820, 1.0
        %v2852 = vadd.f32 %v2822, 1.0
        %v2853 = vadd.f32 %v2824, 1.0
        %v2854 = vadd.f32 %v2826, 1.0
        %v2855 = vadd.f32 %v2828, 1.0
        %v2856 = vadd.f32 %v2830, 1.0
        %v2857 = vadd.f32 %v2832, 1.0
        %v2858 = vadd.f32 %v2834, 1.0
        %v2859 = vadd.f32 %v2836, 1.0
        %v2860 = vadd.f32 %v2838, 1.0
        %v2861 = vadd.f32 %v2840, 1.0
        %v2862 = vadd.f32 %v2842, 1.0
        %v2863 = vadd.f32 %v2844, 1.0
        %v2864 = vadd.f32 %v2846, 1.0
        %v2865 = vadd.f32 %v2848, 1.0
        %v2866 = vadd.f32 %v2850, 1.0
        %v2867 = vrcp.pop %v2851
        %v2868 = vrcp.pop %v2852
        %v2869 = vrcp.pop %v2853
        %v2870 = vrcp.pop %v2854
        %v2871 = vrcp.pop %v2855
        %v2872 = vrcp.pop %v2856
        %v2873 = vrcp.pop %v2857
        %v2874 = vrcp.pop %v2858
        %v2875 = vrcp.pop %v2859
        %v2876 = vrcp.pop %v2860
        %v2877 = vrcp.pop %v2861
        %v2878 = vrcp.pop %v2862
        %v2879 = vrcp.pop %v2863
        %v2880 = vrcp.pop %v2864
        %v2881 = vrcp.pop %v2865
        %v2882 = vrcp.pop %v2866
        %v2883 = vmul.f32 %v2787, %v2867
        %v2884 = vmul.f32 %v2788, %v2868
        %v2885 = vmul.f32 %v2789, %v2869
        %v2886 = vmul.f32 %v2790, %v2870
        %v2887 = vmul.f32 %v2791, %v2871
        %v2888 = vmul.f32 %v2792, %v2872
        %v2889 = vmul.f32 %v2793, %v2873
        %v2890 = vmul.f32 %v2794, %v2874
        %v2891 = vmul.f32 %v2795, %v2875
        %v2892 = vmul.f32 %v2796, %v2876
        %v2893 = vmul.f32 %v2797, %v2877
        %v2894 = vmul.f32 %v2798, %v2878
        %v2895 = vmul.f32 %v2799, %v2879
        %v2896 = vmul.f32 %v2800, %v2880
        %v2897 = vmul.f32 %v2801, %v2881
        %v2898 = vmul.f32 %v2802, %v2882
        %2899 = vadd.xlane.f32.xlu0 %v2883
        %v2900 = vpop.xlane.xlu0 %2899
        %2901 = vadd.xlane.f32.xlu0 %v2884
        %v2902 = vpop.xlane.xlu0 %2901
        %2903 = vadd.xlane.f32.xlu0 %v2885
        %v2904 = vpop.xlane.xlu0 %2903
        %2905 = vadd.xlane.f32.xlu0 %v2886
        %v2906 = vpop.xlane.xlu0 %2905
        %2907 = vadd.xlane.f32.xlu0 %v2887
        %v2908 = vpop.xlane.xlu0 %2907
        %2909 = vadd.xlane.f32.xlu0 %v2888
        %v2910 = vpop.xlane.xlu0 %2909
        %2911 = vadd.xlane.f32.xlu0 %v2889
        %v2912 = vpop.xlane.xlu0 %2911
        %2913 = vadd.xlane.f32.xlu0 %v2890
        %v2914 = vpop.xlane.xlu0 %2913
        %2915 = vadd.xlane.f32.xlu0 %v2891
        %v2916 = vpop.xlane.xlu0 %2915
        %2917 = vadd.xlane.f32.xlu0 %v2892
        %v2918 = vpop.xlane.xlu0 %2917
        %2919 = vadd.xlane.f32.xlu0 %v2893
        %v2920 = vpop.xlane.xlu0 %2919
        %2921 = vadd.xlane.f32.xlu0 %v2894
        %v2922 = vpop.xlane.xlu0 %2921
        %2923 = vadd.xlane.f32.xlu0 %v2895
        %v2924 = vpop.xlane.xlu0 %2923
        %2925 = vadd.xlane.f32.xlu0 %v2896
        %v2926 = vpop.xlane.xlu0 %2925
        %2927 = vadd.xlane.f32.xlu0 %v2897
        %v2928 = vpop.xlane.xlu0 %2927
        %2929 = vadd.xlane.f32.xlu0 %v2898
        %v2930 = vpop.xlane.xlu0 %2929
        %v2931 = vmul.f32 %v2900, %v1770
        %v2932 = vmul.f32 %v2902, %v1770
        %v2933 = vmul.f32 %v2904, %v1770
        %v2934 = vmul.f32 %v2906, %v1770
        %v2935 = vmul.f32 %v2908, %v1770
        %v2936 = vmul.f32 %v2910, %v1770
        %v2937 = vmul.f32 %v2912, %v1770
        %v2938 = vmul.f32 %v2914, %v1770
        %v2939 = vmul.f32 %v2916, %v1770
        %v2940 = vmul.f32 %v2918, %v1770
        %v2941 = vmul.f32 %v2920, %v1770
        %v2942 = vmul.f32 %v2922, %v1770
        %v2943 = vmul.f32 %v2924, %v1770
        %v2944 = vmul.f32 %v2926, %v1770
        %v2945 = vmul.f32 %v2928, %v1770
        %v2946 = vmul.f32 %v2930, %v1770
        %v2947 = vsub.f32 %v2883, %v2931
        %v2948 = vsub.f32 %v2884, %v2932
        %v2949 = vsub.f32 %v2885, %v2933
        %v2950 = vsub.f32 %v2886, %v2934
        %v2951 = vsub.f32 %v2887, %v2935
        %v2952 = vsub.f32 %v2888, %v2936
        %v2953 = vsub.f32 %v2889, %v2937
        %v2954 = vsub.f32 %v2890, %v2938
        %v2955 = vsub.f32 %v2891, %v2939
        %v2956 = vsub.f32 %v2892, %v2940
        %v2957 = vsub.f32 %v2893, %v2941
        %v2958 = vsub.f32 %v2894, %v2942
        %v2959 = vsub.f32 %v2895, %v2943
        %v2960 = vsub.f32 %v2896, %v2944
        %v2961 = vsub.f32 %v2897, %v2945
        %v2962 = vsub.f32 %v2898, %v2946
        %v2963 = vmul.f32 %v2947, %v2947
        %v2964 = vmul.f32 %v2948, %v2948
        %v2965 = vmul.f32 %v2949, %v2949
        %v2966 = vmul.f32 %v2950, %v2950
        %v2967 = vmul.f32 %v2951, %v2951
        %v2968 = vmul.f32 %v2952, %v2952
        %v2969 = vmul.f32 %v2953, %v2953
        %v2970 = vmul.f32 %v2954, %v2954
        %v2971 = vmul.f32 %v2955, %v2955
        %v2972 = vmul.f32 %v2956, %v2956
        %v2973 = vmul.f32 %v2957, %v2957
        %v2974 = vmul.f32 %v2958, %v2958
        %v2975 = vmul.f32 %v2959, %v2959
        %v2976 = vmul.f32 %v2960, %v2960
        %v2977 = vmul.f32 %v2961, %v2961
        %v2978 = vmul.f32 %v2962, %v2962
        %2979 = vadd.xlane.f32.xlu0 %v2963
        %v2980 = vpop.xlane.xlu0 %2979
        %2981 = vadd.xlane.f32.xlu0 %v2964
        %v2982 = vpop.xlane.xlu0 %2981
        %2983 = vadd.xlane.f32.xlu0 %v2965
        %v2984 = vpop.xlane.xlu0 %2983
        %2985 = vadd.xlane.f32.xlu0 %v2966
        %v2986 = vpop.xlane.xlu0 %2985
        %2987 = vadd.xlane.f32.xlu0 %v2967
        %v2988 = vpop.xlane.xlu0 %2987
        %2989 = vadd.xlane.f32.xlu0 %v2968
        %v2990 = vpop.xlane.xlu0 %2989
        %2991 = vadd.xlane.f32.xlu0 %v2969
        %v2992 = vpop.xlane.xlu0 %2991
        %2993 = vadd.xlane.f32.xlu0 %v2970
        %v2994 = vpop.xlane.xlu0 %2993
        %2995 = vadd.xlane.f32.xlu0 %v2971
        %v2996 = vpop.xlane.xlu0 %2995
        %2997 = vadd.xlane.f32.xlu0 %v2972
        %v2998 = vpop.xlane.xlu0 %2997
        %2999 = vadd.xlane.f32.xlu0 %v2973
        %v3000 = vpop.xlane.xlu0 %2999
        %3001 = vadd.xlane.f32.xlu0 %v2974
        %v3002 = vpop.xlane.xlu0 %3001
        %3003 = vadd.xlane.f32.xlu0 %v2975
        %v3004 = vpop.xlane.xlu0 %3003
        %3005 = vadd.xlane.f32.xlu0 %v2976
        %v3006 = vpop.xlane.xlu0 %3005
        %3007 = vadd.xlane.f32.xlu0 %v2977
        %v3008 = vpop.xlane.xlu0 %3007
        %3009 = vadd.xlane.f32.xlu0 %v2978
        %v3010 = vpop.xlane.xlu0 %3009
        %v3011 = vmul.f32 %v2980, %v1770
        %v3012 = vmul.f32 %v2982, %v1770
        %v3013 = vmul.f32 %v2984, %v1770
        %v3014 = vmul.f32 %v2986, %v1770
        %v3015 = vmul.f32 %v2988, %v1770
        %v3016 = vmul.f32 %v2990, %v1770
        %v3017 = vmul.f32 %v2992, %v1770
        %v3018 = vmul.f32 %v2994, %v1770
        %v3019 = vmul.f32 %v2996, %v1770
        %v3020 = vmul.f32 %v2998, %v1770
        %v3021 = vmul.f32 %v3000, %v1770
        %v3022 = vmul.f32 %v3002, %v1770
        %v3023 = vmul.f32 %v3004, %v1770
        %v3024 = vmul.f32 %v3006, %v1770
        %v3025 = vmul.f32 %v3008, %v1770
        %v3026 = vmul.f32 %v3010, %v1770
        %v3027 = vadd.f32 %v3011, 0.1
        %v3028 = vadd.f32 %v3012, 0.1
        %v3029 = vadd.f32 %v3013, 0.1
        %v3030 = vadd.f32 %v3014, 0.1
        %v3031 = vadd.f32 %v3015, 0.1
        %v3032 = vadd.f32 %v3016, 0.1
        %v3033 = vadd.f32 %v3017, 0.1
        %v3034 = vadd.f32 %v3018, 0.1
        %v3035 = vadd.f32 %v3019, 0.1
        %v3036 = vadd.f32 %v3020, 0.1
        %v3037 = vadd.f32 %v3021, 0.1
        %v3038 = vadd.f32 %v3022, 0.1
        %v3039 = vadd.f32 %v3023, 0.1
        %v3040 = vadd.f32 %v3024, 0.1
        %v3041 = vadd.f32 %v3025, 0.1
        %v3042 = vadd.f32 %v3026, 0.1
        %v3043 = vrsqrt.pop %v3027
        %v3044 = vmul.f32 %v3043, %v3027
        %v3045 = vmul.f32 %v3044, %v3043
        %v3046 = vmul.f32 0.5, %v3045
        %v3047 = vsub.f32 1.5, %v3046
        %v3048 = vmul.f32 %v3043, %v3047
        %vm3049 = vweird.f32 %v3027
        %vm3050 = vweird.f32 %v3043
        %vm3051 = vmor %vm3049, %vm3050
        %v3052 = vsel %vm3051, %v3043, %v3048
        %v3053 = vrsqrt.pop %v3028
        %v3054 = vmul.f32 %v3053, %v3028
        %v3055 = vmul.f32 %v3054, %v3053
        %v3056 = vmul.f32 0.5, %v3055
        %v3057 = vsub.f32 1.5, %v3056
        %v3058 = vmul.f32 %v3053, %v3057
        %vm3059 = vweird.f32 %v3028
        %vm3060 = vweird.f32 %v3053
        %vm3061 = vmor %vm3059, %vm3060
        %v3062 = vsel %vm3061, %v3053, %v3058
        %v3063 = vrsqrt.pop %v3029
        %v3064 = vmul.f32 %v3063, %v3029
        %v3065 = vmul.f32 %v3064, %v3063
        %v3066 = vmul.f32 0.5, %v3065
        %v3067 = vsub.f32 1.5, %v3066
        %v3068 = vmul.f32 %v3063, %v3067
        %vm3069 = vweird.f32 %v3029
        %vm3070 = vweird.f32 %v3063
        %vm3071 = vmor %vm3069, %vm3070
        %v3072 = vsel %vm3071, %v3063, %v3068
        %v3073 = vrsqrt.pop %v3030
        %v3074 = vmul.f32 %v3073, %v3030
        %v3075 = vmul.f32 %v3074, %v3073
        %v3076 = vmul.f32 0.5, %v3075
        %v3077 = vsub.f32 1.5, %v3076
        %v3078 = vmul.f32 %v3073, %v3077
        %vm3079 = vweird.f32 %v3030
        %vm3080 = vweird.f32 %v3073
        %vm3081 = vmor %vm3079, %vm3080
        %v3082 = vsel %vm3081, %v3073, %v3078
        %v3083 = vrsqrt.pop %v3031
        %v3084 = vmul.f32 %v3083, %v3031
        %v3085 = vmul.f32 %v3084, %v3083
        %v3086 = vmul.f32 0.5, %v3085
        %v3087 = vsub.f32 1.5, %v3086
        %v3088 = vmul.f32 %v3083, %v3087
        %vm3089 = vweird.f32 %v3031
        %vm3090 = vweird.f32 %v3083
        %vm3091 = vmor %vm3089, %vm3090
        %v3092 = vsel %vm3091, %v3083, %v3088
        %v3093 = vrsqrt.pop %v3032
        %v3094 = vmul.f32 %v3093, %v3032
        %v3095 = vmul.f32 %v3094, %v3093
        %v3096 = vmul.f32 0.5, %v3095
        %v3097 = vsub.f32 1.5, %v3096
        %v3098 = vmul.f32 %v3093, %v3097
        %vm3099 = vweird.f32 %v3032
        %vm3100 = vweird.f32 %v3093
        %vm3101 = vmor %vm3099, %vm3100
        %v3102 = vsel %vm3101, %v3093, %v3098
        %v3103 = vrsqrt.pop %v3033
        %v3104 = vmul.f32 %v3103, %v3033
        %v3105 = vmul.f32 %v3104, %v3103
        %v3106 = vmul.f32 0.5, %v3105
        %v3107 = vsub.f32 1.5, %v3106
        %v3108 = vmul.f32 %v3103, %v3107
        %vm3109 = vweird.f32 %v3033
        %vm3110 = vweird.f32 %v3103
        %vm3111 = vmor %vm3109, %vm3110
        %v3112 = vsel %vm3111, %v3103, %v3108
        %v3113 = vrsqrt.pop %v3034
        %v3114 = vmul.f32 %v3113, %v3034
        %v3115 = vmul.f32 %v3114, %v3113
        %v3116 = vmul.f32 0.5, %v3115
        %v3117 = vsub.f32 1.5, %v3116
        %v3118 = vmul.f32 %v3113, %v3117
        %vm3119 = vweird.f32 %v3034
        %vm3120 = vweird.f32 %v3113
        %vm3121 = vmor %vm3119, %vm3120
        %v3122 = vsel %vm3121, %v3113, %v3118
        %v3123 = vrsqrt.pop %v3035
        %v3124 = vmul.f32 %v3123, %v3035
        %v3125 = vmul.f32 %v3124, %v3123
        %v3126 = vmul.f32 0.5, %v3125
        %v3127 = vsub.f32 1.5, %v3126
        %v3128 = vmul.f32 %v3123, %v3127
        %vm3129 = vweird.f32 %v3035
        %vm3130 = vweird.f32 %v3123
        %vm3131 = vmor %vm3129, %vm3130
        %v3132 = vsel %vm3131, %v3123, %v3128
        %v3133 = vrsqrt.pop %v3036
        %v3134 = vmul.f32 %v3133, %v3036
        %v3135 = vmul.f32 %v3134, %v3133
        %v3136 = vmul.f32 0.5, %v3135
        %v3137 = vsub.f32 1.5, %v3136
        %v3138 = vmul.f32 %v3133, %v3137
        %vm3139 = vweird.f32 %v3036
        %vm3140 = vweird.f32 %v3133
        %vm3141 = vmor %vm3139, %vm3140
        %v3142 = vsel %vm3141, %v3133, %v3138
        %v3143 = vrsqrt.pop %v3037
        %v3144 = vmul.f32 %v3143, %v3037
        %v3145 = vmul.f32 %v3144, %v3143
        %v3146 = vmul.f32 0.5, %v3145
        %v3147 = vsub.f32 1.5, %v3146
        %v3148 = vmul.f32 %v3143, %v3147
        %vm3149 = vweird.f32 %v3037
        %vm3150 = vweird.f32 %v3143
        %vm3151 = vmor %vm3149, %vm3150
        %v3152 = vsel %vm3151, %v3143, %v3148
        %v3153 = vrsqrt.pop %v3038
        %v3154 = vmul.f32 %v3153, %v3038
        %v3155 = vmul.f32 %v3154, %v3153
        %v3156 = vmul.f32 0.5, %v3155
        %v3157 = vsub.f32 1.5, %v3156
        %v3158 = vmul.f32 %v3153, %v3157
        %vm3159 = vweird.f32 %v3038
        %vm3160 = vweird.f32 %v3153
        %vm3161 = vmor %vm3159, %vm3160
        %v3162 = vsel %vm3161, %v3153, %v3158
        %v3163 = vrsqrt.pop %v3039
        %v3164 = vmul.f32 %v3163, %v3039
        %v3165 = vmul.f32 %v3164, %v3163
        %v3166 = vmul.f32 0.5, %v3165
        %v3167 = vsub.f32 1.5, %v3166
        %v3168 = vmul.f32 %v3163, %v3167
        %vm3169 = vweird.f32 %v3039
        %vm3170 = vweird.f32 %v3163
        %vm3171 = vmor %vm3169, %vm3170
        %v3172 = vsel %vm3171, %v3163, %v3168
        %v3173 = vrsqrt.pop %v3040
        %v3174 = vmul.f32 %v3173, %v3040
        %v3175 = vmul.f32 %v3174, %v3173
        %v3176 = vmul.f32 0.5, %v3175
        %v3177 = vsub.f32 1.5, %v3176
        %v3178 = vmul.f32 %v3173, %v3177
        %vm3179 = vweird.f32 %v3040
        %vm3180 = vweird.f32 %v3173
        %vm3181 = vmor %vm3179, %vm3180
        %v3182 = vsel %vm3181, %v3173, %v3178
        %v3183 = vrsqrt.pop %v3041
        %v3184 = vmul.f32 %v3183, %v3041
        %v3185 = vmul.f32 %v3184, %v3183
        %v3186 = vmul.f32 0.5, %v3185
        %v3187 = vsub.f32 1.5, %v3186
        %v3188 = vmul.f32 %v3183, %v3187
        %vm3189 = vweird.f32 %v3041
        %vm3190 = vweird.f32 %v3183
        %vm3191 = vmor %vm3189, %vm3190
        %v3192 = vsel %vm3191, %v3183, %v3188
        %v3193 = vrsqrt.pop %v3042
        %v3194 = vmul.f32 %v3193, %v3042
        %v3195 = vmul.f32 %v3194, %v3193
        %v3196 = vmul.f32 0.5, %v3195
        %v3197 = vsub.f32 1.5, %v3196
        %v3198 = vmul.f32 %v3193, %v3197
        %vm3199 = vweird.f32 %v3042
        %vm3200 = vweird.f32 %v3193
        %vm3201 = vmor %vm3199, %vm3200
        %v3202 = vsel %vm3201, %v3193, %v3198
        %v3203 = vmul.f32 %v2947, %v3052
        %v3204 = vmul.f32 %v2948, %v3062
        %v3205 = vmul.f32 %v2949, %v3072
        %v3206 = vmul.f32 %v2950, %v3082
        %v3207 = vmul.f32 %v2951, %v3092
        %v3208 = vmul.f32 %v2952, %v3102
        %v3209 = vmul.f32 %v2953, %v3112
        %v3210 = vmul.f32 %v2954, %v3122
        %v3211 = vmul.f32 %v2955, %v3132
        %v3212 = vmul.f32 %v2956, %v3142
        %v3213 = vmul.f32 %v2957, %v3152
        %v3214 = vmul.f32 %v2958, %v3162
        %v3215 = vmul.f32 %v2959, %v3172
        %v3216 = vmul.f32 %v2960, %v3182
        %v3217 = vmul.f32 %v2961, %v3192
        %v3218 = vmul.f32 %v2962, %v3202
        %v3219 = vperm.slane %v824, 7
        %v3220 = vmul.f32 %v3203, %v3219
        %v3221 = vmul.f32 %v3204, %v3219
        %v3222 = vmul.f32 %v3205, %v3219
        %v3223 = vmul.f32 %v3206, %v3219
        %v3224 = vmul.f32 %v3207, %v3219
        %v3225 = vmul.f32 %v3208, %v3219
        %v3226 = vmul.f32 %v3209, %v3219
        %v3227 = vmul.f32 %v3210, %v3219
        %v3228 = vmul.f32 %v3211, %v3219
        %v3229 = vmul.f32 %v3212, %v3219
        %v3230 = vmul.f32 %v3213, %v3219
        %v3231 = vmul.f32 %v3214, %v3219
        %v3232 = vmul.f32 %v3215, %v3219
        %v3233 = vmul.f32 %v3216, %v3219
        %v3234 = vmul.f32 %v3217, %v3219
        %v3235 = vmul.f32 %v3218, %v3219
        %v3236 = vperm.slane %v825, 0
        %v3237 = vadd.f32 %v3220, %v3236
        %v3238 = vadd.f32 %v3221, %v3236
        %v3239 = vadd.f32 %v3222, %v3236
        %v3240 = vadd.f32 %v3223, %v3236
        %v3241 = vadd.f32 %v3224, %v3236
        %v3242 = vadd.f32 %v3225, %v3236
        %v3243 = vadd.f32 %v3226, %v3236
        %v3244 = vadd.f32 %v3227, %v3236
        %v3245 = vadd.f32 %v3228, %v3236
        %v3246 = vadd.f32 %v3229, %v3236
        %v3247 = vadd.f32 %v3230, %v3236
        %v3248 = vadd.f32 %v3231, %v3236
        %v3249 = vadd.f32 %v3232, %v3236
        %v3250 = vadd.f32 %v3233, %v3236
        %v3251 = vadd.f32 %v3234, %v3236
        %v3252 = vadd.f32 %v3235, %v3236
        %v3253 = vadd.f32 %v2665, %v3237
        %v3254 = vadd.f32 %v2666, %v3238
        %v3255 = vadd.f32 %v2667, %v3239
        %v3256 = vadd.f32 %v2668, %v3240
        %v3257 = vadd.f32 %v2669, %v3241
        %v3258 = vadd.f32 %v2670, %v3242
        %v3259 = vadd.f32 %v2671, %v3243
        %v3260 = vadd.f32 %v2672, %v3244
        %v3261 = vadd.f32 %v2673, %v3245
        %v3262 = vadd.f32 %v2674, %v3246
        %v3263 = vadd.f32 %v2675, %v3247
        %v3264 = vadd.f32 %v2676, %v3248
        %v3265 = vadd.f32 %v2677, %v3249
        %v3266 = vadd.f32 %v2678, %v3250
        %v3267 = vadd.f32 %v2679, %v3251
        %v3268 = vadd.f32 %v2680, %v3252
        %v3269 = vpack.c.bf16 %v3238, %v3237
        %v3270 = vpack.c.bf16 %v3240, %v3239
        %v3271 = vpack.c.bf16 %v3242, %v3241
        %v3272 = vpack.c.bf16 %v3244, %v3243
        %v3273 = vpack.c.bf16 %v3246, %v3245
        %v3274 = vpack.c.bf16 %v3248, %v3247
        %v3275 = vpack.c.bf16 %v3250, %v3249
        %v3276 = vpack.c.bf16 %v3252, %v3251
        %v3277 = vperm.slane %v825, 1
        %v3294 = vunpack.c.l.b16 %v776
        %v3295 = vunpack.c.l.b16 %v777
        %v3296 = vunpack.c.l.b16 %v778
        %v3297 = vunpack.c.l.b16 %v779
        %v3298 = vunpack.c.l.b16 %v780
        %v3299 = vunpack.c.l.b16 %v781
        %v3300 = vunpack.c.l.b16 %v782
        %v3301 = vunpack.c.l.b16 %v783
        %v3302 = vunpack.c.l.b16 %v784
        %v3303 = vunpack.c.l.b16 %v785
        %v3304 = vunpack.c.l.b16 %v786
        %v3305 = vunpack.c.l.b16 %v787
        %v3306 = vunpack.c.l.b16 %v788
        %v3307 = vunpack.c.l.b16 %v789
        %v3308 = vunpack.c.l.b16 %v790
        %v3309 = vunpack.c.l.b16 %v791
        %v3310 = vpack.c.b16 %v3295, %v3294
        %v3311 = vpack.c.b16 %v3297, %v3296
        %v3312 = vpack.c.b16 %v3299, %v3298
        %v3313 = vpack.c.b16 %v3301, %v3300
        %v3314 = vpack.c.b16 %v3303, %v3302
        %v3315 = vpack.c.b16 %v3305, %v3304
        %v3316 = vpack.c.b16 %v3307, %v3306
        %v3317 = vpack.c.b16 %v3309, %v3308
        %3326 = vmatpush.bf16.msra.mxu0 %v3317
        %3327 = vmatpush.bf16.msra.mxu0 %v3316
        %3328 = vmatpush.bf16.msra.mxu0 %v3315
        %3329 = vmatpush.bf16.msra.mxu0 %v3314
        %3330 = vmatpush.bf16.msra.mxu0 %v3313
        %3331 = vmatpush.bf16.msra.mxu0 %v3312
        %3332 = vmatpush.bf16.msra.mxu0 %v3311
        %3333 = vmatpush.bf16.msra.mxu0 %v3310
        %3334 = vmatmul.bf16.gmra.mxu0 %v3269
        %v3335 = vpop.f32.mrf.mxu0
        %v3336 = vadd.f32 %v3277, %v3335
        %v3337 = vpop.f32.mrf.mxu0
        %v3338 = vadd.f32 %v3277, %v3337
        %3339 = vmatmul.bf16.gmra.mxu0 %v3270
        %v3340 = vpop.f32.mrf.mxu0
        %v3341 = vadd.f32 %v3277, %v3340
        %v3342 = vpop.f32.mrf.mxu0
        %v3343 = vadd.f32 %v3277, %v3342
        %3344 = vmatmul.bf16.gmra.mxu0 %v3271
        %v3345 = vpop.f32.mrf.mxu0
        %v3346 = vadd.f32 %v3277, %v3345
        %v3347 = vpop.f32.mrf.mxu0
        %v3348 = vadd.f32 %v3277, %v3347
        %3349 = vmatmul.bf16.gmra.mxu0 %v3272
        %v3350 = vpop.f32.mrf.mxu0
        %v3351 = vadd.f32 %v3277, %v3350
        %v3352 = vpop.f32.mrf.mxu0
        %v3353 = vadd.f32 %v3277, %v3352
        %3354 = vmatmul.bf16.gmra.mxu0 %v3273
        %v3355 = vpop.f32.mrf.mxu0
        %v3356 = vadd.f32 %v3277, %v3355
        %v3357 = vpop.f32.mrf.mxu0
        %v3358 = vadd.f32 %v3277, %v3357
        %3359 = vmatmul.bf16.gmra.mxu0 %v3274
        %v3360 = vpop.f32.mrf.mxu0
        %v3361 = vadd.f32 %v3277, %v3360
        %v3362 = vpop.f32.mrf.mxu0
        %v3363 = vadd.f32 %v3277, %v3362
        %3364 = vmatmul.bf16.gmra.mxu0 %v3275
        %v3365 = vpop.f32.mrf.mxu0
        %v3366 = vadd.f32 %v3277, %v3365
        %v3367 = vpop.f32.mrf.mxu0
        %v3368 = vadd.f32 %v3277, %v3367
        %3369 = vmatmul.bf16.gmra.mxu0 %v3276
        %v3370 = vpop.f32.mrf.mxu0
        %v3371 = vadd.f32 %v3277, %v3370
        %v3372 = vpop.f32.mrf.mxu0
        %v3373 = vadd.f32 %v3277, %v3372
        %3374 = vdwg.mxu0
        %v3375 = vadd.f32 %v3336, %v3253
        %v3376 = vadd.f32 %v3338, %v3254
        %v3377 = vadd.f32 %v3341, %v3255
        %v3378 = vadd.f32 %v3343, %v3256
        %v3379 = vadd.f32 %v3346, %v3257
        %v3380 = vadd.f32 %v3348, %v3258
        %v3381 = vadd.f32 %v3351, %v3259
        %v3382 = vadd.f32 %v3353, %v3260
        %v3383 = vadd.f32 %v3356, %v3261
        %v3384 = vadd.f32 %v3358, %v3262
        %v3385 = vadd.f32 %v3361, %v3263
        %v3386 = vadd.f32 %v3363, %v3264
        %v3387 = vadd.f32 %v3366, %v3265
        %v3388 = vadd.f32 %v3368, %v3266
        %v3389 = vadd.f32 %v3371, %v3267
        %v3390 = vadd.f32 %v3373, %v3268
        %v3391 = vsub.f32 0.0, %v3375
        %v3392 = vsub.f32 0.0, %v3376
        %v3393 = vsub.f32 0.0, %v3377
        %v3394 = vsub.f32 0.0, %v3378
        %v3395 = vsub.f32 0.0, %v3379
        %v3396 = vsub.f32 0.0, %v3380
        %v3397 = vsub.f32 0.0, %v3381
        %v3398 = vsub.f32 0.0, %v3382
        %v3399 = vsub.f32 0.0, %v3383
        %v3400 = vsub.f32 0.0, %v3384
        %v3401 = vsub.f32 0.0, %v3385
        %v3402 = vsub.f32 0.0, %v3386
        %v3403 = vsub.f32 0.0, %v3387
        %v3404 = vsub.f32 0.0, %v3388
        %v3405 = vsub.f32 0.0, %v3389
        %v3406 = vsub.f32 0.0, %v3390
        %v3407 = vmul.f32 %v3391, 1.442695
        %v3408 = vpow.pop %v3407
        %v3409 = vmul.f32 %v3392, 1.442695
        %v3410 = vpow.pop %v3409
        %v3411 = vmul.f32 %v3393, 1.442695
        %v3412 = vpow.pop %v3411
        %v3413 = vmul.f32 %v3394, 1.442695
        %v3414 = vpow.pop %v3413
        %v3415 = vmul.f32 %v3395, 1.442695
        %v3416 = vpow.pop %v3415
        %v3417 = vmul.f32 %v3396, 1.442695
        %v3418 = vpow.pop %v3417
        %v3419 = vmul.f32 %v3397, 1.442695
        %v3420 = vpow.pop %v3419
        %v3421 = vmul.f32 %v3398, 1.442695
        %v3422 = vpow.pop %v3421
        %v3423 = vmul.f32 %v3399, 1.442695
        %v3424 = vpow.pop %v3423
        %v3425 = vmul.f32 %v3400, 1.442695
        %v3426 = vpow.pop %v3425
        %v3427 = vmul.f32 %v3401, 1.442695
        %v3428 = vpow.pop %v3427
        %v3429 = vmul.f32 %v3402, 1.442695
        %v3430 = vpow.pop %v3429
        %v3431 = vmul.f32 %v3403, 1.442695
        %v3432 = vpow.pop %v3431
        %v3433 = vmul.f32 %v3404, 1.442695
        %v3434 = vpow.pop %v3433
        %v3435 = vmul.f32 %v3405, 1.442695
        %v3436 = vpow.pop %v3435
        %v3437 = vmul.f32 %v3406, 1.442695
        %v3438 = vpow.pop %v3437
        %v3439 = vadd.f32 %v3408, 1.0
        %v3440 = vadd.f32 %v3410, 1.0
        %v3441 = vadd.f32 %v3412, 1.0
        %v3442 = vadd.f32 %v3414, 1.0
        %v3443 = vadd.f32 %v3416, 1.0
        %v3444 = vadd.f32 %v3418, 1.0
        %v3445 = vadd.f32 %v3420, 1.0
        %v3446 = vadd.f32 %v3422, 1.0
        %v3447 = vadd.f32 %v3424, 1.0
        %v3448 = vadd.f32 %v3426, 1.0
        %v3449 = vadd.f32 %v3428, 1.0
        %v3450 = vadd.f32 %v3430, 1.0
        %v3451 = vadd.f32 %v3432, 1.0
        %v3452 = vadd.f32 %v3434, 1.0
        %v3453 = vadd.f32 %v3436, 1.0
        %v3454 = vadd.f32 %v3438, 1.0
        %v3455 = vrcp.pop %v3439
        %v3456 = vrcp.pop %v3440
        %v3457 = vrcp.pop %v3441
        %v3458 = vrcp.pop %v3442
        %v3459 = vrcp.pop %v3443
        %v3460 = vrcp.pop %v3444
        %v3461 = vrcp.pop %v3445
        %v3462 = vrcp.pop %v3446
        %v3463 = vrcp.pop %v3447
        %v3464 = vrcp.pop %v3448
        %v3465 = vrcp.pop %v3449
        %v3466 = vrcp.pop %v3450
        %v3467 = vrcp.pop %v3451
        %v3468 = vrcp.pop %v3452
        %v3469 = vrcp.pop %v3453
        %v3470 = vrcp.pop %v3454
        %v3471 = vmul.f32 %v3375, %v3455
        %v3472 = vmul.f32 %v3376, %v3456
        %v3473 = vmul.f32 %v3377, %v3457
        %v3474 = vmul.f32 %v3378, %v3458
        %v3475 = vmul.f32 %v3379, %v3459
        %v3476 = vmul.f32 %v3380, %v3460
        %v3477 = vmul.f32 %v3381, %v3461
        %v3478 = vmul.f32 %v3382, %v3462
        %v3479 = vmul.f32 %v3383, %v3463
        %v3480 = vmul.f32 %v3384, %v3464
        %v3481 = vmul.f32 %v3385, %v3465
        %v3482 = vmul.f32 %v3386, %v3466
        %v3483 = vmul.f32 %v3387, %v3467
        %v3484 = vmul.f32 %v3388, %v3468
        %v3485 = vmul.f32 %v3389, %v3469
        %v3486 = vmul.f32 %v3390, %v3470
        %3487 = vadd.xlane.f32.xlu0 %v3471
        %v3488 = vpop.xlane.xlu0 %3487
        %3489 = vadd.xlane.f32.xlu0 %v3472
        %v3490 = vpop.xlane.xlu0 %3489
        %3491 = vadd.xlane.f32.xlu0 %v3473
        %v3492 = vpop.xlane.xlu0 %3491
        %3493 = vadd.xlane.f32.xlu0 %v3474
        %v3494 = vpop.xlane.xlu0 %3493
        %3495 = vadd.xlane.f32.xlu0 %v3475
        %v3496 = vpop.xlane.xlu0 %3495
        %3497 = vadd.xlane.f32.xlu0 %v3476
        %v3498 = vpop.xlane.xlu0 %3497
        %3499 = vadd.xlane.f32.xlu0 %v3477
        %v3500 = vpop.xlane.xlu0 %3499
        %3501 = vadd.xlane.f32.xlu0 %v3478
        %v3502 = vpop.xlane.xlu0 %3501
        %3503 = vadd.xlane.f32.xlu0 %v3479
        %v3504 = vpop.xlane.xlu0 %3503
        %3505 = vadd.xlane.f32.xlu0 %v3480
        %v3506 = vpop.xlane.xlu0 %3505
        %3507 = vadd.xlane.f32.xlu0 %v3481
        %v3508 = vpop.xlane.xlu0 %3507
        %3509 = vadd.xlane.f32.xlu0 %v3482
        %v3510 = vpop.xlane.xlu0 %3509
        %3511 = vadd.xlane.f32.xlu0 %v3483
        %v3512 = vpop.xlane.xlu0 %3511
        %3513 = vadd.xlane.f32.xlu0 %v3484
        %v3514 = vpop.xlane.xlu0 %3513
        %3515 = vadd.xlane.f32.xlu0 %v3485
        %v3516 = vpop.xlane.xlu0 %3515
        %3517 = vadd.xlane.f32.xlu0 %v3486
        %v3518 = vpop.xlane.xlu0 %3517
        %v3519 = vmul.f32 %v3488, %v1770
        %v3520 = vmul.f32 %v3490, %v1770
        %v3521 = vmul.f32 %v3492, %v1770
        %v3522 = vmul.f32 %v3494, %v1770
        %v3523 = vmul.f32 %v3496, %v1770
        %v3524 = vmul.f32 %v3498, %v1770
        %v3525 = vmul.f32 %v3500, %v1770
        %v3526 = vmul.f32 %v3502, %v1770
        %v3527 = vmul.f32 %v3504, %v1770
        %v3528 = vmul.f32 %v3506, %v1770
        %v3529 = vmul.f32 %v3508, %v1770
        %v3530 = vmul.f32 %v3510, %v1770
        %v3531 = vmul.f32 %v3512, %v1770
        %v3532 = vmul.f32 %v3514, %v1770
        %v3533 = vmul.f32 %v3516, %v1770
        %v3534 = vmul.f32 %v3518, %v1770
        %v3535 = vsub.f32 %v3471, %v3519
        %v3536 = vsub.f32 %v3472, %v3520
        %v3537 = vsub.f32 %v3473, %v3521
        %v3538 = vsub.f32 %v3474, %v3522
        %v3539 = vsub.f32 %v3475, %v3523
        %v3540 = vsub.f32 %v3476, %v3524
        %v3541 = vsub.f32 %v3477, %v3525
        %v3542 = vsub.f32 %v3478, %v3526
        %v3543 = vsub.f32 %v3479, %v3527
        %v3544 = vsub.f32 %v3480, %v3528
        %v3545 = vsub.f32 %v3481, %v3529
        %v3546 = vsub.f32 %v3482, %v3530
        %v3547 = vsub.f32 %v3483, %v3531
        %v3548 = vsub.f32 %v3484, %v3532
        %v3549 = vsub.f32 %v3485, %v3533
        %v3550 = vsub.f32 %v3486, %v3534
        %v3551 = vmul.f32 %v3535, %v3535
        %v3552 = vmul.f32 %v3536, %v3536
        %v3553 = vmul.f32 %v3537, %v3537
        %v3554 = vmul.f32 %v3538, %v3538
        %v3555 = vmul.f32 %v3539, %v3539
        %v3556 = vmul.f32 %v3540, %v3540
        %v3557 = vmul.f32 %v3541, %v3541
        %v3558 = vmul.f32 %v3542, %v3542
        %v3559 = vmul.f32 %v3543, %v3543
        %v3560 = vmul.f32 %v3544, %v3544
        %v3561 = vmul.f32 %v3545, %v3545
        %v3562 = vmul.f32 %v3546, %v3546
        %v3563 = vmul.f32 %v3547, %v3547
        %v3564 = vmul.f32 %v3548, %v3548
        %v3565 = vmul.f32 %v3549, %v3549
        %v3566 = vmul.f32 %v3550, %v3550
        %3567 = vadd.xlane.f32.xlu0 %v3551
        %v3568 = vpop.xlane.xlu0 %3567
        %3569 = vadd.xlane.f32.xlu0 %v3552
        %v3570 = vpop.xlane.xlu0 %3569
        %3571 = vadd.xlane.f32.xlu0 %v3553
        %v3572 = vpop.xlane.xlu0 %3571
        %3573 = vadd.xlane.f32.xlu0 %v3554
        %v3574 = vpop.xlane.xlu0 %3573
        %3575 = vadd.xlane.f32.xlu0 %v3555
        %v3576 = vpop.xlane.xlu0 %3575
        %3577 = vadd.xlane.f32.xlu0 %v3556
        %v3578 = vpop.xlane.xlu0 %3577
        %3579 = vadd.xlane.f32.xlu0 %v3557
        %v3580 = vpop.xlane.xlu0 %3579
        %3581 = vadd.xlane.f32.xlu0 %v3558
        %v3582 = vpop.xlane.xlu0 %3581
        %3583 = vadd.xlane.f32.xlu0 %v3559
        %v3584 = vpop.xlane.xlu0 %3583
        %3585 = vadd.xlane.f32.xlu0 %v3560
        %v3586 = vpop.xlane.xlu0 %3585
        %3587 = vadd.xlane.f32.xlu0 %v3561
        %v3588 = vpop.xlane.xlu0 %3587
        %3589 = vadd.xlane.f32.xlu0 %v3562
        %v3590 = vpop.xlane.xlu0 %3589
        %3591 = vadd.xlane.f32.xlu0 %v3563
        %v3592 = vpop.xlane.xlu0 %3591
        %3593 = vadd.xlane.f32.xlu0 %v3564
        %v3594 = vpop.xlane.xlu0 %3593
        %3595 = vadd.xlane.f32.xlu0 %v3565
        %v3596 = vpop.xlane.xlu0 %3595
        %3597 = vadd.xlane.f32.xlu0 %v3566
        %v3598 = vpop.xlane.xlu0 %3597
        %v3599 = vmul.f32 %v3568, %v1770
        %v3600 = vmul.f32 %v3570, %v1770
        %v3601 = vmul.f32 %v3572, %v1770
        %v3602 = vmul.f32 %v3574, %v1770
        %v3603 = vmul.f32 %v3576, %v1770
        %v3604 = vmul.f32 %v3578, %v1770
        %v3605 = vmul.f32 %v3580, %v1770
        %v3606 = vmul.f32 %v3582, %v1770
        %v3607 = vmul.f32 %v3584, %v1770
        %v3608 = vmul.f32 %v3586, %v1770
        %v3609 = vmul.f32 %v3588, %v1770
        %v3610 = vmul.f32 %v3590, %v1770
        %v3611 = vmul.f32 %v3592, %v1770
        %v3612 = vmul.f32 %v3594, %v1770
        %v3613 = vmul.f32 %v3596, %v1770
        %v3614 = vmul.f32 %v3598, %v1770
        %v3615 = vadd.f32 %v3599, 0.1
        %v3616 = vadd.f32 %v3600, 0.1
        %v3617 = vadd.f32 %v3601, 0.1
        %v3618 = vadd.f32 %v3602, 0.1
        %v3619 = vadd.f32 %v3603, 0.1
        %v3620 = vadd.f32 %v3604, 0.1
        %v3621 = vadd.f32 %v3605, 0.1
        %v3622 = vadd.f32 %v3606, 0.1
        %v3623 = vadd.f32 %v3607, 0.1
        %v3624 = vadd.f32 %v3608, 0.1
        %v3625 = vadd.f32 %v3609, 0.1
        %v3626 = vadd.f32 %v3610, 0.1
        %v3627 = vadd.f32 %v3611, 0.1
        %v3628 = vadd.f32 %v3612, 0.1
        %v3629 = vadd.f32 %v3613, 0.1
        %v3630 = vadd.f32 %v3614, 0.1
        %v3631 = vrsqrt.pop %v3615
        %v3632 = vmul.f32 %v3631, %v3615
        %v3633 = vmul.f32 %v3632, %v3631
        %v3634 = vmul.f32 0.5, %v3633
        %v3635 = vsub.f32 1.5, %v3634
        %v3636 = vmul.f32 %v3631, %v3635
        %vm3637 = vweird.f32 %v3615
        %vm3638 = vweird.f32 %v3631
        %vm3639 = vmor %vm3637, %vm3638
        %v3640 = vsel %vm3639, %v3631, %v3636
        %v3641 = vrsqrt.pop %v3616
        %v3642 = vmul.f32 %v3641, %v3616
        %v3643 = vmul.f32 %v3642, %v3641
        %v3644 = vmul.f32 0.5, %v3643
        %v3645 = vsub.f32 1.5, %v3644
        %v3646 = vmul.f32 %v3641, %v3645
        %vm3647 = vweird.f32 %v3616
        %vm3648 = vweird.f32 %v3641
        %vm3649 = vmor %vm3647, %vm3648
        %v3650 = vsel %vm3649, %v3641, %v3646
        %v3651 = vrsqrt.pop %v3617
        %v3652 = vmul.f32 %v3651, %v3617
        %v3653 = vmul.f32 %v3652, %v3651
        %v3654 = vmul.f32 0.5, %v3653
        %v3655 = vsub.f32 1.5, %v3654
        %v3656 = vmul.f32 %v3651, %v3655
        %vm3657 = vweird.f32 %v3617
        %vm3658 = vweird.f32 %v3651
        %vm3659 = vmor %vm3657, %vm3658
        %v3660 = vsel %vm3659, %v3651, %v3656
        %v3661 = vrsqrt.pop %v3618
        %v3662 = vmul.f32 %v3661, %v3618
        %v3663 = vmul.f32 %v3662, %v3661
        %v3664 = vmul.f32 0.5, %v3663
        %v3665 = vsub.f32 1.5, %v3664
        %v3666 = vmul.f32 %v3661, %v3665
        %vm3667 = vweird.f32 %v3618
        %vm3668 = vweird.f32 %v3661
        %vm3669 = vmor %vm3667, %vm3668
        %v3670 = vsel %vm3669, %v3661, %v3666
        %v3671 = vrsqrt.pop %v3619
        %v3672 = vmul.f32 %v3671, %v3619
        %v3673 = vmul.f32 %v3672, %v3671
        %v3674 = vmul.f32 0.5, %v3673
        %v3675 = vsub.f32 1.5, %v3674
        %v3676 = vmul.f32 %v3671, %v3675
        %vm3677 = vweird.f32 %v3619
        %vm3678 = vweird.f32 %v3671
        %vm3679 = vmor %vm3677, %vm3678
        %v3680 = vsel %vm3679, %v3671, %v3676
        %v3681 = vrsqrt.pop %v3620
        %v3682 = vmul.f32 %v3681, %v3620
        %v3683 = vmul.f32 %v3682, %v3681
        %v3684 = vmul.f32 0.5, %v3683
        %v3685 = vsub.f32 1.5, %v3684
        %v3686 = vmul.f32 %v3681, %v3685
        %vm3687 = vweird.f32 %v3620
        %vm3688 = vweird.f32 %v3681
        %vm3689 = vmor %vm3687, %vm3688
        %v3690 = vsel %vm3689, %v3681, %v3686
        %v3691 = vrsqrt.pop %v3621
        %v3692 = vmul.f32 %v3691, %v3621
        %v3693 = vmul.f32 %v3692, %v3691
        %v3694 = vmul.f32 0.5, %v3693
        %v3695 = vsub.f32 1.5, %v3694
        %v3696 = vmul.f32 %v3691, %v3695
        %vm3697 = vweird.f32 %v3621
        %vm3698 = vweird.f32 %v3691
        %vm3699 = vmor %vm3697, %vm3698
        %v3700 = vsel %vm3699, %v3691, %v3696
        %v3701 = vrsqrt.pop %v3622
        %v3702 = vmul.f32 %v3701, %v3622
        %v3703 = vmul.f32 %v3702, %v3701
        %v3704 = vmul.f32 0.5, %v3703
        %v3705 = vsub.f32 1.5, %v3704
        %v3706 = vmul.f32 %v3701, %v3705
        %vm3707 = vweird.f32 %v3622
        %vm3708 = vweird.f32 %v3701
        %vm3709 = vmor %vm3707, %vm3708
        %v3710 = vsel %vm3709, %v3701, %v3706
        %v3711 = vrsqrt.pop %v3623
        %v3712 = vmul.f32 %v3711, %v3623
        %v3713 = vmul.f32 %v3712, %v3711
        %v3714 = vmul.f32 0.5, %v3713
        %v3715 = vsub.f32 1.5, %v3714
        %v3716 = vmul.f32 %v3711, %v3715
        %vm3717 = vweird.f32 %v3623
        %vm3718 = vweird.f32 %v3711
        %vm3719 = vmor %vm3717, %vm3718
        %v3720 = vsel %vm3719, %v3711, %v3716
        %v3721 = vrsqrt.pop %v3624
        %v3722 = vmul.f32 %v3721, %v3624
        %v3723 = vmul.f32 %v3722, %v3721
        %v3724 = vmul.f32 0.5, %v3723
        %v3725 = vsub.f32 1.5, %v3724
        %v3726 = vmul.f32 %v3721, %v3725
        %vm3727 = vweird.f32 %v3624
        %vm3728 = vweird.f32 %v3721
        %vm3729 = vmor %vm3727, %vm3728
        %v3730 = vsel %vm3729, %v3721, %v3726
        %v3731 = vrsqrt.pop %v3625
        %v3732 = vmul.f32 %v3731, %v3625
        %v3733 = vmul.f32 %v3732, %v3731
        %v3734 = vmul.f32 0.5, %v3733
        %v3735 = vsub.f32 1.5, %v3734
        %v3736 = vmul.f32 %v3731, %v3735
        %vm3737 = vweird.f32 %v3625
        %vm3738 = vweird.f32 %v3731
        %vm3739 = vmor %vm3737, %vm3738
        %v3740 = vsel %vm3739, %v3731, %v3736
        %v3741 = vrsqrt.pop %v3626
        %v3742 = vmul.f32 %v3741, %v3626
        %v3743 = vmul.f32 %v3742, %v3741
        %v3744 = vmul.f32 0.5, %v3743
        %v3745 = vsub.f32 1.5, %v3744
        %v3746 = vmul.f32 %v3741, %v3745
        %vm3747 = vweird.f32 %v3626
        %vm3748 = vweird.f32 %v3741
        %vm3749 = vmor %vm3747, %vm3748
        %v3750 = vsel %vm3749, %v3741, %v3746
        %v3751 = vrsqrt.pop %v3627
        %v3752 = vmul.f32 %v3751, %v3627
        %v3753 = vmul.f32 %v3752, %v3751
        %v3754 = vmul.f32 0.5, %v3753
        %v3755 = vsub.f32 1.5, %v3754
        %v3756 = vmul.f32 %v3751, %v3755
        %vm3757 = vweird.f32 %v3627
        %vm3758 = vweird.f32 %v3751
        %vm3759 = vmor %vm3757, %vm3758
        %v3760 = vsel %vm3759, %v3751, %v3756
        %v3761 = vrsqrt.pop %v3628
        %v3762 = vmul.f32 %v3761, %v3628
        %v3763 = vmul.f32 %v3762, %v3761
        %v3764 = vmul.f32 0.5, %v3763
        %v3765 = vsub.f32 1.5, %v3764
        %v3766 = vmul.f32 %v3761, %v3765
        %vm3767 = vweird.f32 %v3628
        %vm3768 = vweird.f32 %v3761
        %vm3769 = vmor %vm3767, %vm3768
        %v3770 = vsel %vm3769, %v3761, %v3766
        %v3771 = vrsqrt.pop %v3629
        %v3772 = vmul.f32 %v3771, %v3629
        %v3773 = vmul.f32 %v3772, %v3771
        %v3774 = vmul.f32 0.5, %v3773
        %v3775 = vsub.f32 1.5, %v3774
        %v3776 = vmul.f32 %v3771, %v3775
        %vm3777 = vweird.f32 %v3629
        %vm3778 = vweird.f32 %v3771
        %vm3779 = vmor %vm3777, %vm3778
        %v3780 = vsel %vm3779, %v3771, %v3776
        %v3781 = vrsqrt.pop %v3630
        %v3782 = vmul.f32 %v3781, %v3630
        %v3783 = vmul.f32 %v3782, %v3781
        %v3784 = vmul.f32 0.5, %v3783
        %v3785 = vsub.f32 1.5, %v3784
        %v3786 = vmul.f32 %v3781, %v3785
        %vm3787 = vweird.f32 %v3630
        %vm3788 = vweird.f32 %v3781
        %vm3789 = vmor %vm3787, %vm3788
        %v3790 = vsel %vm3789, %v3781, %v3786
        %v3791 = vmul.f32 %v3535, %v3640
        %v3792 = vmul.f32 %v3536, %v3650
        %v3793 = vmul.f32 %v3537, %v3660
        %v3794 = vmul.f32 %v3538, %v3670
        %v3795 = vmul.f32 %v3539, %v3680
        %v3796 = vmul.f32 %v3540, %v3690
        %v3797 = vmul.f32 %v3541, %v3700
        %v3798 = vmul.f32 %v3542, %v3710
        %v3799 = vmul.f32 %v3543, %v3720
        %v3800 = vmul.f32 %v3544, %v3730
        %v3801 = vmul.f32 %v3545, %v3740
        %v3802 = vmul.f32 %v3546, %v3750
        %v3803 = vmul.f32 %v3547, %v3760
        %v3804 = vmul.f32 %v3548, %v3770
        %v3805 = vmul.f32 %v3549, %v3780
        %v3806 = vmul.f32 %v3550, %v3790
        %v3807 = vperm.slane %v825, 2
        %v3808 = vmul.f32 %v3791, %v3807
        %v3809 = vmul.f32 %v3792, %v3807
        %v3810 = vmul.f32 %v3793, %v3807
        %v3811 = vmul.f32 %v3794, %v3807
        %v3812 = vmul.f32 %v3795, %v3807
        %v3813 = vmul.f32 %v3796, %v3807
        %v3814 = vmul.f32 %v3797, %v3807
        %v3815 = vmul.f32 %v3798, %v3807
        %v3816 = vmul.f32 %v3799, %v3807
        %v3817 = vmul.f32 %v3800, %v3807
        %v3818 = vmul.f32 %v3801, %v3807
        %v3819 = vmul.f32 %v3802, %v3807
        %v3820 = vmul.f32 %v3803, %v3807
        %v3821 = vmul.f32 %v3804, %v3807
        %v3822 = vmul.f32 %v3805, %v3807
        %v3823 = vmul.f32 %v3806, %v3807
        %v3824 = vperm.slane %v825, 3
        %v3825 = vadd.f32 %v3808, %v3824
        %v3826 = vadd.f32 %v3809, %v3824
        %v3827 = vadd.f32 %v3810, %v3824
        %v3828 = vadd.f32 %v3811, %v3824
        %v3829 = vadd.f32 %v3812, %v3824
        %v3830 = vadd.f32 %v3813, %v3824
        %v3831 = vadd.f32 %v3814, %v3824
        %v3832 = vadd.f32 %v3815, %v3824
        %v3833 = vadd.f32 %v3816, %v3824
        %v3834 = vadd.f32 %v3817, %v3824
        %v3835 = vadd.f32 %v3818, %v3824
        %v3836 = vadd.f32 %v3819, %v3824
        %v3837 = vadd.f32 %v3820, %v3824
        %v3838 = vadd.f32 %v3821, %v3824
        %v3839 = vadd.f32 %v3822, %v3824
        %v3840 = vadd.f32 %v3823, %v3824
        %v3841 = vadd.f32 %v3253, %v3825
        %v3842 = vadd.f32 %v3254, %v3826
        %v3843 = vadd.f32 %v3255, %v3827
        %v3844 = vadd.f32 %v3256, %v3828
        %v3845 = vadd.f32 %v3257, %v3829
        %v3846 = vadd.f32 %v3258, %v3830
        %v3847 = vadd.f32 %v3259, %v3831
        %v3848 = vadd.f32 %v3260, %v3832
        %v3849 = vadd.f32 %v3261, %v3833
        %v3850 = vadd.f32 %v3262, %v3834
        %v3851 = vadd.f32 %v3263, %v3835
        %v3852 = vadd.f32 %v3264, %v3836
        %v3853 = vadd.f32 %v3265, %v3837
        %v3854 = vadd.f32 %v3266, %v3838
        %v3855 = vadd.f32 %v3267, %v3839
        %v3856 = vadd.f32 %v3268, %v3840
        %v3857 = vpack.c.bf16 %v3826, %v3825
        %v3858 = vpack.c.bf16 %v3828, %v3827
        %v3859 = vpack.c.bf16 %v3830, %v3829
        %v3860 = vpack.c.bf16 %v3832, %v3831
        %v3861 = vpack.c.bf16 %v3834, %v3833
        %v3862 = vpack.c.bf16 %v3836, %v3835
        %v3863 = vpack.c.bf16 %v3838, %v3837
        %v3864 = vpack.c.bf16 %v3840, %v3839
        %v3865 = vperm.slane %v825, 4
        %v3882 = vunpack.c.l.b16 %v792
        %v3883 = vunpack.c.l.b16 %v793
        %v3884 = vunpack.c.l.b16 %v794
        %v3885 = vunpack.c.l.b16 %v795
        %v3886 = vunpack.c.l.b16 %v796
        %v3887 = vunpack.c.l.b16 %v797
        %v3888 = vunpack.c.l.b16 %v798
        %v3889 = vunpack.c.l.b16 %v799
        %v3890 = vunpack.c.l.b16 %v800
        %v3891 = vunpack.c.l.b16 %v801
        %v3892 = vunpack.c.l.b16 %v802
        %v3893 = vunpack.c.l.b16 %v803
        %v3894 = vunpack.c.l.b16 %v804
        %v3895 = vunpack.c.l.b16 %v805
        %v3896 = vunpack.c.l.b16 %v806
        %v3897 = vunpack.c.l.b16 %v807
        %v3898 = vpack.c.b16 %v3883, %v3882
        %v3899 = vpack.c.b16 %v3885, %v3884
        %v3900 = vpack.c.b16 %v3887, %v3886
        %v3901 = vpack.c.b16 %v3889, %v3888
        %v3902 = vpack.c.b16 %v3891, %v3890
        %v3903 = vpack.c.b16 %v3893, %v3892
        %v3904 = vpack.c.b16 %v3895, %v3894
        %v3905 = vpack.c.b16 %v3897, %v3896
        %3914 = vmatpush.bf16.msra.mxu0 %v3905
        %3915 = vmatpush.bf16.msra.mxu0 %v3904
        %3916 = vmatpush.bf16.msra.mxu0 %v3903
        %3917 = vmatpush.bf16.msra.mxu0 %v3902
        %3918 = vmatpush.bf16.msra.mxu0 %v3901
        %3919 = vmatpush.bf16.msra.mxu0 %v3900
        %3920 = vmatpush.bf16.msra.mxu0 %v3899
        %3921 = vmatpush.bf16.msra.mxu0 %v3898
        %3922 = vmatmul.bf16.gmra.mxu0 %v3857
        %v3923 = vpop.f32.mrf.mxu0
        %v3924 = vadd.f32 %v3865, %v3923
        %v3925 = vpop.f32.mrf.mxu0
        %v3926 = vadd.f32 %v3865, %v3925
        %3927 = vmatmul.bf16.gmra.mxu0 %v3858
        %v3928 = vpop.f32.mrf.mxu0
        %v3929 = vadd.f32 %v3865, %v3928
        %v3930 = vpop.f32.mrf.mxu0
        %v3931 = vadd.f32 %v3865, %v3930
        %3932 = vmatmul.bf16.gmra.mxu0 %v3859
        %v3933 = vpop.f32.mrf.mxu0
        %v3934 = vadd.f32 %v3865, %v3933
        %v3935 = vpop.f32.mrf.mxu0
        %v3936 = vadd.f32 %v3865, %v3935
        %3937 = vmatmul.bf16.gmra.mxu0 %v3860
        %v3938 = vpop.f32.mrf.mxu0
        %v3939 = vadd.f32 %v3865, %v3938
        %v3940 = vpop.f32.mrf.mxu0
        %v3941 = vadd.f32 %v3865, %v3940
        %3942 = vmatmul.bf16.gmra.mxu0 %v3861
        %v3943 = vpop.f32.mrf.mxu0
        %v3944 = vadd.f32 %v3865, %v3943
        %v3945 = vpop.f32.mrf.mxu0
        %v3946 = vadd.f32 %v3865, %v3945
        %3947 = vmatmul.bf16.gmra.mxu0 %v3862
        %v3948 = vpop.f32.mrf.mxu0
        %v3949 = vadd.f32 %v3865, %v3948
        %v3950 = vpop.f32.mrf.mxu0
        %v3951 = vadd.f32 %v3865, %v3950
        %3952 = vmatmul.bf16.gmra.mxu0 %v3863
        %v3953 = vpop.f32.mrf.mxu0
        %v3954 = vadd.f32 %v3865, %v3953
        %v3955 = vpop.f32.mrf.mxu0
        %v3956 = vadd.f32 %v3865, %v3955
        %3957 = vmatmul.bf16.gmra.mxu0 %v3864
        %v3958 = vpop.f32.mrf.mxu0
        %v3959 = vadd.f32 %v3865, %v3958
        %v3960 = vpop.f32.mrf.mxu0
        %v3961 = vadd.f32 %v3865, %v3960
        %3962 = vdwg.mxu0
        %v3963 = vadd.f32 %v3924, %v3841
        %v3964 = vadd.f32 %v3926, %v3842
        %v3965 = vadd.f32 %v3929, %v3843
        %v3966 = vadd.f32 %v3931, %v3844
        %v3967 = vadd.f32 %v3934, %v3845
        %v3968 = vadd.f32 %v3936, %v3846
        %v3969 = vadd.f32 %v3939, %v3847
        %v3970 = vadd.f32 %v3941, %v3848
        %v3971 = vadd.f32 %v3944, %v3849
        %v3972 = vadd.f32 %v3946, %v3850
        %v3973 = vadd.f32 %v3949, %v3851
        %v3974 = vadd.f32 %v3951, %v3852
        %v3975 = vadd.f32 %v3954, %v3853
        %v3976 = vadd.f32 %v3956, %v3854
        %v3977 = vadd.f32 %v3959, %v3855
        %v3978 = vadd.f32 %v3961, %v3856
        %v3979 = vsub.f32 0.0, %v3963
        %v3980 = vsub.f32 0.0, %v3964
        %v3981 = vsub.f32 0.0, %v3965
        %v3982 = vsub.f32 0.0, %v3966
        %v3983 = vsub.f32 0.0, %v3967
        %v3984 = vsub.f32 0.0, %v3968
        %v3985 = vsub.f32 0.0, %v3969
        %v3986 = vsub.f32 0.0, %v3970
        %v3987 = vsub.f32 0.0, %v3971
        %v3988 = vsub.f32 0.0, %v3972
        %v3989 = vsub.f32 0.0, %v3973
        %v3990 = vsub.f32 0.0, %v3974
        %v3991 = vsub.f32 0.0, %v3975
        %v3992 = vsub.f32 0.0, %v3976
        %v3993 = vsub.f32 0.0, %v3977
        %v3994 = vsub.f32 0.0, %v3978
        %v3995 = vmul.f32 %v3979, 1.442695
        %v3996 = vpow.pop %v3995
        %v3997 = vmul.f32 %v3980, 1.442695
        %v3998 = vpow.pop %v3997
        %v3999 = vmul.f32 %v3981, 1.442695
        %v4000 = vpow.pop %v3999
        %v4001 = vmul.f32 %v3982, 1.442695
        %v4002 = vpow.pop %v4001
        %v4003 = vmul.f32 %v3983, 1.442695
        %v4004 = vpow.pop %v4003
        %v4005 = vmul.f32 %v3984, 1.442695
        %v4006 = vpow.pop %v4005
        %v4007 = vmul.f32 %v3985, 1.442695
        %v4008 = vpow.pop %v4007
        %v4009 = vmul.f32 %v3986, 1.442695
        %v4010 = vpow.pop %v4009
        %v4011 = vmul.f32 %v3987, 1.442695
        %v4012 = vpow.pop %v4011
        %v4013 = vmul.f32 %v3988, 1.442695
        %v4014 = vpow.pop %v4013
        %v4015 = vmul.f32 %v3989, 1.442695
        %v4016 = vpow.pop %v4015
        %v4017 = vmul.f32 %v3990, 1.442695
        %v4018 = vpow.pop %v4017
        %v4019 = vmul.f32 %v3991, 1.442695
        %v4020 = vpow.pop %v4019
        %v4021 = vmul.f32 %v3992, 1.442695
        %v4022 = vpow.pop %v4021
        %v4023 = vmul.f32 %v3993, 1.442695
        %v4024 = vpow.pop %v4023
        %v4025 = vmul.f32 %v3994, 1.442695
        %v4026 = vpow.pop %v4025
        %v4027 = vadd.f32 %v3996, 1.0
        %v4028 = vadd.f32 %v3998, 1.0
        %v4029 = vadd.f32 %v4000, 1.0
        %v4030 = vadd.f32 %v4002, 1.0
        %v4031 = vadd.f32 %v4004, 1.0
        %v4032 = vadd.f32 %v4006, 1.0
        %v4033 = vadd.f32 %v4008, 1.0
        %v4034 = vadd.f32 %v4010, 1.0
        %v4035 = vadd.f32 %v4012, 1.0
        %v4036 = vadd.f32 %v4014, 1.0
        %v4037 = vadd.f32 %v4016, 1.0
        %v4038 = vadd.f32 %v4018, 1.0
        %v4039 = vadd.f32 %v4020, 1.0
        %v4040 = vadd.f32 %v4022, 1.0
        %v4041 = vadd.f32 %v4024, 1.0
        %v4042 = vadd.f32 %v4026, 1.0
        %v4043 = vrcp.pop %v4027
        %v4044 = vrcp.pop %v4028
        %v4045 = vrcp.pop %v4029
        %v4046 = vrcp.pop %v4030
        %v4047 = vrcp.pop %v4031
        %v4048 = vrcp.pop %v4032
        %v4049 = vrcp.pop %v4033
        %v4050 = vrcp.pop %v4034
        %v4051 = vrcp.pop %v4035
        %v4052 = vrcp.pop %v4036
        %v4053 = vrcp.pop %v4037
        %v4054 = vrcp.pop %v4038
        %v4055 = vrcp.pop %v4039
        %v4056 = vrcp.pop %v4040
        %v4057 = vrcp.pop %v4041
        %v4058 = vrcp.pop %v4042
        %v4059 = vmul.f32 %v3963, %v4043
        %v4060 = vmul.f32 %v3964, %v4044
        %v4061 = vmul.f32 %v3965, %v4045
        %v4062 = vmul.f32 %v3966, %v4046
        %v4063 = vmul.f32 %v3967, %v4047
        %v4064 = vmul.f32 %v3968, %v4048
        %v4065 = vmul.f32 %v3969, %v4049
        %v4066 = vmul.f32 %v3970, %v4050
        %v4067 = vmul.f32 %v3971, %v4051
        %v4068 = vmul.f32 %v3972, %v4052
        %v4069 = vmul.f32 %v3973, %v4053
        %v4070 = vmul.f32 %v3974, %v4054
        %v4071 = vmul.f32 %v3975, %v4055
        %v4072 = vmul.f32 %v3976, %v4056
        %v4073 = vmul.f32 %v3977, %v4057
        %v4074 = vmul.f32 %v3978, %v4058
        %4075 = vadd.xlane.f32.xlu0 %v4059
        %v4076 = vpop.xlane.xlu0 %4075
        %4077 = vadd.xlane.f32.xlu0 %v4060
        %v4078 = vpop.xlane.xlu0 %4077
        %4079 = vadd.xlane.f32.xlu0 %v4061
        %v4080 = vpop.xlane.xlu0 %4079
        %4081 = vadd.xlane.f32.xlu0 %v4062
        %v4082 = vpop.xlane.xlu0 %4081
        %4083 = vadd.xlane.f32.xlu0 %v4063
        %v4084 = vpop.xlane.xlu0 %4083
        %4085 = vadd.xlane.f32.xlu0 %v4064
        %v4086 = vpop.xlane.xlu0 %4085
        %4087 = vadd.xlane.f32.xlu0 %v4065
        %v4088 = vpop.xlane.xlu0 %4087
        %4089 = vadd.xlane.f32.xlu0 %v4066
        %v4090 = vpop.xlane.xlu0 %4089
        %4091 = vadd.xlane.f32.xlu0 %v4067
        %v4092 = vpop.xlane.xlu0 %4091
        %4093 = vadd.xlane.f32.xlu0 %v4068
        %v4094 = vpop.xlane.xlu0 %4093
        %4095 = vadd.xlane.f32.xlu0 %v4069
        %v4096 = vpop.xlane.xlu0 %4095
        %4097 = vadd.xlane.f32.xlu0 %v4070
        %v4098 = vpop.xlane.xlu0 %4097
        %4099 = vadd.xlane.f32.xlu0 %v4071
        %v4100 = vpop.xlane.xlu0 %4099
        %4101 = vadd.xlane.f32.xlu0 %v4072
        %v4102 = vpop.xlane.xlu0 %4101
        %4103 = vadd.xlane.f32.xlu0 %v4073
        %v4104 = vpop.xlane.xlu0 %4103
        %4105 = vadd.xlane.f32.xlu0 %v4074
        %v4106 = vpop.xlane.xlu0 %4105
        %v4107 = vmul.f32 %v4076, %v1770
        %v4108 = vmul.f32 %v4078, %v1770
        %v4109 = vmul.f32 %v4080, %v1770
        %v4110 = vmul.f32 %v4082, %v1770
        %v4111 = vmul.f32 %v4084, %v1770
        %v4112 = vmul.f32 %v4086, %v1770
        %v4113 = vmul.f32 %v4088, %v1770
        %v4114 = vmul.f32 %v4090, %v1770
        %v4115 = vmul.f32 %v4092, %v1770
        %v4116 = vmul.f32 %v4094, %v1770
        %v4117 = vmul.f32 %v4096, %v1770
        %v4118 = vmul.f32 %v4098, %v1770
        %v4119 = vmul.f32 %v4100, %v1770
        %v4120 = vmul.f32 %v4102, %v1770
        %v4121 = vmul.f32 %v4104, %v1770
        %v4122 = vmul.f32 %v4106, %v1770
        %v4123 = vsub.f32 %v4059, %v4107
        %v4124 = vsub.f32 %v4060, %v4108
        %v4125 = vsub.f32 %v4061, %v4109
        %v4126 = vsub.f32 %v4062, %v4110
        %v4127 = vsub.f32 %v4063, %v4111
        %v4128 = vsub.f32 %v4064, %v4112
        %v4129 = vsub.f32 %v4065, %v4113
        %v4130 = vsub.f32 %v4066, %v4114
        %v4131 = vsub.f32 %v4067, %v4115
        %v4132 = vsub.f32 %v4068, %v4116
        %v4133 = vsub.f32 %v4069, %v4117
        %v4134 = vsub.f32 %v4070, %v4118
        %v4135 = vsub.f32 %v4071, %v4119
        %v4136 = vsub.f32 %v4072, %v4120
        %v4137 = vsub.f32 %v4073, %v4121
        %v4138 = vsub.f32 %v4074, %v4122
        %v4139 = vmul.f32 %v4123, %v4123
        %v4140 = vmul.f32 %v4124, %v4124
        %v4141 = vmul.f32 %v4125, %v4125
        %v4142 = vmul.f32 %v4126, %v4126
        %v4143 = vmul.f32 %v4127, %v4127
        %v4144 = vmul.f32 %v4128, %v4128
        %v4145 = vmul.f32 %v4129, %v4129
        %v4146 = vmul.f32 %v4130, %v4130
        %v4147 = vmul.f32 %v4131, %v4131
        %v4148 = vmul.f32 %v4132, %v4132
        %v4149 = vmul.f32 %v4133, %v4133
        %v4150 = vmul.f32 %v4134, %v4134
        %v4151 = vmul.f32 %v4135, %v4135
        %v4152 = vmul.f32 %v4136, %v4136
        %v4153 = vmul.f32 %v4137, %v4137
        %v4154 = vmul.f32 %v4138, %v4138
        %4155 = vadd.xlane.f32.xlu0 %v4139
        %v4156 = vpop.xlane.xlu0 %4155
        %4157 = vadd.xlane.f32.xlu0 %v4140
        %v4158 = vpop.xlane.xlu0 %4157
        %4159 = vadd.xlane.f32.xlu0 %v4141
        %v4160 = vpop.xlane.xlu0 %4159
        %4161 = vadd.xlane.f32.xlu0 %v4142
        %v4162 = vpop.xlane.xlu0 %4161
        %4163 = vadd.xlane.f32.xlu0 %v4143
        %v4164 = vpop.xlane.xlu0 %4163
        %4165 = vadd.xlane.f32.xlu0 %v4144
        %v4166 = vpop.xlane.xlu0 %4165
        %4167 = vadd.xlane.f32.xlu0 %v4145
        %v4168 = vpop.xlane.xlu0 %4167
        %4169 = vadd.xlane.f32.xlu0 %v4146
        %v4170 = vpop.xlane.xlu0 %4169
        %4171 = vadd.xlane.f32.xlu0 %v4147
        %v4172 = vpop.xlane.xlu0 %4171
        %4173 = vadd.xlane.f32.xlu0 %v4148
        %v4174 = vpop.xlane.xlu0 %4173
        %4175 = vadd.xlane.f32.xlu0 %v4149
        %v4176 = vpop.xlane.xlu0 %4175
        %4177 = vadd.xlane.f32.xlu0 %v4150
        %v4178 = vpop.xlane.xlu0 %4177
        %4179 = vadd.xlane.f32.xlu0 %v4151
        %v4180 = vpop.xlane.xlu0 %4179
        %4181 = vadd.xlane.f32.xlu0 %v4152
        %v4182 = vpop.xlane.xlu0 %4181
        %4183 = vadd.xlane.f32.xlu0 %v4153
        %v4184 = vpop.xlane.xlu0 %4183
        %4185 = vadd.xlane.f32.xlu0 %v4154
        %v4186 = vpop.xlane.xlu0 %4185
        %v4187 = vmul.f32 %v4156, %v1770
        %v4188 = vmul.f32 %v4158, %v1770
        %v4189 = vmul.f32 %v4160, %v1770
        %v4190 = vmul.f32 %v4162, %v1770
        %v4191 = vmul.f32 %v4164, %v1770
        %v4192 = vmul.f32 %v4166, %v1770
        %v4193 = vmul.f32 %v4168, %v1770
        %v4194 = vmul.f32 %v4170, %v1770
        %v4195 = vmul.f32 %v4172, %v1770
        %v4196 = vmul.f32 %v4174, %v1770
        %v4197 = vmul.f32 %v4176, %v1770
        %v4198 = vmul.f32 %v4178, %v1770
        %v4199 = vmul.f32 %v4180, %v1770
        %v4200 = vmul.f32 %v4182, %v1770
        %v4201 = vmul.f32 %v4184, %v1770
        %v4202 = vmul.f32 %v4186, %v1770
        %v4203 = vadd.f32 %v4187, 0.1
        %v4204 = vadd.f32 %v4188, 0.1
        %v4205 = vadd.f32 %v4189, 0.1
        %v4206 = vadd.f32 %v4190, 0.1
        %v4207 = vadd.f32 %v4191, 0.1
        %v4208 = vadd.f32 %v4192, 0.1
        %v4209 = vadd.f32 %v4193, 0.1
        %v4210 = vadd.f32 %v4194, 0.1
        %v4211 = vadd.f32 %v4195, 0.1
        %v4212 = vadd.f32 %v4196, 0.1
        %v4213 = vadd.f32 %v4197, 0.1
        %v4214 = vadd.f32 %v4198, 0.1
        %v4215 = vadd.f32 %v4199, 0.1
        %v4216 = vadd.f32 %v4200, 0.1
        %v4217 = vadd.f32 %v4201, 0.1
        %v4218 = vadd.f32 %v4202, 0.1
        %v4219 = vrsqrt.pop %v4203
        %v4220 = vmul.f32 %v4219, %v4203
        %v4221 = vmul.f32 %v4220, %v4219
        %v4222 = vmul.f32 0.5, %v4221
        %v4223 = vsub.f32 1.5, %v4222
        %v4224 = vmul.f32 %v4219, %v4223
        %vm4225 = vweird.f32 %v4203
        %vm4226 = vweird.f32 %v4219
        %vm4227 = vmor %vm4225, %vm4226
        %v4228 = vsel %vm4227, %v4219, %v4224
        %v4229 = vrsqrt.pop %v4204
        %v4230 = vmul.f32 %v4229, %v4204
        %v4231 = vmul.f32 %v4230, %v4229
        %v4232 = vmul.f32 0.5, %v4231
        %v4233 = vsub.f32 1.5, %v4232
        %v4234 = vmul.f32 %v4229, %v4233
        %vm4235 = vweird.f32 %v4204
        %vm4236 = vweird.f32 %v4229
        %vm4237 = vmor %vm4235, %vm4236
        %v4238 = vsel %vm4237, %v4229, %v4234
        %v4239 = vrsqrt.pop %v4205
        %v4240 = vmul.f32 %v4239, %v4205
        %v4241 = vmul.f32 %v4240, %v4239
        %v4242 = vmul.f32 0.5, %v4241
        %v4243 = vsub.f32 1.5, %v4242
        %v4244 = vmul.f32 %v4239, %v4243
        %vm4245 = vweird.f32 %v4205
        %vm4246 = vweird.f32 %v4239
        %vm4247 = vmor %vm4245, %vm4246
        %v4248 = vsel %vm4247, %v4239, %v4244
        %v4249 = vrsqrt.pop %v4206
        %v4250 = vmul.f32 %v4249, %v4206
        %v4251 = vmul.f32 %v4250, %v4249
        %v4252 = vmul.f32 0.5, %v4251
        %v4253 = vsub.f32 1.5, %v4252
        %v4254 = vmul.f32 %v4249, %v4253
        %vm4255 = vweird.f32 %v4206
        %vm4256 = vweird.f32 %v4249
        %vm4257 = vmor %vm4255, %vm4256
        %v4258 = vsel %vm4257, %v4249, %v4254
        %v4259 = vrsqrt.pop %v4207
        %v4260 = vmul.f32 %v4259, %v4207
        %v4261 = vmul.f32 %v4260, %v4259
        %v4262 = vmul.f32 0.5, %v4261
        %v4263 = vsub.f32 1.5, %v4262
        %v4264 = vmul.f32 %v4259, %v4263
        %vm4265 = vweird.f32 %v4207
        %vm4266 = vweird.f32 %v4259
        %vm4267 = vmor %vm4265, %vm4266
        %v4268 = vsel %vm4267, %v4259, %v4264
        %v4269 = vrsqrt.pop %v4208
        %v4270 = vmul.f32 %v4269, %v4208
        %v4271 = vmul.f32 %v4270, %v4269
        %v4272 = vmul.f32 0.5, %v4271
        %v4273 = vsub.f32 1.5, %v4272
        %v4274 = vmul.f32 %v4269, %v4273
        %vm4275 = vweird.f32 %v4208
        %vm4276 = vweird.f32 %v4269
        %vm4277 = vmor %vm4275, %vm4276
        %v4278 = vsel %vm4277, %v4269, %v4274
        %v4279 = vrsqrt.pop %v4209
        %v4280 = vmul.f32 %v4279, %v4209
        %v4281 = vmul.f32 %v4280, %v4279
        %v4282 = vmul.f32 0.5, %v4281
        %v4283 = vsub.f32 1.5, %v4282
        %v4284 = vmul.f32 %v4279, %v4283
        %vm4285 = vweird.f32 %v4209
        %vm4286 = vweird.f32 %v4279
        %vm4287 = vmor %vm4285, %vm4286
        %v4288 = vsel %vm4287, %v4279, %v4284
        %v4289 = vrsqrt.pop %v4210
        %v4290 = vmul.f32 %v4289, %v4210
        %v4291 = vmul.f32 %v4290, %v4289
        %v4292 = vmul.f32 0.5, %v4291
        %v4293 = vsub.f32 1.5, %v4292
        %v4294 = vmul.f32 %v4289, %v4293
        %vm4295 = vweird.f32 %v4210
        %vm4296 = vweird.f32 %v4289
        %vm4297 = vmor %vm4295, %vm4296
        %v4298 = vsel %vm4297, %v4289, %v4294
        %v4299 = vrsqrt.pop %v4211
        %v4300 = vmul.f32 %v4299, %v4211
        %v4301 = vmul.f32 %v4300, %v4299
        %v4302 = vmul.f32 0.5, %v4301
        %v4303 = vsub.f32 1.5, %v4302
        %v4304 = vmul.f32 %v4299, %v4303
        %vm4305 = vweird.f32 %v4211
        %vm4306 = vweird.f32 %v4299
        %vm4307 = vmor %vm4305, %vm4306
        %v4308 = vsel %vm4307, %v4299, %v4304
        %v4309 = vrsqrt.pop %v4212
        %v4310 = vmul.f32 %v4309, %v4212
        %v4311 = vmul.f32 %v4310, %v4309
        %v4312 = vmul.f32 0.5, %v4311
        %v4313 = vsub.f32 1.5, %v4312
        %v4314 = vmul.f32 %v4309, %v4313
        %vm4315 = vweird.f32 %v4212
        %vm4316 = vweird.f32 %v4309
        %vm4317 = vmor %vm4315, %vm4316
        %v4318 = vsel %vm4317, %v4309, %v4314
        %v4319 = vrsqrt.pop %v4213
        %v4320 = vmul.f32 %v4319, %v4213
        %v4321 = vmul.f32 %v4320, %v4319
        %v4322 = vmul.f32 0.5, %v4321
        %v4323 = vsub.f32 1.5, %v4322
        %v4324 = vmul.f32 %v4319, %v4323
        %vm4325 = vweird.f32 %v4213
        %vm4326 = vweird.f32 %v4319
        %vm4327 = vmor %vm4325, %vm4326
        %v4328 = vsel %vm4327, %v4319, %v4324
        %v4329 = vrsqrt.pop %v4214
        %v4330 = vmul.f32 %v4329, %v4214
        %v4331 = vmul.f32 %v4330, %v4329
        %v4332 = vmul.f32 0.5, %v4331
        %v4333 = vsub.f32 1.5, %v4332
        %v4334 = vmul.f32 %v4329, %v4333
        %vm4335 = vweird.f32 %v4214
        %vm4336 = vweird.f32 %v4329
        %vm4337 = vmor %vm4335, %vm4336
        %v4338 = vsel %vm4337, %v4329, %v4334
        %v4339 = vrsqrt.pop %v4215
        %v4340 = vmul.f32 %v4339, %v4215
        %v4341 = vmul.f32 %v4340, %v4339
        %v4342 = vmul.f32 0.5, %v4341
        %v4343 = vsub.f32 1.5, %v4342
        %v4344 = vmul.f32 %v4339, %v4343
        %vm4345 = vweird.f32 %v4215
        %vm4346 = vweird.f32 %v4339
        %vm4347 = vmor %vm4345, %vm4346
        %v4348 = vsel %vm4347, %v4339, %v4344
        %v4349 = vrsqrt.pop %v4216
        %v4350 = vmul.f32 %v4349, %v4216
        %v4351 = vmul.f32 %v4350, %v4349
        %v4352 = vmul.f32 0.5, %v4351
        %v4353 = vsub.f32 1.5, %v4352
        %v4354 = vmul.f32 %v4349, %v4353
        %vm4355 = vweird.f32 %v4216
        %vm4356 = vweird.f32 %v4349
        %vm4357 = vmor %vm4355, %vm4356
        %v4358 = vsel %vm4357, %v4349, %v4354
        %v4359 = vrsqrt.pop %v4217
        %v4360 = vmul.f32 %v4359, %v4217
        %v4361 = vmul.f32 %v4360, %v4359
        %v4362 = vmul.f32 0.5, %v4361
        %v4363 = vsub.f32 1.5, %v4362
        %v4364 = vmul.f32 %v4359, %v4363
        %vm4365 = vweird.f32 %v4217
        %vm4366 = vweird.f32 %v4359
        %vm4367 = vmor %vm4365, %vm4366
        %v4368 = vsel %vm4367, %v4359, %v4364
        %v4369 = vrsqrt.pop %v4218
        %v4370 = vmul.f32 %v4369, %v4218
        %v4371 = vmul.f32 %v4370, %v4369
        %v4372 = vmul.f32 0.5, %v4371
        %v4373 = vsub.f32 1.5, %v4372
        %v4374 = vmul.f32 %v4369, %v4373
        %vm4375 = vweird.f32 %v4218
        %vm4376 = vweird.f32 %v4369
        %vm4377 = vmor %vm4375, %vm4376
        %v4378 = vsel %vm4377, %v4369, %v4374
        %v4379 = vmul.f32 %v4123, %v4228
        %v4380 = vmul.f32 %v4124, %v4238
        %v4381 = vmul.f32 %v4125, %v4248
        %v4382 = vmul.f32 %v4126, %v4258
        %v4383 = vmul.f32 %v4127, %v4268
        %v4384 = vmul.f32 %v4128, %v4278
        %v4385 = vmul.f32 %v4129, %v4288
        %v4386 = vmul.f32 %v4130, %v4298
        %v4387 = vmul.f32 %v4131, %v4308
        %v4388 = vmul.f32 %v4132, %v4318
        %v4389 = vmul.f32 %v4133, %v4328
        %v4390 = vmul.f32 %v4134, %v4338
        %v4391 = vmul.f32 %v4135, %v4348
        %v4392 = vmul.f32 %v4136, %v4358
        %v4393 = vmul.f32 %v4137, %v4368
        %v4394 = vmul.f32 %v4138, %v4378
        %v4395 = vperm.slane %v825, 5
        %v4396 = vmul.f32 %v4379, %v4395
        %v4397 = vmul.f32 %v4380, %v4395
        %v4398 = vmul.f32 %v4381, %v4395
        %v4399 = vmul.f32 %v4382, %v4395
        %v4400 = vmul.f32 %v4383, %v4395
        %v4401 = vmul.f32 %v4384, %v4395
        %v4402 = vmul.f32 %v4385, %v4395
        %v4403 = vmul.f32 %v4386, %v4395
        %v4404 = vmul.f32 %v4387, %v4395
        %v4405 = vmul.f32 %v4388, %v4395
        %v4406 = vmul.f32 %v4389, %v4395
        %v4407 = vmul.f32 %v4390, %v4395
        %v4408 = vmul.f32 %v4391, %v4395
        %v4409 = vmul.f32 %v4392, %v4395
        %v4410 = vmul.f32 %v4393, %v4395
        %v4411 = vmul.f32 %v4394, %v4395
        %v4412 = vperm.slane %v825, 6
        %v4413 = vadd.f32 %v4396, %v4412
        %v4414 = vadd.f32 %v4397, %v4412
        %v4415 = vadd.f32 %v4398, %v4412
        %v4416 = vadd.f32 %v4399, %v4412
        %v4417 = vadd.f32 %v4400, %v4412
        %v4418 = vadd.f32 %v4401, %v4412
        %v4419 = vadd.f32 %v4402, %v4412
        %v4420 = vadd.f32 %v4403, %v4412
        %v4421 = vadd.f32 %v4404, %v4412
        %v4422 = vadd.f32 %v4405, %v4412
        %v4423 = vadd.f32 %v4406, %v4412
        %v4424 = vadd.f32 %v4407, %v4412
        %v4425 = vadd.f32 %v4408, %v4412
        %v4426 = vadd.f32 %v4409, %v4412
        %v4427 = vadd.f32 %v4410, %v4412
        %v4428 = vadd.f32 %v4411, %v4412
        %v4429 = vpack.c.bf16 %v4414, %v4413
        %v4430 = vpack.c.bf16 %v4416, %v4415
        %v4431 = vpack.c.bf16 %v4418, %v4417
        %v4432 = vpack.c.bf16 %v4420, %v4419
        %v4433 = vpack.c.bf16 %v4422, %v4421
        %v4434 = vpack.c.bf16 %v4424, %v4423
        %v4435 = vpack.c.bf16 %v4426, %v4425
        %v4436 = vpack.c.bf16 %v4428, %v4427
        %v4438 = vperm.slane %v826, 0
        %v4439 = vperm.slane %v826, 1
        %v4458 = vunpack.c.l.b16 %v808
        %v4459 = vunpack.c.h.b16 %v808
        %v4460 = vunpack.c.l.b16 %v809
        %v4461 = vunpack.c.h.b16 %v809
        %v4462 = vunpack.c.l.b16 %v810
        %v4463 = vunpack.c.h.b16 %v810
        %v4464 = vunpack.c.l.b16 %v811
        %v4465 = vunpack.c.h.b16 %v811
        %v4466 = vunpack.c.l.b16 %v812
        %v4467 = vunpack.c.h.b16 %v812
        %v4468 = vunpack.c.l.b16 %v813
        %v4469 = vunpack.c.h.b16 %v813
        %v4470 = vunpack.c.l.b16 %v814
        %v4471 = vunpack.c.h.b16 %v814
        %v4472 = vunpack.c.l.b16 %v815
        %v4473 = vunpack.c.h.b16 %v815
        %v4474 = vunpack.c.l.b16 %v816
        %v4475 = vunpack.c.h.b16 %v816
        %v4476 = vunpack.c.l.b16 %v817
        %v4477 = vunpack.c.h.b16 %v817
        %v4478 = vunpack.c.l.b16 %v818
        %v4479 = vunpack.c.h.b16 %v818
        %v4480 = vunpack.c.l.b16 %v819
        %v4481 = vunpack.c.h.b16 %v819
        %v4482 = vunpack.c.l.b16 %v820
        %v4483 = vunpack.c.h.b16 %v820
        %v4484 = vunpack.c.l.b16 %v821
        %v4485 = vunpack.c.h.b16 %v821
        %v4486 = vunpack.c.l.b16 %v822
        %v4487 = vunpack.c.h.b16 %v822
        %v4488 = vunpack.c.l.b16 %v823
        %v4489 = vunpack.c.h.b16 %v823
        %v4490 = vpack.c.b16 %v4460, %v4458
        %v4491 = vpack.c.b16 %v4461, %v4459
        %v4492 = vpack.c.b16 %v4464, %v4462
        %v4493 = vpack.c.b16 %v4465, %v4463
        %v4494 = vpack.c.b16 %v4468, %v4466
        %v4495 = vpack.c.b16 %v4469, %v4467
        %v4496 = vpack.c.b16 %v4472, %v4470
        %v4497 = vpack.c.b16 %v4473, %v4471
        %v4498 = vpack.c.b16 %v4476, %v4474
        %v4499 = vpack.c.b16 %v4477, %v4475
        %v4500 = vpack.c.b16 %v4480, %v4478
        %v4501 = vpack.c.b16 %v4481, %v4479
        %v4502 = vpack.c.b16 %v4484, %v4482
        %v4503 = vpack.c.b16 %v4485, %v4483
        %v4504 = vpack.c.b16 %v4488, %v4486
        %v4505 = vpack.c.b16 %v4489, %v4487
        %4522 = vmatpush.bf16.msra.mxu0 %v4504
        %4523 = vmatpush.bf16.msra.mxu0 %v4502
        %4524 = vmatpush.bf16.msra.mxu0 %v4500
        %4525 = vmatpush.bf16.msra.mxu0 %v4498
        %4526 = vmatpush.bf16.msra.mxu0 %v4496
        %4527 = vmatpush.bf16.msra.mxu0 %v4494
        %4528 = vmatpush.bf16.msra.mxu0 %v4492
        %4529 = vmatpush.bf16.msra.mxu0 %v4490
        %4530 = vmatmul.bf16.gmra.mxu0 %v4429
        %v4531 = vpop.f32.mrf.mxu0
        %v4532 = vadd.f32 %v4438, %v4531
        %v4533 = vpop.f32.mrf.mxu0
        %v4534 = vadd.f32 %v4438, %v4533
        %4535 = vmatmul.bf16.gmra.mxu0 %v4430
        %v4536 = vpop.f32.mrf.mxu0
        %v4537 = vadd.f32 %v4438, %v4536
        %v4538 = vpop.f32.mrf.mxu0
        %v4539 = vadd.f32 %v4438, %v4538
        %4540 = vmatmul.bf16.gmra.mxu0 %v4431
        %v4541 = vpop.f32.mrf.mxu0
        %v4542 = vadd.f32 %v4438, %v4541
        %v4543 = vpop.f32.mrf.mxu0
        %v4544 = vadd.f32 %v4438, %v4543
        %4545 = vmatmul.bf16.gmra.mxu0 %v4432
        %v4546 = vpop.f32.mrf.mxu0
        %v4547 = vadd.f32 %v4438, %v4546
        %v4548 = vpop.f32.mrf.mxu0
        %v4549 = vadd.f32 %v4438, %v4548
        %4550 = vmatmul.bf16.gmra.mxu0 %v4433
        %v4551 = vpop.f32.mrf.mxu0
        %v4552 = vadd.f32 %v4438, %v4551
        %v4553 = vpop.f32.mrf.mxu0
        %v4554 = vadd.f32 %v4438, %v4553
        %4555 = vmatmul.bf16.gmra.mxu0 %v4434
        %v4556 = vpop.f32.mrf.mxu0
        %v4557 = vadd.f32 %v4438, %v4556
        %v4558 = vpop.f32.mrf.mxu0
        %v4559 = vadd.f32 %v4438, %v4558
        %4560 = vmatmul.bf16.gmra.mxu0 %v4435
        %v4561 = vpop.f32.mrf.mxu0
        %v4562 = vadd.f32 %v4438, %v4561
        %v4563 = vpop.f32.mrf.mxu0
        %v4564 = vadd.f32 %v4438, %v4563
        %4565 = vmatmul.bf16.gmra.mxu0 %v4436
        %v4566 = vpop.f32.mrf.mxu0
        %v4567 = vadd.f32 %v4438, %v4566
        %v4568 = vpop.f32.mrf.mxu0
        %v4569 = vadd.f32 %v4438, %v4568
        %4570 = vdwg.mxu0
        %4571 = vmatpush.bf16.msra.mxu0 %v4505
        %4572 = vmatpush.bf16.msra.mxu0 %v4503
        %4573 = vmatpush.bf16.msra.mxu0 %v4501
        %4574 = vmatpush.bf16.msra.mxu0 %v4499
        %4575 = vmatpush.bf16.msra.mxu0 %v4497
        %4576 = vmatpush.bf16.msra.mxu0 %v4495
        %4577 = vmatpush.bf16.msra.mxu0 %v4493
        %4578 = vmatpush.bf16.msra.mxu0 %v4491
        %4579 = vmatmul.bf16.gmra.mxu0 %v4429
        %v4580 = vpop.f32.mrf.mxu0
        %v4581 = vadd.f32 %v4439, %v4580
        %v4582 = vpop.f32.mrf.mxu0
        %v4583 = vadd.f32 %v4439, %v4582
        %4584 = vmatmul.bf16.gmra.mxu0 %v4430
        %v4585 = vpop.f32.mrf.mxu0
        %v4586 = vadd.f32 %v4439, %v4585
        %v4587 = vpop.f32.mrf.mxu0
        %v4588 = vadd.f32 %v4439, %v4587
        %4589 = vmatmul.bf16.gmra.mxu0 %v4431
        %v4590 = vpop.f32.mrf.mxu0
        %v4591 = vadd.f32 %v4439, %v4590
        %v4592 = vpop.f32.mrf.mxu0
        %v4593 = vadd.f32 %v4439, %v4592
        %4594 = vmatmul.bf16.gmra.mxu0 %v4432
        %v4595 = vpop.f32.mrf.mxu0
        %v4596 = vadd.f32 %v4439, %v4595
        %v4597 = vpop.f32.mrf.mxu0
        %v4598 = vadd.f32 %v4439, %v4597
        %4599 = vmatmul.bf16.gmra.mxu0 %v4433
        %v4600 = vpop.f32.mrf.mxu0
        %v4601 = vadd.f32 %v4439, %v4600
        %v4602 = vpop.f32.mrf.mxu0
        %v4603 = vadd.f32 %v4439, %v4602
        %4604 = vmatmul.bf16.gmra.mxu0 %v4434
        %v4605 = vpop.f32.mrf.mxu0
        %v4606 = vadd.f32 %v4439, %v4605
        %v4607 = vpop.f32.mrf.mxu0
        %v4608 = vadd.f32 %v4439, %v4607
        %4609 = vmatmul.bf16.gmra.mxu0 %v4435
        %v4610 = vpop.f32.mrf.mxu0
        %v4611 = vadd.f32 %v4439, %v4610
        %v4612 = vpop.f32.mrf.mxu0
        %v4613 = vadd.f32 %v4439, %v4612
        %4614 = vmatmul.bf16.gmra.mxu0 %v4436
        %v4615 = vpop.f32.mrf.mxu0
        %v4616 = vadd.f32 %v4439, %v4615
        %v4617 = vpop.f32.mrf.mxu0
        %v4618 = vadd.f32 %v4439, %v4617
        %4619 = vdwg.mxu0
        %v4620 = vperm.slane %v907, 0
        %v4621 = vadd.f32 %v1580, %v4620
        %v4622 = vadd.f32 %v1582, %v4620
        %v4623 = vadd.f32 %v1585, %v4620
        %v4624 = vadd.f32 %v1587, %v4620
        %v4625 = vadd.f32 %v1590, %v4620
        %v4626 = vadd.f32 %v1592, %v4620
        %v4627 = vadd.f32 %v1595, %v4620
        %v4628 = vadd.f32 %v1597, %v4620
        %v4629 = vadd.f32 %v1600, %v4620
        %v4630 = vadd.f32 %v1602, %v4620
        %v4631 = vadd.f32 %v1605, %v4620
        %v4632 = vadd.f32 %v1607, %v4620
        %v4633 = vadd.f32 %v1610, %v4620
        %v4634 = vadd.f32 %v1612, %v4620
        %v4635 = vadd.f32 %v1615, %v4620
        %v4636 = vadd.f32 %v1617, %v4620
        %v4637 = vsub.f32 0.0, %v4621
        %v4638 = vsub.f32 0.0, %v4622
        %v4639 = vsub.f32 0.0, %v4623
        %v4640 = vsub.f32 0.0, %v4624
        %v4641 = vsub.f32 0.0, %v4625
        %v4642 = vsub.f32 0.0, %v4626
        %v4643 = vsub.f32 0.0, %v4627
        %v4644 = vsub.f32 0.0, %v4628
        %v4645 = vsub.f32 0.0, %v4629
        %v4646 = vsub.f32 0.0, %v4630
        %v4647 = vsub.f32 0.0, %v4631
        %v4648 = vsub.f32 0.0, %v4632
        %v4649 = vsub.f32 0.0, %v4633
        %v4650 = vsub.f32 0.0, %v4634
        %v4651 = vsub.f32 0.0, %v4635
        %v4652 = vsub.f32 0.0, %v4636
        %v4653 = vmul.f32 %v4637, 1.442695
        %v4654 = vpow.pop %v4653
        %v4655 = vmul.f32 %v4638, 1.442695
        %v4656 = vpow.pop %v4655
        %v4657 = vmul.f32 %v4639, 1.442695
        %v4658 = vpow.pop %v4657
        %v4659 = vmul.f32 %v4640, 1.442695
        %v4660 = vpow.pop %v4659
        %v4661 = vmul.f32 %v4641, 1.442695
        %v4662 = vpow.pop %v4661
        %v4663 = vmul.f32 %v4642, 1.442695
        %v4664 = vpow.pop %v4663
        %v4665 = vmul.f32 %v4643, 1.442695
        %v4666 = vpow.pop %v4665
        %v4667 = vmul.f32 %v4644, 1.442695
        %v4668 = vpow.pop %v4667
        %v4669 = vmul.f32 %v4645, 1.442695
        %v4670 = vpow.pop %v4669
        %v4671 = vmul.f32 %v4646, 1.442695
        %v4672 = vpow.pop %v4671
        %v4673 = vmul.f32 %v4647, 1.442695
        %v4674 = vpow.pop %v4673
        %v4675 = vmul.f32 %v4648, 1.442695
        %v4676 = vpow.pop %v4675
        %v4677 = vmul.f32 %v4649, 1.442695
        %v4678 = vpow.pop %v4677
        %v4679 = vmul.f32 %v4650, 1.442695
        %v4680 = vpow.pop %v4679
        %v4681 = vmul.f32 %v4651, 1.442695
        %v4682 = vpow.pop %v4681
        %v4683 = vmul.f32 %v4652, 1.442695
        %v4684 = vpow.pop %v4683
        %v4685 = vadd.f32 %v4654, 1.0
        %v4686 = vadd.f32 %v4656, 1.0
        %v4687 = vadd.f32 %v4658, 1.0
        %v4688 = vadd.f32 %v4660, 1.0
        %v4689 = vadd.f32 %v4662, 1.0
        %v4690 = vadd.f32 %v4664, 1.0
        %v4691 = vadd.f32 %v4666, 1.0
        %v4692 = vadd.f32 %v4668, 1.0
        %v4693 = vadd.f32 %v4670, 1.0
        %v4694 = vadd.f32 %v4672, 1.0
        %v4695 = vadd.f32 %v4674, 1.0
        %v4696 = vadd.f32 %v4676, 1.0
        %v4697 = vadd.f32 %v4678, 1.0
        %v4698 = vadd.f32 %v4680, 1.0
        %v4699 = vadd.f32 %v4682, 1.0
        %v4700 = vadd.f32 %v4684, 1.0
        %v4701 = vrcp.pop %v4685
        %v4702 = vrcp.pop %v4686
        %v4703 = vrcp.pop %v4687
        %v4704 = vrcp.pop %v4688
        %v4705 = vrcp.pop %v4689
        %v4706 = vrcp.pop %v4690
        %v4707 = vrcp.pop %v4691
        %v4708 = vrcp.pop %v4692
        %v4709 = vrcp.pop %v4693
        %v4710 = vrcp.pop %v4694
        %v4711 = vrcp.pop %v4695
        %v4712 = vrcp.pop %v4696
        %v4713 = vrcp.pop %v4697
        %v4714 = vrcp.pop %v4698
        %v4715 = vrcp.pop %v4699
        %v4716 = vrcp.pop %v4700
        %v4717 = vmul.f32 %v4621, %v4701
        %v4718 = vmul.f32 %v4622, %v4702
        %v4719 = vmul.f32 %v4623, %v4703
        %v4720 = vmul.f32 %v4624, %v4704
        %v4721 = vmul.f32 %v4625, %v4705
        %v4722 = vmul.f32 %v4626, %v4706
        %v4723 = vmul.f32 %v4627, %v4707
        %v4724 = vmul.f32 %v4628, %v4708
        %v4725 = vmul.f32 %v4629, %v4709
        %v4726 = vmul.f32 %v4630, %v4710
        %v4727 = vmul.f32 %v4631, %v4711
        %v4728 = vmul.f32 %v4632, %v4712
        %v4729 = vmul.f32 %v4633, %v4713
        %v4730 = vmul.f32 %v4634, %v4714
        %v4731 = vmul.f32 %v4635, %v4715
        %v4732 = vmul.f32 %v4636, %v4716
        %4733 = vadd.xlane.f32.xlu0 %v4717
        %v4734 = vpop.xlane.xlu0 %4733
        %4735 = vadd.xlane.f32.xlu0 %v4718
        %v4736 = vpop.xlane.xlu0 %4735
        %4737 = vadd.xlane.f32.xlu0 %v4719
        %v4738 = vpop.xlane.xlu0 %4737
        %4739 = vadd.xlane.f32.xlu0 %v4720
        %v4740 = vpop.xlane.xlu0 %4739
        %4741 = vadd.xlane.f32.xlu0 %v4721
        %v4742 = vpop.xlane.xlu0 %4741
        %4743 = vadd.xlane.f32.xlu0 %v4722
        %v4744 = vpop.xlane.xlu0 %4743
        %4745 = vadd.xlane.f32.xlu0 %v4723
        %v4746 = vpop.xlane.xlu0 %4745
        %4747 = vadd.xlane.f32.xlu0 %v4724
        %v4748 = vpop.xlane.xlu0 %4747
        %4749 = vadd.xlane.f32.xlu0 %v4725
        %v4750 = vpop.xlane.xlu0 %4749
        %4751 = vadd.xlane.f32.xlu0 %v4726
        %v4752 = vpop.xlane.xlu0 %4751
        %4753 = vadd.xlane.f32.xlu0 %v4727
        %v4754 = vpop.xlane.xlu0 %4753
        %4755 = vadd.xlane.f32.xlu0 %v4728
        %v4756 = vpop.xlane.xlu0 %4755
        %4757 = vadd.xlane.f32.xlu0 %v4729
        %v4758 = vpop.xlane.xlu0 %4757
        %4759 = vadd.xlane.f32.xlu0 %v4730
        %v4760 = vpop.xlane.xlu0 %4759
        %4761 = vadd.xlane.f32.xlu0 %v4731
        %v4762 = vpop.xlane.xlu0 %4761
        %4763 = vadd.xlane.f32.xlu0 %v4732
        %v4764 = vpop.xlane.xlu0 %4763
        %v4765 = vmul.f32 %v4734, %v1770
        %v4766 = vmul.f32 %v4736, %v1770
        %v4767 = vmul.f32 %v4738, %v1770
        %v4768 = vmul.f32 %v4740, %v1770
        %v4769 = vmul.f32 %v4742, %v1770
        %v4770 = vmul.f32 %v4744, %v1770
        %v4771 = vmul.f32 %v4746, %v1770
        %v4772 = vmul.f32 %v4748, %v1770
        %v4773 = vmul.f32 %v4750, %v1770
        %v4774 = vmul.f32 %v4752, %v1770
        %v4775 = vmul.f32 %v4754, %v1770
        %v4776 = vmul.f32 %v4756, %v1770
        %v4777 = vmul.f32 %v4758, %v1770
        %v4778 = vmul.f32 %v4760, %v1770
        %v4779 = vmul.f32 %v4762, %v1770
        %v4780 = vmul.f32 %v4764, %v1770
        %v4781 = vsub.f32 %v4717, %v4765
        %v4782 = vsub.f32 %v4718, %v4766
        %v4783 = vsub.f32 %v4719, %v4767
        %v4784 = vsub.f32 %v4720, %v4768
        %v4785 = vsub.f32 %v4721, %v4769
        %v4786 = vsub.f32 %v4722, %v4770
        %v4787 = vsub.f32 %v4723, %v4771
        %v4788 = vsub.f32 %v4724, %v4772
        %v4789 = vsub.f32 %v4725, %v4773
        %v4790 = vsub.f32 %v4726, %v4774
        %v4791 = vsub.f32 %v4727, %v4775
        %v4792 = vsub.f32 %v4728, %v4776
        %v4793 = vsub.f32 %v4729, %v4777
        %v4794 = vsub.f32 %v4730, %v4778
        %v4795 = vsub.f32 %v4731, %v4779
        %v4796 = vsub.f32 %v4732, %v4780
        %v4797 = vmul.f32 %v4781, %v4781
        %v4798 = vmul.f32 %v4782, %v4782
        %v4799 = vmul.f32 %v4783, %v4783
        %v4800 = vmul.f32 %v4784, %v4784
        %v4801 = vmul.f32 %v4785, %v4785
        %v4802 = vmul.f32 %v4786, %v4786
        %v4803 = vmul.f32 %v4787, %v4787
        %v4804 = vmul.f32 %v4788, %v4788
        %v4805 = vmul.f32 %v4789, %v4789
        %v4806 = vmul.f32 %v4790, %v4790
        %v4807 = vmul.f32 %v4791, %v4791
        %v4808 = vmul.f32 %v4792, %v4792
        %v4809 = vmul.f32 %v4793, %v4793
        %v4810 = vmul.f32 %v4794, %v4794
        %v4811 = vmul.f32 %v4795, %v4795
        %v4812 = vmul.f32 %v4796, %v4796
        %4813 = vadd.xlane.f32.xlu0 %v4797
        %v4814 = vpop.xlane.xlu0 %4813
        %4815 = vadd.xlane.f32.xlu0 %v4798
        %v4816 = vpop.xlane.xlu0 %4815
        %4817 = vadd.xlane.f32.xlu0 %v4799
        %v4818 = vpop.xlane.xlu0 %4817
        %4819 = vadd.xlane.f32.xlu0 %v4800
        %v4820 = vpop.xlane.xlu0 %4819
        %4821 = vadd.xlane.f32.xlu0 %v4801
        %v4822 = vpop.xlane.xlu0 %4821
        %4823 = vadd.xlane.f32.xlu0 %v4802
        %v4824 = vpop.xlane.xlu0 %4823
        %4825 = vadd.xlane.f32.xlu0 %v4803
        %v4826 = vpop.xlane.xlu0 %4825
        %4827 = vadd.xlane.f32.xlu0 %v4804
        %v4828 = vpop.xlane.xlu0 %4827
        %4829 = vadd.xlane.f32.xlu0 %v4805
        %v4830 = vpop.xlane.xlu0 %4829
        %4831 = vadd.xlane.f32.xlu0 %v4806
        %v4832 = vpop.xlane.xlu0 %4831
        %4833 = vadd.xlane.f32.xlu0 %v4807
        %v4834 = vpop.xlane.xlu0 %4833
        %4835 = vadd.xlane.f32.xlu0 %v4808
        %v4836 = vpop.xlane.xlu0 %4835
        %4837 = vadd.xlane.f32.xlu0 %v4809
        %v4838 = vpop.xlane.xlu0 %4837
        %4839 = vadd.xlane.f32.xlu0 %v4810
        %v4840 = vpop.xlane.xlu0 %4839
        %4841 = vadd.xlane.f32.xlu0 %v4811
        %v4842 = vpop.xlane.xlu0 %4841
        %4843 = vadd.xlane.f32.xlu0 %v4812
        %v4844 = vpop.xlane.xlu0 %4843
        %v4845 = vmul.f32 %v4814, %v1770
        %v4846 = vmul.f32 %v4816, %v1770
        %v4847 = vmul.f32 %v4818, %v1770
        %v4848 = vmul.f32 %v4820, %v1770
        %v4849 = vmul.f32 %v4822, %v1770
        %v4850 = vmul.f32 %v4824, %v1770
        %v4851 = vmul.f32 %v4826, %v1770
        %v4852 = vmul.f32 %v4828, %v1770
        %v4853 = vmul.f32 %v4830, %v1770
        %v4854 = vmul.f32 %v4832, %v1770
        %v4855 = vmul.f32 %v4834, %v1770
        %v4856 = vmul.f32 %v4836, %v1770
        %v4857 = vmul.f32 %v4838, %v1770
        %v4858 = vmul.f32 %v4840, %v1770
        %v4859 = vmul.f32 %v4842, %v1770
        %v4860 = vmul.f32 %v4844, %v1770
        %v4861 = vadd.f32 %v4845, 0.1
        %v4862 = vadd.f32 %v4846, 0.1
        %v4863 = vadd.f32 %v4847, 0.1
        %v4864 = vadd.f32 %v4848, 0.1
        %v4865 = vadd.f32 %v4849, 0.1
        %v4866 = vadd.f32 %v4850, 0.1
        %v4867 = vadd.f32 %v4851, 0.1
        %v4868 = vadd.f32 %v4852, 0.1
        %v4869 = vadd.f32 %v4853, 0.1
        %v4870 = vadd.f32 %v4854, 0.1
        %v4871 = vadd.f32 %v4855, 0.1
        %v4872 = vadd.f32 %v4856, 0.1
        %v4873 = vadd.f32 %v4857, 0.1
        %v4874 = vadd.f32 %v4858, 0.1
        %v4875 = vadd.f32 %v4859, 0.1
        %v4876 = vadd.f32 %v4860, 0.1
        %v4877 = vrsqrt.pop %v4861
        %v4878 = vmul.f32 %v4877, %v4861
        %v4879 = vmul.f32 %v4878, %v4877
        %v4880 = vmul.f32 0.5, %v4879
        %v4881 = vsub.f32 1.5, %v4880
        %v4882 = vmul.f32 %v4877, %v4881
        %vm4883 = vweird.f32 %v4861
        %vm4884 = vweird.f32 %v4877
        %vm4885 = vmor %vm4883, %vm4884
        %v4886 = vsel %vm4885, %v4877, %v4882
        %v4887 = vrsqrt.pop %v4862
        %v4888 = vmul.f32 %v4887, %v4862
        %v4889 = vmul.f32 %v4888, %v4887
        %v4890 = vmul.f32 0.5, %v4889
        %v4891 = vsub.f32 1.5, %v4890
        %v4892 = vmul.f32 %v4887, %v4891
        %vm4893 = vweird.f32 %v4862
        %vm4894 = vweird.f32 %v4887
        %vm4895 = vmor %vm4893, %vm4894
        %v4896 = vsel %vm4895, %v4887, %v4892
        %v4897 = vrsqrt.pop %v4863
        %v4898 = vmul.f32 %v4897, %v4863
        %v4899 = vmul.f32 %v4898, %v4897
        %v4900 = vmul.f32 0.5, %v4899
        %v4901 = vsub.f32 1.5, %v4900
        %v4902 = vmul.f32 %v4897, %v4901
        %vm4903 = vweird.f32 %v4863
        %vm4904 = vweird.f32 %v4897
        %vm4905 = vmor %vm4903, %vm4904
        %v4906 = vsel %vm4905, %v4897, %v4902
        %v4907 = vrsqrt.pop %v4864
        %v4908 = vmul.f32 %v4907, %v4864
        %v4909 = vmul.f32 %v4908, %v4907
        %v4910 = vmul.f32 0.5, %v4909
        %v4911 = vsub.f32 1.5, %v4910
        %v4912 = vmul.f32 %v4907, %v4911
        %vm4913 = vweird.f32 %v4864
        %vm4914 = vweird.f32 %v4907
        %vm4915 = vmor %vm4913, %vm4914
        %v4916 = vsel %vm4915, %v4907, %v4912
        %v4917 = vrsqrt.pop %v4865
        %v4918 = vmul.f32 %v4917, %v4865
        %v4919 = vmul.f32 %v4918, %v4917
        %v4920 = vmul.f32 0.5, %v4919
        %v4921 = vsub.f32 1.5, %v4920
        %v4922 = vmul.f32 %v4917, %v4921
        %vm4923 = vweird.f32 %v4865
        %vm4924 = vweird.f32 %v4917
        %vm4925 = vmor %vm4923, %vm4924
        %v4926 = vsel %vm4925, %v4917, %v4922
        %v4927 = vrsqrt.pop %v4866
        %v4928 = vmul.f32 %v4927, %v4866
        %v4929 = vmul.f32 %v4928, %v4927
        %v4930 = vmul.f32 0.5, %v4929
        %v4931 = vsub.f32 1.5, %v4930
        %v4932 = vmul.f32 %v4927, %v4931
        %vm4933 = vweird.f32 %v4866
        %vm4934 = vweird.f32 %v4927
        %vm4935 = vmor %vm4933, %vm4934
        %v4936 = vsel %vm4935, %v4927, %v4932
        %v4937 = vrsqrt.pop %v4867
        %v4938 = vmul.f32 %v4937, %v4867
        %v4939 = vmul.f32 %v4938, %v4937
        %v4940 = vmul.f32 0.5, %v4939
        %v4941 = vsub.f32 1.5, %v4940
        %v4942 = vmul.f32 %v4937, %v4941
        %vm4943 = vweird.f32 %v4867
        %vm4944 = vweird.f32 %v4937
        %vm4945 = vmor %vm4943, %vm4944
        %v4946 = vsel %vm4945, %v4937, %v4942
        %v4947 = vrsqrt.pop %v4868
        %v4948 = vmul.f32 %v4947, %v4868
        %v4949 = vmul.f32 %v4948, %v4947
        %v4950 = vmul.f32 0.5, %v4949
        %v4951 = vsub.f32 1.5, %v4950
        %v4952 = vmul.f32 %v4947, %v4951
        %vm4953 = vweird.f32 %v4868
        %vm4954 = vweird.f32 %v4947
        %vm4955 = vmor %vm4953, %vm4954
        %v4956 = vsel %vm4955, %v4947, %v4952
        %v4957 = vrsqrt.pop %v4869
        %v4958 = vmul.f32 %v4957, %v4869
        %v4959 = vmul.f32 %v4958, %v4957
        %v4960 = vmul.f32 0.5, %v4959
        %v4961 = vsub.f32 1.5, %v4960
        %v4962 = vmul.f32 %v4957, %v4961
        %vm4963 = vweird.f32 %v4869
        %vm4964 = vweird.f32 %v4957
        %vm4965 = vmor %vm4963, %vm4964
        %v4966 = vsel %vm4965, %v4957, %v4962
        %v4967 = vrsqrt.pop %v4870
        %v4968 = vmul.f32 %v4967, %v4870
        %v4969 = vmul.f32 %v4968, %v4967
        %v4970 = vmul.f32 0.5, %v4969
        %v4971 = vsub.f32 1.5, %v4970
        %v4972 = vmul.f32 %v4967, %v4971
        %vm4973 = vweird.f32 %v4870
        %vm4974 = vweird.f32 %v4967
        %vm4975 = vmor %vm4973, %vm4974
        %v4976 = vsel %vm4975, %v4967, %v4972
        %v4977 = vrsqrt.pop %v4871
        %v4978 = vmul.f32 %v4977, %v4871
        %v4979 = vmul.f32 %v4978, %v4977
        %v4980 = vmul.f32 0.5, %v4979
        %v4981 = vsub.f32 1.5, %v4980
        %v4982 = vmul.f32 %v4977, %v4981
        %vm4983 = vweird.f32 %v4871
        %vm4984 = vweird.f32 %v4977
        %vm4985 = vmor %vm4983, %vm4984
        %v4986 = vsel %vm4985, %v4977, %v4982
        %v4987 = vrsqrt.pop %v4872
        %v4988 = vmul.f32 %v4987, %v4872
        %v4989 = vmul.f32 %v4988, %v4987
        %v4990 = vmul.f32 0.5, %v4989
        %v4991 = vsub.f32 1.5, %v4990
        %v4992 = vmul.f32 %v4987, %v4991
        %vm4993 = vweird.f32 %v4872
        %vm4994 = vweird.f32 %v4987
        %vm4995 = vmor %vm4993, %vm4994
        %v4996 = vsel %vm4995, %v4987, %v4992
        %v4997 = vrsqrt.pop %v4873
        %v4998 = vmul.f32 %v4997, %v4873
        %v4999 = vmul.f32 %v4998, %v4997
        %v5000 = vmul.f32 0.5, %v4999
        %v5001 = vsub.f32 1.5, %v5000
        %v5002 = vmul.f32 %v4997, %v5001
        %vm5003 = vweird.f32 %v4873
        %vm5004 = vweird.f32 %v4997
        %vm5005 = vmor %vm5003, %vm5004
        %v5006 = vsel %vm5005, %v4997, %v5002
        %v5007 = vrsqrt.pop %v4874
        %v5008 = vmul.f32 %v5007, %v4874
        %v5009 = vmul.f32 %v5008, %v5007
        %v5010 = vmul.f32 0.5, %v5009
        %v5011 = vsub.f32 1.5, %v5010
        %v5012 = vmul.f32 %v5007, %v5011
        %vm5013 = vweird.f32 %v4874
        %vm5014 = vweird.f32 %v5007
        %vm5015 = vmor %vm5013, %vm5014
        %v5016 = vsel %vm5015, %v5007, %v5012
        %v5017 = vrsqrt.pop %v4875
        %v5018 = vmul.f32 %v5017, %v4875
        %v5019 = vmul.f32 %v5018, %v5017
        %v5020 = vmul.f32 0.5, %v5019
        %v5021 = vsub.f32 1.5, %v5020
        %v5022 = vmul.f32 %v5017, %v5021
        %vm5023 = vweird.f32 %v4875
        %vm5024 = vweird.f32 %v5017
        %vm5025 = vmor %vm5023, %vm5024
        %v5026 = vsel %vm5025, %v5017, %v5022
        %v5027 = vrsqrt.pop %v4876
        %v5028 = vmul.f32 %v5027, %v4876
        %v5029 = vmul.f32 %v5028, %v5027
        %v5030 = vmul.f32 0.5, %v5029
        %v5031 = vsub.f32 1.5, %v5030
        %v5032 = vmul.f32 %v5027, %v5031
        %vm5033 = vweird.f32 %v4876
        %vm5034 = vweird.f32 %v5027
        %vm5035 = vmor %vm5033, %vm5034
        %v5036 = vsel %vm5035, %v5027, %v5032
        %v5037 = vmul.f32 %v4781, %v4886
        %v5038 = vmul.f32 %v4782, %v4896
        %v5039 = vmul.f32 %v4783, %v4906
        %v5040 = vmul.f32 %v4784, %v4916
        %v5041 = vmul.f32 %v4785, %v4926
        %v5042 = vmul.f32 %v4786, %v4936
        %v5043 = vmul.f32 %v4787, %v4946
        %v5044 = vmul.f32 %v4788, %v4956
        %v5045 = vmul.f32 %v4789, %v4966
        %v5046 = vmul.f32 %v4790, %v4976
        %v5047 = vmul.f32 %v4791, %v4986
        %v5048 = vmul.f32 %v4792, %v4996
        %v5049 = vmul.f32 %v4793, %v5006
        %v5050 = vmul.f32 %v4794, %v5016
        %v5051 = vmul.f32 %v4795, %v5026
        %v5052 = vmul.f32 %v4796, %v5036
        %v5053 = vperm.slane %v907, 1
        %v5054 = vmul.f32 %v5037, %v5053
        %v5055 = vmul.f32 %v5038, %v5053
        %v5056 = vmul.f32 %v5039, %v5053
        %v5057 = vmul.f32 %v5040, %v5053
        %v5058 = vmul.f32 %v5041, %v5053
        %v5059 = vmul.f32 %v5042, %v5053
        %v5060 = vmul.f32 %v5043, %v5053
        %v5061 = vmul.f32 %v5044, %v5053
        %v5062 = vmul.f32 %v5045, %v5053
        %v5063 = vmul.f32 %v5046, %v5053
        %v5064 = vmul.f32 %v5047, %v5053
        %v5065 = vmul.f32 %v5048, %v5053
        %v5066 = vmul.f32 %v5049, %v5053
        %v5067 = vmul.f32 %v5050, %v5053
        %v5068 = vmul.f32 %v5051, %v5053
        %v5069 = vmul.f32 %v5052, %v5053
        %v5070 = vperm.slane %v907, 2
        %v5071 = vadd.f32 %v5054, %v5070
        %v5072 = vadd.f32 %v5055, %v5070
        %v5073 = vadd.f32 %v5056, %v5070
        %v5074 = vadd.f32 %v5057, %v5070
        %v5075 = vadd.f32 %v5058, %v5070
        %v5076 = vadd.f32 %v5059, %v5070
        %v5077 = vadd.f32 %v5060, %v5070
        %v5078 = vadd.f32 %v5061, %v5070
        %v5079 = vadd.f32 %v5062, %v5070
        %v5080 = vadd.f32 %v5063, %v5070
        %v5081 = vadd.f32 %v5064, %v5070
        %v5082 = vadd.f32 %v5065, %v5070
        %v5083 = vadd.f32 %v5066, %v5070
        %v5084 = vadd.f32 %v5067, %v5070
        %v5085 = vadd.f32 %v5068, %v5070
        %v5086 = vadd.f32 %v5069, %v5070
        %v5087 = vpack.c.bf16 %v5072, %v5071
        %v5088 = vpack.c.bf16 %v5074, %v5073
        %v5089 = vpack.c.bf16 %v5076, %v5075
        %v5090 = vpack.c.bf16 %v5078, %v5077
        %v5091 = vpack.c.bf16 %v5080, %v5079
        %v5092 = vpack.c.bf16 %v5082, %v5081
        %v5093 = vpack.c.bf16 %v5084, %v5083
        %v5094 = vpack.c.bf16 %v5086, %v5085
        %v5095 = vperm.slane %v907, 3
        %v5112 = vunpack.c.l.b16 %v827
        %v5113 = vunpack.c.l.b16 %v828
        %v5114 = vunpack.c.l.b16 %v829
        %v5115 = vunpack.c.l.b16 %v830
        %v5116 = vunpack.c.l.b16 %v831
        %v5117 = vunpack.c.l.b16 %v832
        %v5118 = vunpack.c.l.b16 %v833
        %v5119 = vunpack.c.l.b16 %v834
        %v5120 = vunpack.c.l.b16 %v835
        %v5121 = vunpack.c.l.b16 %v836
        %v5122 = vunpack.c.l.b16 %v837
        %v5123 = vunpack.c.l.b16 %v838
        %v5124 = vunpack.c.l.b16 %v839
        %v5125 = vunpack.c.l.b16 %v840
        %v5126 = vunpack.c.l.b16 %v841
        %v5127 = vunpack.c.l.b16 %v842
        %v5128 = vpack.c.b16 %v5113, %v5112
        %v5129 = vpack.c.b16 %v5115, %v5114
        %v5130 = vpack.c.b16 %v5117, %v5116
        %v5131 = vpack.c.b16 %v5119, %v5118
        %v5132 = vpack.c.b16 %v5121, %v5120
        %v5133 = vpack.c.b16 %v5123, %v5122
        %v5134 = vpack.c.b16 %v5125, %v5124
        %v5135 = vpack.c.b16 %v5127, %v5126
        %5144 = vmatpush.bf16.msra.mxu0 %v5135
        %5145 = vmatpush.bf16.msra.mxu0 %v5134
        %5146 = vmatpush.bf16.msra.mxu0 %v5133
        %5147 = vmatpush.bf16.msra.mxu0 %v5132
        %5148 = vmatpush.bf16.msra.mxu0 %v5131
        %5149 = vmatpush.bf16.msra.mxu0 %v5130
        %5150 = vmatpush.bf16.msra.mxu0 %v5129
        %5151 = vmatpush.bf16.msra.mxu0 %v5128
        %5152 = vmatmul.bf16.gmra.mxu0 %v5087
        %v5153 = vpop.f32.mrf.mxu0
        %v5154 = vadd.f32 %v5095, %v5153
        %v5155 = vpop.f32.mrf.mxu0
        %v5156 = vadd.f32 %v5095, %v5155
        %5157 = vmatmul.bf16.gmra.mxu0 %v5088
        %v5158 = vpop.f32.mrf.mxu0
        %v5159 = vadd.f32 %v5095, %v5158
        %v5160 = vpop.f32.mrf.mxu0
        %v5161 = vadd.f32 %v5095, %v5160
        %5162 = vmatmul.bf16.gmra.mxu0 %v5089
        %v5163 = vpop.f32.mrf.mxu0
        %v5164 = vadd.f32 %v5095, %v5163
        %v5165 = vpop.f32.mrf.mxu0
        %v5166 = vadd.f32 %v5095, %v5165
        %5167 = vmatmul.bf16.gmra.mxu0 %v5090
        %v5168 = vpop.f32.mrf.mxu0
        %v5169 = vadd.f32 %v5095, %v5168
        %v5170 = vpop.f32.mrf.mxu0
        %v5171 = vadd.f32 %v5095, %v5170
        %5172 = vmatmul.bf16.gmra.mxu0 %v5091
        %v5173 = vpop.f32.mrf.mxu0
        %v5174 = vadd.f32 %v5095, %v5173
        %v5175 = vpop.f32.mrf.mxu0
        %v5176 = vadd.f32 %v5095, %v5175
        %5177 = vmatmul.bf16.gmra.mxu0 %v5092
        %v5178 = vpop.f32.mrf.mxu0
        %v5179 = vadd.f32 %v5095, %v5178
        %v5180 = vpop.f32.mrf.mxu0
        %v5181 = vadd.f32 %v5095, %v5180
        %5182 = vmatmul.bf16.gmra.mxu0 %v5093
        %v5183 = vpop.f32.mrf.mxu0
        %v5184 = vadd.f32 %v5095, %v5183
        %v5185 = vpop.f32.mrf.mxu0
        %v5186 = vadd.f32 %v5095, %v5185
        %5187 = vmatmul.bf16.gmra.mxu0 %v5094
        %v5188 = vpop.f32.mrf.mxu0
        %v5189 = vadd.f32 %v5095, %v5188
        %v5190 = vpop.f32.mrf.mxu0
        %v5191 = vadd.f32 %v5095, %v5190
        %5192 = vdwg.mxu0
        %v5193 = vadd.f32 %v5154, %v5071
        %v5194 = vadd.f32 %v5156, %v5072
        %v5195 = vadd.f32 %v5159, %v5073
        %v5196 = vadd.f32 %v5161, %v5074
        %v5197 = vadd.f32 %v5164, %v5075
        %v5198 = vadd.f32 %v5166, %v5076
        %v5199 = vadd.f32 %v5169, %v5077
        %v5200 = vadd.f32 %v5171, %v5078
        %v5201 = vadd.f32 %v5174, %v5079
        %v5202 = vadd.f32 %v5176, %v5080
        %v5203 = vadd.f32 %v5179, %v5081
        %v5204 = vadd.f32 %v5181, %v5082
        %v5205 = vadd.f32 %v5184, %v5083
        %v5206 = vadd.f32 %v5186, %v5084
        %v5207 = vadd.f32 %v5189, %v5085
        %v5208 = vadd.f32 %v5191, %v5086
        %v5209 = vsub.f32 0.0, %v5193
        %v5210 = vsub.f32 0.0, %v5194
        %v5211 = vsub.f32 0.0, %v5195
        %v5212 = vsub.f32 0.0, %v5196
        %v5213 = vsub.f32 0.0, %v5197
        %v5214 = vsub.f32 0.0, %v5198
        %v5215 = vsub.f32 0.0, %v5199
        %v5216 = vsub.f32 0.0, %v5200
        %v5217 = vsub.f32 0.0, %v5201
        %v5218 = vsub.f32 0.0, %v5202
        %v5219 = vsub.f32 0.0, %v5203
        %v5220 = vsub.f32 0.0, %v5204
        %v5221 = vsub.f32 0.0, %v5205
        %v5222 = vsub.f32 0.0, %v5206
        %v5223 = vsub.f32 0.0, %v5207
        %v5224 = vsub.f32 0.0, %v5208
        %v5225 = vmul.f32 %v5209, 1.442695
        %v5226 = vpow.pop %v5225
        %v5227 = vmul.f32 %v5210, 1.442695
        %v5228 = vpow.pop %v5227
        %v5229 = vmul.f32 %v5211, 1.442695
        %v5230 = vpow.pop %v5229
        %v5231 = vmul.f32 %v5212, 1.442695
        %v5232 = vpow.pop %v5231
        %v5233 = vmul.f32 %v5213, 1.442695
        %v5234 = vpow.pop %v5233
        %v5235 = vmul.f32 %v5214, 1.442695
        %v5236 = vpow.pop %v5235
        %v5237 = vmul.f32 %v5215, 1.442695
        %v5238 = vpow.pop %v5237
        %v5239 = vmul.f32 %v5216, 1.442695
        %v5240 = vpow.pop %v5239
        %v5241 = vmul.f32 %v5217, 1.442695
        %v5242 = vpow.pop %v5241
        %v5243 = vmul.f32 %v5218, 1.442695
        %v5244 = vpow.pop %v5243
        %v5245 = vmul.f32 %v5219, 1.442695
        %v5246 = vpow.pop %v5245
        %v5247 = vmul.f32 %v5220, 1.442695
        %v5248 = vpow.pop %v5247
        %v5249 = vmul.f32 %v5221, 1.442695
        %v5250 = vpow.pop %v5249
        %v5251 = vmul.f32 %v5222, 1.442695
        %v5252 = vpow.pop %v5251
        %v5253 = vmul.f32 %v5223, 1.442695
        %v5254 = vpow.pop %v5253
        %v5255 = vmul.f32 %v5224, 1.442695
        %v5256 = vpow.pop %v5255
        %v5257 = vadd.f32 %v5226, 1.0
        %v5258 = vadd.f32 %v5228, 1.0
        %v5259 = vadd.f32 %v5230, 1.0
        %v5260 = vadd.f32 %v5232, 1.0
        %v5261 = vadd.f32 %v5234, 1.0
        %v5262 = vadd.f32 %v5236, 1.0
        %v5263 = vadd.f32 %v5238, 1.0
        %v5264 = vadd.f32 %v5240, 1.0
        %v5265 = vadd.f32 %v5242, 1.0
        %v5266 = vadd.f32 %v5244, 1.0
        %v5267 = vadd.f32 %v5246, 1.0
        %v5268 = vadd.f32 %v5248, 1.0
        %v5269 = vadd.f32 %v5250, 1.0
        %v5270 = vadd.f32 %v5252, 1.0
        %v5271 = vadd.f32 %v5254, 1.0
        %v5272 = vadd.f32 %v5256, 1.0
        %v5273 = vrcp.pop %v5257
        %v5274 = vrcp.pop %v5258
        %v5275 = vrcp.pop %v5259
        %v5276 = vrcp.pop %v5260
        %v5277 = vrcp.pop %v5261
        %v5278 = vrcp.pop %v5262
        %v5279 = vrcp.pop %v5263
        %v5280 = vrcp.pop %v5264
        %v5281 = vrcp.pop %v5265
        %v5282 = vrcp.pop %v5266
        %v5283 = vrcp.pop %v5267
        %v5284 = vrcp.pop %v5268
        %v5285 = vrcp.pop %v5269
        %v5286 = vrcp.pop %v5270
        %v5287 = vrcp.pop %v5271
        %v5288 = vrcp.pop %v5272
        %v5289 = vmul.f32 %v5193, %v5273
        %v5290 = vmul.f32 %v5194, %v5274
        %v5291 = vmul.f32 %v5195, %v5275
        %v5292 = vmul.f32 %v5196, %v5276
        %v5293 = vmul.f32 %v5197, %v5277
        %v5294 = vmul.f32 %v5198, %v5278
        %v5295 = vmul.f32 %v5199, %v5279
        %v5296 = vmul.f32 %v5200, %v5280
        %v5297 = vmul.f32 %v5201, %v5281
        %v5298 = vmul.f32 %v5202, %v5282
        %v5299 = vmul.f32 %v5203, %v5283
        %v5300 = vmul.f32 %v5204, %v5284
        %v5301 = vmul.f32 %v5205, %v5285
        %v5302 = vmul.f32 %v5206, %v5286
        %v5303 = vmul.f32 %v5207, %v5287
        %v5304 = vmul.f32 %v5208, %v5288
        %5305 = vadd.xlane.f32.xlu0 %v5289
        %v5306 = vpop.xlane.xlu0 %5305
        %5307 = vadd.xlane.f32.xlu0 %v5290
        %v5308 = vpop.xlane.xlu0 %5307
        %5309 = vadd.xlane.f32.xlu0 %v5291
        %v5310 = vpop.xlane.xlu0 %5309
        %5311 = vadd.xlane.f32.xlu0 %v5292
        %v5312 = vpop.xlane.xlu0 %5311
        %5313 = vadd.xlane.f32.xlu0 %v5293
        %v5314 = vpop.xlane.xlu0 %5313
        %5315 = vadd.xlane.f32.xlu0 %v5294
        %v5316 = vpop.xlane.xlu0 %5315
        %5317 = vadd.xlane.f32.xlu0 %v5295
        %v5318 = vpop.xlane.xlu0 %5317
        %5319 = vadd.xlane.f32.xlu0 %v5296
        %v5320 = vpop.xlane.xlu0 %5319
        %5321 = vadd.xlane.f32.xlu0 %v5297
        %v5322 = vpop.xlane.xlu0 %5321
        %5323 = vadd.xlane.f32.xlu0 %v5298
        %v5324 = vpop.xlane.xlu0 %5323
        %5325 = vadd.xlane.f32.xlu0 %v5299
        %v5326 = vpop.xlane.xlu0 %5325
        %5327 = vadd.xlane.f32.xlu0 %v5300
        %v5328 = vpop.xlane.xlu0 %5327
        %5329 = vadd.xlane.f32.xlu0 %v5301
        %v5330 = vpop.xlane.xlu0 %5329
        %5331 = vadd.xlane.f32.xlu0 %v5302
        %v5332 = vpop.xlane.xlu0 %5331
        %5333 = vadd.xlane.f32.xlu0 %v5303
        %v5334 = vpop.xlane.xlu0 %5333
        %5335 = vadd.xlane.f32.xlu0 %v5304
        %v5336 = vpop.xlane.xlu0 %5335
        %v5337 = vmul.f32 %v5306, %v1770
        %v5338 = vmul.f32 %v5308, %v1770
        %v5339 = vmul.f32 %v5310, %v1770
        %v5340 = vmul.f32 %v5312, %v1770
        %v5341 = vmul.f32 %v5314, %v1770
        %v5342 = vmul.f32 %v5316, %v1770
        %v5343 = vmul.f32 %v5318, %v1770
        %v5344 = vmul.f32 %v5320, %v1770
        %v5345 = vmul.f32 %v5322, %v1770
        %v5346 = vmul.f32 %v5324, %v1770
        %v5347 = vmul.f32 %v5326, %v1770
        %v5348 = vmul.f32 %v5328, %v1770
        %v5349 = vmul.f32 %v5330, %v1770
        %v5350 = vmul.f32 %v5332, %v1770
        %v5351 = vmul.f32 %v5334, %v1770
        %v5352 = vmul.f32 %v5336, %v1770
        %v5353 = vsub.f32 %v5289, %v5337
        %v5354 = vsub.f32 %v5290, %v5338
        %v5355 = vsub.f32 %v5291, %v5339
        %v5356 = vsub.f32 %v5292, %v5340
        %v5357 = vsub.f32 %v5293, %v5341
        %v5358 = vsub.f32 %v5294, %v5342
        %v5359 = vsub.f32 %v5295, %v5343
        %v5360 = vsub.f32 %v5296, %v5344
        %v5361 = vsub.f32 %v5297, %v5345
        %v5362 = vsub.f32 %v5298, %v5346
        %v5363 = vsub.f32 %v5299, %v5347
        %v5364 = vsub.f32 %v5300, %v5348
        %v5365 = vsub.f32 %v5301, %v5349
        %v5366 = vsub.f32 %v5302, %v5350
        %v5367 = vsub.f32 %v5303, %v5351
        %v5368 = vsub.f32 %v5304, %v5352
        %v5369 = vmul.f32 %v5353, %v5353
        %v5370 = vmul.f32 %v5354, %v5354
        %v5371 = vmul.f32 %v5355, %v5355
        %v5372 = vmul.f32 %v5356, %v5356
        %v5373 = vmul.f32 %v5357, %v5357
        %v5374 = vmul.f32 %v5358, %v5358
        %v5375 = vmul.f32 %v5359, %v5359
        %v5376 = vmul.f32 %v5360, %v5360
        %v5377 = vmul.f32 %v5361, %v5361
        %v5378 = vmul.f32 %v5362, %v5362
        %v5379 = vmul.f32 %v5363, %v5363
        %v5380 = vmul.f32 %v5364, %v5364
        %v5381 = vmul.f32 %v5365, %v5365
        %v5382 = vmul.f32 %v5366, %v5366
        %v5383 = vmul.f32 %v5367, %v5367
        %v5384 = vmul.f32 %v5368, %v5368
        %5385 = vadd.xlane.f32.xlu0 %v5369
        %v5386 = vpop.xlane.xlu0 %5385
        %5387 = vadd.xlane.f32.xlu0 %v5370
        %v5388 = vpop.xlane.xlu0 %5387
        %5389 = vadd.xlane.f32.xlu0 %v5371
        %v5390 = vpop.xlane.xlu0 %5389
        %5391 = vadd.xlane.f32.xlu0 %v5372
        %v5392 = vpop.xlane.xlu0 %5391
        %5393 = vadd.xlane.f32.xlu0 %v5373
        %v5394 = vpop.xlane.xlu0 %5393
        %5395 = vadd.xlane.f32.xlu0 %v5374
        %v5396 = vpop.xlane.xlu0 %5395
        %5397 = vadd.xlane.f32.xlu0 %v5375
        %v5398 = vpop.xlane.xlu0 %5397
        %5399 = vadd.xlane.f32.xlu0 %v5376
        %v5400 = vpop.xlane.xlu0 %5399
        %5401 = vadd.xlane.f32.xlu0 %v5377
        %v5402 = vpop.xlane.xlu0 %5401
        %5403 = vadd.xlane.f32.xlu0 %v5378
        %v5404 = vpop.xlane.xlu0 %5403
        %5405 = vadd.xlane.f32.xlu0 %v5379
        %v5406 = vpop.xlane.xlu0 %5405
        %5407 = vadd.xlane.f32.xlu0 %v5380
        %v5408 = vpop.xlane.xlu0 %5407
        %5409 = vadd.xlane.f32.xlu0 %v5381
        %v5410 = vpop.xlane.xlu0 %5409
        %5411 = vadd.xlane.f32.xlu0 %v5382
        %v5412 = vpop.xlane.xlu0 %5411
        %5413 = vadd.xlane.f32.xlu0 %v5383
        %v5414 = vpop.xlane.xlu0 %5413
        %5415 = vadd.xlane.f32.xlu0 %v5384
        %v5416 = vpop.xlane.xlu0 %5415
        %v5417 = vmul.f32 %v5386, %v1770
        %v5418 = vmul.f32 %v5388, %v1770
        %v5419 = vmul.f32 %v5390, %v1770
        %v5420 = vmul.f32 %v5392, %v1770
        %v5421 = vmul.f32 %v5394, %v1770
        %v5422 = vmul.f32 %v5396, %v1770
        %v5423 = vmul.f32 %v5398, %v1770
        %v5424 = vmul.f32 %v5400, %v1770
        %v5425 = vmul.f32 %v5402, %v1770
        %v5426 = vmul.f32 %v5404, %v1770
        %v5427 = vmul.f32 %v5406, %v1770
        %v5428 = vmul.f32 %v5408, %v1770
        %v5429 = vmul.f32 %v5410, %v1770
        %v5430 = vmul.f32 %v5412, %v1770
        %v5431 = vmul.f32 %v5414, %v1770
        %v5432 = vmul.f32 %v5416, %v1770
        %v5433 = vadd.f32 %v5417, 0.1
        %v5434 = vadd.f32 %v5418, 0.1
        %v5435 = vadd.f32 %v5419, 0.1
        %v5436 = vadd.f32 %v5420, 0.1
        %v5437 = vadd.f32 %v5421, 0.1
        %v5438 = vadd.f32 %v5422, 0.1
        %v5439 = vadd.f32 %v5423, 0.1
        %v5440 = vadd.f32 %v5424, 0.1
        %v5441 = vadd.f32 %v5425, 0.1
        %v5442 = vadd.f32 %v5426, 0.1
        %v5443 = vadd.f32 %v5427, 0.1
        %v5444 = vadd.f32 %v5428, 0.1
        %v5445 = vadd.f32 %v5429, 0.1
        %v5446 = vadd.f32 %v5430, 0.1
        %v5447 = vadd.f32 %v5431, 0.1
        %v5448 = vadd.f32 %v5432, 0.1
        %v5449 = vrsqrt.pop %v5433
        %v5450 = vmul.f32 %v5449, %v5433
        %v5451 = vmul.f32 %v5450, %v5449
        %v5452 = vmul.f32 0.5, %v5451
        %v5453 = vsub.f32 1.5, %v5452
        %v5454 = vmul.f32 %v5449, %v5453
        %vm5455 = vweird.f32 %v5433
        %vm5456 = vweird.f32 %v5449
        %vm5457 = vmor %vm5455, %vm5456
        %v5458 = vsel %vm5457, %v5449, %v5454
        %v5459 = vrsqrt.pop %v5434
        %v5460 = vmul.f32 %v5459, %v5434
        %v5461 = vmul.f32 %v5460, %v5459
        %v5462 = vmul.f32 0.5, %v5461
        %v5463 = vsub.f32 1.5, %v5462
        %v5464 = vmul.f32 %v5459, %v5463
        %vm5465 = vweird.f32 %v5434
        %vm5466 = vweird.f32 %v5459
        %vm5467 = vmor %vm5465, %vm5466
        %v5468 = vsel %vm5467, %v5459, %v5464
        %v5469 = vrsqrt.pop %v5435
        %v5470 = vmul.f32 %v5469, %v5435
        %v5471 = vmul.f32 %v5470, %v5469
        %v5472 = vmul.f32 0.5, %v5471
        %v5473 = vsub.f32 1.5, %v5472
        %v5474 = vmul.f32 %v5469, %v5473
        %vm5475 = vweird.f32 %v5435
        %vm5476 = vweird.f32 %v5469
        %vm5477 = vmor %vm5475, %vm5476
        %v5478 = vsel %vm5477, %v5469, %v5474
        %v5479 = vrsqrt.pop %v5436
        %v5480 = vmul.f32 %v5479, %v5436
        %v5481 = vmul.f32 %v5480, %v5479
        %v5482 = vmul.f32 0.5, %v5481
        %v5483 = vsub.f32 1.5, %v5482
        %v5484 = vmul.f32 %v5479, %v5483
        %vm5485 = vweird.f32 %v5436
        %vm5486 = vweird.f32 %v5479
        %vm5487 = vmor %vm5485, %vm5486
        %v5488 = vsel %vm5487, %v5479, %v5484
        %v5489 = vrsqrt.pop %v5437
        %v5490 = vmul.f32 %v5489, %v5437
        %v5491 = vmul.f32 %v5490, %v5489
        %v5492 = vmul.f32 0.5, %v5491
        %v5493 = vsub.f32 1.5, %v5492
        %v5494 = vmul.f32 %v5489, %v5493
        %vm5495 = vweird.f32 %v5437
        %vm5496 = vweird.f32 %v5489
        %vm5497 = vmor %vm5495, %vm5496
        %v5498 = vsel %vm5497, %v5489, %v5494
        %v5499 = vrsqrt.pop %v5438
        %v5500 = vmul.f32 %v5499, %v5438
        %v5501 = vmul.f32 %v5500, %v5499
        %v5502 = vmul.f32 0.5, %v5501
        %v5503 = vsub.f32 1.5, %v5502
        %v5504 = vmul.f32 %v5499, %v5503
        %vm5505 = vweird.f32 %v5438
        %vm5506 = vweird.f32 %v5499
        %vm5507 = vmor %vm5505, %vm5506
        %v5508 = vsel %vm5507, %v5499, %v5504
        %v5509 = vrsqrt.pop %v5439
        %v5510 = vmul.f32 %v5509, %v5439
        %v5511 = vmul.f32 %v5510, %v5509
        %v5512 = vmul.f32 0.5, %v5511
        %v5513 = vsub.f32 1.5, %v5512
        %v5514 = vmul.f32 %v5509, %v5513
        %vm5515 = vweird.f32 %v5439
        %vm5516 = vweird.f32 %v5509
        %vm5517 = vmor %vm5515, %vm5516
        %v5518 = vsel %vm5517, %v5509, %v5514
        %v5519 = vrsqrt.pop %v5440
        %v5520 = vmul.f32 %v5519, %v5440
        %v5521 = vmul.f32 %v5520, %v5519
        %v5522 = vmul.f32 0.5, %v5521
        %v5523 = vsub.f32 1.5, %v5522
        %v5524 = vmul.f32 %v5519, %v5523
        %vm5525 = vweird.f32 %v5440
        %vm5526 = vweird.f32 %v5519
        %vm5527 = vmor %vm5525, %vm5526
        %v5528 = vsel %vm5527, %v5519, %v5524
        %v5529 = vrsqrt.pop %v5441
        %v5530 = vmul.f32 %v5529, %v5441
        %v5531 = vmul.f32 %v5530, %v5529
        %v5532 = vmul.f32 0.5, %v5531
        %v5533 = vsub.f32 1.5, %v5532
        %v5534 = vmul.f32 %v5529, %v5533
        %vm5535 = vweird.f32 %v5441
        %vm5536 = vweird.f32 %v5529
        %vm5537 = vmor %vm5535, %vm5536
        %v5538 = vsel %vm5537, %v5529, %v5534
        %v5539 = vrsqrt.pop %v5442
        %v5540 = vmul.f32 %v5539, %v5442
        %v5541 = vmul.f32 %v5540, %v5539
        %v5542 = vmul.f32 0.5, %v5541
        %v5543 = vsub.f32 1.5, %v5542
        %v5544 = vmul.f32 %v5539, %v5543
        %vm5545 = vweird.f32 %v5442
        %vm5546 = vweird.f32 %v5539
        %vm5547 = vmor %vm5545, %vm5546
        %v5548 = vsel %vm5547, %v5539, %v5544
        %v5549 = vrsqrt.pop %v5443
        %v5550 = vmul.f32 %v5549, %v5443
        %v5551 = vmul.f32 %v5550, %v5549
        %v5552 = vmul.f32 0.5, %v5551
        %v5553 = vsub.f32 1.5, %v5552
        %v5554 = vmul.f32 %v5549, %v5553
        %vm5555 = vweird.f32 %v5443
        %vm5556 = vweird.f32 %v5549
        %vm5557 = vmor %vm5555, %vm5556
        %v5558 = vsel %vm5557, %v5549, %v5554
        %v5559 = vrsqrt.pop %v5444
        %v5560 = vmul.f32 %v5559, %v5444
        %v5561 = vmul.f32 %v5560, %v5559
        %v5562 = vmul.f32 0.5, %v5561
        %v5563 = vsub.f32 1.5, %v5562
        %v5564 = vmul.f32 %v5559, %v5563
        %vm5565 = vweird.f32 %v5444
        %vm5566 = vweird.f32 %v5559
        %vm5567 = vmor %vm5565, %vm5566
        %v5568 = vsel %vm5567, %v5559, %v5564
        %v5569 = vrsqrt.pop %v5445
        %v5570 = vmul.f32 %v5569, %v5445
        %v5571 = vmul.f32 %v5570, %v5569
        %v5572 = vmul.f32 0.5, %v5571
        %v5573 = vsub.f32 1.5, %v5572
        %v5574 = vmul.f32 %v5569, %v5573
        %vm5575 = vweird.f32 %v5445
        %vm5576 = vweird.f32 %v5569
        %vm5577 = vmor %vm5575, %vm5576
        %v5578 = vsel %vm5577, %v5569, %v5574
        %v5579 = vrsqrt.pop %v5446
        %v5580 = vmul.f32 %v5579, %v5446
        %v5581 = vmul.f32 %v5580, %v5579
        %v5582 = vmul.f32 0.5, %v5581
        %v5583 = vsub.f32 1.5, %v5582
        %v5584 = vmul.f32 %v5579, %v5583
        %vm5585 = vweird.f32 %v5446
        %vm5586 = vweird.f32 %v5579
        %vm5587 = vmor %vm5585, %vm5586
        %v5588 = vsel %vm5587, %v5579, %v5584
        %v5589 = vrsqrt.pop %v5447
        %v5590 = vmul.f32 %v5589, %v5447
        %v5591 = vmul.f32 %v5590, %v5589
        %v5592 = vmul.f32 0.5, %v5591
        %v5593 = vsub.f32 1.5, %v5592
        %v5594 = vmul.f32 %v5589, %v5593
        %vm5595 = vweird.f32 %v5447
        %vm5596 = vweird.f32 %v5589
        %vm5597 = vmor %vm5595, %vm5596
        %v5598 = vsel %vm5597, %v5589, %v5594
        %v5599 = vrsqrt.pop %v5448
        %v5600 = vmul.f32 %v5599, %v5448
        %v5601 = vmul.f32 %v5600, %v5599
        %v5602 = vmul.f32 0.5, %v5601
        %v5603 = vsub.f32 1.5, %v5602
        %v5604 = vmul.f32 %v5599, %v5603
        %vm5605 = vweird.f32 %v5448
        %vm5606 = vweird.f32 %v5599
        %vm5607 = vmor %vm5605, %vm5606
        %v5608 = vsel %vm5607, %v5599, %v5604
        %v5609 = vmul.f32 %v5353, %v5458
        %v5610 = vmul.f32 %v5354, %v5468
        %v5611 = vmul.f32 %v5355, %v5478
        %v5612 = vmul.f32 %v5356, %v5488
        %v5613 = vmul.f32 %v5357, %v5498
        %v5614 = vmul.f32 %v5358, %v5508
        %v5615 = vmul.f32 %v5359, %v5518
        %v5616 = vmul.f32 %v5360, %v5528
        %v5617 = vmul.f32 %v5361, %v5538
        %v5618 = vmul.f32 %v5362, %v5548
        %v5619 = vmul.f32 %v5363, %v5558
        %v5620 = vmul.f32 %v5364, %v5568
        %v5621 = vmul.f32 %v5365, %v5578
        %v5622 = vmul.f32 %v5366, %v5588
        %v5623 = vmul.f32 %v5367, %v5598
        %v5624 = vmul.f32 %v5368, %v5608
        %v5625 = vperm.slane %v907, 4
        %v5626 = vmul.f32 %v5609, %v5625
        %v5627 = vmul.f32 %v5610, %v5625
        %v5628 = vmul.f32 %v5611, %v5625
        %v5629 = vmul.f32 %v5612, %v5625
        %v5630 = vmul.f32 %v5613, %v5625
        %v5631 = vmul.f32 %v5614, %v5625
        %v5632 = vmul.f32 %v5615, %v5625
        %v5633 = vmul.f32 %v5616, %v5625
        %v5634 = vmul.f32 %v5617, %v5625
        %v5635 = vmul.f32 %v5618, %v5625
        %v5636 = vmul.f32 %v5619, %v5625
        %v5637 = vmul.f32 %v5620, %v5625
        %v5638 = vmul.f32 %v5621, %v5625
        %v5639 = vmul.f32 %v5622, %v5625
        %v5640 = vmul.f32 %v5623, %v5625
        %v5641 = vmul.f32 %v5624, %v5625
        %v5642 = vperm.slane %v907, 5
        %v5643 = vadd.f32 %v5626, %v5642
        %v5644 = vadd.f32 %v5627, %v5642
        %v5645 = vadd.f32 %v5628, %v5642
        %v5646 = vadd.f32 %v5629, %v5642
        %v5647 = vadd.f32 %v5630, %v5642
        %v5648 = vadd.f32 %v5631, %v5642
        %v5649 = vadd.f32 %v5632, %v5642
        %v5650 = vadd.f32 %v5633, %v5642
        %v5651 = vadd.f32 %v5634, %v5642
        %v5652 = vadd.f32 %v5635, %v5642
        %v5653 = vadd.f32 %v5636, %v5642
        %v5654 = vadd.f32 %v5637, %v5642
        %v5655 = vadd.f32 %v5638, %v5642
        %v5656 = vadd.f32 %v5639, %v5642
        %v5657 = vadd.f32 %v5640, %v5642
        %v5658 = vadd.f32 %v5641, %v5642
        %v5659 = vadd.f32 %v5071, %v5643
        %v5660 = vadd.f32 %v5072, %v5644
        %v5661 = vadd.f32 %v5073, %v5645
        %v5662 = vadd.f32 %v5074, %v5646
        %v5663 = vadd.f32 %v5075, %v5647
        %v5664 = vadd.f32 %v5076, %v5648
        %v5665 = vadd.f32 %v5077, %v5649
        %v5666 = vadd.f32 %v5078, %v5650
        %v5667 = vadd.f32 %v5079, %v5651
        %v5668 = vadd.f32 %v5080, %v5652
        %v5669 = vadd.f32 %v5081, %v5653
        %v5670 = vadd.f32 %v5082, %v5654
        %v5671 = vadd.f32 %v5083, %v5655
        %v5672 = vadd.f32 %v5084, %v5656
        %v5673 = vadd.f32 %v5085, %v5657
        %v5674 = vadd.f32 %v5086, %v5658
        %v5675 = vpack.c.bf16 %v5644, %v5643
        %v5676 = vpack.c.bf16 %v5646, %v5645
        %v5677 = vpack.c.bf16 %v5648, %v5647
        %v5678 = vpack.c.bf16 %v5650, %v5649
        %v5679 = vpack.c.bf16 %v5652, %v5651
        %v5680 = vpack.c.bf16 %v5654, %v5653
        %v5681 = vpack.c.bf16 %v5656, %v5655
        %v5682 = vpack.c.bf16 %v5658, %v5657
        %v5683 = vperm.slane %v907, 6
        %v5700 = vunpack.c.l.b16 %v843
        %v5701 = vunpack.c.l.b16 %v844
        %v5702 = vunpack.c.l.b16 %v845
        %v5703 = vunpack.c.l.b16 %v846
        %v5704 = vunpack.c.l.b16 %v847
        %v5705 = vunpack.c.l.b16 %v848
        %v5706 = vunpack.c.l.b16 %v849
        %v5707 = vunpack.c.l.b16 %v850
        %v5708 = vunpack.c.l.b16 %v851
        %v5709 = vunpack.c.l.b16 %v852
        %v5710 = vunpack.c.l.b16 %v853
        %v5711 = vunpack.c.l.b16 %v854
        %v5712 = vunpack.c.l.b16 %v855
        %v5713 = vunpack.c.l.b16 %v856
        %v5714 = vunpack.c.l.b16 %v857
        %v5715 = vunpack.c.l.b16 %v858
        %v5716 = vpack.c.b16 %v5701, %v5700
        %v5717 = vpack.c.b16 %v5703, %v5702
        %v5718 = vpack.c.b16 %v5705, %v5704
        %v5719 = vpack.c.b16 %v5707, %v5706
        %v5720 = vpack.c.b16 %v5709, %v5708
        %v5721 = vpack.c.b16 %v5711, %v5710
        %v5722 = vpack.c.b16 %v5713, %v5712
        %v5723 = vpack.c.b16 %v5715, %v5714
        %5732 = vmatpush.bf16.msra.mxu0 %v5723
        %5733 = vmatpush.bf16.msra.mxu0 %v5722
        %5734 = vmatpush.bf16.msra.mxu0 %v5721
        %5735 = vmatpush.bf16.msra.mxu0 %v5720
        %5736 = vmatpush.bf16.msra.mxu0 %v5719
        %5737 = vmatpush.bf16.msra.mxu0 %v5718
        %5738 = vmatpush.bf16.msra.mxu0 %v5717
        %5739 = vmatpush.bf16.msra.mxu0 %v5716
        %5740 = vmatmul.bf16.gmra.mxu0 %v5675
        %v5741 = vpop.f32.mrf.mxu0
        %v5742 = vadd.f32 %v5683, %v5741
        %v5743 = vpop.f32.mrf.mxu0
        %v5744 = vadd.f32 %v5683, %v5743
        %5745 = vmatmul.bf16.gmra.mxu0 %v5676
        %v5746 = vpop.f32.mrf.mxu0
        %v5747 = vadd.f32 %v5683, %v5746
        %v5748 = vpop.f32.mrf.mxu0
        %v5749 = vadd.f32 %v5683, %v5748
        %5750 = vmatmul.bf16.gmra.mxu0 %v5677
        %v5751 = vpop.f32.mrf.mxu0
        %v5752 = vadd.f32 %v5683, %v5751
        %v5753 = vpop.f32.mrf.mxu0
        %v5754 = vadd.f32 %v5683, %v5753
        %5755 = vmatmul.bf16.gmra.mxu0 %v5678
        %v5756 = vpop.f32.mrf.mxu0
        %v5757 = vadd.f32 %v5683, %v5756
        %v5758 = vpop.f32.mrf.mxu0
        %v5759 = vadd.f32 %v5683, %v5758
        %5760 = vmatmul.bf16.gmra.mxu0 %v5679
        %v5761 = vpop.f32.mrf.mxu0
        %v5762 = vadd.f32 %v5683, %v5761
        %v5763 = vpop.f32.mrf.mxu0
        %v5764 = vadd.f32 %v5683, %v5763
        %5765 = vmatmul.bf16.gmra.mxu0 %v5680
        %v5766 = vpop.f32.mrf.mxu0
        %v5767 = vadd.f32 %v5683, %v5766
        %v5768 = vpop.f32.mrf.mxu0
        %v5769 = vadd.f32 %v5683, %v5768
        %5770 = vmatmul.bf16.gmra.mxu0 %v5681
        %v5771 = vpop.f32.mrf.mxu0
        %v5772 = vadd.f32 %v5683, %v5771
        %v5773 = vpop.f32.mrf.mxu0
        %v5774 = vadd.f32 %v5683, %v5773
        %5775 = vmatmul.bf16.gmra.mxu0 %v5682
        %v5776 = vpop.f32.mrf.mxu0
        %v5777 = vadd.f32 %v5683, %v5776
        %v5778 = vpop.f32.mrf.mxu0
        %v5779 = vadd.f32 %v5683, %v5778
        %5780 = vdwg.mxu0
        %v5781 = vadd.f32 %v5742, %v5659
        %v5782 = vadd.f32 %v5744, %v5660
        %v5783 = vadd.f32 %v5747, %v5661
        %v5784 = vadd.f32 %v5749, %v5662
        %v5785 = vadd.f32 %v5752, %v5663
        %v5786 = vadd.f32 %v5754, %v5664
        %v5787 = vadd.f32 %v5757, %v5665
        %v5788 = vadd.f32 %v5759, %v5666
        %v5789 = vadd.f32 %v5762, %v5667
        %v5790 = vadd.f32 %v5764, %v5668
        %v5791 = vadd.f32 %v5767, %v5669
        %v5792 = vadd.f32 %v5769, %v5670
        %v5793 = vadd.f32 %v5772, %v5671
        %v5794 = vadd.f32 %v5774, %v5672
        %v5795 = vadd.f32 %v5777, %v5673
        %v5796 = vadd.f32 %v5779, %v5674
        %v5797 = vsub.f32 0.0, %v5781
        %v5798 = vsub.f32 0.0, %v5782
        %v5799 = vsub.f32 0.0, %v5783
        %v5800 = vsub.f32 0.0, %v5784
        %v5801 = vsub.f32 0.0, %v5785
        %v5802 = vsub.f32 0.0, %v5786
        %v5803 = vsub.f32 0.0, %v5787
        %v5804 = vsub.f32 0.0, %v5788
        %v5805 = vsub.f32 0.0, %v5789
        %v5806 = vsub.f32 0.0, %v5790
        %v5807 = vsub.f32 0.0, %v5791
        %v5808 = vsub.f32 0.0, %v5792
        %v5809 = vsub.f32 0.0, %v5793
        %v5810 = vsub.f32 0.0, %v5794
        %v5811 = vsub.f32 0.0, %v5795
        %v5812 = vsub.f32 0.0, %v5796
        %v5813 = vmul.f32 %v5797, 1.442695
        %v5814 = vpow.pop %v5813
        %v5815 = vmul.f32 %v5798, 1.442695
        %v5816 = vpow.pop %v5815
        %v5817 = vmul.f32 %v5799, 1.442695
        %v5818 = vpow.pop %v5817
        %v5819 = vmul.f32 %v5800, 1.442695
        %v5820 = vpow.pop %v5819
        %v5821 = vmul.f32 %v5801, 1.442695
        %v5822 = vpow.pop %v5821
        %v5823 = vmul.f32 %v5802, 1.442695
        %v5824 = vpow.pop %v5823
        %v5825 = vmul.f32 %v5803, 1.442695
        %v5826 = vpow.pop %v5825
        %v5827 = vmul.f32 %v5804, 1.442695
        %v5828 = vpow.pop %v5827
        %v5829 = vmul.f32 %v5805, 1.442695
        %v5830 = vpow.pop %v5829
        %v5831 = vmul.f32 %v5806, 1.442695
        %v5832 = vpow.pop %v5831
        %v5833 = vmul.f32 %v5807, 1.442695
        %v5834 = vpow.pop %v5833
        %v5835 = vmul.f32 %v5808, 1.442695
        %v5836 = vpow.pop %v5835
        %v5837 = vmul.f32 %v5809, 1.442695
        %v5838 = vpow.pop %v5837
        %v5839 = vmul.f32 %v5810, 1.442695
        %v5840 = vpow.pop %v5839
        %v5841 = vmul.f32 %v5811, 1.442695
        %v5842 = vpow.pop %v5841
        %v5843 = vmul.f32 %v5812, 1.442695
        %v5844 = vpow.pop %v5843
        %v5845 = vadd.f32 %v5814, 1.0
        %v5846 = vadd.f32 %v5816, 1.0
        %v5847 = vadd.f32 %v5818, 1.0
        %v5848 = vadd.f32 %v5820, 1.0
        %v5849 = vadd.f32 %v5822, 1.0
        %v5850 = vadd.f32 %v5824, 1.0
        %v5851 = vadd.f32 %v5826, 1.0
        %v5852 = vadd.f32 %v5828, 1.0
        %v5853 = vadd.f32 %v5830, 1.0
        %v5854 = vadd.f32 %v5832, 1.0
        %v5855 = vadd.f32 %v5834, 1.0
        %v5856 = vadd.f32 %v5836, 1.0
        %v5857 = vadd.f32 %v5838, 1.0
        %v5858 = vadd.f32 %v5840, 1.0
        %v5859 = vadd.f32 %v5842, 1.0
        %v5860 = vadd.f32 %v5844, 1.0
        %v5861 = vrcp.pop %v5845
        %v5862 = vrcp.pop %v5846
        %v5863 = vrcp.pop %v5847
        %v5864 = vrcp.pop %v5848
        %v5865 = vrcp.pop %v5849
        %v5866 = vrcp.pop %v5850
        %v5867 = vrcp.pop %v5851
        %v5868 = vrcp.pop %v5852
        %v5869 = vrcp.pop %v5853
        %v5870 = vrcp.pop %v5854
        %v5871 = vrcp.pop %v5855
        %v5872 = vrcp.pop %v5856
        %v5873 = vrcp.pop %v5857
        %v5874 = vrcp.pop %v5858
        %v5875 = vrcp.pop %v5859
        %v5876 = vrcp.pop %v5860
        %v5877 = vmul.f32 %v5781, %v5861
        %v5878 = vmul.f32 %v5782, %v5862
        %v5879 = vmul.f32 %v5783, %v5863
        %v5880 = vmul.f32 %v5784, %v5864
        %v5881 = vmul.f32 %v5785, %v5865
        %v5882 = vmul.f32 %v5786, %v5866
        %v5883 = vmul.f32 %v5787, %v5867
        %v5884 = vmul.f32 %v5788, %v5868
        %v5885 = vmul.f32 %v5789, %v5869
        %v5886 = vmul.f32 %v5790, %v5870
        %v5887 = vmul.f32 %v5791, %v5871
        %v5888 = vmul.f32 %v5792, %v5872
        %v5889 = vmul.f32 %v5793, %v5873
        %v5890 = vmul.f32 %v5794, %v5874
        %v5891 = vmul.f32 %v5795, %v5875
        %v5892 = vmul.f32 %v5796, %v5876
        %5893 = vadd.xlane.f32.xlu0 %v5877
        %v5894 = vpop.xlane.xlu0 %5893
        %5895 = vadd.xlane.f32.xlu0 %v5878
        %v5896 = vpop.xlane.xlu0 %5895
        %5897 = vadd.xlane.f32.xlu0 %v5879
        %v5898 = vpop.xlane.xlu0 %5897
        %5899 = vadd.xlane.f32.xlu0 %v5880
        %v5900 = vpop.xlane.xlu0 %5899
        %5901 = vadd.xlane.f32.xlu0 %v5881
        %v5902 = vpop.xlane.xlu0 %5901
        %5903 = vadd.xlane.f32.xlu0 %v5882
        %v5904 = vpop.xlane.xlu0 %5903
        %5905 = vadd.xlane.f32.xlu0 %v5883
        %v5906 = vpop.xlane.xlu0 %5905
        %5907 = vadd.xlane.f32.xlu0 %v5884
        %v5908 = vpop.xlane.xlu0 %5907
        %5909 = vadd.xlane.f32.xlu0 %v5885
        %v5910 = vpop.xlane.xlu0 %5909
        %5911 = vadd.xlane.f32.xlu0 %v5886
        %v5912 = vpop.xlane.xlu0 %5911
        %5913 = vadd.xlane.f32.xlu0 %v5887
        %v5914 = vpop.xlane.xlu0 %5913
        %5915 = vadd.xlane.f32.xlu0 %v5888
        %v5916 = vpop.xlane.xlu0 %5915
        %5917 = vadd.xlane.f32.xlu0 %v5889
        %v5918 = vpop.xlane.xlu0 %5917
        %5919 = vadd.xlane.f32.xlu0 %v5890
        %v5920 = vpop.xlane.xlu0 %5919
        %5921 = vadd.xlane.f32.xlu0 %v5891
        %v5922 = vpop.xlane.xlu0 %5921
        %5923 = vadd.xlane.f32.xlu0 %v5892
        %v5924 = vpop.xlane.xlu0 %5923
        %v5925 = vmul.f32 %v5894, %v1770
        %v5926 = vmul.f32 %v5896, %v1770
        %v5927 = vmul.f32 %v5898, %v1770
        %v5928 = vmul.f32 %v5900, %v1770
        %v5929 = vmul.f32 %v5902, %v1770
        %v5930 = vmul.f32 %v5904, %v1770
        %v5931 = vmul.f32 %v5906, %v1770
        %v5932 = vmul.f32 %v5908, %v1770
        %v5933 = vmul.f32 %v5910, %v1770
        %v5934 = vmul.f32 %v5912, %v1770
        %v5935 = vmul.f32 %v5914, %v1770
        %v5936 = vmul.f32 %v5916, %v1770
        %v5937 = vmul.f32 %v5918, %v1770
        %v5938 = vmul.f32 %v5920, %v1770
        %v5939 = vmul.f32 %v5922, %v1770
        %v5940 = vmul.f32 %v5924, %v1770
        %v5941 = vsub.f32 %v5877, %v5925
        %v5942 = vsub.f32 %v5878, %v5926
        %v5943 = vsub.f32 %v5879, %v5927
        %v5944 = vsub.f32 %v5880, %v5928
        %v5945 = vsub.f32 %v5881, %v5929
        %v5946 = vsub.f32 %v5882, %v5930
        %v5947 = vsub.f32 %v5883, %v5931
        %v5948 = vsub.f32 %v5884, %v5932
        %v5949 = vsub.f32 %v5885, %v5933
        %v5950 = vsub.f32 %v5886, %v5934
        %v5951 = vsub.f32 %v5887, %v5935
        %v5952 = vsub.f32 %v5888, %v5936
        %v5953 = vsub.f32 %v5889, %v5937
        %v5954 = vsub.f32 %v5890, %v5938
        %v5955 = vsub.f32 %v5891, %v5939
        %v5956 = vsub.f32 %v5892, %v5940
        %v5957 = vmul.f32 %v5941, %v5941
        %v5958 = vmul.f32 %v5942, %v5942
        %v5959 = vmul.f32 %v5943, %v5943
        %v5960 = vmul.f32 %v5944, %v5944
        %v5961 = vmul.f32 %v5945, %v5945
        %v5962 = vmul.f32 %v5946, %v5946
        %v5963 = vmul.f32 %v5947, %v5947
        %v5964 = vmul.f32 %v5948, %v5948
        %v5965 = vmul.f32 %v5949, %v5949
        %v5966 = vmul.f32 %v5950, %v5950
        %v5967 = vmul.f32 %v5951, %v5951
        %v5968 = vmul.f32 %v5952, %v5952
        %v5969 = vmul.f32 %v5953, %v5953
        %v5970 = vmul.f32 %v5954, %v5954
        %v5971 = vmul.f32 %v5955, %v5955
        %v5972 = vmul.f32 %v5956, %v5956
        %5973 = vadd.xlane.f32.xlu0 %v5957
        %v5974 = vpop.xlane.xlu0 %5973
        %5975 = vadd.xlane.f32.xlu0 %v5958
        %v5976 = vpop.xlane.xlu0 %5975
        %5977 = vadd.xlane.f32.xlu0 %v5959
        %v5978 = vpop.xlane.xlu0 %5977
        %5979 = vadd.xlane.f32.xlu0 %v5960
        %v5980 = vpop.xlane.xlu0 %5979
        %5981 = vadd.xlane.f32.xlu0 %v5961
        %v5982 = vpop.xlane.xlu0 %5981
        %5983 = vadd.xlane.f32.xlu0 %v5962
        %v5984 = vpop.xlane.xlu0 %5983
        %5985 = vadd.xlane.f32.xlu0 %v5963
        %v5986 = vpop.xlane.xlu0 %5985
        %5987 = vadd.xlane.f32.xlu0 %v5964
        %v5988 = vpop.xlane.xlu0 %5987
        %5989 = vadd.xlane.f32.xlu0 %v5965
        %v5990 = vpop.xlane.xlu0 %5989
        %5991 = vadd.xlane.f32.xlu0 %v5966
        %v5992 = vpop.xlane.xlu0 %5991
        %5993 = vadd.xlane.f32.xlu0 %v5967
        %v5994 = vpop.xlane.xlu0 %5993
        %5995 = vadd.xlane.f32.xlu0 %v5968
        %v5996 = vpop.xlane.xlu0 %5995
        %5997 = vadd.xlane.f32.xlu0 %v5969
        %v5998 = vpop.xlane.xlu0 %5997
        %5999 = vadd.xlane.f32.xlu0 %v5970
        %v6000 = vpop.xlane.xlu0 %5999
        %6001 = vadd.xlane.f32.xlu0 %v5971
        %v6002 = vpop.xlane.xlu0 %6001
        %6003 = vadd.xlane.f32.xlu0 %v5972
        %v6004 = vpop.xlane.xlu0 %6003
        %v6005 = vmul.f32 %v5974, %v1770
        %v6006 = vmul.f32 %v5976, %v1770
        %v6007 = vmul.f32 %v5978, %v1770
        %v6008 = vmul.f32 %v5980, %v1770
        %v6009 = vmul.f32 %v5982, %v1770
        %v6010 = vmul.f32 %v5984, %v1770
        %v6011 = vmul.f32 %v5986, %v1770
        %v6012 = vmul.f32 %v5988, %v1770
        %v6013 = vmul.f32 %v5990, %v1770
        %v6014 = vmul.f32 %v5992, %v1770
        %v6015 = vmul.f32 %v5994, %v1770
        %v6016 = vmul.f32 %v5996, %v1770
        %v6017 = vmul.f32 %v5998, %v1770
        %v6018 = vmul.f32 %v6000, %v1770
        %v6019 = vmul.f32 %v6002, %v1770
        %v6020 = vmul.f32 %v6004, %v1770
        %v6021 = vadd.f32 %v6005, 0.1
        %v6022 = vadd.f32 %v6006, 0.1
        %v6023 = vadd.f32 %v6007, 0.1
        %v6024 = vadd.f32 %v6008, 0.1
        %v6025 = vadd.f32 %v6009, 0.1
        %v6026 = vadd.f32 %v6010, 0.1
        %v6027 = vadd.f32 %v6011, 0.1
        %v6028 = vadd.f32 %v6012, 0.1
        %v6029 = vadd.f32 %v6013, 0.1
        %v6030 = vadd.f32 %v6014, 0.1
        %v6031 = vadd.f32 %v6015, 0.1
        %v6032 = vadd.f32 %v6016, 0.1
        %v6033 = vadd.f32 %v6017, 0.1
        %v6034 = vadd.f32 %v6018, 0.1
        %v6035 = vadd.f32 %v6019, 0.1
        %v6036 = vadd.f32 %v6020, 0.1
        %v6037 = vrsqrt.pop %v6021
        %v6038 = vmul.f32 %v6037, %v6021
        %v6039 = vmul.f32 %v6038, %v6037
        %v6040 = vmul.f32 0.5, %v6039
        %v6041 = vsub.f32 1.5, %v6040
        %v6042 = vmul.f32 %v6037, %v6041
        %vm6043 = vweird.f32 %v6021
        %vm6044 = vweird.f32 %v6037
        %vm6045 = vmor %vm6043, %vm6044
        %v6046 = vsel %vm6045, %v6037, %v6042
        %v6047 = vrsqrt.pop %v6022
        %v6048 = vmul.f32 %v6047, %v6022
        %v6049 = vmul.f32 %v6048, %v6047
        %v6050 = vmul.f32 0.5, %v6049
        %v6051 = vsub.f32 1.5, %v6050
        %v6052 = vmul.f32 %v6047, %v6051
        %vm6053 = vweird.f32 %v6022
        %vm6054 = vweird.f32 %v6047
        %vm6055 = vmor %vm6053, %vm6054
        %v6056 = vsel %vm6055, %v6047, %v6052
        %v6057 = vrsqrt.pop %v6023
        %v6058 = vmul.f32 %v6057, %v6023
        %v6059 = vmul.f32 %v6058, %v6057
        %v6060 = vmul.f32 0.5, %v6059
        %v6061 = vsub.f32 1.5, %v6060
        %v6062 = vmul.f32 %v6057, %v6061
        %vm6063 = vweird.f32 %v6023
        %vm6064 = vweird.f32 %v6057
        %vm6065 = vmor %vm6063, %vm6064
        %v6066 = vsel %vm6065, %v6057, %v6062
        %v6067 = vrsqrt.pop %v6024
        %v6068 = vmul.f32 %v6067, %v6024
        %v6069 = vmul.f32 %v6068, %v6067
        %v6070 = vmul.f32 0.5, %v6069
        %v6071 = vsub.f32 1.5, %v6070
        %v6072 = vmul.f32 %v6067, %v6071
        %vm6073 = vweird.f32 %v6024
        %vm6074 = vweird.f32 %v6067
        %vm6075 = vmor %vm6073, %vm6074
        %v6076 = vsel %vm6075, %v6067, %v6072
        %v6077 = vrsqrt.pop %v6025
        %v6078 = vmul.f32 %v6077, %v6025
        %v6079 = vmul.f32 %v6078, %v6077
        %v6080 = vmul.f32 0.5, %v6079
        %v6081 = vsub.f32 1.5, %v6080
        %v6082 = vmul.f32 %v6077, %v6081
        %vm6083 = vweird.f32 %v6025
        %vm6084 = vweird.f32 %v6077
        %vm6085 = vmor %vm6083, %vm6084
        %v6086 = vsel %vm6085, %v6077, %v6082
        %v6087 = vrsqrt.pop %v6026
        %v6088 = vmul.f32 %v6087, %v6026
        %v6089 = vmul.f32 %v6088, %v6087
        %v6090 = vmul.f32 0.5, %v6089
        %v6091 = vsub.f32 1.5, %v6090
        %v6092 = vmul.f32 %v6087, %v6091
        %vm6093 = vweird.f32 %v6026
        %vm6094 = vweird.f32 %v6087
        %vm6095 = vmor %vm6093, %vm6094
        %v6096 = vsel %vm6095, %v6087, %v6092
        %v6097 = vrsqrt.pop %v6027
        %v6098 = vmul.f32 %v6097, %v6027
        %v6099 = vmul.f32 %v6098, %v6097
        %v6100 = vmul.f32 0.5, %v6099
        %v6101 = vsub.f32 1.5, %v6100
        %v6102 = vmul.f32 %v6097, %v6101
        %vm6103 = vweird.f32 %v6027
        %vm6104 = vweird.f32 %v6097
        %vm6105 = vmor %vm6103, %vm6104
        %v6106 = vsel %vm6105, %v6097, %v6102
        %v6107 = vrsqrt.pop %v6028
        %v6108 = vmul.f32 %v6107, %v6028
        %v6109 = vmul.f32 %v6108, %v6107
        %v6110 = vmul.f32 0.5, %v6109
        %v6111 = vsub.f32 1.5, %v6110
        %v6112 = vmul.f32 %v6107, %v6111
        %vm6113 = vweird.f32 %v6028
        %vm6114 = vweird.f32 %v6107
        %vm6115 = vmor %vm6113, %vm6114
        %v6116 = vsel %vm6115, %v6107, %v6112
        %v6117 = vrsqrt.pop %v6029
        %v6118 = vmul.f32 %v6117, %v6029
        %v6119 = vmul.f32 %v6118, %v6117
        %v6120 = vmul.f32 0.5, %v6119
        %v6121 = vsub.f32 1.5, %v6120
        %v6122 = vmul.f32 %v6117, %v6121
        %vm6123 = vweird.f32 %v6029
        %vm6124 = vweird.f32 %v6117
        %vm6125 = vmor %vm6123, %vm6124
        %v6126 = vsel %vm6125, %v6117, %v6122
        %v6127 = vrsqrt.pop %v6030
        %v6128 = vmul.f32 %v6127, %v6030
        %v6129 = vmul.f32 %v6128, %v6127
        %v6130 = vmul.f32 0.5, %v6129
        %v6131 = vsub.f32 1.5, %v6130
        %v6132 = vmul.f32 %v6127, %v6131
        %vm6133 = vweird.f32 %v6030
        %vm6134 = vweird.f32 %v6127
        %vm6135 = vmor %vm6133, %vm6134
        %v6136 = vsel %vm6135, %v6127, %v6132
        %v6137 = vrsqrt.pop %v6031
        %v6138 = vmul.f32 %v6137, %v6031
        %v6139 = vmul.f32 %v6138, %v6137
        %v6140 = vmul.f32 0.5, %v6139
        %v6141 = vsub.f32 1.5, %v6140
        %v6142 = vmul.f32 %v6137, %v6141
        %vm6143 = vweird.f32 %v6031
        %vm6144 = vweird.f32 %v6137
        %vm6145 = vmor %vm6143, %vm6144
        %v6146 = vsel %vm6145, %v6137, %v6142
        %v6147 = vrsqrt.pop %v6032
        %v6148 = vmul.f32 %v6147, %v6032
        %v6149 = vmul.f32 %v6148, %v6147
        %v6150 = vmul.f32 0.5, %v6149
        %v6151 = vsub.f32 1.5, %v6150
        %v6152 = vmul.f32 %v6147, %v6151
        %vm6153 = vweird.f32 %v6032
        %vm6154 = vweird.f32 %v6147
        %vm6155 = vmor %vm6153, %vm6154
        %v6156 = vsel %vm6155, %v6147, %v6152
        %v6157 = vrsqrt.pop %v6033
        %v6158 = vmul.f32 %v6157, %v6033
        %v6159 = vmul.f32 %v6158, %v6157
        %v6160 = vmul.f32 0.5, %v6159
        %v6161 = vsub.f32 1.5, %v6160
        %v6162 = vmul.f32 %v6157, %v6161
        %vm6163 = vweird.f32 %v6033
        %vm6164 = vweird.f32 %v6157
        %vm6165 = vmor %vm6163, %vm6164
        %v6166 = vsel %vm6165, %v6157, %v6162
        %v6167 = vrsqrt.pop %v6034
        %v6168 = vmul.f32 %v6167, %v6034
        %v6169 = vmul.f32 %v6168, %v6167
        %v6170 = vmul.f32 0.5, %v6169
        %v6171 = vsub.f32 1.5, %v6170
        %v6172 = vmul.f32 %v6167, %v6171
        %vm6173 = vweird.f32 %v6034
        %vm6174 = vweird.f32 %v6167
        %vm6175 = vmor %vm6173, %vm6174
        %v6176 = vsel %vm6175, %v6167, %v6172
        %v6177 = vrsqrt.pop %v6035
        %v6178 = vmul.f32 %v6177, %v6035
        %v6179 = vmul.f32 %v6178, %v6177
        %v6180 = vmul.f32 0.5, %v6179
        %v6181 = vsub.f32 1.5, %v6180
        %v6182 = vmul.f32 %v6177, %v6181
        %vm6183 = vweird.f32 %v6035
        %vm6184 = vweird.f32 %v6177
        %vm6185 = vmor %vm6183, %vm6184
        %v6186 = vsel %vm6185, %v6177, %v6182
        %v6187 = vrsqrt.pop %v6036
        %v6188 = vmul.f32 %v6187, %v6036
        %v6189 = vmul.f32 %v6188, %v6187
        %v6190 = vmul.f32 0.5, %v6189
        %v6191 = vsub.f32 1.5, %v6190
        %v6192 = vmul.f32 %v6187, %v6191
        %vm6193 = vweird.f32 %v6036
        %vm6194 = vweird.f32 %v6187
        %vm6195 = vmor %vm6193, %vm6194
        %v6196 = vsel %vm6195, %v6187, %v6192
        %v6197 = vmul.f32 %v5941, %v6046
        %v6198 = vmul.f32 %v5942, %v6056
        %v6199 = vmul.f32 %v5943, %v6066
        %v6200 = vmul.f32 %v5944, %v6076
        %v6201 = vmul.f32 %v5945, %v6086
        %v6202 = vmul.f32 %v5946, %v6096
        %v6203 = vmul.f32 %v5947, %v6106
        %v6204 = vmul.f32 %v5948, %v6116
        %v6205 = vmul.f32 %v5949, %v6126
        %v6206 = vmul.f32 %v5950, %v6136
        %v6207 = vmul.f32 %v5951, %v6146
        %v6208 = vmul.f32 %v5952, %v6156
        %v6209 = vmul.f32 %v5953, %v6166
        %v6210 = vmul.f32 %v5954, %v6176
        %v6211 = vmul.f32 %v5955, %v6186
        %v6212 = vmul.f32 %v5956, %v6196
        %v6213 = vperm.slane %v907, 7
        %v6214 = vmul.f32 %v6197, %v6213
        %v6215 = vmul.f32 %v6198, %v6213
        %v6216 = vmul.f32 %v6199, %v6213
        %v6217 = vmul.f32 %v6200, %v6213
        %v6218 = vmul.f32 %v6201, %v6213
        %v6219 = vmul.f32 %v6202, %v6213
        %v6220 = vmul.f32 %v6203, %v6213
        %v6221 = vmul.f32 %v6204, %v6213
        %v6222 = vmul.f32 %v6205, %v6213
        %v6223 = vmul.f32 %v6206, %v6213
        %v6224 = vmul.f32 %v6207, %v6213
        %v6225 = vmul.f32 %v6208, %v6213
        %v6226 = vmul.f32 %v6209, %v6213
        %v6227 = vmul.f32 %v6210, %v6213
        %v6228 = vmul.f32 %v6211, %v6213
        %v6229 = vmul.f32 %v6212, %v6213
        %v6230 = vperm.slane %v908, 0
        %v6231 = vadd.f32 %v6214, %v6230
        %v6232 = vadd.f32 %v6215, %v6230
        %v6233 = vadd.f32 %v6216, %v6230
        %v6234 = vadd.f32 %v6217, %v6230
        %v6235 = vadd.f32 %v6218, %v6230
        %v6236 = vadd.f32 %v6219, %v6230
        %v6237 = vadd.f32 %v6220, %v6230
        %v6238 = vadd.f32 %v6221, %v6230
        %v6239 = vadd.f32 %v6222, %v6230
        %v6240 = vadd.f32 %v6223, %v6230
        %v6241 = vadd.f32 %v6224, %v6230
        %v6242 = vadd.f32 %v6225, %v6230
        %v6243 = vadd.f32 %v6226, %v6230
        %v6244 = vadd.f32 %v6227, %v6230
        %v6245 = vadd.f32 %v6228, %v6230
        %v6246 = vadd.f32 %v6229, %v6230
        %v6247 = vadd.f32 %v5659, %v6231
        %v6248 = vadd.f32 %v5660, %v6232
        %v6249 = vadd.f32 %v5661, %v6233
        %v6250 = vadd.f32 %v5662, %v6234
        %v6251 = vadd.f32 %v5663, %v6235
        %v6252 = vadd.f32 %v5664, %v6236
        %v6253 = vadd.f32 %v5665, %v6237
        %v6254 = vadd.f32 %v5666, %v6238
        %v6255 = vadd.f32 %v5667, %v6239
        %v6256 = vadd.f32 %v5668, %v6240
        %v6257 = vadd.f32 %v5669, %v6241
        %v6258 = vadd.f32 %v5670, %v6242
        %v6259 = vadd.f32 %v5671, %v6243
        %v6260 = vadd.f32 %v5672, %v6244
        %v6261 = vadd.f32 %v5673, %v6245
        %v6262 = vadd.f32 %v5674, %v6246
        %v6263 = vpack.c.bf16 %v6232, %v6231
        %v6264 = vpack.c.bf16 %v6234, %v6233
        %v6265 = vpack.c.bf16 %v6236, %v6235
        %v6266 = vpack.c.bf16 %v6238, %v6237
        %v6267 = vpack.c.bf16 %v6240, %v6239
        %v6268 = vpack.c.bf16 %v6242, %v6241
        %v6269 = vpack.c.bf16 %v6244, %v6243
        %v6270 = vpack.c.bf16 %v6246, %v6245
        %v6271 = vperm.slane %v908, 1
        %v6288 = vunpack.c.l.b16 %v859
        %v6289 = vunpack.c.l.b16 %v860
        %v6290 = vunpack.c.l.b16 %v861
        %v6291 = vunpack.c.l.b16 %v862
        %v6292 = vunpack.c.l.b16 %v863
        %v6293 = vunpack.c.l.b16 %v864
        %v6294 = vunpack.c.l.b16 %v865
        %v6295 = vunpack.c.l.b16 %v866
        %v6296 = vunpack.c.l.b16 %v867
        %v6297 = vunpack.c.l.b16 %v868
        %v6298 = vunpack.c.l.b16 %v869
        %v6299 = vunpack.c.l.b16 %v870
        %v6300 = vunpack.c.l.b16 %v871
        %v6301 = vunpack.c.l.b16 %v872
        %v6302 = vunpack.c.l.b16 %v873
        %v6303 = vunpack.c.l.b16 %v874
        %v6304 = vpack.c.b16 %v6289, %v6288
        %v6305 = vpack.c.b16 %v6291, %v6290
        %v6306 = vpack.c.b16 %v6293, %v6292
        %v6307 = vpack.c.b16 %v6295, %v6294
        %v6308 = vpack.c.b16 %v6297, %v6296
        %v6309 = vpack.c.b16 %v6299, %v6298
        %v6310 = vpack.c.b16 %v6301, %v6300
        %v6311 = vpack.c.b16 %v6303, %v6302
        %6320 = vmatpush.bf16.msra.mxu0 %v6311
        %6321 = vmatpush.bf16.msra.mxu0 %v6310
        %6322 = vmatpush.bf16.msra.mxu0 %v6309
        %6323 = vmatpush.bf16.msra.mxu0 %v6308
        %6324 = vmatpush.bf16.msra.mxu0 %v6307
        %6325 = vmatpush.bf16.msra.mxu0 %v6306
        %6326 = vmatpush.bf16.msra.mxu0 %v6305
        %6327 = vmatpush.bf16.msra.mxu0 %v6304
        %6328 = vmatmul.bf16.gmra.mxu0 %v6263
        %v6329 = vpop.f32.mrf.mxu0
        %v6330 = vadd.f32 %v6271, %v6329
        %v6331 = vpop.f32.mrf.mxu0
        %v6332 = vadd.f32 %v6271, %v6331
        %6333 = vmatmul.bf16.gmra.mxu0 %v6264
        %v6334 = vpop.f32.mrf.mxu0
        %v6335 = vadd.f32 %v6271, %v6334
        %v6336 = vpop.f32.mrf.mxu0
        %v6337 = vadd.f32 %v6271, %v6336
        %6338 = vmatmul.bf16.gmra.mxu0 %v6265
        %v6339 = vpop.f32.mrf.mxu0
        %v6340 = vadd.f32 %v6271, %v6339
        %v6341 = vpop.f32.mrf.mxu0
        %v6342 = vadd.f32 %v6271, %v6341
        %6343 = vmatmul.bf16.gmra.mxu0 %v6266
        %v6344 = vpop.f32.mrf.mxu0
        %v6345 = vadd.f32 %v6271, %v6344
        %v6346 = vpop.f32.mrf.mxu0
        %v6347 = vadd.f32 %v6271, %v6346
        %6348 = vmatmul.bf16.gmra.mxu0 %v6267
        %v6349 = vpop.f32.mrf.mxu0
        %v6350 = vadd.f32 %v6271, %v6349
        %v6351 = vpop.f32.mrf.mxu0
        %v6352 = vadd.f32 %v6271, %v6351
        %6353 = vmatmul.bf16.gmra.mxu0 %v6268
        %v6354 = vpop.f32.mrf.mxu0
        %v6355 = vadd.f32 %v6271, %v6354
        %v6356 = vpop.f32.mrf.mxu0
        %v6357 = vadd.f32 %v6271, %v6356
        %6358 = vmatmul.bf16.gmra.mxu0 %v6269
        %v6359 = vpop.f32.mrf.mxu0
        %v6360 = vadd.f32 %v6271, %v6359
        %v6361 = vpop.f32.mrf.mxu0
        %v6362 = vadd.f32 %v6271, %v6361
        %6363 = vmatmul.bf16.gmra.mxu0 %v6270
        %v6364 = vpop.f32.mrf.mxu0
        %v6365 = vadd.f32 %v6271, %v6364
        %v6366 = vpop.f32.mrf.mxu0
        %v6367 = vadd.f32 %v6271, %v6366
        %6368 = vdwg.mxu0
        %v6369 = vadd.f32 %v6330, %v6247
        %v6370 = vadd.f32 %v6332, %v6248
        %v6371 = vadd.f32 %v6335, %v6249
        %v6372 = vadd.f32 %v6337, %v6250
        %v6373 = vadd.f32 %v6340, %v6251
        %v6374 = vadd.f32 %v6342, %v6252
        %v6375 = vadd.f32 %v6345, %v6253
        %v6376 = vadd.f32 %v6347, %v6254
        %v6377 = vadd.f32 %v6350, %v6255
        %v6378 = vadd.f32 %v6352, %v6256
        %v6379 = vadd.f32 %v6355, %v6257
        %v6380 = vadd.f32 %v6357, %v6258
        %v6381 = vadd.f32 %v6360, %v6259
        %v6382 = vadd.f32 %v6362, %v6260
        %v6383 = vadd.f32 %v6365, %v6261
        %v6384 = vadd.f32 %v6367, %v6262
        %v6385 = vsub.f32 0.0, %v6369
        %v6386 = vsub.f32 0.0, %v6370
        %v6387 = vsub.f32 0.0, %v6371
        %v6388 = vsub.f32 0.0, %v6372
        %v6389 = vsub.f32 0.0, %v6373
        %v6390 = vsub.f32 0.0, %v6374
        %v6391 = vsub.f32 0.0, %v6375
        %v6392 = vsub.f32 0.0, %v6376
        %v6393 = vsub.f32 0.0, %v6377
        %v6394 = vsub.f32 0.0, %v6378
        %v6395 = vsub.f32 0.0, %v6379
        %v6396 = vsub.f32 0.0, %v6380
        %v6397 = vsub.f32 0.0, %v6381
        %v6398 = vsub.f32 0.0, %v6382
        %v6399 = vsub.f32 0.0, %v6383
        %v6400 = vsub.f32 0.0, %v6384
        %v6401 = vmul.f32 %v6385, 1.442695
        %v6402 = vpow.pop %v6401
        %v6403 = vmul.f32 %v6386, 1.442695
        %v6404 = vpow.pop %v6403
        %v6405 = vmul.f32 %v6387, 1.442695
        %v6406 = vpow.pop %v6405
        %v6407 = vmul.f32 %v6388, 1.442695
        %v6408 = vpow.pop %v6407
        %v6409 = vmul.f32 %v6389, 1.442695
        %v6410 = vpow.pop %v6409
        %v6411 = vmul.f32 %v6390, 1.442695
        %v6412 = vpow.pop %v6411
        %v6413 = vmul.f32 %v6391, 1.442695
        %v6414 = vpow.pop %v6413
        %v6415 = vmul.f32 %v6392, 1.442695
        %v6416 = vpow.pop %v6415
        %v6417 = vmul.f32 %v6393, 1.442695
        %v6418 = vpow.pop %v6417
        %v6419 = vmul.f32 %v6394, 1.442695
        %v6420 = vpow.pop %v6419
        %v6421 = vmul.f32 %v6395, 1.442695
        %v6422 = vpow.pop %v6421
        %v6423 = vmul.f32 %v6396, 1.442695
        %v6424 = vpow.pop %v6423
        %v6425 = vmul.f32 %v6397, 1.442695
        %v6426 = vpow.pop %v6425
        %v6427 = vmul.f32 %v6398, 1.442695
        %v6428 = vpow.pop %v6427
        %v6429 = vmul.f32 %v6399, 1.442695
        %v6430 = vpow.pop %v6429
        %v6431 = vmul.f32 %v6400, 1.442695
        %v6432 = vpow.pop %v6431
        %v6433 = vadd.f32 %v6402, 1.0
        %v6434 = vadd.f32 %v6404, 1.0
        %v6435 = vadd.f32 %v6406, 1.0
        %v6436 = vadd.f32 %v6408, 1.0
        %v6437 = vadd.f32 %v6410, 1.0
        %v6438 = vadd.f32 %v6412, 1.0
        %v6439 = vadd.f32 %v6414, 1.0
        %v6440 = vadd.f32 %v6416, 1.0
        %v6441 = vadd.f32 %v6418, 1.0
        %v6442 = vadd.f32 %v6420, 1.0
        %v6443 = vadd.f32 %v6422, 1.0
        %v6444 = vadd.f32 %v6424, 1.0
        %v6445 = vadd.f32 %v6426, 1.0
        %v6446 = vadd.f32 %v6428, 1.0
        %v6447 = vadd.f32 %v6430, 1.0
        %v6448 = vadd.f32 %v6432, 1.0
        %v6449 = vrcp.pop %v6433
        %v6450 = vrcp.pop %v6434
        %v6451 = vrcp.pop %v6435
        %v6452 = vrcp.pop %v6436
        %v6453 = vrcp.pop %v6437
        %v6454 = vrcp.pop %v6438
        %v6455 = vrcp.pop %v6439
        %v6456 = vrcp.pop %v6440
        %v6457 = vrcp.pop %v6441
        %v6458 = vrcp.pop %v6442
        %v6459 = vrcp.pop %v6443
        %v6460 = vrcp.pop %v6444
        %v6461 = vrcp.pop %v6445
        %v6462 = vrcp.pop %v6446
        %v6463 = vrcp.pop %v6447
        %v6464 = vrcp.pop %v6448
        %v6465 = vmul.f32 %v6369, %v6449
        %v6466 = vmul.f32 %v6370, %v6450
        %v6467 = vmul.f32 %v6371, %v6451
        %v6468 = vmul.f32 %v6372, %v6452
        %v6469 = vmul.f32 %v6373, %v6453
        %v6470 = vmul.f32 %v6374, %v6454
        %v6471 = vmul.f32 %v6375, %v6455
        %v6472 = vmul.f32 %v6376, %v6456
        %v6473 = vmul.f32 %v6377, %v6457
        %v6474 = vmul.f32 %v6378, %v6458
        %v6475 = vmul.f32 %v6379, %v6459
        %v6476 = vmul.f32 %v6380, %v6460
        %v6477 = vmul.f32 %v6381, %v6461
        %v6478 = vmul.f32 %v6382, %v6462
        %v6479 = vmul.f32 %v6383, %v6463
        %v6480 = vmul.f32 %v6384, %v6464
        %6481 = vadd.xlane.f32.xlu0 %v6465
        %v6482 = vpop.xlane.xlu0 %6481
        %6483 = vadd.xlane.f32.xlu0 %v6466
        %v6484 = vpop.xlane.xlu0 %6483
        %6485 = vadd.xlane.f32.xlu0 %v6467
        %v6486 = vpop.xlane.xlu0 %6485
        %6487 = vadd.xlane.f32.xlu0 %v6468
        %v6488 = vpop.xlane.xlu0 %6487
        %6489 = vadd.xlane.f32.xlu0 %v6469
        %v6490 = vpop.xlane.xlu0 %6489
        %6491 = vadd.xlane.f32.xlu0 %v6470
        %v6492 = vpop.xlane.xlu0 %6491
        %6493 = vadd.xlane.f32.xlu0 %v6471
        %v6494 = vpop.xlane.xlu0 %6493
        %6495 = vadd.xlane.f32.xlu0 %v6472
        %v6496 = vpop.xlane.xlu0 %6495
        %6497 = vadd.xlane.f32.xlu0 %v6473
        %v6498 = vpop.xlane.xlu0 %6497
        %6499 = vadd.xlane.f32.xlu0 %v6474
        %v6500 = vpop.xlane.xlu0 %6499
        %6501 = vadd.xlane.f32.xlu0 %v6475
        %v6502 = vpop.xlane.xlu0 %6501
        %6503 = vadd.xlane.f32.xlu0 %v6476
        %v6504 = vpop.xlane.xlu0 %6503
        %6505 = vadd.xlane.f32.xlu0 %v6477
        %v6506 = vpop.xlane.xlu0 %6505
        %6507 = vadd.xlane.f32.xlu0 %v6478
        %v6508 = vpop.xlane.xlu0 %6507
        %6509 = vadd.xlane.f32.xlu0 %v6479
        %v6510 = vpop.xlane.xlu0 %6509
        %6511 = vadd.xlane.f32.xlu0 %v6480
        %v6512 = vpop.xlane.xlu0 %6511
        %v6513 = vmul.f32 %v6482, %v1770
        %v6514 = vmul.f32 %v6484, %v1770
        %v6515 = vmul.f32 %v6486, %v1770
        %v6516 = vmul.f32 %v6488, %v1770
        %v6517 = vmul.f32 %v6490, %v1770
        %v6518 = vmul.f32 %v6492, %v1770
        %v6519 = vmul.f32 %v6494, %v1770
        %v6520 = vmul.f32 %v6496, %v1770
        %v6521 = vmul.f32 %v6498, %v1770
        %v6522 = vmul.f32 %v6500, %v1770
        %v6523 = vmul.f32 %v6502, %v1770
        %v6524 = vmul.f32 %v6504, %v1770
        %v6525 = vmul.f32 %v6506, %v1770
        %v6526 = vmul.f32 %v6508, %v1770
        %v6527 = vmul.f32 %v6510, %v1770
        %v6528 = vmul.f32 %v6512, %v1770
        %v6529 = vsub.f32 %v6465, %v6513
        %v6530 = vsub.f32 %v6466, %v6514
        %v6531 = vsub.f32 %v6467, %v6515
        %v6532 = vsub.f32 %v6468, %v6516
        %v6533 = vsub.f32 %v6469, %v6517
        %v6534 = vsub.f32 %v6470, %v6518
        %v6535 = vsub.f32 %v6471, %v6519
        %v6536 = vsub.f32 %v6472, %v6520
        %v6537 = vsub.f32 %v6473, %v6521
        %v6538 = vsub.f32 %v6474, %v6522
        %v6539 = vsub.f32 %v6475, %v6523
        %v6540 = vsub.f32 %v6476, %v6524
        %v6541 = vsub.f32 %v6477, %v6525
        %v6542 = vsub.f32 %v6478, %v6526
        %v6543 = vsub.f32 %v6479, %v6527
        %v6544 = vsub.f32 %v6480, %v6528
        %v6545 = vmul.f32 %v6529, %v6529
        %v6546 = vmul.f32 %v6530, %v6530
        %v6547 = vmul.f32 %v6531, %v6531
        %v6548 = vmul.f32 %v6532, %v6532
        %v6549 = vmul.f32 %v6533, %v6533
        %v6550 = vmul.f32 %v6534, %v6534
        %v6551 = vmul.f32 %v6535, %v6535
        %v6552 = vmul.f32 %v6536, %v6536
        %v6553 = vmul.f32 %v6537, %v6537
        %v6554 = vmul.f32 %v6538, %v6538
        %v6555 = vmul.f32 %v6539, %v6539
        %v6556 = vmul.f32 %v6540, %v6540
        %v6557 = vmul.f32 %v6541, %v6541
        %v6558 = vmul.f32 %v6542, %v6542
        %v6559 = vmul.f32 %v6543, %v6543
        %v6560 = vmul.f32 %v6544, %v6544
        %6561 = vadd.xlane.f32.xlu0 %v6545
        %v6562 = vpop.xlane.xlu0 %6561
        %6563 = vadd.xlane.f32.xlu0 %v6546
        %v6564 = vpop.xlane.xlu0 %6563
        %6565 = vadd.xlane.f32.xlu0 %v6547
        %v6566 = vpop.xlane.xlu0 %6565
        %6567 = vadd.xlane.f32.xlu0 %v6548
        %v6568 = vpop.xlane.xlu0 %6567
        %6569 = vadd.xlane.f32.xlu0 %v6549
        %v6570 = vpop.xlane.xlu0 %6569
        %6571 = vadd.xlane.f32.xlu0 %v6550
        %v6572 = vpop.xlane.xlu0 %6571
        %6573 = vadd.xlane.f32.xlu0 %v6551
        %v6574 = vpop.xlane.xlu0 %6573
        %6575 = vadd.xlane.f32.xlu0 %v6552
        %v6576 = vpop.xlane.xlu0 %6575
        %6577 = vadd.xlane.f32.xlu0 %v6553
        %v6578 = vpop.xlane.xlu0 %6577
        %6579 = vadd.xlane.f32.xlu0 %v6554
        %v6580 = vpop.xlane.xlu0 %6579
        %6581 = vadd.xlane.f32.xlu0 %v6555
        %v6582 = vpop.xlane.xlu0 %6581
        %6583 = vadd.xlane.f32.xlu0 %v6556
        %v6584 = vpop.xlane.xlu0 %6583
        %6585 = vadd.xlane.f32.xlu0 %v6557
        %v6586 = vpop.xlane.xlu0 %6585
        %6587 = vadd.xlane.f32.xlu0 %v6558
        %v6588 = vpop.xlane.xlu0 %6587
        %6589 = vadd.xlane.f32.xlu0 %v6559
        %v6590 = vpop.xlane.xlu0 %6589
        %6591 = vadd.xlane.f32.xlu0 %v6560
        %v6592 = vpop.xlane.xlu0 %6591
        %v6593 = vmul.f32 %v6562, %v1770
        %v6594 = vmul.f32 %v6564, %v1770
        %v6595 = vmul.f32 %v6566, %v1770
        %v6596 = vmul.f32 %v6568, %v1770
        %v6597 = vmul.f32 %v6570, %v1770
        %v6598 = vmul.f32 %v6572, %v1770
        %v6599 = vmul.f32 %v6574, %v1770
        %v6600 = vmul.f32 %v6576, %v1770
        %v6601 = vmul.f32 %v6578, %v1770
        %v6602 = vmul.f32 %v6580, %v1770
        %v6603 = vmul.f32 %v6582, %v1770
        %v6604 = vmul.f32 %v6584, %v1770
        %v6605 = vmul.f32 %v6586, %v1770
        %v6606 = vmul.f32 %v6588, %v1770
        %v6607 = vmul.f32 %v6590, %v1770
        %v6608 = vmul.f32 %v6592, %v1770
        %v6609 = vadd.f32 %v6593, 0.1
        %v6610 = vadd.f32 %v6594, 0.1
        %v6611 = vadd.f32 %v6595, 0.1
        %v6612 = vadd.f32 %v6596, 0.1
        %v6613 = vadd.f32 %v6597, 0.1
        %v6614 = vadd.f32 %v6598, 0.1
        %v6615 = vadd.f32 %v6599, 0.1
        %v6616 = vadd.f32 %v6600, 0.1
        %v6617 = vadd.f32 %v6601, 0.1
        %v6618 = vadd.f32 %v6602, 0.1
        %v6619 = vadd.f32 %v6603, 0.1
        %v6620 = vadd.f32 %v6604, 0.1
        %v6621 = vadd.f32 %v6605, 0.1
        %v6622 = vadd.f32 %v6606, 0.1
        %v6623 = vadd.f32 %v6607, 0.1
        %v6624 = vadd.f32 %v6608, 0.1
        %v6625 = vrsqrt.pop %v6609
        %v6626 = vmul.f32 %v6625, %v6609
        %v6627 = vmul.f32 %v6626, %v6625
        %v6628 = vmul.f32 0.5, %v6627
        %v6629 = vsub.f32 1.5, %v6628
        %v6630 = vmul.f32 %v6625, %v6629
        %vm6631 = vweird.f32 %v6609
        %vm6632 = vweird.f32 %v6625
        %vm6633 = vmor %vm6631, %vm6632
        %v6634 = vsel %vm6633, %v6625, %v6630
        %v6635 = vrsqrt.pop %v6610
        %v6636 = vmul.f32 %v6635, %v6610
        %v6637 = vmul.f32 %v6636, %v6635
        %v6638 = vmul.f32 0.5, %v6637
        %v6639 = vsub.f32 1.5, %v6638
        %v6640 = vmul.f32 %v6635, %v6639
        %vm6641 = vweird.f32 %v6610
        %vm6642 = vweird.f32 %v6635
        %vm6643 = vmor %vm6641, %vm6642
        %v6644 = vsel %vm6643, %v6635, %v6640
        %v6645 = vrsqrt.pop %v6611
        %v6646 = vmul.f32 %v6645, %v6611
        %v6647 = vmul.f32 %v6646, %v6645
        %v6648 = vmul.f32 0.5, %v6647
        %v6649 = vsub.f32 1.5, %v6648
        %v6650 = vmul.f32 %v6645, %v6649
        %vm6651 = vweird.f32 %v6611
        %vm6652 = vweird.f32 %v6645
        %vm6653 = vmor %vm6651, %vm6652
        %v6654 = vsel %vm6653, %v6645, %v6650
        %v6655 = vrsqrt.pop %v6612
        %v6656 = vmul.f32 %v6655, %v6612
        %v6657 = vmul.f32 %v6656, %v6655
        %v6658 = vmul.f32 0.5, %v6657
        %v6659 = vsub.f32 1.5, %v6658
        %v6660 = vmul.f32 %v6655, %v6659
        %vm6661 = vweird.f32 %v6612
        %vm6662 = vweird.f32 %v6655
        %vm6663 = vmor %vm6661, %vm6662
        %v6664 = vsel %vm6663, %v6655, %v6660
        %v6665 = vrsqrt.pop %v6613
        %v6666 = vmul.f32 %v6665, %v6613
        %v6667 = vmul.f32 %v6666, %v6665
        %v6668 = vmul.f32 0.5, %v6667
        %v6669 = vsub.f32 1.5, %v6668
        %v6670 = vmul.f32 %v6665, %v6669
        %vm6671 = vweird.f32 %v6613
        %vm6672 = vweird.f32 %v6665
        %vm6673 = vmor %vm6671, %vm6672
        %v6674 = vsel %vm6673, %v6665, %v6670
        %v6675 = vrsqrt.pop %v6614
        %v6676 = vmul.f32 %v6675, %v6614
        %v6677 = vmul.f32 %v6676, %v6675
        %v6678 = vmul.f32 0.5, %v6677
        %v6679 = vsub.f32 1.5, %v6678
        %v6680 = vmul.f32 %v6675, %v6679
        %vm6681 = vweird.f32 %v6614
        %vm6682 = vweird.f32 %v6675
        %vm6683 = vmor %vm6681, %vm6682
        %v6684 = vsel %vm6683, %v6675, %v6680
        %v6685 = vrsqrt.pop %v6615
        %v6686 = vmul.f32 %v6685, %v6615
        %v6687 = vmul.f32 %v6686, %v6685
        %v6688 = vmul.f32 0.5, %v6687
        %v6689 = vsub.f32 1.5, %v6688
        %v6690 = vmul.f32 %v6685, %v6689
        %vm6691 = vweird.f32 %v6615
        %vm6692 = vweird.f32 %v6685
        %vm6693 = vmor %vm6691, %vm6692
        %v6694 = vsel %vm6693, %v6685, %v6690
        %v6695 = vrsqrt.pop %v6616
        %v6696 = vmul.f32 %v6695, %v6616
        %v6697 = vmul.f32 %v6696, %v6695
        %v6698 = vmul.f32 0.5, %v6697
        %v6699 = vsub.f32 1.5, %v6698
        %v6700 = vmul.f32 %v6695, %v6699
        %vm6701 = vweird.f32 %v6616
        %vm6702 = vweird.f32 %v6695
        %vm6703 = vmor %vm6701, %vm6702
        %v6704 = vsel %vm6703, %v6695, %v6700
        %v6705 = vrsqrt.pop %v6617
        %v6706 = vmul.f32 %v6705, %v6617
        %v6707 = vmul.f32 %v6706, %v6705
        %v6708 = vmul.f32 0.5, %v6707
        %v6709 = vsub.f32 1.5, %v6708
        %v6710 = vmul.f32 %v6705, %v6709
        %vm6711 = vweird.f32 %v6617
        %vm6712 = vweird.f32 %v6705
        %vm6713 = vmor %vm6711, %vm6712
        %v6714 = vsel %vm6713, %v6705, %v6710
        %v6715 = vrsqrt.pop %v6618
        %v6716 = vmul.f32 %v6715, %v6618
        %v6717 = vmul.f32 %v6716, %v6715
        %v6718 = vmul.f32 0.5, %v6717
        %v6719 = vsub.f32 1.5, %v6718
        %v6720 = vmul.f32 %v6715, %v6719
        %vm6721 = vweird.f32 %v6618
        %vm6722 = vweird.f32 %v6715
        %vm6723 = vmor %vm6721, %vm6722
        %v6724 = vsel %vm6723, %v6715, %v6720
        %v6725 = vrsqrt.pop %v6619
        %v6726 = vmul.f32 %v6725, %v6619
        %v6727 = vmul.f32 %v6726, %v6725
        %v6728 = vmul.f32 0.5, %v6727
        %v6729 = vsub.f32 1.5, %v6728
        %v6730 = vmul.f32 %v6725, %v6729
        %vm6731 = vweird.f32 %v6619
        %vm6732 = vweird.f32 %v6725
        %vm6733 = vmor %vm6731, %vm6732
        %v6734 = vsel %vm6733, %v6725, %v6730
        %v6735 = vrsqrt.pop %v6620
        %v6736 = vmul.f32 %v6735, %v6620
        %v6737 = vmul.f32 %v6736, %v6735
        %v6738 = vmul.f32 0.5, %v6737
        %v6739 = vsub.f32 1.5, %v6738
        %v6740 = vmul.f32 %v6735, %v6739
        %vm6741 = vweird.f32 %v6620
        %vm6742 = vweird.f32 %v6735
        %vm6743 = vmor %vm6741, %vm6742
        %v6744 = vsel %vm6743, %v6735, %v6740
        %v6745 = vrsqrt.pop %v6621
        %v6746 = vmul.f32 %v6745, %v6621
        %v6747 = vmul.f32 %v6746, %v6745
        %v6748 = vmul.f32 0.5, %v6747
        %v6749 = vsub.f32 1.5, %v6748
        %v6750 = vmul.f32 %v6745, %v6749
        %vm6751 = vweird.f32 %v6621
        %vm6752 = vweird.f32 %v6745
        %vm6753 = vmor %vm6751, %vm6752
        %v6754 = vsel %vm6753, %v6745, %v6750
        %v6755 = vrsqrt.pop %v6622
        %v6756 = vmul.f32 %v6755, %v6622
        %v6757 = vmul.f32 %v6756, %v6755
        %v6758 = vmul.f32 0.5, %v6757
        %v6759 = vsub.f32 1.5, %v6758
        %v6760 = vmul.f32 %v6755, %v6759
        %vm6761 = vweird.f32 %v6622
        %vm6762 = vweird.f32 %v6755
        %vm6763 = vmor %vm6761, %vm6762
        %v6764 = vsel %vm6763, %v6755, %v6760
        %v6765 = vrsqrt.pop %v6623
        %v6766 = vmul.f32 %v6765, %v6623
        %v6767 = vmul.f32 %v6766, %v6765
        %v6768 = vmul.f32 0.5, %v6767
        %v6769 = vsub.f32 1.5, %v6768
        %v6770 = vmul.f32 %v6765, %v6769
        %vm6771 = vweird.f32 %v6623
        %vm6772 = vweird.f32 %v6765
        %vm6773 = vmor %vm6771, %vm6772
        %v6774 = vsel %vm6773, %v6765, %v6770
        %v6775 = vrsqrt.pop %v6624
        %v6776 = vmul.f32 %v6775, %v6624
        %v6777 = vmul.f32 %v6776, %v6775
        %v6778 = vmul.f32 0.5, %v6777
        %v6779 = vsub.f32 1.5, %v6778
        %v6780 = vmul.f32 %v6775, %v6779
        %vm6781 = vweird.f32 %v6624
        %vm6782 = vweird.f32 %v6775
        %vm6783 = vmor %vm6781, %vm6782
        %v6784 = vsel %vm6783, %v6775, %v6780
        %v6785 = vmul.f32 %v6529, %v6634
        %v6786 = vmul.f32 %v6530, %v6644
        %v6787 = vmul.f32 %v6531, %v6654
        %v6788 = vmul.f32 %v6532, %v6664
        %v6789 = vmul.f32 %v6533, %v6674
        %v6790 = vmul.f32 %v6534, %v6684
        %v6791 = vmul.f32 %v6535, %v6694
        %v6792 = vmul.f32 %v6536, %v6704
        %v6793 = vmul.f32 %v6537, %v6714
        %v6794 = vmul.f32 %v6538, %v6724
        %v6795 = vmul.f32 %v6539, %v6734
        %v6796 = vmul.f32 %v6540, %v6744
        %v6797 = vmul.f32 %v6541, %v6754
        %v6798 = vmul.f32 %v6542, %v6764
        %v6799 = vmul.f32 %v6543, %v6774
        %v6800 = vmul.f32 %v6544, %v6784
        %v6801 = vperm.slane %v908, 2
        %v6802 = vmul.f32 %v6785, %v6801
        %v6803 = vmul.f32 %v6786, %v6801
        %v6804 = vmul.f32 %v6787, %v6801
        %v6805 = vmul.f32 %v6788, %v6801
        %v6806 = vmul.f32 %v6789, %v6801
        %v6807 = vmul.f32 %v6790, %v6801
        %v6808 = vmul.f32 %v6791, %v6801
        %v6809 = vmul.f32 %v6792, %v6801
        %v6810 = vmul.f32 %v6793, %v6801
        %v6811 = vmul.f32 %v6794, %v6801
        %v6812 = vmul.f32 %v6795, %v6801
        %v6813 = vmul.f32 %v6796, %v6801
        %v6814 = vmul.f32 %v6797, %v6801
        %v6815 = vmul.f32 %v6798, %v6801
        %v6816 = vmul.f32 %v6799, %v6801
        %v6817 = vmul.f32 %v6800, %v6801
        %v6818 = vperm.slane %v908, 3
        %v6819 = vadd.f32 %v6802, %v6818
        %v6820 = vadd.f32 %v6803, %v6818
        %v6821 = vadd.f32 %v6804, %v6818
        %v6822 = vadd.f32 %v6805, %v6818
        %v6823 = vadd.f32 %v6806, %v6818
        %v6824 = vadd.f32 %v6807, %v6818
        %v6825 = vadd.f32 %v6808, %v6818
        %v6826 = vadd.f32 %v6809, %v6818
        %v6827 = vadd.f32 %v6810, %v6818
        %v6828 = vadd.f32 %v6811, %v6818
        %v6829 = vadd.f32 %v6812, %v6818
        %v6830 = vadd.f32 %v6813, %v6818
        %v6831 = vadd.f32 %v6814, %v6818
        %v6832 = vadd.f32 %v6815, %v6818
        %v6833 = vadd.f32 %v6816, %v6818
        %v6834 = vadd.f32 %v6817, %v6818
        %v6835 = vadd.f32 %v6247, %v6819
        %v6836 = vadd.f32 %v6248, %v6820
        %v6837 = vadd.f32 %v6249, %v6821
        %v6838 = vadd.f32 %v6250, %v6822
        %v6839 = vadd.f32 %v6251, %v6823
        %v6840 = vadd.f32 %v6252, %v6824
        %v6841 = vadd.f32 %v6253, %v6825
        %v6842 = vadd.f32 %v6254, %v6826
        %v6843 = vadd.f32 %v6255, %v6827
        %v6844 = vadd.f32 %v6256, %v6828
        %v6845 = vadd.f32 %v6257, %v6829
        %v6846 = vadd.f32 %v6258, %v6830
        %v6847 = vadd.f32 %v6259, %v6831
        %v6848 = vadd.f32 %v6260, %v6832
        %v6849 = vadd.f32 %v6261, %v6833
        %v6850 = vadd.f32 %v6262, %v6834
        %v6851 = vpack.c.bf16 %v6820, %v6819
        %v6852 = vpack.c.bf16 %v6822, %v6821
        %v6853 = vpack.c.bf16 %v6824, %v6823
        %v6854 = vpack.c.bf16 %v6826, %v6825
        %v6855 = vpack.c.bf16 %v6828, %v6827
        %v6856 = vpack.c.bf16 %v6830, %v6829
        %v6857 = vpack.c.bf16 %v6832, %v6831
        %v6858 = vpack.c.bf16 %v6834, %v6833
        %v6859 = vperm.slane %v908, 4
        %v6876 = vunpack.c.l.b16 %v875
        %v6877 = vunpack.c.l.b16 %v876
        %v6878 = vunpack.c.l.b16 %v877
        %v6879 = vunpack.c.l.b16 %v878
        %v6880 = vunpack.c.l.b16 %v879
        %v6881 = vunpack.c.l.b16 %v880
        %v6882 = vunpack.c.l.b16 %v881
        %v6883 = vunpack.c.l.b16 %v882
        %v6884 = vunpack.c.l.b16 %v883
        %v6885 = vunpack.c.l.b16 %v884
        %v6886 = vunpack.c.l.b16 %v885
        %v6887 = vunpack.c.l.b16 %v886
        %v6888 = vunpack.c.l.b16 %v887
        %v6889 = vunpack.c.l.b16 %v888
        %v6890 = vunpack.c.l.b16 %v889
        %v6891 = vunpack.c.l.b16 %v890
        %v6892 = vpack.c.b16 %v6877, %v6876
        %v6893 = vpack.c.b16 %v6879, %v6878
        %v6894 = vpack.c.b16 %v6881, %v6880
        %v6895 = vpack.c.b16 %v6883, %v6882
        %v6896 = vpack.c.b16 %v6885, %v6884
        %v6897 = vpack.c.b16 %v6887, %v6886
        %v6898 = vpack.c.b16 %v6889, %v6888
        %v6899 = vpack.c.b16 %v6891, %v6890
        %6908 = vmatpush.bf16.msra.mxu0 %v6899
        %6909 = vmatpush.bf16.msra.mxu0 %v6898
        %6910 = vmatpush.bf16.msra.mxu0 %v6897
        %6911 = vmatpush.bf16.msra.mxu0 %v6896
        %6912 = vmatpush.bf16.msra.mxu0 %v6895
        %6913 = vmatpush.bf16.msra.mxu0 %v6894
        %6914 = vmatpush.bf16.msra.mxu0 %v6893
        %6915 = vmatpush.bf16.msra.mxu0 %v6892
        %6916 = vmatmul.bf16.gmra.mxu0 %v6851
        %v6917 = vpop.f32.mrf.mxu0
        %v6918 = vadd.f32 %v6859, %v6917
        %v6919 = vpop.f32.mrf.mxu0
        %v6920 = vadd.f32 %v6859, %v6919
        %6921 = vmatmul.bf16.gmra.mxu0 %v6852
        %v6922 = vpop.f32.mrf.mxu0
        %v6923 = vadd.f32 %v6859, %v6922
        %v6924 = vpop.f32.mrf.mxu0
        %v6925 = vadd.f32 %v6859, %v6924
        %6926 = vmatmul.bf16.gmra.mxu0 %v6853
        %v6927 = vpop.f32.mrf.mxu0
        %v6928 = vadd.f32 %v6859, %v6927
        %v6929 = vpop.f32.mrf.mxu0
        %v6930 = vadd.f32 %v6859, %v6929
        %6931 = vmatmul.bf16.gmra.mxu0 %v6854
        %v6932 = vpop.f32.mrf.mxu0
        %v6933 = vadd.f32 %v6859, %v6932
        %v6934 = vpop.f32.mrf.mxu0
        %v6935 = vadd.f32 %v6859, %v6934
        %6936 = vmatmul.bf16.gmra.mxu0 %v6855
        %v6937 = vpop.f32.mrf.mxu0
        %v6938 = vadd.f32 %v6859, %v6937
        %v6939 = vpop.f32.mrf.mxu0
        %v6940 = vadd.f32 %v6859, %v6939
        %6941 = vmatmul.bf16.gmra.mxu0 %v6856
        %v6942 = vpop.f32.mrf.mxu0
        %v6943 = vadd.f32 %v6859, %v6942
        %v6944 = vpop.f32.mrf.mxu0
        %v6945 = vadd.f32 %v6859, %v6944
        %6946 = vmatmul.bf16.gmra.mxu0 %v6857
        %v6947 = vpop.f32.mrf.mxu0
        %v6948 = vadd.f32 %v6859, %v6947
        %v6949 = vpop.f32.mrf.mxu0
        %v6950 = vadd.f32 %v6859, %v6949
        %6951 = vmatmul.bf16.gmra.mxu0 %v6858
        %v6952 = vpop.f32.mrf.mxu0
        %v6953 = vadd.f32 %v6859, %v6952
        %v6954 = vpop.f32.mrf.mxu0
        %v6955 = vadd.f32 %v6859, %v6954
        %6956 = vdwg.mxu0
        %v6957 = vadd.f32 %v6918, %v6835
        %v6958 = vadd.f32 %v6920, %v6836
        %v6959 = vadd.f32 %v6923, %v6837
        %v6960 = vadd.f32 %v6925, %v6838
        %v6961 = vadd.f32 %v6928, %v6839
        %v6962 = vadd.f32 %v6930, %v6840
        %v6963 = vadd.f32 %v6933, %v6841
        %v6964 = vadd.f32 %v6935, %v6842
        %v6965 = vadd.f32 %v6938, %v6843
        %v6966 = vadd.f32 %v6940, %v6844
        %v6967 = vadd.f32 %v6943, %v6845
        %v6968 = vadd.f32 %v6945, %v6846
        %v6969 = vadd.f32 %v6948, %v6847
        %v6970 = vadd.f32 %v6950, %v6848
        %v6971 = vadd.f32 %v6953, %v6849
        %v6972 = vadd.f32 %v6955, %v6850
        %v6973 = vsub.f32 0.0, %v6957
        %v6974 = vsub.f32 0.0, %v6958
        %v6975 = vsub.f32 0.0, %v6959
        %v6976 = vsub.f32 0.0, %v6960
        %v6977 = vsub.f32 0.0, %v6961
        %v6978 = vsub.f32 0.0, %v6962
        %v6979 = vsub.f32 0.0, %v6963
        %v6980 = vsub.f32 0.0, %v6964
        %v6981 = vsub.f32 0.0, %v6965
        %v6982 = vsub.f32 0.0, %v6966
        %v6983 = vsub.f32 0.0, %v6967
        %v6984 = vsub.f32 0.0, %v6968
        %v6985 = vsub.f32 0.0, %v6969
        %v6986 = vsub.f32 0.0, %v6970
        %v6987 = vsub.f32 0.0, %v6971
        %v6988 = vsub.f32 0.0, %v6972
        %v6989 = vmul.f32 %v6973, 1.442695
        %v6990 = vpow.pop %v6989
        %v6991 = vmul.f32 %v6974, 1.442695
        %v6992 = vpow.pop %v6991
        %v6993 = vmul.f32 %v6975, 1.442695
        %v6994 = vpow.pop %v6993
        %v6995 = vmul.f32 %v6976, 1.442695
        %v6996 = vpow.pop %v6995
        %v6997 = vmul.f32 %v6977, 1.442695
        %v6998 = vpow.pop %v6997
        %v6999 = vmul.f32 %v6978, 1.442695
        %v7000 = vpow.pop %v6999
        %v7001 = vmul.f32 %v6979, 1.442695
        %v7002 = vpow.pop %v7001
        %v7003 = vmul.f32 %v6980, 1.442695
        %v7004 = vpow.pop %v7003
        %v7005 = vmul.f32 %v6981, 1.442695
        %v7006 = vpow.pop %v7005
        %v7007 = vmul.f32 %v6982, 1.442695
        %v7008 = vpow.pop %v7007
        %v7009 = vmul.f32 %v6983, 1.442695
        %v7010 = vpow.pop %v7009
        %v7011 = vmul.f32 %v6984, 1.442695
        %v7012 = vpow.pop %v7011
        %v7013 = vmul.f32 %v6985, 1.442695
        %v7014 = vpow.pop %v7013
        %v7015 = vmul.f32 %v6986, 1.442695
        %v7016 = vpow.pop %v7015
        %v7017 = vmul.f32 %v6987, 1.442695
        %v7018 = vpow.pop %v7017
        %v7019 = vmul.f32 %v6988, 1.442695
        %v7020 = vpow.pop %v7019
        %v7021 = vadd.f32 %v6990, 1.0
        %v7022 = vadd.f32 %v6992, 1.0
        %v7023 = vadd.f32 %v6994, 1.0
        %v7024 = vadd.f32 %v6996, 1.0
        %v7025 = vadd.f32 %v6998, 1.0
        %v7026 = vadd.f32 %v7000, 1.0
        %v7027 = vadd.f32 %v7002, 1.0
        %v7028 = vadd.f32 %v7004, 1.0
        %v7029 = vadd.f32 %v7006, 1.0
        %v7030 = vadd.f32 %v7008, 1.0
        %v7031 = vadd.f32 %v7010, 1.0
        %v7032 = vadd.f32 %v7012, 1.0
        %v7033 = vadd.f32 %v7014, 1.0
        %v7034 = vadd.f32 %v7016, 1.0
        %v7035 = vadd.f32 %v7018, 1.0
        %v7036 = vadd.f32 %v7020, 1.0
        %v7037 = vrcp.pop %v7021
        %v7038 = vrcp.pop %v7022
        %v7039 = vrcp.pop %v7023
        %v7040 = vrcp.pop %v7024
        %v7041 = vrcp.pop %v7025
        %v7042 = vrcp.pop %v7026
        %v7043 = vrcp.pop %v7027
        %v7044 = vrcp.pop %v7028
        %v7045 = vrcp.pop %v7029
        %v7046 = vrcp.pop %v7030
        %v7047 = vrcp.pop %v7031
        %v7048 = vrcp.pop %v7032
        %v7049 = vrcp.pop %v7033
        %v7050 = vrcp.pop %v7034
        %v7051 = vrcp.pop %v7035
        %v7052 = vrcp.pop %v7036
        %v7053 = vmul.f32 %v6957, %v7037
        %v7054 = vmul.f32 %v6958, %v7038
        %v7055 = vmul.f32 %v6959, %v7039
        %v7056 = vmul.f32 %v6960, %v7040
        %v7057 = vmul.f32 %v6961, %v7041
        %v7058 = vmul.f32 %v6962, %v7042
        %v7059 = vmul.f32 %v6963, %v7043
        %v7060 = vmul.f32 %v6964, %v7044
        %v7061 = vmul.f32 %v6965, %v7045
        %v7062 = vmul.f32 %v6966, %v7046
        %v7063 = vmul.f32 %v6967, %v7047
        %v7064 = vmul.f32 %v6968, %v7048
        %v7065 = vmul.f32 %v6969, %v7049
        %v7066 = vmul.f32 %v6970, %v7050
        %v7067 = vmul.f32 %v6971, %v7051
        %v7068 = vmul.f32 %v6972, %v7052
        %7069 = vadd.xlane.f32.xlu0 %v7053
        %v7070 = vpop.xlane.xlu0 %7069
        %7071 = vadd.xlane.f32.xlu0 %v7054
        %v7072 = vpop.xlane.xlu0 %7071
        %7073 = vadd.xlane.f32.xlu0 %v7055
        %v7074 = vpop.xlane.xlu0 %7073
        %7075 = vadd.xlane.f32.xlu0 %v7056
        %v7076 = vpop.xlane.xlu0 %7075
        %7077 = vadd.xlane.f32.xlu0 %v7057
        %v7078 = vpop.xlane.xlu0 %7077
        %7079 = vadd.xlane.f32.xlu0 %v7058
        %v7080 = vpop.xlane.xlu0 %7079
        %7081 = vadd.xlane.f32.xlu0 %v7059
        %v7082 = vpop.xlane.xlu0 %7081
        %7083 = vadd.xlane.f32.xlu0 %v7060
        %v7084 = vpop.xlane.xlu0 %7083
        %7085 = vadd.xlane.f32.xlu0 %v7061
        %v7086 = vpop.xlane.xlu0 %7085
        %7087 = vadd.xlane.f32.xlu0 %v7062
        %v7088 = vpop.xlane.xlu0 %7087
        %7089 = vadd.xlane.f32.xlu0 %v7063
        %v7090 = vpop.xlane.xlu0 %7089
        %7091 = vadd.xlane.f32.xlu0 %v7064
        %v7092 = vpop.xlane.xlu0 %7091
        %7093 = vadd.xlane.f32.xlu0 %v7065
        %v7094 = vpop.xlane.xlu0 %7093
        %7095 = vadd.xlane.f32.xlu0 %v7066
        %v7096 = vpop.xlane.xlu0 %7095
        %7097 = vadd.xlane.f32.xlu0 %v7067
        %v7098 = vpop.xlane.xlu0 %7097
        %7099 = vadd.xlane.f32.xlu0 %v7068
        %v7100 = vpop.xlane.xlu0 %7099
        %v7101 = vmul.f32 %v7070, %v1770
        %v7102 = vmul.f32 %v7072, %v1770
        %v7103 = vmul.f32 %v7074, %v1770
        %v7104 = vmul.f32 %v7076, %v1770
        %v7105 = vmul.f32 %v7078, %v1770
        %v7106 = vmul.f32 %v7080, %v1770
        %v7107 = vmul.f32 %v7082, %v1770
        %v7108 = vmul.f32 %v7084, %v1770
        %v7109 = vmul.f32 %v7086, %v1770
        %v7110 = vmul.f32 %v7088, %v1770
        %v7111 = vmul.f32 %v7090, %v1770
        %v7112 = vmul.f32 %v7092, %v1770
        %v7113 = vmul.f32 %v7094, %v1770
        %v7114 = vmul.f32 %v7096, %v1770
        %v7115 = vmul.f32 %v7098, %v1770
        %v7116 = vmul.f32 %v7100, %v1770
        %v7117 = vsub.f32 %v7053, %v7101
        %v7118 = vsub.f32 %v7054, %v7102
        %v7119 = vsub.f32 %v7055, %v7103
        %v7120 = vsub.f32 %v7056, %v7104
        %v7121 = vsub.f32 %v7057, %v7105
        %v7122 = vsub.f32 %v7058, %v7106
        %v7123 = vsub.f32 %v7059, %v7107
        %v7124 = vsub.f32 %v7060, %v7108
        %v7125 = vsub.f32 %v7061, %v7109
        %v7126 = vsub.f32 %v7062, %v7110
        %v7127 = vsub.f32 %v7063, %v7111
        %v7128 = vsub.f32 %v7064, %v7112
        %v7129 = vsub.f32 %v7065, %v7113
        %v7130 = vsub.f32 %v7066, %v7114
        %v7131 = vsub.f32 %v7067, %v7115
        %v7132 = vsub.f32 %v7068, %v7116
        %v7133 = vmul.f32 %v7117, %v7117
        %v7134 = vmul.f32 %v7118, %v7118
        %v7135 = vmul.f32 %v7119, %v7119
        %v7136 = vmul.f32 %v7120, %v7120
        %v7137 = vmul.f32 %v7121, %v7121
        %v7138 = vmul.f32 %v7122, %v7122
        %v7139 = vmul.f32 %v7123, %v7123
        %v7140 = vmul.f32 %v7124, %v7124
        %v7141 = vmul.f32 %v7125, %v7125
        %v7142 = vmul.f32 %v7126, %v7126
        %v7143 = vmul.f32 %v7127, %v7127
        %v7144 = vmul.f32 %v7128, %v7128
        %v7145 = vmul.f32 %v7129, %v7129
        %v7146 = vmul.f32 %v7130, %v7130
        %v7147 = vmul.f32 %v7131, %v7131
        %v7148 = vmul.f32 %v7132, %v7132
        %7149 = vadd.xlane.f32.xlu0 %v7133
        %v7150 = vpop.xlane.xlu0 %7149
        %7151 = vadd.xlane.f32.xlu0 %v7134
        %v7152 = vpop.xlane.xlu0 %7151
        %7153 = vadd.xlane.f32.xlu0 %v7135
        %v7154 = vpop.xlane.xlu0 %7153
        %7155 = vadd.xlane.f32.xlu0 %v7136
        %v7156 = vpop.xlane.xlu0 %7155
        %7157 = vadd.xlane.f32.xlu0 %v7137
        %v7158 = vpop.xlane.xlu0 %7157
        %7159 = vadd.xlane.f32.xlu0 %v7138
        %v7160 = vpop.xlane.xlu0 %7159
        %7161 = vadd.xlane.f32.xlu0 %v7139
        %v7162 = vpop.xlane.xlu0 %7161
        %7163 = vadd.xlane.f32.xlu0 %v7140
        %v7164 = vpop.xlane.xlu0 %7163
        %7165 = vadd.xlane.f32.xlu0 %v7141
        %v7166 = vpop.xlane.xlu0 %7165
        %7167 = vadd.xlane.f32.xlu0 %v7142
        %v7168 = vpop.xlane.xlu0 %7167
        %7169 = vadd.xlane.f32.xlu0 %v7143
        %v7170 = vpop.xlane.xlu0 %7169
        %7171 = vadd.xlane.f32.xlu0 %v7144
        %v7172 = vpop.xlane.xlu0 %7171
        %7173 = vadd.xlane.f32.xlu0 %v7145
        %v7174 = vpop.xlane.xlu0 %7173
        %7175 = vadd.xlane.f32.xlu0 %v7146
        %v7176 = vpop.xlane.xlu0 %7175
        %7177 = vadd.xlane.f32.xlu0 %v7147
        %v7178 = vpop.xlane.xlu0 %7177
        %7179 = vadd.xlane.f32.xlu0 %v7148
        %v7180 = vpop.xlane.xlu0 %7179
        %v7181 = vmul.f32 %v7150, %v1770
        %v7182 = vmul.f32 %v7152, %v1770
        %v7183 = vmul.f32 %v7154, %v1770
        %v7184 = vmul.f32 %v7156, %v1770
        %v7185 = vmul.f32 %v7158, %v1770
        %v7186 = vmul.f32 %v7160, %v1770
        %v7187 = vmul.f32 %v7162, %v1770
        %v7188 = vmul.f32 %v7164, %v1770
        %v7189 = vmul.f32 %v7166, %v1770
        %v7190 = vmul.f32 %v7168, %v1770
        %v7191 = vmul.f32 %v7170, %v1770
        %v7192 = vmul.f32 %v7172, %v1770
        %v7193 = vmul.f32 %v7174, %v1770
        %v7194 = vmul.f32 %v7176, %v1770
        %v7195 = vmul.f32 %v7178, %v1770
        %v7196 = vmul.f32 %v7180, %v1770
        %v7197 = vadd.f32 %v7181, 0.1
        %v7198 = vadd.f32 %v7182, 0.1
        %v7199 = vadd.f32 %v7183, 0.1
        %v7200 = vadd.f32 %v7184, 0.1
        %v7201 = vadd.f32 %v7185, 0.1
        %v7202 = vadd.f32 %v7186, 0.1
        %v7203 = vadd.f32 %v7187, 0.1
        %v7204 = vadd.f32 %v7188, 0.1
        %v7205 = vadd.f32 %v7189, 0.1
        %v7206 = vadd.f32 %v7190, 0.1
        %v7207 = vadd.f32 %v7191, 0.1
        %v7208 = vadd.f32 %v7192, 0.1
        %v7209 = vadd.f32 %v7193, 0.1
        %v7210 = vadd.f32 %v7194, 0.1
        %v7211 = vadd.f32 %v7195, 0.1
        %v7212 = vadd.f32 %v7196, 0.1
        %v7213 = vrsqrt.pop %v7197
        %v7214 = vmul.f32 %v7213, %v7197
        %v7215 = vmul.f32 %v7214, %v7213
        %v7216 = vmul.f32 0.5, %v7215
        %v7217 = vsub.f32 1.5, %v7216
        %v7218 = vmul.f32 %v7213, %v7217
        %vm7219 = vweird.f32 %v7197
        %vm7220 = vweird.f32 %v7213
        %vm7221 = vmor %vm7219, %vm7220
        %v7222 = vsel %vm7221, %v7213, %v7218
        %v7223 = vrsqrt.pop %v7198
        %v7224 = vmul.f32 %v7223, %v7198
        %v7225 = vmul.f32 %v7224, %v7223
        %v7226 = vmul.f32 0.5, %v7225
        %v7227 = vsub.f32 1.5, %v7226
        %v7228 = vmul.f32 %v7223, %v7227
        %vm7229 = vweird.f32 %v7198
        %vm7230 = vweird.f32 %v7223
        %vm7231 = vmor %vm7229, %vm7230
        %v7232 = vsel %vm7231, %v7223, %v7228
        %v7233 = vrsqrt.pop %v7199
        %v7234 = vmul.f32 %v7233, %v7199
        %v7235 = vmul.f32 %v7234, %v7233
        %v7236 = vmul.f32 0.5, %v7235
        %v7237 = vsub.f32 1.5, %v7236
        %v7238 = vmul.f32 %v7233, %v7237
        %vm7239 = vweird.f32 %v7199
        %vm7240 = vweird.f32 %v7233
        %vm7241 = vmor %vm7239, %vm7240
        %v7242 = vsel %vm7241, %v7233, %v7238
        %v7243 = vrsqrt.pop %v7200
        %v7244 = vmul.f32 %v7243, %v7200
        %v7245 = vmul.f32 %v7244, %v7243
        %v7246 = vmul.f32 0.5, %v7245
        %v7247 = vsub.f32 1.5, %v7246
        %v7248 = vmul.f32 %v7243, %v7247
        %vm7249 = vweird.f32 %v7200
        %vm7250 = vweird.f32 %v7243
        %vm7251 = vmor %vm7249, %vm7250
        %v7252 = vsel %vm7251, %v7243, %v7248
        %v7253 = vrsqrt.pop %v7201
        %v7254 = vmul.f32 %v7253, %v7201
        %v7255 = vmul.f32 %v7254, %v7253
        %v7256 = vmul.f32 0.5, %v7255
        %v7257 = vsub.f32 1.5, %v7256
        %v7258 = vmul.f32 %v7253, %v7257
        %vm7259 = vweird.f32 %v7201
        %vm7260 = vweird.f32 %v7253
        %vm7261 = vmor %vm7259, %vm7260
        %v7262 = vsel %vm7261, %v7253, %v7258
        %v7263 = vrsqrt.pop %v7202
        %v7264 = vmul.f32 %v7263, %v7202
        %v7265 = vmul.f32 %v7264, %v7263
        %v7266 = vmul.f32 0.5, %v7265
        %v7267 = vsub.f32 1.5, %v7266
        %v7268 = vmul.f32 %v7263, %v7267
        %vm7269 = vweird.f32 %v7202
        %vm7270 = vweird.f32 %v7263
        %vm7271 = vmor %vm7269, %vm7270
        %v7272 = vsel %vm7271, %v7263, %v7268
        %v7273 = vrsqrt.pop %v7203
        %v7274 = vmul.f32 %v7273, %v7203
        %v7275 = vmul.f32 %v7274, %v7273
        %v7276 = vmul.f32 0.5, %v7275
        %v7277 = vsub.f32 1.5, %v7276
        %v7278 = vmul.f32 %v7273, %v7277
        %vm7279 = vweird.f32 %v7203
        %vm7280 = vweird.f32 %v7273
        %vm7281 = vmor %vm7279, %vm7280
        %v7282 = vsel %vm7281, %v7273, %v7278
        %v7283 = vrsqrt.pop %v7204
        %v7284 = vmul.f32 %v7283, %v7204
        %v7285 = vmul.f32 %v7284, %v7283
        %v7286 = vmul.f32 0.5, %v7285
        %v7287 = vsub.f32 1.5, %v7286
        %v7288 = vmul.f32 %v7283, %v7287
        %vm7289 = vweird.f32 %v7204
        %vm7290 = vweird.f32 %v7283
        %vm7291 = vmor %vm7289, %vm7290
        %v7292 = vsel %vm7291, %v7283, %v7288
        %v7293 = vrsqrt.pop %v7205
        %v7294 = vmul.f32 %v7293, %v7205
        %v7295 = vmul.f32 %v7294, %v7293
        %v7296 = vmul.f32 0.5, %v7295
        %v7297 = vsub.f32 1.5, %v7296
        %v7298 = vmul.f32 %v7293, %v7297
        %vm7299 = vweird.f32 %v7205
        %vm7300 = vweird.f32 %v7293
        %vm7301 = vmor %vm7299, %vm7300
        %v7302 = vsel %vm7301, %v7293, %v7298
        %v7303 = vrsqrt.pop %v7206
        %v7304 = vmul.f32 %v7303, %v7206
        %v7305 = vmul.f32 %v7304, %v7303
        %v7306 = vmul.f32 0.5, %v7305
        %v7307 = vsub.f32 1.5, %v7306
        %v7308 = vmul.f32 %v7303, %v7307
        %vm7309 = vweird.f32 %v7206
        %vm7310 = vweird.f32 %v7303
        %vm7311 = vmor %vm7309, %vm7310
        %v7312 = vsel %vm7311, %v7303, %v7308
        %v7313 = vrsqrt.pop %v7207
        %v7314 = vmul.f32 %v7313, %v7207
        %v7315 = vmul.f32 %v7314, %v7313
        %v7316 = vmul.f32 0.5, %v7315
        %v7317 = vsub.f32 1.5, %v7316
        %v7318 = vmul.f32 %v7313, %v7317
        %vm7319 = vweird.f32 %v7207
        %vm7320 = vweird.f32 %v7313
        %vm7321 = vmor %vm7319, %vm7320
        %v7322 = vsel %vm7321, %v7313, %v7318
        %v7323 = vrsqrt.pop %v7208
        %v7324 = vmul.f32 %v7323, %v7208
        %v7325 = vmul.f32 %v7324, %v7323
        %v7326 = vmul.f32 0.5, %v7325
        %v7327 = vsub.f32 1.5, %v7326
        %v7328 = vmul.f32 %v7323, %v7327
        %vm7329 = vweird.f32 %v7208
        %vm7330 = vweird.f32 %v7323
        %vm7331 = vmor %vm7329, %vm7330
        %v7332 = vsel %vm7331, %v7323, %v7328
        %v7333 = vrsqrt.pop %v7209
        %v7334 = vmul.f32 %v7333, %v7209
        %v7335 = vmul.f32 %v7334, %v7333
        %v7336 = vmul.f32 0.5, %v7335
        %v7337 = vsub.f32 1.5, %v7336
        %v7338 = vmul.f32 %v7333, %v7337
        %vm7339 = vweird.f32 %v7209
        %vm7340 = vweird.f32 %v7333
        %vm7341 = vmor %vm7339, %vm7340
        %v7342 = vsel %vm7341, %v7333, %v7338
        %v7343 = vrsqrt.pop %v7210
        %v7344 = vmul.f32 %v7343, %v7210
        %v7345 = vmul.f32 %v7344, %v7343
        %v7346 = vmul.f32 0.5, %v7345
        %v7347 = vsub.f32 1.5, %v7346
        %v7348 = vmul.f32 %v7343, %v7347
        %vm7349 = vweird.f32 %v7210
        %vm7350 = vweird.f32 %v7343
        %vm7351 = vmor %vm7349, %vm7350
        %v7352 = vsel %vm7351, %v7343, %v7348
        %v7353 = vrsqrt.pop %v7211
        %v7354 = vmul.f32 %v7353, %v7211
        %v7355 = vmul.f32 %v7354, %v7353
        %v7356 = vmul.f32 0.5, %v7355
        %v7357 = vsub.f32 1.5, %v7356
        %v7358 = vmul.f32 %v7353, %v7357
        %vm7359 = vweird.f32 %v7211
        %vm7360 = vweird.f32 %v7353
        %vm7361 = vmor %vm7359, %vm7360
        %v7362 = vsel %vm7361, %v7353, %v7358
        %v7363 = vrsqrt.pop %v7212
        %v7364 = vmul.f32 %v7363, %v7212
        %v7365 = vmul.f32 %v7364, %v7363
        %v7366 = vmul.f32 0.5, %v7365
        %v7367 = vsub.f32 1.5, %v7366
        %v7368 = vmul.f32 %v7363, %v7367
        %vm7369 = vweird.f32 %v7212
        %vm7370 = vweird.f32 %v7363
        %vm7371 = vmor %vm7369, %vm7370
        %v7372 = vsel %vm7371, %v7363, %v7368
        %v7373 = vmul.f32 %v7117, %v7222
        %v7374 = vmul.f32 %v7118, %v7232
        %v7375 = vmul.f32 %v7119, %v7242
        %v7376 = vmul.f32 %v7120, %v7252
        %v7377 = vmul.f32 %v7121, %v7262
        %v7378 = vmul.f32 %v7122, %v7272
        %v7379 = vmul.f32 %v7123, %v7282
        %v7380 = vmul.f32 %v7124, %v7292
        %v7381 = vmul.f32 %v7125, %v7302
        %v7382 = vmul.f32 %v7126, %v7312
        %v7383 = vmul.f32 %v7127, %v7322
        %v7384 = vmul.f32 %v7128, %v7332
        %v7385 = vmul.f32 %v7129, %v7342
        %v7386 = vmul.f32 %v7130, %v7352
        %v7387 = vmul.f32 %v7131, %v7362
        %v7388 = vmul.f32 %v7132, %v7372
        %v7389 = vperm.slane %v908, 5
        %v7390 = vmul.f32 %v7373, %v7389
        %v7391 = vmul.f32 %v7374, %v7389
        %v7392 = vmul.f32 %v7375, %v7389
        %v7393 = vmul.f32 %v7376, %v7389
        %v7394 = vmul.f32 %v7377, %v7389
        %v7395 = vmul.f32 %v7378, %v7389
        %v7396 = vmul.f32 %v7379, %v7389
        %v7397 = vmul.f32 %v7380, %v7389
        %v7398 = vmul.f32 %v7381, %v7389
        %v7399 = vmul.f32 %v7382, %v7389
        %v7400 = vmul.f32 %v7383, %v7389
        %v7401 = vmul.f32 %v7384, %v7389
        %v7402 = vmul.f32 %v7385, %v7389
        %v7403 = vmul.f32 %v7386, %v7389
        %v7404 = vmul.f32 %v7387, %v7389
        %v7405 = vmul.f32 %v7388, %v7389
        %v7406 = vperm.slane %v908, 6
        %v7407 = vadd.f32 %v7390, %v7406
        %v7408 = vadd.f32 %v7391, %v7406
        %v7409 = vadd.f32 %v7392, %v7406
        %v7410 = vadd.f32 %v7393, %v7406
        %v7411 = vadd.f32 %v7394, %v7406
        %v7412 = vadd.f32 %v7395, %v7406
        %v7413 = vadd.f32 %v7396, %v7406
        %v7414 = vadd.f32 %v7397, %v7406
        %v7415 = vadd.f32 %v7398, %v7406
        %v7416 = vadd.f32 %v7399, %v7406
        %v7417 = vadd.f32 %v7400, %v7406
        %v7418 = vadd.f32 %v7401, %v7406
        %v7419 = vadd.f32 %v7402, %v7406
        %v7420 = vadd.f32 %v7403, %v7406
        %v7421 = vadd.f32 %v7404, %v7406
        %v7422 = vadd.f32 %v7405, %v7406
        %v7423 = vpack.c.bf16 %v7408, %v7407
        %v7424 = vpack.c.bf16 %v7410, %v7409
        %v7425 = vpack.c.bf16 %v7412, %v7411
        %v7426 = vpack.c.bf16 %v7414, %v7413
        %v7427 = vpack.c.bf16 %v7416, %v7415
        %v7428 = vpack.c.bf16 %v7418, %v7417
        %v7429 = vpack.c.bf16 %v7420, %v7419
        %v7430 = vpack.c.bf16 %v7422, %v7421
        %v7432 = vperm.slane %v909, 0
        %v7433 = vperm.slane %v909, 1
        %v7452 = vunpack.c.l.b16 %v891
        %v7453 = vunpack.c.h.b16 %v891
        %v7454 = vunpack.c.l.b16 %v892
        %v7455 = vunpack.c.h.b16 %v892
        %v7456 = vunpack.c.l.b16 %v893
        %v7457 = vunpack.c.h.b16 %v893
        %v7458 = vunpack.c.l.b16 %v894
        %v7459 = vunpack.c.h.b16 %v894
        %v7460 = vunpack.c.l.b16 %v895
        %v7461 = vunpack.c.h.b16 %v895
        %v7462 = vunpack.c.l.b16 %v896
        %v7463 = vunpack.c.h.b16 %v896
        %v7464 = vunpack.c.l.b16 %v897
        %v7465 = vunpack.c.h.b16 %v897
        %v7466 = vunpack.c.l.b16 %v898
        %v7467 = vunpack.c.h.b16 %v898
        %v7468 = vunpack.c.l.b16 %v899
        %v7469 = vunpack.c.h.b16 %v899
        %v7470 = vunpack.c.l.b16 %v900
        %v7471 = vunpack.c.h.b16 %v900
        %v7472 = vunpack.c.l.b16 %v901
        %v7473 = vunpack.c.h.b16 %v901
        %v7474 = vunpack.c.l.b16 %v902
        %v7475 = vunpack.c.h.b16 %v902
        %v7476 = vunpack.c.l.b16 %v903
        %v7477 = vunpack.c.h.b16 %v903
        %v7478 = vunpack.c.l.b16 %v904
        %v7479 = vunpack.c.h.b16 %v904
        %v7480 = vunpack.c.l.b16 %v905
        %v7481 = vunpack.c.h.b16 %v905
        %v7482 = vunpack.c.l.b16 %v906
        %v7483 = vunpack.c.h.b16 %v906
        %v7484 = vpack.c.b16 %v7454, %v7452
        %v7485 = vpack.c.b16 %v7455, %v7453
        %v7486 = vpack.c.b16 %v7458, %v7456
        %v7487 = vpack.c.b16 %v7459, %v7457
        %v7488 = vpack.c.b16 %v7462, %v7460
        %v7489 = vpack.c.b16 %v7463, %v7461
        %v7490 = vpack.c.b16 %v7466, %v7464
        %v7491 = vpack.c.b16 %v7467, %v7465
        %v7492 = vpack.c.b16 %v7470, %v7468
        %v7493 = vpack.c.b16 %v7471, %v7469
        %v7494 = vpack.c.b16 %v7474, %v7472
        %v7495 = vpack.c.b16 %v7475, %v7473
        %v7496 = vpack.c.b16 %v7478, %v7476
        %v7497 = vpack.c.b16 %v7479, %v7477
        %v7498 = vpack.c.b16 %v7482, %v7480
        %v7499 = vpack.c.b16 %v7483, %v7481
        %7516 = vmatpush.bf16.msra.mxu0 %v7498
        %7517 = vmatpush.bf16.msra.mxu0 %v7496
        %7518 = vmatpush.bf16.msra.mxu0 %v7494
        %7519 = vmatpush.bf16.msra.mxu0 %v7492
        %7520 = vmatpush.bf16.msra.mxu0 %v7490
        %7521 = vmatpush.bf16.msra.mxu0 %v7488
        %7522 = vmatpush.bf16.msra.mxu0 %v7486
        %7523 = vmatpush.bf16.msra.mxu0 %v7484
        %7524 = vmatmul.bf16.gmra.mxu0 %v7423
        %v7525 = vpop.f32.mrf.mxu0
        %v7526 = vadd.f32 %v7432, %v7525
        %v7527 = vpop.f32.mrf.mxu0
        %v7528 = vadd.f32 %v7432, %v7527
        %7529 = vmatmul.bf16.gmra.mxu0 %v7424
        %v7530 = vpop.f32.mrf.mxu0
        %v7531 = vadd.f32 %v7432, %v7530
        %v7532 = vpop.f32.mrf.mxu0
        %v7533 = vadd.f32 %v7432, %v7532
        %7534 = vmatmul.bf16.gmra.mxu0 %v7425
        %v7535 = vpop.f32.mrf.mxu0
        %v7536 = vadd.f32 %v7432, %v7535
        %v7537 = vpop.f32.mrf.mxu0
        %v7538 = vadd.f32 %v7432, %v7537
        %7539 = vmatmul.bf16.gmra.mxu0 %v7426
        %v7540 = vpop.f32.mrf.mxu0
        %v7541 = vadd.f32 %v7432, %v7540
        %v7542 = vpop.f32.mrf.mxu0
        %v7543 = vadd.f32 %v7432, %v7542
        %7544 = vmatmul.bf16.gmra.mxu0 %v7427
        %v7545 = vpop.f32.mrf.mxu0
        %v7546 = vadd.f32 %v7432, %v7545
        %v7547 = vpop.f32.mrf.mxu0
        %v7548 = vadd.f32 %v7432, %v7547
        %7549 = vmatmul.bf16.gmra.mxu0 %v7428
        %v7550 = vpop.f32.mrf.mxu0
        %v7551 = vadd.f32 %v7432, %v7550
        %v7552 = vpop.f32.mrf.mxu0
        %v7553 = vadd.f32 %v7432, %v7552
        %7554 = vmatmul.bf16.gmra.mxu0 %v7429
        %v7555 = vpop.f32.mrf.mxu0
        %v7556 = vadd.f32 %v7432, %v7555
        %v7557 = vpop.f32.mrf.mxu0
        %v7558 = vadd.f32 %v7432, %v7557
        %7559 = vmatmul.bf16.gmra.mxu0 %v7430
        %v7560 = vpop.f32.mrf.mxu0
        %v7561 = vadd.f32 %v7432, %v7560
        %v7562 = vpop.f32.mrf.mxu0
        %v7563 = vadd.f32 %v7432, %v7562
        %7564 = vdwg.mxu0
        %7565 = vmatpush.bf16.msra.mxu0 %v7499
        %7566 = vmatpush.bf16.msra.mxu0 %v7497
        %7567 = vmatpush.bf16.msra.mxu0 %v7495
        %7568 = vmatpush.bf16.msra.mxu0 %v7493
        %7569 = vmatpush.bf16.msra.mxu0 %v7491
        %7570 = vmatpush.bf16.msra.mxu0 %v7489
        %7571 = vmatpush.bf16.msra.mxu0 %v7487
        %7572 = vmatpush.bf16.msra.mxu0 %v7485
        %7573 = vmatmul.bf16.gmra.mxu0 %v7423
        %v7574 = vpop.f32.mrf.mxu0
        %v7575 = vadd.f32 %v7433, %v7574
        %v7576 = vpop.f32.mrf.mxu0
        %v7577 = vadd.f32 %v7433, %v7576
        %7578 = vmatmul.bf16.gmra.mxu0 %v7424
        %v7579 = vpop.f32.mrf.mxu0
        %v7580 = vadd.f32 %v7433, %v7579
        %v7581 = vpop.f32.mrf.mxu0
        %v7582 = vadd.f32 %v7433, %v7581
        %7583 = vmatmul.bf16.gmra.mxu0 %v7425
        %v7584 = vpop.f32.mrf.mxu0
        %v7585 = vadd.f32 %v7433, %v7584
        %v7586 = vpop.f32.mrf.mxu0
        %v7587 = vadd.f32 %v7433, %v7586
        %7588 = vmatmul.bf16.gmra.mxu0 %v7426
        %v7589 = vpop.f32.mrf.mxu0
        %v7590 = vadd.f32 %v7433, %v7589
        %v7591 = vpop.f32.mrf.mxu0
        %v7592 = vadd.f32 %v7433, %v7591
        %7593 = vmatmul.bf16.gmra.mxu0 %v7427
        %v7594 = vpop.f32.mrf.mxu0
        %v7595 = vadd.f32 %v7433, %v7594
        %v7596 = vpop.f32.mrf.mxu0
        %v7597 = vadd.f32 %v7433, %v7596
        %7598 = vmatmul.bf16.gmra.mxu0 %v7428
        %v7599 = vpop.f32.mrf.mxu0
        %v7600 = vadd.f32 %v7433, %v7599
        %v7601 = vpop.f32.mrf.mxu0
        %v7602 = vadd.f32 %v7433, %v7601
        %7603 = vmatmul.bf16.gmra.mxu0 %v7429
        %v7604 = vpop.f32.mrf.mxu0
        %v7605 = vadd.f32 %v7433, %v7604
        %v7606 = vpop.f32.mrf.mxu0
        %v7607 = vadd.f32 %v7433, %v7606
        %7608 = vmatmul.bf16.gmra.mxu0 %v7430
        %v7609 = vpop.f32.mrf.mxu0
        %v7610 = vadd.f32 %v7433, %v7609
        %v7611 = vpop.f32.mrf.mxu0
        %v7612 = vadd.f32 %v7433, %v7611
        %7613 = vdwg.mxu0
        %v7614 = vpack.c.bf16 %v4534, %v4532
        %v7615 = vpack.c.bf16 %v4539, %v4537
        %v7616 = vpack.c.bf16 %v4544, %v4542
        %v7617 = vpack.c.bf16 %v4549, %v4547
        %v7618 = vpack.c.bf16 %v4554, %v4552
        %v7619 = vpack.c.bf16 %v4559, %v4557
        %v7620 = vpack.c.bf16 %v4564, %v4562
        %v7621 = vpack.c.bf16 %v4569, %v4567
        %v7623 = vperm.slane %v926, 0
        %v7624 = vperm.slane %v926, 1
        %v7643 = vunpack.c.l.b16 %v910
        %v7644 = vunpack.c.h.b16 %v910
        %v7645 = vunpack.c.l.b16 %v911
        %v7646 = vunpack.c.h.b16 %v911
        %v7647 = vunpack.c.l.b16 %v912
        %v7648 = vunpack.c.h.b16 %v912
        %v7649 = vunpack.c.l.b16 %v913
        %v7650 = vunpack.c.h.b16 %v913
        %v7651 = vunpack.c.l.b16 %v914
        %v7652 = vunpack.c.h.b16 %v914
        %v7653 = vunpack.c.l.b16 %v915
        %v7654 = vunpack.c.h.b16 %v915
        %v7655 = vunpack.c.l.b16 %v916
        %v7656 = vunpack.c.h.b16 %v916
        %v7657 = vunpack.c.l.b16 %v917
        %v7658 = vunpack.c.h.b16 %v917
        %v7659 = vunpack.c.l.b16 %v918
        %v7660 = vunpack.c.h.b16 %v918
        %v7661 = vunpack.c.l.b16 %v919
        %v7662 = vunpack.c.h.b16 %v919
        %v7663 = vunpack.c.l.b16 %v920
        %v7664 = vunpack.c.h.b16 %v920
        %v7665 = vunpack.c.l.b16 %v921
        %v7666 = vunpack.c.h.b16 %v921
        %v7667 = vunpack.c.l.b16 %v922
        %v7668 = vunpack.c.h.b16 %v922
        %v7669 = vunpack.c.l.b16 %v923
        %v7670 = vunpack.c.h.b16 %v923
        %v7671 = vunpack.c.l.b16 %v924
        %v7672 = vunpack.c.h.b16 %v924
        %v7673 = vunpack.c.l.b16 %v925
        %v7674 = vunpack.c.h.b16 %v925
        %v7675 = vpack.c.b16 %v7645, %v7643
        %v7676 = vpack.c.b16 %v7646, %v7644
        %v7677 = vpack.c.b16 %v7649, %v7647
        %v7678 = vpack.c.b16 %v7650, %v7648
        %v7679 = vpack.c.b16 %v7653, %v7651
        %v7680 = vpack.c.b16 %v7654, %v7652
        %v7681 = vpack.c.b16 %v7657, %v7655
        %v7682 = vpack.c.b16 %v7658, %v7656
        %v7683 = vpack.c.b16 %v7661, %v7659
        %v7684 = vpack.c.b16 %v7662, %v7660
        %v7685 = vpack.c.b16 %v7665, %v7663
        %v7686 = vpack.c.b16 %v7666, %v7664
        %v7687 = vpack.c.b16 %v7669, %v7667
        %v7688 = vpack.c.b16 %v7670, %v7668
        %v7689 = vpack.c.b16 %v7673, %v7671
        %v7690 = vpack.c.b16 %v7674, %v7672
        %7707 = vmatpush.bf16.msra.mxu0 %v7689
        %7708 = vmatpush.bf16.msra.mxu0 %v7687
        %7709 = vmatpush.bf16.msra.mxu0 %v7685
        %7710 = vmatpush.bf16.msra.mxu0 %v7683
        %7711 = vmatpush.bf16.msra.mxu0 %v7681
        %7712 = vmatpush.bf16.msra.mxu0 %v7679
        %7713 = vmatpush.bf16.msra.mxu0 %v7677
        %7714 = vmatpush.bf16.msra.mxu0 %v7675
        %7715 = vmatmul.bf16.gmra.mxu0 %v7614
        %v7716 = vpop.f32.mrf.mxu0
        %v7717 = vadd.f32 %v7623, %v7716
        %v7718 = vpop.f32.mrf.mxu0
        %v7719 = vadd.f32 %v7623, %v7718
        %7720 = vmatmul.bf16.gmra.mxu0 %v7615
        %v7721 = vpop.f32.mrf.mxu0
        %v7722 = vadd.f32 %v7623, %v7721
        %v7723 = vpop.f32.mrf.mxu0
        %v7724 = vadd.f32 %v7623, %v7723
        %7725 = vmatmul.bf16.gmra.mxu0 %v7616
        %v7726 = vpop.f32.mrf.mxu0
        %v7727 = vadd.f32 %v7623, %v7726
        %v7728 = vpop.f32.mrf.mxu0
        %v7729 = vadd.f32 %v7623, %v7728
        %7730 = vmatmul.bf16.gmra.mxu0 %v7617
        %v7731 = vpop.f32.mrf.mxu0
        %v7732 = vadd.f32 %v7623, %v7731
        %v7733 = vpop.f32.mrf.mxu0
        %v7734 = vadd.f32 %v7623, %v7733
        %7735 = vmatmul.bf16.gmra.mxu0 %v7618
        %v7736 = vpop.f32.mrf.mxu0
        %v7737 = vadd.f32 %v7623, %v7736
        %v7738 = vpop.f32.mrf.mxu0
        %v7739 = vadd.f32 %v7623, %v7738
        %7740 = vmatmul.bf16.gmra.mxu0 %v7619
        %v7741 = vpop.f32.mrf.mxu0
        %v7742 = vadd.f32 %v7623, %v7741
        %v7743 = vpop.f32.mrf.mxu0
        %v7744 = vadd.f32 %v7623, %v7743
        %7745 = vmatmul.bf16.gmra.mxu0 %v7620
        %v7746 = vpop.f32.mrf.mxu0
        %v7747 = vadd.f32 %v7623, %v7746
        %v7748 = vpop.f32.mrf.mxu0
        %v7749 = vadd.f32 %v7623, %v7748
        %7750 = vmatmul.bf16.gmra.mxu0 %v7621
        %v7751 = vpop.f32.mrf.mxu0
        %v7752 = vadd.f32 %v7623, %v7751
        %v7753 = vpop.f32.mrf.mxu0
        %v7754 = vadd.f32 %v7623, %v7753
        %7755 = vdwg.mxu0
        %7756 = vmatpush.bf16.msra.mxu0 %v7690
        %7757 = vmatpush.bf16.msra.mxu0 %v7688
        %7758 = vmatpush.bf16.msra.mxu0 %v7686
        %7759 = vmatpush.bf16.msra.mxu0 %v7684
        %7760 = vmatpush.bf16.msra.mxu0 %v7682
        %7761 = vmatpush.bf16.msra.mxu0 %v7680
        %7762 = vmatpush.bf16.msra.mxu0 %v7678
        %7763 = vmatpush.bf16.msra.mxu0 %v7676
        %7764 = vmatmul.bf16.gmra.mxu0 %v7614
        %v7765 = vpop.f32.mrf.mxu0
        %v7766 = vadd.f32 %v7624, %v7765
        %v7767 = vpop.f32.mrf.mxu0
        %v7768 = vadd.f32 %v7624, %v7767
        %7769 = vmatmul.bf16.gmra.mxu0 %v7615
        %v7770 = vpop.f32.mrf.mxu0
        %v7771 = vadd.f32 %v7624, %v7770
        %v7772 = vpop.f32.mrf.mxu0
        %v7773 = vadd.f32 %v7624, %v7772
        %7774 = vmatmul.bf16.gmra.mxu0 %v7616
        %v7775 = vpop.f32.mrf.mxu0
        %v7776 = vadd.f32 %v7624, %v7775
        %v7777 = vpop.f32.mrf.mxu0
        %v7778 = vadd.f32 %v7624, %v7777
        %7779 = vmatmul.bf16.gmra.mxu0 %v7617
        %v7780 = vpop.f32.mrf.mxu0
        %v7781 = vadd.f32 %v7624, %v7780
        %v7782 = vpop.f32.mrf.mxu0
        %v7783 = vadd.f32 %v7624, %v7782
        %7784 = vmatmul.bf16.gmra.mxu0 %v7618
        %v7785 = vpop.f32.mrf.mxu0
        %v7786 = vadd.f32 %v7624, %v7785
        %v7787 = vpop.f32.mrf.mxu0
        %v7788 = vadd.f32 %v7624, %v7787
        %7789 = vmatmul.bf16.gmra.mxu0 %v7619
        %v7790 = vpop.f32.mrf.mxu0
        %v7791 = vadd.f32 %v7624, %v7790
        %v7792 = vpop.f32.mrf.mxu0
        %v7793 = vadd.f32 %v7624, %v7792
        %7794 = vmatmul.bf16.gmra.mxu0 %v7620
        %v7795 = vpop.f32.mrf.mxu0
        %v7796 = vadd.f32 %v7624, %v7795
        %v7797 = vpop.f32.mrf.mxu0
        %v7798 = vadd.f32 %v7624, %v7797
        %7799 = vmatmul.bf16.gmra.mxu0 %v7621
        %v7800 = vpop.f32.mrf.mxu0
        %v7801 = vadd.f32 %v7624, %v7800
        %v7802 = vpop.f32.mrf.mxu0
        %v7803 = vadd.f32 %v7624, %v7802
        %7804 = vdwg.mxu0
        %v7805 = vmax.f32 %v7717, %v7766
        %7806 = vmax.xlane.f32.xlu0 %v7805
        %v7807 = vpop.xlane.xlu0 %7806
        %v7808 = vmax.f32 %v7719, %v7768
        %7809 = vmax.xlane.f32.xlu0 %v7808
        %v7810 = vpop.xlane.xlu0 %7809
        %v7811 = vmax.f32 %v7722, %v7771
        %7812 = vmax.xlane.f32.xlu0 %v7811
        %v7813 = vpop.xlane.xlu0 %7812
        %v7814 = vmax.f32 %v7724, %v7773
        %7815 = vmax.xlane.f32.xlu0 %v7814
        %v7816 = vpop.xlane.xlu0 %7815
        %v7817 = vmax.f32 %v7727, %v7776
        %7818 = vmax.xlane.f32.xlu0 %v7817
        %v7819 = vpop.xlane.xlu0 %7818
        %v7820 = vmax.f32 %v7729, %v7778
        %7821 = vmax.xlane.f32.xlu0 %v7820
        %v7822 = vpop.xlane.xlu0 %7821
        %v7823 = vmax.f32 %v7732, %v7781
        %7824 = vmax.xlane.f32.xlu0 %v7823
        %v7825 = vpop.xlane.xlu0 %7824
        %v7826 = vmax.f32 %v7734, %v7783
        %7827 = vmax.xlane.f32.xlu0 %v7826
        %v7828 = vpop.xlane.xlu0 %7827
        %v7829 = vmax.f32 %v7737, %v7786
        %7830 = vmax.xlane.f32.xlu0 %v7829
        %v7831 = vpop.xlane.xlu0 %7830
        %v7832 = vmax.f32 %v7739, %v7788
        %7833 = vmax.xlane.f32.xlu0 %v7832
        %v7834 = vpop.xlane.xlu0 %7833
        %v7835 = vmax.f32 %v7742, %v7791
        %7836 = vmax.xlane.f32.xlu0 %v7835
        %v7837 = vpop.xlane.xlu0 %7836
        %v7838 = vmax.f32 %v7744, %v7793
        %7839 = vmax.xlane.f32.xlu0 %v7838
        %v7840 = vpop.xlane.xlu0 %7839
        %v7841 = vmax.f32 %v7747, %v7796
        %7842 = vmax.xlane.f32.xlu0 %v7841
        %v7843 = vpop.xlane.xlu0 %7842
        %v7844 = vmax.f32 %v7749, %v7798
        %7845 = vmax.xlane.f32.xlu0 %v7844
        %v7846 = vpop.xlane.xlu0 %7845
        %v7847 = vmax.f32 %v7752, %v7801
        %7848 = vmax.xlane.f32.xlu0 %v7847
        %v7849 = vpop.xlane.xlu0 %7848
        %v7850 = vmax.f32 %v7754, %v7803
        %7851 = vmax.xlane.f32.xlu0 %v7850
        %v7852 = vpop.xlane.xlu0 %7851
        %v7853 = vsub.f32 %v7717, %v7807
        %v7854 = vsub.f32 %v7766, %v7807
        %v7855 = vsub.f32 %v7719, %v7810
        %v7856 = vsub.f32 %v7768, %v7810
        %v7857 = vsub.f32 %v7722, %v7813
        %v7858 = vsub.f32 %v7771, %v7813
        %v7859 = vsub.f32 %v7724, %v7816
        %v7860 = vsub.f32 %v7773, %v7816
        %v7861 = vsub.f32 %v7727, %v7819
        %v7862 = vsub.f32 %v7776, %v7819
        %v7863 = vsub.f32 %v7729, %v7822
        %v7864 = vsub.f32 %v7778, %v7822
        %v7865 = vsub.f32 %v7732, %v7825
        %v7866 = vsub.f32 %v7781, %v7825
        %v7867 = vsub.f32 %v7734, %v7828
        %v7868 = vsub.f32 %v7783, %v7828
        %v7869 = vsub.f32 %v7737, %v7831
        %v7870 = vsub.f32 %v7786, %v7831
        %v7871 = vsub.f32 %v7739, %v7834
        %v7872 = vsub.f32 %v7788, %v7834
        %v7873 = vsub.f32 %v7742, %v7837
        %v7874 = vsub.f32 %v7791, %v7837
        %v7875 = vsub.f32 %v7744, %v7840
        %v7876 = vsub.f32 %v7793, %v7840
        %v7877 = vsub.f32 %v7747, %v7843
        %v7878 = vsub.f32 %v7796, %v7843
        %v7879 = vsub.f32 %v7749, %v7846
        %v7880 = vsub.f32 %v7798, %v7846
        %v7881 = vsub.f32 %v7752, %v7849
        %v7882 = vsub.f32 %v7801, %v7849
        %v7883 = vsub.f32 %v7754, %v7852
        %v7884 = vsub.f32 %v7803, %v7852
        %v7885 = vmul.f32 %v7853, 1.442695
        %v7886 = vpow.pop %v7885
        %v7887 = vmul.f32 %v7854, 1.442695
        %v7888 = vpow.pop %v7887
        %v7889 = vmul.f32 %v7855, 1.442695
        %v7890 = vpow.pop %v7889
        %v7891 = vmul.f32 %v7856, 1.442695
        %v7892 = vpow.pop %v7891
        %v7893 = vmul.f32 %v7857, 1.442695
        %v7894 = vpow.pop %v7893
        %v7895 = vmul.f32 %v7858, 1.442695
        %v7896 = vpow.pop %v7895
        %v7897 = vmul.f32 %v7859, 1.442695
        %v7898 = vpow.pop %v7897
        %v7899 = vmul.f32 %v7860, 1.442695
        %v7900 = vpow.pop %v7899
        %v7901 = vmul.f32 %v7861, 1.442695
        %v7902 = vpow.pop %v7901
        %v7903 = vmul.f32 %v7862, 1.442695
        %v7904 = vpow.pop %v7903
        %v7905 = vmul.f32 %v7863, 1.442695
        %v7906 = vpow.pop %v7905
        %v7907 = vmul.f32 %v7864, 1.442695
        %v7908 = vpow.pop %v7907
        %v7909 = vmul.f32 %v7865, 1.442695
        %v7910 = vpow.pop %v7909
        %v7911 = vmul.f32 %v7866, 1.442695
        %v7912 = vpow.pop %v7911
        %v7913 = vmul.f32 %v7867, 1.442695
        %v7914 = vpow.pop %v7913
        %v7915 = vmul.f32 %v7868, 1.442695
        %v7916 = vpow.pop %v7915
        %v7917 = vmul.f32 %v7869, 1.442695
        %v7918 = vpow.pop %v7917
        %v7919 = vmul.f32 %v7870, 1.442695
        %v7920 = vpow.pop %v7919
        %v7921 = vmul.f32 %v7871, 1.442695
        %v7922 = vpow.pop %v7921
        %v7923 = vmul.f32 %v7872, 1.442695
        %v7924 = vpow.pop %v7923
        %v7925 = vmul.f32 %v7873, 1.442695
        %v7926 = vpow.pop %v7925
        %v7927 = vmul.f32 %v7874, 1.442695
        %v7928 = vpow.pop %v7927
        %v7929 = vmul.f32 %v7875, 1.442695
        %v7930 = vpow.pop %v7929
        %v7931 = vmul.f32 %v7876, 1.442695
        %v7932 = vpow.pop %v7931
        %v7933 = vmul.f32 %v7877, 1.442695
        %v7934 = vpow.pop %v7933
        %v7935 = vmul.f32 %v7878, 1.442695
        %v7936 = vpow.pop %v7935
        %v7937 = vmul.f32 %v7879, 1.442695
        %v7938 = vpow.pop %v7937
        %v7939 = vmul.f32 %v7880, 1.442695
        %v7940 = vpow.pop %v7939
        %v7941 = vmul.f32 %v7881, 1.442695
        %v7942 = vpow.pop %v7941
        %v7943 = vmul.f32 %v7882, 1.442695
        %v7944 = vpow.pop %v7943
        %v7945 = vmul.f32 %v7883, 1.442695
        %v7946 = vpow.pop %v7945
        %v7947 = vmul.f32 %v7884, 1.442695
        %v7948 = vpow.pop %v7947
        %v7949 = vadd.f32 %v7886, %v7888
        %7950 = vadd.xlane.f32.xlu0 %v7949
        %v7951 = vpop.xlane.xlu0 %7950
        %v7952 = vadd.f32 %v7890, %v7892
        %7953 = vadd.xlane.f32.xlu0 %v7952
        %v7954 = vpop.xlane.xlu0 %7953
        %v7955 = vadd.f32 %v7894, %v7896
        %7956 = vadd.xlane.f32.xlu0 %v7955
        %v7957 = vpop.xlane.xlu0 %7956
        %v7958 = vadd.f32 %v7898, %v7900
        %7959 = vadd.xlane.f32.xlu0 %v7958
        %v7960 = vpop.xlane.xlu0 %7959
        %v7961 = vadd.f32 %v7902, %v7904
        %7962 = vadd.xlane.f32.xlu0 %v7961
        %v7963 = vpop.xlane.xlu0 %7962
        %v7964 = vadd.f32 %v7906, %v7908
        %7965 = vadd.xlane.f32.xlu0 %v7964
        %v7966 = vpop.xlane.xlu0 %7965
        %v7967 = vadd.f32 %v7910, %v7912
        %7968 = vadd.xlane.f32.xlu0 %v7967
        %v7969 = vpop.xlane.xlu0 %7968
        %v7970 = vadd.f32 %v7914, %v7916
        %7971 = vadd.xlane.f32.xlu0 %v7970
        %v7972 = vpop.xlane.xlu0 %7971
        %v7973 = vadd.f32 %v7918, %v7920
        %7974 = vadd.xlane.f32.xlu0 %v7973
        %v7975 = vpop.xlane.xlu0 %7974
        %v7976 = vadd.f32 %v7922, %v7924
        %7977 = vadd.xlane.f32.xlu0 %v7976
        %v7978 = vpop.xlane.xlu0 %7977
        %v7979 = vadd.f32 %v7926, %v7928
        %7980 = vadd.xlane.f32.xlu0 %v7979
        %v7981 = vpop.xlane.xlu0 %7980
        %v7982 = vadd.f32 %v7930, %v7932
        %7983 = vadd.xlane.f32.xlu0 %v7982
        %v7984 = vpop.xlane.xlu0 %7983
        %v7985 = vadd.f32 %v7934, %v7936
        %7986 = vadd.xlane.f32.xlu0 %v7985
        %v7987 = vpop.xlane.xlu0 %7986
        %v7988 = vadd.f32 %v7938, %v7940
        %7989 = vadd.xlane.f32.xlu0 %v7988
        %v7990 = vpop.xlane.xlu0 %7989
        %v7991 = vadd.f32 %v7942, %v7944
        %7992 = vadd.xlane.f32.xlu0 %v7991
        %v7993 = vpop.xlane.xlu0 %7992
        %v7994 = vadd.f32 %v7946, %v7948
        %7995 = vadd.xlane.f32.xlu0 %v7994
        %v7996 = vpop.xlane.xlu0 %7995
        %v7997 = vlog2.pop %v7951
        %v7998 = vmul.f32 %v7997, 0.6931472
        %v7999 = vlog2.pop %v7954
        %v8000 = vmul.f32 %v7999, 0.6931472
        %v8001 = vlog2.pop %v7957
        %v8002 = vmul.f32 %v8001, 0.6931472
        %v8003 = vlog2.pop %v7960
        %v8004 = vmul.f32 %v8003, 0.6931472
        %v8005 = vlog2.pop %v7963
        %v8006 = vmul.f32 %v8005, 0.6931472
        %v8007 = vlog2.pop %v7966
        %v8008 = vmul.f32 %v8007, 0.6931472
        %v8009 = vlog2.pop %v7969
        %v8010 = vmul.f32 %v8009, 0.6931472
        %v8011 = vlog2.pop %v7972
        %v8012 = vmul.f32 %v8011, 0.6931472
        %v8013 = vlog2.pop %v7975
        %v8014 = vmul.f32 %v8013, 0.6931472
        %v8015 = vlog2.pop %v7978
        %v8016 = vmul.f32 %v8015, 0.6931472
        %v8017 = vlog2.pop %v7981
        %v8018 = vmul.f32 %v8017, 0.6931472
        %v8019 = vlog2.pop %v7984
        %v8020 = vmul.f32 %v8019, 0.6931472
        %v8021 = vlog2.pop %v7987
        %v8022 = vmul.f32 %v8021, 0.6931472
        %v8023 = vlog2.pop %v7990
        %v8024 = vmul.f32 %v8023, 0.6931472
        %v8025 = vlog2.pop %v7993
        %v8026 = vmul.f32 %v8025, 0.6931472
        %v8027 = vlog2.pop %v7996
        %v8028 = vmul.f32 %v8027, 0.6931472
        %v8029 = vadd.f32 %v7807, %v7998
        %v8030 = vadd.f32 %v7810, %v8000
        %v8031 = vadd.f32 %v7813, %v8002
        %v8032 = vadd.f32 %v7816, %v8004
        %v8033 = vadd.f32 %v7819, %v8006
        %v8034 = vadd.f32 %v7822, %v8008
        %v8035 = vadd.f32 %v7825, %v8010
        %v8036 = vadd.f32 %v7828, %v8012
        %v8037 = vadd.f32 %v7831, %v8014
        %v8038 = vadd.f32 %v7834, %v8016
        %v8039 = vadd.f32 %v7837, %v8018
        %v8040 = vadd.f32 %v7840, %v8020
        %v8041 = vadd.f32 %v7843, %v8022
        %v8042 = vadd.f32 %v7846, %v8024
        %v8043 = vadd.f32 %v7849, %v8026
        %v8044 = vadd.f32 %v7852, %v8028
        %v8045 = vsub.f32 %v7717, %v8029
        %v8046 = vsub.f32 %v7766, %v8029
        %v8047 = vsub.f32 %v7719, %v8030
        %v8048 = vsub.f32 %v7768, %v8030
        %v8049 = vsub.f32 %v7722, %v8031
        %v8050 = vsub.f32 %v7771, %v8031
        %v8051 = vsub.f32 %v7724, %v8032
        %v8052 = vsub.f32 %v7773, %v8032
        %v8053 = vsub.f32 %v7727, %v8033
        %v8054 = vsub.f32 %v7776, %v8033
        %v8055 = vsub.f32 %v7729, %v8034
        %v8056 = vsub.f32 %v7778, %v8034
        %v8057 = vsub.f32 %v7732, %v8035
        %v8058 = vsub.f32 %v7781, %v8035
        %v8059 = vsub.f32 %v7734, %v8036
        %v8060 = vsub.f32 %v7783, %v8036
        %v8061 = vsub.f32 %v7737, %v8037
        %v8062 = vsub.f32 %v7786, %v8037
        %v8063 = vsub.f32 %v7739, %v8038
        %v8064 = vsub.f32 %v7788, %v8038
        %v8065 = vsub.f32 %v7742, %v8039
        %v8066 = vsub.f32 %v7791, %v8039
        %v8067 = vsub.f32 %v7744, %v8040
        %v8068 = vsub.f32 %v7793, %v8040
        %v8069 = vsub.f32 %v7747, %v8041
        %v8070 = vsub.f32 %v7796, %v8041
        %v8071 = vsub.f32 %v7749, %v8042
        %v8072 = vsub.f32 %v7798, %v8042
        %v8073 = vsub.f32 %v7752, %v8043
        %v8074 = vsub.f32 %v7801, %v8043
        %v8075 = vsub.f32 %v7754, %v8044
        %v8076 = vsub.f32 %v7803, %v8044
        %v8077 = vmul.f32 %v8045, %v943
        %v8078 = vmul.f32 %v8046, %v944
        %v8079 = vmul.f32 %v8047, %v945
        %v8080 = vmul.f32 %v8048, %v946
        %v8081 = vmul.f32 %v8049, %v947
        %v8082 = vmul.f32 %v8050, %v948
        %v8083 = vmul.f32 %v8051, %v949
        %v8084 = vmul.f32 %v8052, %v950
        %v8085 = vmul.f32 %v8053, %v951
        %v8086 = vmul.f32 %v8054, %v952
        %v8087 = vmul.f32 %v8055, %v953
        %v8088 = vmul.f32 %v8056, %v954
        %v8089 = vmul.f32 %v8057, %v955
        %v8090 = vmul.f32 %v8058, %v956
        %v8091 = vmul.f32 %v8059, %v957
        %v8092 = vmul.f32 %v8060, %v958
        %v8093 = vmul.f32 %v8061, %v959
        %v8094 = vmul.f32 %v8062, %v960
        %v8095 = vmul.f32 %v8063, %v961
        %v8096 = vmul.f32 %v8064, %v962
        %v8097 = vmul.f32 %v8065, %v963
        %v8098 = vmul.f32 %v8066, %v964
        %v8099 = vmul.f32 %v8067, %v965
        %v8100 = vmul.f32 %v8068, %v966
        %v8101 = vmul.f32 %v8069, %v967
        %v8102 = vmul.f32 %v8070, %v968
        %v8103 = vmul.f32 %v8071, %v969
        %v8104 = vmul.f32 %v8072, %v970
        %v8105 = vmul.f32 %v8073, %v971
        %v8106 = vmul.f32 %v8074, %v972
        %v8107 = vmul.f32 %v8075, %v973
        %v8108 = vmul.f32 %v8076, %v974
        %v8109 = vadd.f32 %v8077, %v8078
        %8110 = vadd.xlane.f32.xlu0 %v8109
        %v8111 = vpop.xlane.xlu0 %8110
        %v8112 = vadd.f32 %v8079, %v8080
        %8113 = vadd.xlane.f32.xlu0 %v8112
        %v8114 = vpop.xlane.xlu0 %8113
        %v8115 = vadd.f32 %v8081, %v8082
        %8116 = vadd.xlane.f32.xlu0 %v8115
        %v8117 = vpop.xlane.xlu0 %8116
        %v8118 = vadd.f32 %v8083, %v8084
        %8119 = vadd.xlane.f32.xlu0 %v8118
        %v8120 = vpop.xlane.xlu0 %8119
        %v8121 = vadd.f32 %v8085, %v8086
        %8122 = vadd.xlane.f32.xlu0 %v8121
        %v8123 = vpop.xlane.xlu0 %8122
        %v8124 = vadd.f32 %v8087, %v8088
        %8125 = vadd.xlane.f32.xlu0 %v8124
        %v8126 = vpop.xlane.xlu0 %8125
        %v8127 = vadd.f32 %v8089, %v8090
        %8128 = vadd.xlane.f32.xlu0 %v8127
        %v8129 = vpop.xlane.xlu0 %8128
        %v8130 = vadd.f32 %v8091, %v8092
        %8131 = vadd.xlane.f32.xlu0 %v8130
        %v8132 = vpop.xlane.xlu0 %8131
        %v8133 = vadd.f32 %v8093, %v8094
        %8134 = vadd.xlane.f32.xlu0 %v8133
        %v8135 = vpop.xlane.xlu0 %8134
        %v8136 = vadd.f32 %v8095, %v8096
        %8137 = vadd.xlane.f32.xlu0 %v8136
        %v8138 = vpop.xlane.xlu0 %8137
        %v8139 = vadd.f32 %v8097, %v8098
        %8140 = vadd.xlane.f32.xlu0 %v8139
        %v8141 = vpop.xlane.xlu0 %8140
        %v8142 = vadd.f32 %v8099, %v8100
        %8143 = vadd.xlane.f32.xlu0 %v8142
        %v8144 = vpop.xlane.xlu0 %8143
        %v8145 = vadd.f32 %v8101, %v8102
        %8146 = vadd.xlane.f32.xlu0 %v8145
        %v8147 = vpop.xlane.xlu0 %8146
        %v8148 = vadd.f32 %v8103, %v8104
        %8149 = vadd.xlane.f32.xlu0 %v8148
        %v8150 = vpop.xlane.xlu0 %8149
        %v8151 = vadd.f32 %v8105, %v8106
        %8152 = vadd.xlane.f32.xlu0 %v8151
        %v8153 = vpop.xlane.xlu0 %8152
        %v8154 = vadd.f32 %v8107, %v8108
        %8155 = vadd.xlane.f32.xlu0 %v8154
        %v8156 = vpop.xlane.xlu0 %8155
        %v8157 = vmul.f32 %v4532, %v4532
        %v8158 = vmul.f32 %v4534, %v4534
        %v8159 = vmul.f32 %v4537, %v4537
        %v8160 = vmul.f32 %v4539, %v4539
        %v8161 = vmul.f32 %v4542, %v4542
        %v8162 = vmul.f32 %v4544, %v4544
        %v8163 = vmul.f32 %v4547, %v4547
        %v8164 = vmul.f32 %v4549, %v4549
        %v8165 = vmul.f32 %v4552, %v4552
        %v8166 = vmul.f32 %v4554, %v4554
        %v8167 = vmul.f32 %v4557, %v4557
        %v8168 = vmul.f32 %v4559, %v4559
        %v8169 = vmul.f32 %v4562, %v4562
        %v8170 = vmul.f32 %v4564, %v4564
        %v8171 = vmul.f32 %v4567, %v4567
        %v8172 = vmul.f32 %v4569, %v4569
        %v8173 = vadd.f32 %v8157, 1.837877
        %v8174 = vadd.f32 %v8158, 1.837877
        %v8175 = vadd.f32 %v8159, 1.837877
        %v8176 = vadd.f32 %v8160, 1.837877
        %v8177 = vadd.f32 %v8161, 1.837877
        %v8178 = vadd.f32 %v8162, 1.837877
        %v8179 = vadd.f32 %v8163, 1.837877
        %v8180 = vadd.f32 %v8164, 1.837877
        %v8181 = vadd.f32 %v8165, 1.837877
        %v8182 = vadd.f32 %v8166, 1.837877
        %v8183 = vadd.f32 %v8167, 1.837877
        %v8184 = vadd.f32 %v8168, 1.837877
        %v8185 = vadd.f32 %v8169, 1.837877
        %v8186 = vadd.f32 %v8170, 1.837877
        %v8187 = vadd.f32 %v8171, 1.837877
        %v8188 = vadd.f32 %v8172, 1.837877
        %v8189 = vmul.f32 %v8173, -0.5
        %v8190 = vmul.f32 %v8174, -0.5
        %v8191 = vmul.f32 %v8175, -0.5
        %v8192 = vmul.f32 %v8176, -0.5
        %v8193 = vmul.f32 %v8177, -0.5
        %v8194 = vmul.f32 %v8178, -0.5
        %v8195 = vmul.f32 %v8179, -0.5
        %v8196 = vmul.f32 %v8180, -0.5
        %v8197 = vmul.f32 %v8181, -0.5
        %v8198 = vmul.f32 %v8182, -0.5
        %v8199 = vmul.f32 %v8183, -0.5
        %v8200 = vmul.f32 %v8184, -0.5
        %v8201 = vmul.f32 %v8185, -0.5
        %v8202 = vmul.f32 %v8186, -0.5
        %v8203 = vmul.f32 %v8187, -0.5
        %v8204 = vmul.f32 %v8188, -0.5
        %v8205 = vadd.f32 %v8189, -1.89712
        %v8206 = vadd.f32 %v8190, -1.89712
        %v8207 = vadd.f32 %v8191, -1.89712
        %v8208 = vadd.f32 %v8192, -1.89712
        %v8209 = vadd.f32 %v8193, -1.89712
        %v8210 = vadd.f32 %v8194, -1.89712
        %v8211 = vadd.f32 %v8195, -1.89712
        %v8212 = vadd.f32 %v8196, -1.89712
        %v8213 = vadd.f32 %v8197, -1.89712
        %v8214 = vadd.f32 %v8198, -1.89712
        %v8215 = vadd.f32 %v8199, -1.89712
        %v8216 = vadd.f32 %v8200, -1.89712
        %v8217 = vadd.f32 %v8201, -1.89712
        %v8218 = vadd.f32 %v8202, -1.89712
        %v8219 = vadd.f32 %v8203, -1.89712
        %v8220 = vadd.f32 %v8204, -1.89712
        %v8221 = vadd.f32 %v7575, 1.837877
        %v8222 = vadd.f32 %v7577, 1.837877
        %v8223 = vadd.f32 %v7580, 1.837877
        %v8224 = vadd.f32 %v7582, 1.837877
        %v8225 = vadd.f32 %v7585, 1.837877
        %v8226 = vadd.f32 %v7587, 1.837877
        %v8227 = vadd.f32 %v7590, 1.837877
        %v8228 = vadd.f32 %v7592, 1.837877
        %v8229 = vadd.f32 %v7595, 1.837877
        %v8230 = vadd.f32 %v7597, 1.837877
        %v8231 = vadd.f32 %v7600, 1.837877
        %v8232 = vadd.f32 %v7602, 1.837877
        %v8233 = vadd.f32 %v7605, 1.837877
        %v8234 = vadd.f32 %v7607, 1.837877
        %v8235 = vadd.f32 %v7610, 1.837877
        %v8236 = vadd.f32 %v7612, 1.837877
        %v8237 = vsub.f32 %v4532, %v7526
        %v8238 = vsub.f32 %v4534, %v7528
        %v8239 = vsub.f32 %v4537, %v7531
        %v8240 = vsub.f32 %v4539, %v7533
        %v8241 = vsub.f32 %v4542, %v7536
        %v8242 = vsub.f32 %v4544, %v7538
        %v8243 = vsub.f32 %v4547, %v7541
        %v8244 = vsub.f32 %v4549, %v7543
        %v8245 = vsub.f32 %v4552, %v7546
        %v8246 = vsub.f32 %v4554, %v7548
        %v8247 = vsub.f32 %v4557, %v7551
        %v8248 = vsub.f32 %v4559, %v7553
        %v8249 = vsub.f32 %v4562, %v7556
        %v8250 = vsub.f32 %v4564, %v7558
        %v8251 = vsub.f32 %v4567, %v7561
        %v8252 = vsub.f32 %v4569, %v7563
        %v8253 = vmul.f32 %v8237, %v8237
        %v8254 = vmul.f32 %v8238, %v8238
        %v8255 = vmul.f32 %v8239, %v8239
        %v8256 = vmul.f32 %v8240, %v8240
        %v8257 = vmul.f32 %v8241, %v8241
        %v8258 = vmul.f32 %v8242, %v8242
        %v8259 = vmul.f32 %v8243, %v8243
        %v8260 = vmul.f32 %v8244, %v8244
        %v8261 = vmul.f32 %v8245, %v8245
        %v8262 = vmul.f32 %v8246, %v8246
        %v8263 = vmul.f32 %v8247, %v8247
        %v8264 = vmul.f32 %v8248, %v8248
        %v8265 = vmul.f32 %v8249, %v8249
        %v8266 = vmul.f32 %v8250, %v8250
        %v8267 = vmul.f32 %v8251, %v8251
        %v8268 = vmul.f32 %v8252, %v8252
        %v8269 = vsub.f32 0.0, %v7575
        %v8270 = vsub.f32 0.0, %v7577
        %v8271 = vsub.f32 0.0, %v7580
        %v8272 = vsub.f32 0.0, %v7582
        %v8273 = vsub.f32 0.0, %v7585
        %v8274 = vsub.f32 0.0, %v7587
        %v8275 = vsub.f32 0.0, %v7590
        %v8276 = vsub.f32 0.0, %v7592
        %v8277 = vsub.f32 0.0, %v7595
        %v8278 = vsub.f32 0.0, %v7597
        %v8279 = vsub.f32 0.0, %v7600
        %v8280 = vsub.f32 0.0, %v7602
        %v8281 = vsub.f32 0.0, %v7605
        %v8282 = vsub.f32 0.0, %v7607
        %v8283 = vsub.f32 0.0, %v7610
        %v8284 = vsub.f32 0.0, %v7612
        %v8285 = vmul.f32 %v8269, 1.442695
        %v8286 = vpow.pop %v8285
        %v8287 = vmul.f32 %v8270, 1.442695
        %v8288 = vpow.pop %v8287
        %v8289 = vmul.f32 %v8271, 1.442695
        %v8290 = vpow.pop %v8289
        %v8291 = vmul.f32 %v8272, 1.442695
        %v8292 = vpow.pop %v8291
        %v8293 = vmul.f32 %v8273, 1.442695
        %v8294 = vpow.pop %v8293
        %v8295 = vmul.f32 %v8274, 1.442695
        %v8296 = vpow.pop %v8295
        %v8297 = vmul.f32 %v8275, 1.442695
        %v8298 = vpow.pop %v8297
        %v8299 = vmul.f32 %v8276, 1.442695
        %v8300 = vpow.pop %v8299
        %v8301 = vmul.f32 %v8277, 1.442695
        %v8302 = vpow.pop %v8301
        %v8303 = vmul.f32 %v8278, 1.442695
        %v8304 = vpow.pop %v8303
        %v8305 = vmul.f32 %v8279, 1.442695
        %v8306 = vpow.pop %v8305
        %v8307 = vmul.f32 %v8280, 1.442695
        %v8308 = vpow.pop %v8307
        %v8309 = vmul.f32 %v8281, 1.442695
        %v8310 = vpow.pop %v8309
        %v8311 = vmul.f32 %v8282, 1.442695
        %v8312 = vpow.pop %v8311
        %v8313 = vmul.f32 %v8283, 1.442695
        %v8314 = vpow.pop %v8313
        %v8315 = vmul.f32 %v8284, 1.442695
        %v8316 = vpow.pop %v8315
        %v8317 = vmul.f32 %v8253, %v8286
        %v8318 = vmul.f32 %v8254, %v8288
        %v8319 = vmul.f32 %v8255, %v8290
        %v8320 = vmul.f32 %v8256, %v8292
        %v8321 = vmul.f32 %v8257, %v8294
        %v8322 = vmul.f32 %v8258, %v8296
        %v8323 = vmul.f32 %v8259, %v8298
        %v8324 = vmul.f32 %v8260, %v8300
        %v8325 = vmul.f32 %v8261, %v8302
        %v8326 = vmul.f32 %v8262, %v8304
        %v8327 = vmul.f32 %v8263, %v8306
        %v8328 = vmul.f32 %v8264, %v8308
        %v8329 = vmul.f32 %v8265, %v8310
        %v8330 = vmul.f32 %v8266, %v8312
        %v8331 = vmul.f32 %v8267, %v8314
        %v8332 = vmul.f32 %v8268, %v8316
        %v8333 = vadd.f32 %v8221, %v8317
        %v8334 = vadd.f32 %v8222, %v8318
        %v8335 = vadd.f32 %v8223, %v8319
        %v8336 = vadd.f32 %v8224, %v8320
        %v8337 = vadd.f32 %v8225, %v8321
        %v8338 = vadd.f32 %v8226, %v8322
        %v8339 = vadd.f32 %v8227, %v8323
        %v8340 = vadd.f32 %v8228, %v8324
        %v8341 = vadd.f32 %v8229, %v8325
        %v8342 = vadd.f32 %v8230, %v8326
        %v8343 = vadd.f32 %v8231, %v8327
        %v8344 = vadd.f32 %v8232, %v8328
        %v8345 = vadd.f32 %v8233, %v8329
        %v8346 = vadd.f32 %v8234, %v8330
        %v8347 = vadd.f32 %v8235, %v8331
        %v8348 = vadd.f32 %v8236, %v8332
        %v8349 = vmul.f32 %v8333, -0.5
        %v8350 = vmul.f32 %v8334, -0.5
        %v8351 = vmul.f32 %v8335, -0.5
        %v8352 = vmul.f32 %v8336, -0.5
        %v8353 = vmul.f32 %v8337, -0.5
        %v8354 = vmul.f32 %v8338, -0.5
        %v8355 = vmul.f32 %v8339, -0.5
        %v8356 = vmul.f32 %v8340, -0.5
        %v8357 = vmul.f32 %v8341, -0.5
        %v8358 = vmul.f32 %v8342, -0.5
        %v8359 = vmul.f32 %v8343, -0.5
        %v8360 = vmul.f32 %v8344, -0.5
        %v8361 = vmul.f32 %v8345, -0.5
        %v8362 = vmul.f32 %v8346, -0.5
        %v8363 = vmul.f32 %v8347, -0.5
        %v8364 = vmul.f32 %v8348, -0.5
        %v8365 = vadd.f32 %v8349, -0.2876821
        %v8366 = vadd.f32 %v8350, -0.2876821
        %v8367 = vadd.f32 %v8351, -0.2876821
        %v8368 = vadd.f32 %v8352, -0.2876821
        %v8369 = vadd.f32 %v8353, -0.2876821
        %v8370 = vadd.f32 %v8354, -0.2876821
        %v8371 = vadd.f32 %v8355, -0.2876821
        %v8372 = vadd.f32 %v8356, -0.2876821
        %v8373 = vadd.f32 %v8357, -0.2876821
        %v8374 = vadd.f32 %v8358, -0.2876821
        %v8375 = vadd.f32 %v8359, -0.2876821
        %v8376 = vadd.f32 %v8360, -0.2876821
        %v8377 = vadd.f32 %v8361, -0.2876821
        %v8378 = vadd.f32 %v8362, -0.2876821
        %v8379 = vadd.f32 %v8363, -0.2876821
        %v8380 = vadd.f32 %v8364, -0.2876821
        %v8381 = vmul.f32 %v8157, 4.539993e-05
        %v8382 = vmul.f32 %v8158, 4.539993e-05
        %v8383 = vmul.f32 %v8159, 4.539993e-05
        %v8384 = vmul.f32 %v8160, 4.539993e-05
        %v8385 = vmul.f32 %v8161, 4.539993e-05
        %v8386 = vmul.f32 %v8162, 4.539993e-05
        %v8387 = vmul.f32 %v8163, 4.539993e-05
        %v8388 = vmul.f32 %v8164, 4.539993e-05
        %v8389 = vmul.f32 %v8165, 4.539993e-05
        %v8390 = vmul.f32 %v8166, 4.539993e-05
        %v8391 = vmul.f32 %v8167, 4.539993e-05
        %v8392 = vmul.f32 %v8168, 4.539993e-05
        %v8393 = vmul.f32 %v8169, 4.539993e-05
        %v8394 = vmul.f32 %v8170, 4.539993e-05
        %v8395 = vmul.f32 %v8171, 4.539993e-05
        %v8396 = vmul.f32 %v8172, 4.539993e-05
        %v8397 = vadd.f32 %v8381, 11.837877
        %v8398 = vadd.f32 %v8382, 11.837877
        %v8399 = vadd.f32 %v8383, 11.837877
        %v8400 = vadd.f32 %v8384, 11.837877
        %v8401 = vadd.f32 %v8385, 11.837877
        %v8402 = vadd.f32 %v8386, 11.837877
        %v8403 = vadd.f32 %v8387, 11.837877
        %v8404 = vadd.f32 %v8388, 11.837877
        %v8405 = vadd.f32 %v8389, 11.837877
        %v8406 = vadd.f32 %v8390, 11.837877
        %v8407 = vadd.f32 %v8391, 11.837877
        %v8408 = vadd.f32 %v8392, 11.837877
        %v8409 = vadd.f32 %v8393, 11.837877
        %v8410 = vadd.f32 %v8394, 11.837877
        %v8411 = vadd.f32 %v8395, 11.837877
        %v8412 = vadd.f32 %v8396, 11.837877
        %v8413 = vmul.f32 %v8397, -0.5
        %v8414 = vmul.f32 %v8398, -0.5
        %v8415 = vmul.f32 %v8399, -0.5
        %v8416 = vmul.f32 %v8400, -0.5
        %v8417 = vmul.f32 %v8401, -0.5
        %v8418 = vmul.f32 %v8402, -0.5
        %v8419 = vmul.f32 %v8403, -0.5
        %v8420 = vmul.f32 %v8404, -0.5
        %v8421 = vmul.f32 %v8405, -0.5
        %v8422 = vmul.f32 %v8406, -0.5
        %v8423 = vmul.f32 %v8407, -0.5
        %v8424 = vmul.f32 %v8408, -0.5
        %v8425 = vmul.f32 %v8409, -0.5
        %v8426 = vmul.f32 %v8410, -0.5
        %v8427 = vmul.f32 %v8411, -0.5
        %v8428 = vmul.f32 %v8412, -0.5
        %v8429 = vadd.f32 %v8413, -2.3025851
        %v8430 = vadd.f32 %v8414, -2.3025851
        %v8431 = vadd.f32 %v8415, -2.3025851
        %v8432 = vadd.f32 %v8416, -2.3025851
        %v8433 = vadd.f32 %v8417, -2.3025851
        %v8434 = vadd.f32 %v8418, -2.3025851
        %v8435 = vadd.f32 %v8419, -2.3025851
        %v8436 = vadd.f32 %v8420, -2.3025851
        %v8437 = vadd.f32 %v8421, -2.3025851
        %v8438 = vadd.f32 %v8422, -2.3025851
        %v8439 = vadd.f32 %v8423, -2.3025851
        %v8440 = vadd.f32 %v8424, -2.3025851
        %v8441 = vadd.f32 %v8425, -2.3025851
        %v8442 = vadd.f32 %v8426, -2.3025851
        %v8443 = vadd.f32 %v8427, -2.3025851
        %v8444 = vadd.f32 %v8428, -2.3025851
        %v8445 = vmax.f32 %v8205, %v8365
        %v8446 = vmax.f32 %v8206, %v8366
        %v8447 = vmax.f32 %v8207, %v8367
        %v8448 = vmax.f32 %v8208, %v8368
        %v8449 = vmax.f32 %v8209, %v8369
        %v8450 = vmax.f32 %v8210, %v8370
        %v8451 = vmax.f32 %v8211, %v8371
        %v8452 = vmax.f32 %v8212, %v8372
        %v8453 = vmax.f32 %v8213, %v8373
        %v8454 = vmax.f32 %v8214, %v8374
        %v8455 = vmax.f32 %v8215, %v8375
        %v8456 = vmax.f32 %v8216, %v8376
        %v8457 = vmax.f32 %v8217, %v8377
        %v8458 = vmax.f32 %v8218, %v8378
        %v8459 = vmax.f32 %v8219, %v8379
        %v8460 = vmax.f32 %v8220, %v8380
        %v8461 = vmax.f32 %v8445, %v8429
        %v8462 = vmax.f32 %v8446, %v8430
        %v8463 = vmax.f32 %v8447, %v8431
        %v8464 = vmax.f32 %v8448, %v8432
        %v8465 = vmax.f32 %v8449, %v8433
        %v8466 = vmax.f32 %v8450, %v8434
        %v8467 = vmax.f32 %v8451, %v8435
        %v8468 = vmax.f32 %v8452, %v8436
        %v8469 = vmax.f32 %v8453, %v8437
        %v8470 = vmax.f32 %v8454, %v8438
        %v8471 = vmax.f32 %v8455, %v8439
        %v8472 = vmax.f32 %v8456, %v8440
        %v8473 = vmax.f32 %v8457, %v8441
        %v8474 = vmax.f32 %v8458, %v8442
        %v8475 = vmax.f32 %v8459, %v8443
        %v8476 = vmax.f32 %v8460, %v8444
        %v8477 = vsub.f32 %v8205, %v8461
        %v8478 = vsub.f32 %v8206, %v8462
        %v8479 = vsub.f32 %v8207, %v8463
        %v8480 = vsub.f32 %v8208, %v8464
        %v8481 = vsub.f32 %v8209, %v8465
        %v8482 = vsub.f32 %v8210, %v8466
        %v8483 = vsub.f32 %v8211, %v8467
        %v8484 = vsub.f32 %v8212, %v8468
        %v8485 = vsub.f32 %v8213, %v8469
        %v8486 = vsub.f32 %v8214, %v8470
        %v8487 = vsub.f32 %v8215, %v8471
        %v8488 = vsub.f32 %v8216, %v8472
        %v8489 = vsub.f32 %v8217, %v8473
        %v8490 = vsub.f32 %v8218, %v8474
        %v8491 = vsub.f32 %v8219, %v8475
        %v8492 = vsub.f32 %v8220, %v8476
        %v8493 = vmul.f32 %v8477, 1.442695
        %v8494 = vpow.pop %v8493
        %v8495 = vmul.f32 %v8478, 1.442695
        %v8496 = vpow.pop %v8495
        %v8497 = vmul.f32 %v8479, 1.442695
        %v8498 = vpow.pop %v8497
        %v8499 = vmul.f32 %v8480, 1.442695
        %v8500 = vpow.pop %v8499
        %v8501 = vmul.f32 %v8481, 1.442695
        %v8502 = vpow.pop %v8501
        %v8503 = vmul.f32 %v8482, 1.442695
        %v8504 = vpow.pop %v8503
        %v8505 = vmul.f32 %v8483, 1.442695
        %v8506 = vpow.pop %v8505
        %v8507 = vmul.f32 %v8484, 1.442695
        %v8508 = vpow.pop %v8507
        %v8509 = vmul.f32 %v8485, 1.442695
        %v8510 = vpow.pop %v8509
        %v8511 = vmul.f32 %v8486, 1.442695
        %v8512 = vpow.pop %v8511
        %v8513 = vmul.f32 %v8487, 1.442695
        %v8514 = vpow.pop %v8513
        %v8515 = vmul.f32 %v8488, 1.442695
        %v8516 = vpow.pop %v8515
        %v8517 = vmul.f32 %v8489, 1.442695
        %v8518 = vpow.pop %v8517
        %v8519 = vmul.f32 %v8490, 1.442695
        %v8520 = vpow.pop %v8519
        %v8521 = vmul.f32 %v8491, 1.442695
        %v8522 = vpow.pop %v8521
        %v8523 = vmul.f32 %v8492, 1.442695
        %v8524 = vpow.pop %v8523
        %v8525 = vsub.f32 %v8365, %v8461
        %v8526 = vsub.f32 %v8366, %v8462
        %v8527 = vsub.f32 %v8367, %v8463
        %v8528 = vsub.f32 %v8368, %v8464
        %v8529 = vsub.f32 %v8369, %v8465
        %v8530 = vsub.f32 %v8370, %v8466
        %v8531 = vsub.f32 %v8371, %v8467
        %v8532 = vsub.f32 %v8372, %v8468
        %v8533 = vsub.f32 %v8373, %v8469
        %v8534 = vsub.f32 %v8374, %v8470
        %v8535 = vsub.f32 %v8375, %v8471
        %v8536 = vsub.f32 %v8376, %v8472
        %v8537 = vsub.f32 %v8377, %v8473
        %v8538 = vsub.f32 %v8378, %v8474
        %v8539 = vsub.f32 %v8379, %v8475
        %v8540 = vsub.f32 %v8380, %v8476
        %v8541 = vmul.f32 %v8525, 1.442695
        %v8542 = vpow.pop %v8541
        %v8543 = vmul.f32 %v8526, 1.442695
        %v8544 = vpow.pop %v8543
        %v8545 = vmul.f32 %v8527, 1.442695
        %v8546 = vpow.pop %v8545
        %v8547 = vmul.f32 %v8528, 1.442695
        %v8548 = vpow.pop %v8547
        %v8549 = vmul.f32 %v8529, 1.442695
        %v8550 = vpow.pop %v8549
        %v8551 = vmul.f32 %v8530, 1.442695
        %v8552 = vpow.pop %v8551
        %v8553 = vmul.f32 %v8531, 1.442695
        %v8554 = vpow.pop %v8553
        %v8555 = vmul.f32 %v8532, 1.442695
        %v8556 = vpow.pop %v8555
        %v8557 = vmul.f32 %v8533, 1.442695
        %v8558 = vpow.pop %v8557
        %v8559 = vmul.f32 %v8534, 1.442695
        %v8560 = vpow.pop %v8559
        %v8561 = vmul.f32 %v8535, 1.442695
        %v8562 = vpow.pop %v8561
        %v8563 = vmul.f32 %v8536, 1.442695
        %v8564 = vpow.pop %v8563
        %v8565 = vmul.f32 %v8537, 1.442695
        %v8566 = vpow.pop %v8565
        %v8567 = vmul.f32 %v8538, 1.442695
        %v8568 = vpow.pop %v8567
        %v8569 = vmul.f32 %v8539, 1.442695
        %v8570 = vpow.pop %v8569
        %v8571 = vmul.f32 %v8540, 1.442695
        %v8572 = vpow.pop %v8571
        %v8573 = vadd.f32 %v8494, %v8542
        %v8574 = vadd.f32 %v8496, %v8544
        %v8575 = vadd.f32 %v8498, %v8546
        %v8576 = vadd.f32 %v8500, %v8548
        %v8577 = vadd.f32 %v8502, %v8550
        %v8578 = vadd.f32 %v8504, %v8552
        %v8579 = vadd.f32 %v8506, %v8554
        %v8580 = vadd.f32 %v8508, %v8556
        %v8581 = vadd.f32 %v8510, %v8558
        %v8582 = vadd.f32 %v8512, %v8560
        %v8583 = vadd.f32 %v8514, %v8562
        %v8584 = vadd.f32 %v8516, %v8564
        %v8585 = vadd.f32 %v8518, %v8566
        %v8586 = vadd.f32 %v8520, %v8568
        %v8587 = vadd.f32 %v8522, %v8570
        %v8588 = vadd.f32 %v8524, %v8572
        %v8589 = vsub.f32 %v8429, %v8461
        %v8590 = vsub.f32 %v8430, %v8462
        %v8591 = vsub.f32 %v8431, %v8463
        %v8592 = vsub.f32 %v8432, %v8464
        %v8593 = vsub.f32 %v8433, %v8465
        %v8594 = vsub.f32 %v8434, %v8466
        %v8595 = vsub.f32 %v8435, %v8467
        %v8596 = vsub.f32 %v8436, %v8468
        %v8597 = vsub.f32 %v8437, %v8469
        %v8598 = vsub.f32 %v8438, %v8470
        %v8599 = vsub.f32 %v8439, %v8471
        %v8600 = vsub.f32 %v8440, %v8472
        %v8601 = vsub.f32 %v8441, %v8473
        %v8602 = vsub.f32 %v8442, %v8474
        %v8603 = vsub.f32 %v8443, %v8475
        %v8604 = vsub.f32 %v8444, %v8476
        %v8605 = vmul.f32 %v8589, 1.442695
        %v8606 = vpow.pop %v8605
        %v8607 = vmul.f32 %v8590, 1.442695
        %v8608 = vpow.pop %v8607
        %v8609 = vmul.f32 %v8591, 1.442695
        %v8610 = vpow.pop %v8609
        %v8611 = vmul.f32 %v8592, 1.442695
        %v8612 = vpow.pop %v8611
        %v8613 = vmul.f32 %v8593, 1.442695
        %v8614 = vpow.pop %v8613
        %v8615 = vmul.f32 %v8594, 1.442695
        %v8616 = vpow.pop %v8615
        %v8617 = vmul.f32 %v8595, 1.442695
        %v8618 = vpow.pop %v8617
        %v8619 = vmul.f32 %v8596, 1.442695
        %v8620 = vpow.pop %v8619
        %v8621 = vmul.f32 %v8597, 1.442695
        %v8622 = vpow.pop %v8621
        %v8623 = vmul.f32 %v8598, 1.442695
        %v8624 = vpow.pop %v8623
        %v8625 = vmul.f32 %v8599, 1.442695
        %v8626 = vpow.pop %v8625
        %v8627 = vmul.f32 %v8600, 1.442695
        %v8628 = vpow.pop %v8627
        %v8629 = vmul.f32 %v8601, 1.442695
        %v8630 = vpow.pop %v8629
        %v8631 = vmul.f32 %v8602, 1.442695
        %v8632 = vpow.pop %v8631
        %v8633 = vmul.f32 %v8603, 1.442695
        %v8634 = vpow.pop %v8633
        %v8635 = vmul.f32 %v8604, 1.442695
        %v8636 = vpow.pop %v8635
        %v8637 = vadd.f32 %v8573, %v8606
        %v8638 = vadd.f32 %v8574, %v8608
        %v8639 = vadd.f32 %v8575, %v8610
        %v8640 = vadd.f32 %v8576, %v8612
        %v8641 = vadd.f32 %v8577, %v8614
        %v8642 = vadd.f32 %v8578, %v8616
        %v8643 = vadd.f32 %v8579, %v8618
        %v8644 = vadd.f32 %v8580, %v8620
        %v8645 = vadd.f32 %v8581, %v8622
        %v8646 = vadd.f32 %v8582, %v8624
        %v8647 = vadd.f32 %v8583, %v8626
        %v8648 = vadd.f32 %v8584, %v8628
        %v8649 = vadd.f32 %v8585, %v8630
        %v8650 = vadd.f32 %v8586, %v8632
        %v8651 = vadd.f32 %v8587, %v8634
        %v8652 = vadd.f32 %v8588, %v8636
        %v8653 = vlog2.pop %v8637
        %v8654 = vmul.f32 %v8653, 0.6931472
        %v8655 = vlog2.pop %v8638
        %v8656 = vmul.f32 %v8655, 0.6931472
        %v8657 = vlog2.pop %v8639
        %v8658 = vmul.f32 %v8657, 0.6931472
        %v8659 = vlog2.pop %v8640
        %v8660 = vmul.f32 %v8659, 0.6931472
        %v8661 = vlog2.pop %v8641
        %v8662 = vmul.f32 %v8661, 0.6931472
        %v8663 = vlog2.pop %v8642
        %v8664 = vmul.f32 %v8663, 0.6931472
        %v8665 = vlog2.pop %v8643
        %v8666 = vmul.f32 %v8665, 0.6931472
        %v8667 = vlog2.pop %v8644
        %v8668 = vmul.f32 %v8667, 0.6931472
        %v8669 = vlog2.pop %v8645
        %v8670 = vmul.f32 %v8669, 0.6931472
        %v8671 = vlog2.pop %v8646
        %v8672 = vmul.f32 %v8671, 0.6931472
        %v8673 = vlog2.pop %v8647
        %v8674 = vmul.f32 %v8673, 0.6931472
        %v8675 = vlog2.pop %v8648
        %v8676 = vmul.f32 %v8675, 0.6931472
        %v8677 = vlog2.pop %v8649
        %v8678 = vmul.f32 %v8677, 0.6931472
        %v8679 = vlog2.pop %v8650
        %v8680 = vmul.f32 %v8679, 0.6931472
        %v8681 = vlog2.pop %v8651
        %v8682 = vmul.f32 %v8681, 0.6931472
        %v8683 = vlog2.pop %v8652
        %v8684 = vmul.f32 %v8683, 0.6931472
        %v8685 = vadd.f32 %v8461, %v8654
        %v8686 = vadd.f32 %v8462, %v8656
        %v8687 = vadd.f32 %v8463, %v8658
        %v8688 = vadd.f32 %v8464, %v8660
        %v8689 = vadd.f32 %v8465, %v8662
        %v8690 = vadd.f32 %v8466, %v8664
        %v8691 = vadd.f32 %v8467, %v8666
        %v8692 = vadd.f32 %v8468, %v8668
        %v8693 = vadd.f32 %v8469, %v8670
        %v8694 = vadd.f32 %v8470, %v8672
        %v8695 = vadd.f32 %v8471, %v8674
        %v8696 = vadd.f32 %v8472, %v8676
        %v8697 = vadd.f32 %v8473, %v8678
        %v8698 = vadd.f32 %v8474, %v8680
        %v8699 = vadd.f32 %v8475, %v8682
        %v8700 = vadd.f32 %v8476, %v8684
        %v8701 = vadd.f32 %v943, %v944
        %8702 = vadd.xlane.f32.xlu0 %v8701
        %v8703 = vpop.xlane.xlu0 %8702
        %v8704 = vadd.f32 %v945, %v946
        %8705 = vadd.xlane.f32.xlu0 %v8704
        %v8706 = vpop.xlane.xlu0 %8705
        %v8707 = vadd.f32 %v947, %v948
        %8708 = vadd.xlane.f32.xlu0 %v8707
        %v8709 = vpop.xlane.xlu0 %8708
        %v8710 = vadd.f32 %v949, %v950
        %8711 = vadd.xlane.f32.xlu0 %v8710
        %v8712 = vpop.xlane.xlu0 %8711
        %v8713 = vadd.f32 %v951, %v952
        %8714 = vadd.xlane.f32.xlu0 %v8713
        %v8715 = vpop.xlane.xlu0 %8714
        %v8716 = vadd.f32 %v953, %v954
        %8717 = vadd.xlane.f32.xlu0 %v8716
        %v8718 = vpop.xlane.xlu0 %8717
        %v8719 = vadd.f32 %v955, %v956
        %8720 = vadd.xlane.f32.xlu0 %v8719
        %v8721 = vpop.xlane.xlu0 %8720
        %v8722 = vadd.f32 %v957, %v958
        %8723 = vadd.xlane.f32.xlu0 %v8722
        %v8724 = vpop.xlane.xlu0 %8723
        %v8725 = vadd.f32 %v959, %v960
        %8726 = vadd.xlane.f32.xlu0 %v8725
        %v8727 = vpop.xlane.xlu0 %8726
        %v8728 = vadd.f32 %v961, %v962
        %8729 = vadd.xlane.f32.xlu0 %v8728
        %v8730 = vpop.xlane.xlu0 %8729
        %v8731 = vadd.f32 %v963, %v964
        %8732 = vadd.xlane.f32.xlu0 %v8731
        %v8733 = vpop.xlane.xlu0 %8732
        %v8734 = vadd.f32 %v965, %v966
        %8735 = vadd.xlane.f32.xlu0 %v8734
        %v8736 = vpop.xlane.xlu0 %8735
        %v8737 = vadd.f32 %v967, %v968
        %8738 = vadd.xlane.f32.xlu0 %v8737
        %v8739 = vpop.xlane.xlu0 %8738
        %v8740 = vadd.f32 %v969, %v970
        %8741 = vadd.xlane.f32.xlu0 %v8740
        %v8742 = vpop.xlane.xlu0 %8741
        %v8743 = vadd.f32 %v971, %v972
        %8744 = vadd.xlane.f32.xlu0 %v8743
        %v8745 = vpop.xlane.xlu0 %8744
        %v8746 = vadd.f32 %v973, %v974
        %8747 = vadd.xlane.f32.xlu0 %v8746
        %v8748 = vpop.xlane.xlu0 %8747
        %v8749 = vadd.f32 %v4581, 1.837877
        %v8750 = vadd.f32 %v4583, 1.837877
        %v8751 = vadd.f32 %v4586, 1.837877
        %v8752 = vadd.f32 %v4588, 1.837877
        %v8753 = vadd.f32 %v4591, 1.837877
        %v8754 = vadd.f32 %v4593, 1.837877
        %v8755 = vadd.f32 %v4596, 1.837877
        %v8756 = vadd.f32 %v4598, 1.837877
        %v8757 = vadd.f32 %v4601, 1.837877
        %v8758 = vadd.f32 %v4603, 1.837877
        %v8759 = vadd.f32 %v4606, 1.837877
        %v8760 = vadd.f32 %v4608, 1.837877
        %v8761 = vadd.f32 %v4611, 1.837877
        %v8762 = vadd.f32 %v4613, 1.837877
        %v8763 = vadd.f32 %v4616, 1.837877
        %v8764 = vadd.f32 %v4618, 1.837877
        %v8765 = vsub.f32 %v4532, %v4532
        %v8766 = vsub.f32 %v4534, %v4534
        %v8767 = vsub.f32 %v4537, %v4537
        %v8768 = vsub.f32 %v4539, %v4539
        %v8769 = vsub.f32 %v4542, %v4542
        %v8770 = vsub.f32 %v4544, %v4544
        %v8771 = vsub.f32 %v4547, %v4547
        %v8772 = vsub.f32 %v4549, %v4549
        %v8773 = vsub.f32 %v4552, %v4552
        %v8774 = vsub.f32 %v4554, %v4554
        %v8775 = vsub.f32 %v4557, %v4557
        %v8776 = vsub.f32 %v4559, %v4559
        %v8777 = vsub.f32 %v4562, %v4562
        %v8778 = vsub.f32 %v4564, %v4564
        %v8779 = vsub.f32 %v4567, %v4567
        %v8780 = vsub.f32 %v4569, %v4569
        %v8781 = vmul.f32 %v8765, %v8765
        %v8782 = vmul.f32 %v8766, %v8766
        %v8783 = vmul.f32 %v8767, %v8767
        %v8784 = vmul.f32 %v8768, %v8768
        %v8785 = vmul.f32 %v8769, %v8769
        %v8786 = vmul.f32 %v8770, %v8770
        %v8787 = vmul.f32 %v8771, %v8771
        %v8788 = vmul.f32 %v8772, %v8772
        %v8789 = vmul.f32 %v8773, %v8773
        %v8790 = vmul.f32 %v8774, %v8774
        %v8791 = vmul.f32 %v8775, %v8775
        %v8792 = vmul.f32 %v8776, %v8776
        %v8793 = vmul.f32 %v8777, %v8777
        %v8794 = vmul.f32 %v8778, %v8778
        %v8795 = vmul.f32 %v8779, %v8779
        %v8796 = vmul.f32 %v8780, %v8780
        %v8797 = vsub.f32 0.0, %v4581
        %v8798 = vsub.f32 0.0, %v4583
        %v8799 = vsub.f32 0.0, %v4586
        %v8800 = vsub.f32 0.0, %v4588
        %v8801 = vsub.f32 0.0, %v4591
        %v8802 = vsub.f32 0.0, %v4593
        %v8803 = vsub.f32 0.0, %v4596
        %v8804 = vsub.f32 0.0, %v4598
        %v8805 = vsub.f32 0.0, %v4601
        %v8806 = vsub.f32 0.0, %v4603
        %v8807 = vsub.f32 0.0, %v4606
        %v8808 = vsub.f32 0.0, %v4608
        %v8809 = vsub.f32 0.0, %v4611
        %v8810 = vsub.f32 0.0, %v4613
        %v8811 = vsub.f32 0.0, %v4616
        %v8812 = vsub.f32 0.0, %v4618
        %v8813 = vmul.f32 %v8797, 1.442695
        %v8814 = vpow.pop %v8813
        %v8815 = vmul.f32 %v8798, 1.442695
        %v8816 = vpow.pop %v8815
        %v8817 = vmul.f32 %v8799, 1.442695
        %v8818 = vpow.pop %v8817
        %v8819 = vmul.f32 %v8800, 1.442695
        %v8820 = vpow.pop %v8819
        %v8821 = vmul.f32 %v8801, 1.442695
        %v8822 = vpow.pop %v8821
        %v8823 = vmul.f32 %v8802, 1.442695
        %v8824 = vpow.pop %v8823
        %v8825 = vmul.f32 %v8803, 1.442695
        %v8826 = vpow.pop %v8825
        %v8827 = vmul.f32 %v8804, 1.442695
        %v8828 = vpow.pop %v8827
        %v8829 = vmul.f32 %v8805, 1.442695
        %v8830 = vpow.pop %v8829
        %v8831 = vmul.f32 %v8806, 1.442695
        %v8832 = vpow.pop %v8831
        %v8833 = vmul.f32 %v8807, 1.442695
        %v8834 = vpow.pop %v8833
        %v8835 = vmul.f32 %v8808, 1.442695
        %v8836 = vpow.pop %v8835
        %v8837 = vmul.f32 %v8809, 1.442695
        %v8838 = vpow.pop %v8837
        %v8839 = vmul.f32 %v8810, 1.442695
        %v8840 = vpow.pop %v8839
        %v8841 = vmul.f32 %v8811, 1.442695
        %v8842 = vpow.pop %v8841
        %v8843 = vmul.f32 %v8812, 1.442695
        %v8844 = vpow.pop %v8843
        %v8845 = vmul.f32 %v8781, %v8814
        %v8846 = vmul.f32 %v8782, %v8816
        %v8847 = vmul.f32 %v8783, %v8818
        %v8848 = vmul.f32 %v8784, %v8820
        %v8849 = vmul.f32 %v8785, %v8822
        %v8850 = vmul.f32 %v8786, %v8824
        %v8851 = vmul.f32 %v8787, %v8826
        %v8852 = vmul.f32 %v8788, %v8828
        %v8853 = vmul.f32 %v8789, %v8830
        %v8854 = vmul.f32 %v8790, %v8832
        %v8855 = vmul.f32 %v8791, %v8834
        %v8856 = vmul.f32 %v8792, %v8836
        %v8857 = vmul.f32 %v8793, %v8838
        %v8858 = vmul.f32 %v8794, %v8840
        %v8859 = vmul.f32 %v8795, %v8842
        %v8860 = vmul.f32 %v8796, %v8844
        %v8861 = vadd.f32 %v8749, %v8845
        %v8862 = vadd.f32 %v8750, %v8846
        %v8863 = vadd.f32 %v8751, %v8847
        %v8864 = vadd.f32 %v8752, %v8848
        %v8865 = vadd.f32 %v8753, %v8849
        %v8866 = vadd.f32 %v8754, %v8850
        %v8867 = vadd.f32 %v8755, %v8851
        %v8868 = vadd.f32 %v8756, %v8852
        %v8869 = vadd.f32 %v8757, %v8853
        %v8870 = vadd.f32 %v8758, %v8854
        %v8871 = vadd.f32 %v8759, %v8855
        %v8872 = vadd.f32 %v8760, %v8856
        %v8873 = vadd.f32 %v8761, %v8857
        %v8874 = vadd.f32 %v8762, %v8858
        %v8875 = vadd.f32 %v8763, %v8859
        %v8876 = vadd.f32 %v8764, %v8860
        %v8877 = vmul.f32 %v8861, -0.5
        %v8878 = vmul.f32 %v8862, -0.5
        %v8879 = vmul.f32 %v8863, -0.5
        %v8880 = vmul.f32 %v8864, -0.5
        %v8881 = vmul.f32 %v8865, -0.5
        %v8882 = vmul.f32 %v8866, -0.5
        %v8883 = vmul.f32 %v8867, -0.5
        %v8884 = vmul.f32 %v8868, -0.5
        %v8885 = vmul.f32 %v8869, -0.5
        %v8886 = vmul.f32 %v8870, -0.5
        %v8887 = vmul.f32 %v8871, -0.5
        %v8888 = vmul.f32 %v8872, -0.5
        %v8889 = vmul.f32 %v8873, -0.5
        %v8890 = vmul.f32 %v8874, -0.5
        %v8891 = vmul.f32 %v8875, -0.5
        %v8892 = vmul.f32 %v8876, -0.5
        %v8893 = vsub.f32 %v8877, %v8685
        %v8894 = vsub.f32 %v8878, %v8686
        %v8895 = vsub.f32 %v8879, %v8687
        %v8896 = vsub.f32 %v8880, %v8688
        %v8897 = vsub.f32 %v8881, %v8689
        %v8898 = vsub.f32 %v8882, %v8690
        %v8899 = vsub.f32 %v8883, %v8691
        %v8900 = vsub.f32 %v8884, %v8692
        %v8901 = vsub.f32 %v8885, %v8693
        %v8902 = vsub.f32 %v8886, %v8694
        %v8903 = vsub.f32 %v8887, %v8695
        %v8904 = vsub.f32 %v8888, %v8696
        %v8905 = vsub.f32 %v8889, %v8697
        %v8906 = vsub.f32 %v8890, %v8698
        %v8907 = vsub.f32 %v8891, %v8699
        %v8908 = vsub.f32 %v8892, %v8700
        %8909 = vadd.xlane.f32.xlu0 %v8893
        %v8910 = vpop.xlane.xlu0 %8909
        %8911 = vadd.xlane.f32.xlu0 %v8894
        %v8912 = vpop.xlane.xlu0 %8911
        %8913 = vadd.xlane.f32.xlu0 %v8895
        %v8914 = vpop.xlane.xlu0 %8913
        %8915 = vadd.xlane.f32.xlu0 %v8896
        %v8916 = vpop.xlane.xlu0 %8915
        %8917 = vadd.xlane.f32.xlu0 %v8897
        %v8918 = vpop.xlane.xlu0 %8917
        %8919 = vadd.xlane.f32.xlu0 %v8898
        %v8920 = vpop.xlane.xlu0 %8919
        %8921 = vadd.xlane.f32.xlu0 %v8899
        %v8922 = vpop.xlane.xlu0 %8921
        %8923 = vadd.xlane.f32.xlu0 %v8900
        %v8924 = vpop.xlane.xlu0 %8923
        %8925 = vadd.xlane.f32.xlu0 %v8901
        %v8926 = vpop.xlane.xlu0 %8925
        %8927 = vadd.xlane.f32.xlu0 %v8902
        %v8928 = vpop.xlane.xlu0 %8927
        %8929 = vadd.xlane.f32.xlu0 %v8903
        %v8930 = vpop.xlane.xlu0 %8929
        %8931 = vadd.xlane.f32.xlu0 %v8904
        %v8932 = vpop.xlane.xlu0 %8931
        %8933 = vadd.xlane.f32.xlu0 %v8905
        %v8934 = vpop.xlane.xlu0 %8933
        %8935 = vadd.xlane.f32.xlu0 %v8906
        %v8936 = vpop.xlane.xlu0 %8935
        %8937 = vadd.xlane.f32.xlu0 %v8907
        %v8938 = vpop.xlane.xlu0 %8937
        %8939 = vadd.xlane.f32.xlu0 %v8908
        %v8940 = vpop.xlane.xlu0 %8939
        %v8941 = vmul.f32 %v8910, %v8703
        %v8942 = vmul.f32 %v8912, %v8706
        %v8943 = vmul.f32 %v8914, %v8709
        %v8944 = vmul.f32 %v8916, %v8712
        %v8945 = vmul.f32 %v8918, %v8715
        %v8946 = vmul.f32 %v8920, %v8718
        %v8947 = vmul.f32 %v8922, %v8721
        %v8948 = vmul.f32 %v8924, %v8724
        %v8949 = vmul.f32 %v8926, %v8727
        %v8950 = vmul.f32 %v8928, %v8730
        %v8951 = vmul.f32 %v8930, %v8733
        %v8952 = vmul.f32 %v8932, %v8736
        %v8953 = vmul.f32 %v8934, %v8739
        %v8954 = vmul.f32 %v8936, %v8742
        %v8955 = vmul.f32 %v8938, %v8745
        %v8956 = vmul.f32 %v8940, %v8748
        %s8957 = smul.u32 %s34, 128
        %v8958 = vlaneseq
        %v8959 = vshrl.u32 %v8958, 7
        %v8960 = vadd.s32 %v8959, 8
        %v8961 = vadd.s32 %v8959, 16
        %v8962 = vadd.s32 %v8959, 24
        %v8963 = vadd.s32 %v8959, 32
        %v8964 = vadd.s32 %v8959, 40
        %v8965 = vadd.s32 %v8959, 48
        %v8966 = vadd.s32 %v8959, 56
        %v8967 = vadd.s32 %v8959, 64
        %v8968 = vadd.s32 %v8959, 72
        %v8969 = vadd.s32 %v8959, 80
        %v8970 = vadd.s32 %v8959, 88
        %v8971 = vadd.s32 %v8959, 96
        %v8972 = vadd.s32 %v8959, 104
        %v8973 = vadd.s32 %v8959, 112
        %v8974 = vadd.s32 %v8959, 120
        %v8975 = vstv %s8957
        %v8976 = vadd.s32 %v8975, %v8959
        %v8977 = vadd.s32 %v8975, %v8960
        %v8978 = vadd.s32 %v8975, %v8961
        %v8979 = vadd.s32 %v8975, %v8962
        %v8980 = vadd.s32 %v8975, %v8963
        %v8981 = vadd.s32 %v8975, %v8964
        %v8982 = vadd.s32 %v8975, %v8965
        %v8983 = vadd.s32 %v8975, %v8966
        %v8984 = vadd.s32 %v8975, %v8967
        %v8985 = vadd.s32 %v8975, %v8968
        %v8986 = vadd.s32 %v8975, %v8969
        %v8987 = vadd.s32 %v8975, %v8970
        %v8988 = vadd.s32 %v8975, %v8971
        %v8989 = vadd.s32 %v8975, %v8972
        %v8990 = vadd.s32 %v8975, %v8973
        %v8991 = vadd.s32 %v8975, %v8974
        %vm8992 = vcmp.lt.s32.totalorder %v8976, 512
        %vm8993 = vcmp.lt.s32.totalorder %v8977, 512
        %vm8994 = vcmp.lt.s32.totalorder %v8978, 512
        %vm8995 = vcmp.lt.s32.totalorder %v8979, 512
        %vm8996 = vcmp.lt.s32.totalorder %v8980, 512
        %vm8997 = vcmp.lt.s32.totalorder %v8981, 512
        %vm8998 = vcmp.lt.s32.totalorder %v8982, 512
        %vm8999 = vcmp.lt.s32.totalorder %v8983, 512
        %vm9000 = vcmp.lt.s32.totalorder %v8984, 512
        %vm9001 = vcmp.lt.s32.totalorder %v8985, 512
        %vm9002 = vcmp.lt.s32.totalorder %v8986, 512
        %vm9003 = vcmp.lt.s32.totalorder %v8987, 512
        %vm9004 = vcmp.lt.s32.totalorder %v8988, 512
        %vm9005 = vcmp.lt.s32.totalorder %v8989, 512
        %vm9006 = vcmp.lt.s32.totalorder %v8990, 512
        %vm9007 = vcmp.lt.s32.totalorder %v8991, 512
        %v9008 = vsel %vm8992, %v8111, 0.0
        %v9009 = vsel %vm8993, %v8114, 0.0
        %v9010 = vsel %vm8994, %v8117, 0.0
        %v9011 = vsel %vm8995, %v8120, 0.0
        %v9012 = vsel %vm8996, %v8123, 0.0
        %v9013 = vsel %vm8997, %v8126, 0.0
        %v9014 = vsel %vm8998, %v8129, 0.0
        %v9015 = vsel %vm8999, %v8132, 0.0
        %v9016 = vsel %vm9000, %v8135, 0.0
        %v9017 = vsel %vm9001, %v8138, 0.0
        %v9018 = vsel %vm9002, %v8141, 0.0
        %v9019 = vsel %vm9003, %v8144, 0.0
        %v9020 = vsel %vm9004, %v8147, 0.0
        %v9021 = vsel %vm9005, %v8150, 0.0
        %v9022 = vsel %vm9006, %v8153, 0.0
        %v9023 = vsel %vm9007, %v8156, 0.0
        %vm9024 = vcmask 7168
        %v9025 = vsel %vm9024, %v9008, 0.0
        %v9026 = vsel %vm9024, %v9009, 0.0
        %v9027 = vadd.f32 %v9025, %v9026
        %v9028 = vsel %vm9024, %v9010, 0.0
        %v9029 = vadd.f32 %v9027, %v9028
        %v9030 = vsel %vm9024, %v9011, 0.0
        %v9031 = vadd.f32 %v9029, %v9030
        %v9032 = vsel %vm9024, %v9012, 0.0
        %v9033 = vadd.f32 %v9031, %v9032
        %v9034 = vsel %vm9024, %v9013, 0.0
        %v9035 = vadd.f32 %v9033, %v9034
        %v9036 = vsel %vm9024, %v9014, 0.0
        %v9037 = vadd.f32 %v9035, %v9036
        %v9038 = vsel %vm9024, %v9015, 0.0
        %v9039 = vadd.f32 %v9037, %v9038
        %v9040 = vsel %vm9024, %v9016, 0.0
        %v9041 = vadd.f32 %v9039, %v9040
        %v9042 = vsel %vm9024, %v9017, 0.0
        %v9043 = vadd.f32 %v9041, %v9042
        %v9044 = vsel %vm9024, %v9018, 0.0
        %v9045 = vadd.f32 %v9043, %v9044
        %v9046 = vsel %vm9024, %v9019, 0.0
        %v9047 = vadd.f32 %v9045, %v9046
        %v9048 = vsel %vm9024, %v9020, 0.0
        %v9049 = vadd.f32 %v9047, %v9048
        %v9050 = vsel %vm9024, %v9021, 0.0
        %v9051 = vadd.f32 %v9049, %v9050
        %v9052 = vsel %vm9024, %v9022, 0.0
        %v9053 = vadd.f32 %v9051, %v9052
        %v9054 = vsel %vm9024, %v9023, 0.0
        %v9055 = vadd.f32 %v9053, %v9054
        %9056 = vadd.xlane.f32.xlu0 %v9055
        %v9057 = vpop.xlane.xlu0 %9056
        %v9058 = vrot.slane %v9057, 4
        %v9059 = vadd.f32 %v9057, %v9058
        %v9060 = vrot.slane %v9059, 2
        %v9061 = vadd.f32 %v9059, %v9060
        %v9062 = vrot.slane %v9061, 1
        %v9063 = vadd.f32 %v9061, %v9062
        %s9064 = vtos %v9063
        %v9065 = vsel %vm8992, %v8941, 0.0
        %v9066 = vsel %vm8993, %v8942, 0.0
        %v9067 = vsel %vm8994, %v8943, 0.0
        %v9068 = vsel %vm8995, %v8944, 0.0
        %v9069 = vsel %vm8996, %v8945, 0.0
        %v9070 = vsel %vm8997, %v8946, 0.0
        %v9071 = vsel %vm8998, %v8947, 0.0
        %v9072 = vsel %vm8999, %v8948, 0.0
        %v9073 = vsel %vm9000, %v8949, 0.0
        %v9074 = vsel %vm9001, %v8950, 0.0
        %v9075 = vsel %vm9002, %v8951, 0.0
        %v9076 = vsel %vm9003, %v8952, 0.0
        %v9077 = vsel %vm9004, %v8953, 0.0
        %v9078 = vsel %vm9005, %v8954, 0.0
        %v9079 = vsel %vm9006, %v8955, 0.0
        %v9080 = vsel %vm9007, %v8956, 0.0
        %v9081 = vsel %vm9024, %v9065, 0.0
        %v9082 = vsel %vm9024, %v9066, 0.0
        %v9083 = vadd.f32 %v9081, %v9082
        %v9084 = vsel %vm9024, %v9067, 0.0
        %v9085 = vadd.f32 %v9083, %v9084
        %v9086 = vsel %vm9024, %v9068, 0.0
        %v9087 = vadd.f32 %v9085, %v9086
        %v9088 = vsel %vm9024, %v9069, 0.0
        %v9089 = vadd.f32 %v9087, %v9088
        %v9090 = vsel %vm9024, %v9070, 0.0
        %v9091 = vadd.f32 %v9089, %v9090
        %v9092 = vsel %vm9024, %v9071, 0.0
        %v9093 = vadd.f32 %v9091, %v9092
        %v9094 = vsel %vm9024, %v9072, 0.0
        %v9095 = vadd.f32 %v9093, %v9094
        %v9096 = vsel %vm9024, %v9073, 0.0
        %v9097 = vadd.f32 %v9095, %v9096
        %v9098 = vsel %vm9024, %v9074, 0.0
        %v9099 = vadd.f32 %v9097, %v9098
        %v9100 = vsel %vm9024, %v9075, 0.0
        %v9101 = vadd.f32 %v9099, %v9100
        %v9102 = vsel %vm9024, %v9076, 0.0
        %v9103 = vadd.f32 %v9101, %v9102
        %v9104 = vsel %vm9024, %v9077, 0.0
        %v9105 = vadd.f32 %v9103, %v9104
        %v9106 = vsel %vm9024, %v9078, 0.0
        %v9107 = vadd.f32 %v9105, %v9106
        %v9108 = vsel %vm9024, %v9079, 0.0
        %v9109 = vadd.f32 %v9107, %v9108
        %v9110 = vsel %vm9024, %v9080, 0.0
        %v9111 = vadd.f32 %v9109, %v9110
        %9112 = vadd.xlane.f32.xlu0 %v9111
        %v9113 = vpop.xlane.xlu0 %9112
        %v9114 = vrot.slane %v9113, 4
        %v9115 = vadd.f32 %v9113, %v9114
        %v9116 = vrot.slane %v9115, 2
        %v9117 = vadd.f32 %v9115, %v9116
        %v9118 = vrot.slane %v9117, 1
        %v9119 = vadd.f32 %v9117, %v9118
        %s9120 = vtos %v9119
        %v9121 = vlaneseq
        %v9122 = vand.u32 %v9121, 127
        %vm9123 = vcmp.eq.s32.totalorder %v9122, 0
        %vm9124 = vcmp.eq.s32.totalorder %v9122, 1
        %v9125 = vstv %s9120
        %v9126 = vsel %vm9124, %v9125, 0.0
        %v9127 = vstv %s9064
        %v9128 = vsel %vm9123, %v9127, %v9126
        %9129 = vst [vmem:[%s711] sm:$0xff] %v9128
        %p9130 = scmp.lt.s32.totalorder %s34, 3
        %s9131 = scalar_select %p9130, %s34, 3
        %s9132 = smul.addr %s9131, 8
        %s9133 = scalar_lea.vmem %s18, %s9132
        // Predicated region
        $region125: #{_recvae_loss_pallas.1} parent=91 // pred_check
          %p9134 = pneg %p435
        $region126: #{_recvae_loss_pallas.1} parent=91 // pred_check_branch
          %9136 = sbr.rel (%p9134) target = $region128
        $region127: #{_recvae_loss_pallas.1} parent=91 // pred_region
          _
        $region128: #{_recvae_loss_pallas.1} parent=91 // pred_fallthru
          _
      $region92: #{_recvae_loss_pallas.1} parent=5 // pred_fallthru
        _
      %p9137 = scmp.le.s32.totalorder 2, %s29
      // Predicated region
      $region129: #{_recvae_loss_pallas.1} parent=5 // pred_check
        %p9138 = pneg %p9137
      $region130: #{_recvae_loss_pallas.1} parent=5 // pred_check_branch
        %9140 = sbr.rel (%p9138) target = $region132
      $region131: #{_recvae_loss_pallas.1} parent=5 // pred_region
        %s9141 = ssub.s32 %s29, 2
        // Predicated region
        $region133: #{_recvae_loss_pallas.1} parent=131 // pred_check
          %p9142 = pneg %p441
        $region134: #{_recvae_loss_pallas.1} parent=131 // pred_check_branch
          %9144 = sbr.rel (%p9142) target = $region136
        $region135: #{_recvae_loss_pallas.1} parent=131 // pred_region
          %p9145 = scmp.lt.s32.totalorder %s35, 3
          %s9146 = scalar_select %p9145, %s35, 3
          %s9147 = smul.addr %s9146, 8
          %s9148 = scalar_lea.vmem %s18, %s9147
        $region136: #{_recvae_loss_pallas.1} parent=131 // pred_fallthru
          _
      $region132: #{_recvae_loss_pallas.1} parent=5 // pred_fallthru
        _
    $region6: #{_recvae_loss_pallas.1} parent=1 // loop_footer
      %s33 = sadd.s32 1, %s29
    $region7: #{_recvae_loss_pallas.1} parent=1 // loop_footer_branch
      %28 = sbr.rel target = $region3
    $region8: #{_recvae_loss_pallas.1} parent=1 // loop_exit
      _
    %9149 = vsyncpa [#allocation3], 1
    %s9150 = scalar_lea.sflag [#allocation3], 1
    %9151 = vsyncpa %s9150, 1
    %9152 = vsyncpa [#allocation5], 1
    %9153 = vsyncpa [#allocation8], 1
    %9154 = vsyncpa [#allocation11], 1
    %9155 = vsyncpa [#allocation14], 1

</llo_original>
